<compile_context>
chip_gen: v7x
topology: tpu7x:2x2x1
jax: 0.10.0
libtpu: 0.0.40
codegen_flags: <defaults>
</compile_context>

<pallas_src>
import functools
import math

import jax
import jax.numpy as jnp
import numpy as np
from jax.experimental import pallas as pl
from jax.experimental.pallas import tpu as pltpu

# ----------------------- SamMaskDecoderConfig (small) -----------------------
HIDDEN_SIZE = 64          # config.hidden_size
NUM_HEADS = 2             # config.num_attention_heads
NUM_LAYERS = 2            # config.num_hidden_layers
DOWNSAMPLE_RATE = 2       # config.attention_downsample_rate
MLP_DIM = 128             # config.mlp_dim (SamMLPBlock inner dim, ReLU act)
LAYER_NORM_EPS = 1e-6     # config.layer_norm_eps (block layer norms)
FINAL_LN_EPS = 1e-5       # nn.LayerNorm default eps (final layer norm)

LANES = 128               # slab lane width
W_ALIGN = 16              # bf16 sublane tile rows (weight slab segment align)
S_ALIGN = 8               # f32 sublane tile rows (bias/LN slab segment align)


# --------------------------- static slab layout -------------------------------
def _build_layout():
    """Row offsets (static Python ints) of every parameter inside the slabs."""
    H = HIDDEN_SIZE
    D2 = HIDDEN_SIZE // DOWNSAMPLE_RATE
    M = MLP_DIM
    wcur, scur = [0], [0]

    def wseg(nrows):
        off = wcur[0]
        wcur[0] += -(-nrows // W_ALIGN) * W_ALIGN
        return off

    def sseg(nrows):
        off = scur[0]
        scur[0] += -(-nrows // S_ALIGN) * S_ALIGN
        return off

    def attn(internal):
        return {"wq": wseg(H), "wk": wseg(H), "wv": wseg(H),
                "wo": wseg(internal), "b": sseg(4), "din": internal}

    layers = []
    for _ in range(NUM_LAYERS):
        layers.append({
            "self": attn(H),          # self-attn uses downsample_rate=1
            "ln1": sseg(2),
            "t2i": attn(D2),
            "ln2": sseg(2),
            "mlp": {"w1": wseg(H), "w2": wseg(M), "b": sseg(2)},
            "ln3": sseg(2),
            "i2t": attn(D2),
            "ln4": sseg(2),
        })
    final = {"attn": attn(D2), "ln": sseg(2)}
    return {"layers": layers, "final": final,
            "w_rows": wcur[0], "s_rows": scur[0]}


# --------------------------- host-side slab packing ---------------------------
def pack_params(params):
    """Pack the nested parameter dict into (bf16 weight slab, f32 scalar slab)."""
    layout = _build_layout()
    w_slab = np.zeros((layout["w_rows"], LANES), np.float32)
    s_slab = np.zeros((layout["s_rows"], LANES), np.float32)

    def put_w(off, arr):
        a = np.asarray(arr, np.float32)
        w_slab[off:off + a.shape[0], 0:a.shape[1]] = a

    def put_rows(off, rows):
        for i, r in enumerate(rows):
            r = np.asarray(r, np.float32)
            s_slab[off + i, 0:r.shape[0]] = r

    def put_attn(ent, p):
        put_w(ent["wq"], p["wq"])
        put_w(ent["wk"], p["wk"])
        put_w(ent["wv"], p["wv"])
        put_w(ent["wo"], p["wo"])
        put_rows(ent["b"], [p["bq"], p["bk"], p["bv"], p["bo"]])

    for lp, ent in zip(params["layers"], layout["layers"]):
        put_attn(ent["self"], lp["self_attn"])
        put_rows(ent["ln1"], [lp["ln1"]["w"], lp["ln1"]["b"]])
        put_attn(ent["t2i"], lp["t2i"])
        put_rows(ent["ln2"], [lp["ln2"]["w"], lp["ln2"]["b"]])
        put_w(ent["mlp"]["w1"], lp["mlp"]["w1"])
        put_w(ent["mlp"]["w2"], lp["mlp"]["w2"])
        put_rows(ent["mlp"]["b"], [lp["mlp"]["b1"], lp["mlp"]["b2"]])
        put_rows(ent["ln3"], [lp["ln3"]["w"], lp["ln3"]["b"]])
        put_attn(ent["i2t"], lp["i2t"])
        put_rows(ent["ln4"], [lp["ln4"]["w"], lp["ln4"]["b"]])
    put_attn(layout["final"]["attn"], params["final_attn"])
    put_rows(layout["final"]["ln"],
             [params["ln_final"]["w"], params["ln_final"]["b"]])

    return jnp.asarray(w_slab, jnp.bfloat16), jnp.asarray(s_slab, jnp.float32)


# ----------------------- in-kernel helpers (deferred loads) -------------------
def _layernorm(x, s_ref, off, hidden, eps):
    scale = s_ref[off:off + 1, 0:hidden]        # [1, H] f32
    bias = s_ref[off + 1:off + 2, 0:hidden]     # [1, H] f32
    mean = jnp.mean(x, axis=-1, keepdims=True)
    c = x - mean
    var = jnp.mean(c * c, axis=-1, keepdims=True)
    return c * jax.lax.rsqrt(var + eps) * scale + bias


def _attention(q, k, v, w_ref, s_ref, ent, num_heads, hidden):
    """SamAttention: separate q/k/v projections, per-head softmax attention,
    head-concat folded into the output projection.  Weights are sliced from
    the slab ref right before each matmul (short live ranges)."""
    D = ent["din"]
    b = ent["b"]
    qb = q.astype(jnp.bfloat16)
    kb = k.astype(jnp.bfloat16)
    vb = v.astype(jnp.bfloat16)

    wq = w_ref[ent["wq"]:ent["wq"] + hidden, 0:D]
    qp = jnp.dot(qb, wq, preferred_element_type=jnp.float32) + s_ref[b:b + 1, 0:D]
    wk = w_ref[ent["wk"]:ent["wk"] + hidden, 0:D]
    kp = jnp.dot(kb, wk, preferred_element_type=jnp.float32) + s_ref[b + 1:b + 2, 0:D]
    wv = w_ref[ent["wv"]:ent["wv"] + hidden, 0:D]
    vp = jnp.dot(vb, wv, preferred_element_type=jnp.float32) + s_ref[b + 2:b + 3, 0:D]

    ch = D // num_heads
    scale = 1.0 / math.sqrt(ch)
    out = None
    for h in range(num_heads):                      # static tiny head loop
        sl = slice(h * ch, (h + 1) * ch)
        qh = qp[:, sl].astype(jnp.bfloat16)
        kh = kp[:, sl].astype(jnp.bfloat16)
        # q @ k^T via dot_general on the last dims (no explicit transpose)
        s = jax.lax.dot_general(qh, kh, (((1,), (1,)), ((), ())),
                                preferred_element_type=jnp.float32) * scale
        s = s - jnp.max(s, axis=-1, keepdims=True)
        p = jnp.exp(s)
        p = p * pl.reciprocal(jnp.sum(p, axis=-1, keepdims=True), approx=True)
        ho = jnp.dot(p.astype(jnp.bfloat16), vp[:, sl].astype(jnp.bfloat16),
                     preferred_element_type=jnp.float32)
        wo_h = w_ref[ent["wo"] + h * ch:ent["wo"] + (h + 1) * ch, 0:hidden]
        contrib = jnp.dot(ho.astype(jnp.bfloat16), wo_h,
                          preferred_element_type=jnp.float32)
        out = contrib if out is None else out + contrib
    return out + s_ref[b + 3:b + 4, 0:hidden]


def _mlp(x, w_ref, s_ref, ent, hidden, mlp_dim):
    xb = x.astype(jnp.bfloat16)
    w1 = w_ref[ent["w1"]:ent["w1"] + hidden, 0:mlp_dim]
    h = jnp.dot(xb, w1, preferred_element_type=jnp.float32) \
        + s_ref[ent["b"]:ent["b"] + 1, 0:mlp_dim]
    h = jnp.maximum(h, 0.0)
    w2 = w_ref[ent["w2"]:ent["w2"] + mlp_dim, 0:hidden]
    return jnp.dot(h.astype(jnp.bfloat16), w2, preferred_element_type=jnp.float32) \
        + s_ref[ent["b"] + 1:ent["b"] + 2, 0:hidden]


# ------------------------------ fused kernel ---------------------------------
def _fused_kernel(layout, num_heads, hidden, mlp_dim, ln_eps, final_eps,
                  prompt_ref, img_ref, imgpe_ref, w_ref, s_ref,
                  q_out_ref, k_out_ref):
    q_pe = prompt_ref[0]          # [Tq, H]  (query_point_embedding == prompt)
    k_pe = imgpe_ref[0]           # [S,  H]
    qs = q_pe                     # queries start as the prompt embeddings
    ks = img_ref[0]               # keys start as flattened image embeddings

    q_with_pe = qs + q_pe
    for i, lp in enumerate(layout["layers"]):
        # (1) self-attention on sparse tokens
        if i == 0:   # skip_first_layer_pe: queries replaced, no residual / PE
            qs = _attention(qs, qs, qs, w_ref, s_ref, lp["self"], num_heads, hidden)
        else:
            q_in = qs + q_pe
            qs = qs + _attention(q_in, q_in, qs, w_ref, s_ref, lp["self"],
                                 num_heads, hidden)
        qs = _layernorm(qs, s_ref, lp["ln1"], hidden, ln_eps)

        k_with_pe = ks + k_pe     # hoisted: ks unchanged between (2) and (4)

        # (2) cross-attention token -> image
        qs = qs + _attention(qs + q_pe, k_with_pe, ks, w_ref, s_ref, lp["t2i"],
                             num_heads, hidden)
        qs = _layernorm(qs, s_ref, lp["ln2"], hidden, ln_eps)

        # (3) MLP block (ReLU)
        qs = qs + _mlp(qs, w_ref, s_ref, lp["mlp"], hidden, mlp_dim)
        qs = _layernorm(qs, s_ref, lp["ln3"], hidden, ln_eps)

        # (4) cross-attention image -> token
        q_with_pe = qs + q_pe     # also reused by the final attention
        ks = ks + _attention(k_with_pe, q_with_pe, qs, w_ref, s_ref, lp["i2t"],
                             num_heads, hidden)
        ks = _layernorm(ks, s_ref, lp["ln4"], hidden, ln_eps)

    # final token->image attention + final LayerNorm (qs unchanged since (4))
    fin = layout["final"]
    qs = qs + _attention(q_with_pe, ks + k_pe, ks, w_ref, s_ref, fin["attn"],
                         num_heads, hidden)
    qs = _layernorm(qs, s_ref, fin["ln"], hidden, final_eps)

    q_out_ref[0] = qs.astype(q_out_ref.dtype)
    k_out_ref[0] = ks.astype(k_out_ref.dtype)


# ------------------------------ Pallas wrapper --------------------------------
def _pallas_forward(qs, ks, k_pe, w_slab, s_slab):
    BP, Tq, H = qs.shape
    S = ks.shape[1]
    layout = _build_layout()

    kernel = functools.partial(_fused_kernel, layout, NUM_HEADS, H, MLP_DIM,
                               LAYER_NORM_EPS, FINAL_LN_EPS)

    def tok_spec(seq):
        return pl.BlockSpec((1, seq, H), lambda b: (b, 0, 0))

    # Slab block index never changes across the grid -> copied to VMEM once.
    w_spec = pl.BlockSpec(w_slab.shape, lambda b: (0, 0))
    s_spec = pl.BlockSpec(s_slab.shape, lambda b: (0, 0))

    q_out, k_out = pl.pallas_call(
        kernel,
        out_shape=(jax.ShapeDtypeStruct((BP, Tq, H), qs.dtype),
                   jax.ShapeDtypeStruct((BP, S, H), ks.dtype)),
        grid=(BP,),
        in_specs=[tok_spec(Tq), tok_spec(S), tok_spec(S), w_spec, s_spec],
        out_specs=(tok_spec(Tq), tok_spec(S)),
        compiler_params=pltpu.CompilerParams(
            dimension_semantics=("parallel",)),
    )(qs, ks, k_pe, w_slab, s_slab)
    return q_out, k_out


def sam_two_way_transformer_pallas(prompt_embeddings, image_embeddings,
                                   image_positional_embeddings, w_slab, s_slab):
    B, C, h, w = image_embeddings.shape
    S_img = h * w
    # flatten(2).permute(0,2,1).unsqueeze(1)  (NCHW -> [B, 1, h*w, C])
    keys = image_embeddings.reshape(B, C, S_img).transpose(0, 2, 1)
    key_pe = image_positional_embeddings.reshape(B, C, S_img).transpose(0, 2, 1)

    Bq, P, Tq, H = prompt_embeddings.shape
    assert Bq == B and P == 1 and C == H   # assumes point_batch == 1
    BP = B * P
    qs0 = prompt_embeddings.reshape(BP, Tq, H)

    q_out, k_out = _pallas_forward(qs0, keys, key_pe, w_slab, s_slab)
    return q_out.reshape(B, P, Tq, H), k_out.reshape(B, P, S_img, H)


# ------------------------- pure-JAX reference (checks) ------------------------
def _ref_attention(q, k, v, p, num_heads):
    qp = q @ p["wq"] + p["bq"]
    kp = k @ p["wk"] + p["bk"]
    vp = v @ p["wv"] + p["bv"]
    BP, Sq, D = qp.shape
    Sk = kp.shape[1]
    ch = D // num_heads
    qh = qp.reshape(BP, Sq, num_heads, ch).transpose(0, 2, 1, 3)
    kh = kp.reshape(BP, Sk, num_heads, ch).transpose(0, 2, 1, 3)
    vh = vp.reshape(BP, Sk, num_heads, ch).transpose(0, 2, 1, 3)
    s = jnp.einsum("bhqc,bhkc->bhqk", qh, kh) / math.sqrt(ch)
    a = jax.nn.softmax(s, axis=-1)
    o = jnp.einsum("bhqk,bhkc->bhqc", a, vh)
    o = o.transpose(0, 2, 1, 3).reshape(BP, Sq, D)
    return o @ p["wo"] + p["bo"]


def _ref_layernorm(x, p, eps):
    mean = jnp.mean(x, axis=-1, keepdims=True)
    var = jnp.mean((x - mean) ** 2, axis=-1, keepdims=True)
    return (x - mean) * jax.lax.rsqrt(var + eps) * p["w"] + p["b"]


def _ref_mlp(x, p):
    return jnp.maximum(x @ p["w1"] + p["b1"], 0.0) @ p["w2"] + p["b2"]


def sam_two_way_transformer_reference(prompt_embeddings, image_embeddings,
                                      image_positional_embeddings, params):
    B, C, h, w = image_embeddings.shape
    S_img = h * w
    keys = image_embeddings.reshape(B, C, S_img).transpose(0, 2, 1)
    key_pe = image_positional_embeddings.reshape(B, C, S_img).transpose(0, 2, 1)
    Bq, P, Tq, H = prompt_embeddings.shape
    qs = prompt_embeddings.reshape(B * P, Tq, H)
    ks, k_pe = keys, key_pe
    q_pe = qs
    for i, lp in enumerate(params["layers"]):
        if i == 0:
            qs = _ref_attention(qs, qs, qs, lp["self_attn"], NUM_HEADS)
        else:
            q_in = qs + q_pe
            qs = qs + _ref_attention(q_in, q_in, qs, lp["self_attn"], NUM_HEADS)
        qs = _ref_layernorm(qs, lp["ln1"], LAYER_NORM_EPS)
        qs = qs + _ref_attention(qs + q_pe, ks + k_pe, ks, lp["t2i"], NUM_HEADS)
        qs = _ref_layernorm(qs, lp["ln2"], LAYER_NORM_EPS)
        qs = qs + _ref_mlp(qs, lp["mlp"])
        qs = _ref_layernorm(qs, lp["ln3"], LAYER_NORM_EPS)
        ks = ks + _ref_attention(ks + k_pe, qs + q_pe, qs, lp["i2t"], NUM_HEADS)
        ks = _ref_layernorm(ks, lp["ln4"], LAYER_NORM_EPS)
    qs = qs + _ref_attention(qs + q_pe, ks + k_pe, ks, params["final_attn"], NUM_HEADS)
    qs = _ref_layernorm(qs, params["ln_final"], FINAL_LN_EPS)
    return qs.reshape(B, P, Tq, H), ks.reshape(B, P, S_img, H)


# ------------------------------ parameter init --------------------------------
def _init_attention(key, hidden, internal, scale=0.05):
    ks = jax.random.split(key, 8)
    r = lambda k, s: scale * jax.random.normal(k, s, jnp.float32)
    return {"wq": r(ks[0], (hidden, internal)), "bq": r(ks[1], (internal,)),
            "wk": r(ks[2], (hidden, internal)), "bk": r(ks[3], (internal,)),
            "wv": r(ks[4], (hidden, internal)), "bv": r(ks[5], (internal,)),
            "wo": r(ks[6], (internal, hidden)), "bo": r(ks[7], (hidden,))}


def _init_ln(key, hidden):
    kw, kb = jax.random.split(key)
    return {"w": 1.0 + 0.05 * jax.random.normal(kw, (hidden,), jnp.float32),
            "b": 0.05 * jax.random.normal(kb, (hidden,), jnp.float32)}


def _init_mlp(key, hidden, mlp_dim, scale=0.05):
    ks = jax.random.split(key, 4)
    r = lambda k, s: scale * jax.random.normal(k, s, jnp.float32)
    return {"w1": r(ks[0], (hidden, mlp_dim)), "b1": r(ks[1], (mlp_dim,)),
            "w2": r(ks[2], (mlp_dim, hidden)), "b2": r(ks[3], (hidden,))}


def init_params(key):
    layers = []
    for _ in range(NUM_LAYERS):
        key, *ks = jax.random.split(key, 9)
        layers.append({
            "self_attn": _init_attention(ks[0], HIDDEN_SIZE, HIDDEN_SIZE),  # dr=1
            "ln1": _init_ln(ks[1], HIDDEN_SIZE),
            "t2i": _init_attention(ks[2], HIDDEN_SIZE, HIDDEN_SIZE // DOWNSAMPLE_RATE),
            "ln2": _init_ln(ks[3], HIDDEN_SIZE),
            "mlp": _init_mlp(ks[4], HIDDEN_SIZE, MLP_DIM),
            "ln3": _init_ln(ks[5], HIDDEN_SIZE),
            "i2t": _init_attention(ks[6], HIDDEN_SIZE, HIDDEN_SIZE // DOWNSAMPLE_RATE),
            "ln4": _init_ln(ks[7], HIDDEN_SIZE),
        })
    key, k1, k2 = jax.random.split(key, 3)
    return {"layers": layers,
            "final_attn": _init_attention(k1, HIDDEN_SIZE, HIDDEN_SIZE // DOWNSAMPLE_RATE),
            "ln_final": _init_ln(k2, HIDDEN_SIZE)}


# ----------------------------------- main -------------------------------------
if __name__ == "__main__":
    root = jax.random.PRNGKey(0)
    kp, ki, kpe, kw = jax.random.split(root, 4)

    B, P, Tq = 2, 1, 8
    h = w = 8
    prompt_embeddings = jax.random.normal(kp, (B, P, Tq, HIDDEN_SIZE), jnp.float32)
    image_embeddings = jax.random.normal(ki, (B, HIDDEN_SIZE, h, w), jnp.float32)
    image_positional_embeddings = jax.random.normal(
        kpe, (B, HIDDEN_SIZE, h, w), jnp.float32)

    params = init_params(kw)
    w_slab, s_slab = pack_params(params)        # host-side packing, done once

    pallas_fwd = jax.jit(sam_two_way_transformer_pallas)
    q_out, k_out = pallas_fwd(prompt_embeddings, image_embeddings,
                              image_positional_embeddings, w_slab, s_slab)
    q_out = jax.block_until_ready(q_out)
    k_out = jax.block_until_ready(k_out)

    # Cross-check against a pure-JAX f32 reference (kernel uses bf16 matmuls).
    q_ref, k_ref = sam_two_way_transformer_reference(
        prompt_embeddings, image_embeddings, image_positional_embeddings, params)
    np.testing.assert_allclose(np.asarray(q_out), np.asarray(q_ref),
                               rtol=3e-2, atol=3e-2)
    np.testing.assert_allclose(np.asarray(k_out), np.asarray(k_ref),
                               rtol=3e-2, atol=3e-2)

    assert q_out.shape == (B, P, Tq, HIDDEN_SIZE)
    assert k_out.shape == (B, P, h * w, HIDDEN_SIZE)
    print("KERNEL_OK")
</pallas_src>

<mosaic_0001>
module attributes {stable_mosaic.version = 11 : i64} {
  func.func @_fused_kernel(%arg0: i32, %arg1: memref<1x8x64xf32, #tpu.memory_space<vmem>>, %arg2: memref<1x64x64xf32, #tpu.memory_space<vmem>>, %arg3: memref<1x64x64xf32, #tpu.memory_space<vmem>>, %arg4: memref<2016x128xbf16, #tpu.memory_space<vmem>>, %arg5: memref<144x128xf32, #tpu.memory_space<vmem>>, %arg6: memref<1x8x64xf32, #tpu.memory_space<vmem>>, %arg7: memref<1x64x64xf32, #tpu.memory_space<vmem>>) attributes {dimension_semantics = [#tpu.dimension_semantics<parallel>], iteration_bounds = array<i64: 2>, scalar_prefetch = 0 : i64, scratch_operands = 0 : i64, tpu.core_type = #tpu.core_type<tc>, window_params = [{transform_indices = @transform_0, window_bounds = array<i64: 1, 8, 64>}, {transform_indices = @transform_1, window_bounds = array<i64: 1, 64, 64>}, {transform_indices = @transform_2, window_bounds = array<i64: 1, 64, 64>}, {pipeline_mode = #tpu.pipeline_mode<synchronous>, transform_indices = @transform_3, window_bounds = array<i64: 2016, 128>}, {pipeline_mode = #tpu.pipeline_mode<synchronous>, transform_indices = @transform_4, window_bounds = array<i64: 144, 128>}, {transform_indices = @transform_5, window_bounds = array<i64: 1, 8, 64>}, {transform_indices = @transform_6, window_bounds = array<i64: 1, 64, 64>}]} {
    %c0 = arith.constant 0 : index
    %c0_0 = arith.constant 0 : index
    %c0_1 = arith.constant 0 : index
    %0 = vector.load %arg1[%c0, %c0_0, %c0_1] : memref<1x8x64xf32, #tpu.memory_space<vmem>>, vector<1x8x64xf32>
    %1 = vector.shape_cast %0 : vector<1x8x64xf32> to vector<8x64xf32>
    %c0_2 = arith.constant 0 : index
    %c0_3 = arith.constant 0 : index
    %c0_4 = arith.constant 0 : index
    %2 = vector.load %arg3[%c0_2, %c0_3, %c0_4] : memref<1x64x64xf32, #tpu.memory_space<vmem>>, vector<1x64x64xf32>
    %3 = vector.shape_cast %2 : vector<1x64x64xf32> to vector<64x64xf32>
    %c0_5 = arith.constant 0 : index
    %c0_6 = arith.constant 0 : index
    %c0_7 = arith.constant 0 : index
    %4 = vector.load %arg2[%c0_5, %c0_6, %c0_7] : memref<1x64x64xf32, #tpu.memory_space<vmem>>, vector<1x64x64xf32>
    %5 = vector.shape_cast %4 : vector<1x64x64xf32> to vector<64x64xf32>
    %6 = arith.truncf %1 : vector<8x64xf32> to vector<8x64xbf16>
    %7 = arith.truncf %1 : vector<8x64xf32> to vector<8x64xbf16>
    %8 = arith.truncf %1 : vector<8x64xf32> to vector<8x64xbf16>
    %c0_8 = arith.constant 0 : index
    %c0_9 = arith.constant 0 : index
    %9 = vector.load %arg4[%c0_8, %c0_9] : memref<2016x128xbf16, #tpu.memory_space<vmem>>, vector<64x64xbf16>
    %cst = arith.constant dense<0.000000e+00> : vector<8x64xf32>
    %10 = tpu.matmul %6, %9, %cst {dimension_numbers = #tpu.dot_dimension_numbers<[1], [0], [0], [1], [0, 0, 1, 1], [], []>} : vector<8x64xbf16>, vector<64x64xbf16>, vector<8x64xf32> -> vector<8x64xf32>
    %c0_10 = arith.constant 0 : index
    %c0_11 = arith.constant 0 : index
    %11 = vector.load %arg5[%c0_10, %c0_11] : memref<144x128xf32, #tpu.memory_space<vmem>>, vector<1x64xf32>
    %12 = vector.broadcast %11 : vector<1x64xf32> to vector<8x64xf32>
    %13 = arith.addf %10, %12 : vector<8x64xf32>
    %c64 = arith.constant 64 : index
    %c0_12 = arith.constant 0 : index
    %14 = vector.load %arg4[%c64, %c0_12] : memref<2016x128xbf16, #tpu.memory_space<vmem>>, vector<64x64xbf16>
    %cst_13 = arith.constant dense<0.000000e+00> : vector<8x64xf32>
    %15 = tpu.matmul %7, %14, %cst_13 {dimension_numbers = #tpu.dot_dimension_numbers<[1], [0], [0], [1], [0, 0, 1, 1], [], []>} : vector<8x64xbf16>, vector<64x64xbf16>, vector<8x64xf32> -> vector<8x64xf32>
    %c1 = arith.constant 1 : index
    %c0_14 = arith.constant 0 : index
    %16 = vector.load %arg5[%c1, %c0_14] : memref<144x128xf32, #tpu.memory_space<vmem>>, vector<1x64xf32>
    %17 = vector.broadcast %16 : vector<1x64xf32> to vector<8x64xf32>
    %18 = arith.addf %15, %17 : vector<8x64xf32>
    %c128 = arith.constant 128 : index
    %c0_15 = arith.constant 0 : index
    %19 = vector.load %arg4[%c128, %c0_15] : memref<2016x128xbf16, #tpu.memory_space<vmem>>, vector<64x64xbf16>
    %cst_16 = arith.constant dense<0.000000e+00> : vector<8x64xf32>
    %20 = tpu.matmul %8, %19, %cst_16 {dimension_numbers = #tpu.dot_dimension_numbers<[1], [0], [0], [1], [0, 0, 1, 1], [], []>} : vector<8x64xbf16>, vector<64x64xbf16>, vector<8x64xf32> -> vector<8x64xf32>
    %c2 = arith.constant 2 : index
    %c0_17 = arith.constant 0 : index
    %21 = vector.load %arg5[%c2, %c0_17] : memref<144x128xf32, #tpu.memory_space<vmem>>, vector<1x64xf32>
    %22 = vector.broadcast %21 : vector<1x64xf32> to vector<8x64xf32>
    %23 = arith.addf %20, %22 : vector<8x64xf32>
    %24 = vector.extract_strided_slice %13 {offsets = [0, 0], sizes = [8, 32], strides = [1, 1]} : vector<8x64xf32> to vector<8x32xf32>
    %25 = arith.truncf %24 : vector<8x32xf32> to vector<8x32xbf16>
    %26 = vector.extract_strided_slice %18 {offsets = [0, 0], sizes = [8, 32], strides = [1, 1]} : vector<8x64xf32> to vector<8x32xf32>
    %27 = arith.truncf %26 : vector<8x32xf32> to vector<8x32xbf16>
    %cst_18 = arith.constant dense<0.000000e+00> : vector<8x8xf32>
    %28 = tpu.matmul %25, %27, %cst_18 {dimension_numbers = #tpu.dot_dimension_numbers<[1], [1], [0], [0], [0, 0, 1, 0], [], []>} : vector<8x32xbf16>, vector<8x32xbf16>, vector<8x8xf32> -> vector<8x8xf32>
    %cst_19 = arith.constant 0.176776692 : f32
    %29 = vector.broadcast %cst_19 : f32 to vector<8x8xf32>
    %30 = arith.mulf %28, %29 : vector<8x8xf32>
    %cst_20 = arith.constant dense<0xFF800000> : vector<8xf32>
    %31 = vector.multi_reduction <maximumf>, %30, %cst_20 [1] : vector<8x8xf32> to vector<8xf32>
    %32 = vector.shape_cast %31 : vector<8xf32> to vector<8x1xf32>
    %33 = vector.broadcast %32 : vector<8x1xf32> to vector<8x8xf32>
    %34 = arith.subf %30, %33 : vector<8x8xf32>
    %35 = math.exp %34 : vector<8x8xf32>
    %cst_21 = arith.constant dense<0.000000e+00> : vector<8xf32>
    %36 = vector.multi_reduction <add>, %35, %cst_21 [1] : vector<8x8xf32> to vector<8xf32>
    %37 = vector.shape_cast %36 : vector<8xf32> to vector<8x1xf32>
    %38 = tpu.reciprocal %37 {approx = true} : vector<8x1xf32> -> vector<8x1xf32>
    %39 = vector.broadcast %38 : vector<8x1xf32> to vector<8x8xf32>
    %40 = arith.mulf %35, %39 : vector<8x8xf32>
    %41 = arith.truncf %40 : vector<8x8xf32> to vector<8x8xbf16>
    %42 = vector.extract_strided_slice %23 {offsets = [0, 0], sizes = [8, 32], strides = [1, 1]} : vector<8x64xf32> to vector<8x32xf32>
    %43 = arith.truncf %42 : vector<8x32xf32> to vector<8x32xbf16>
    %cst_22 = arith.constant dense<0.000000e+00> : vector<8x32xf32>
    %44 = tpu.matmul %41, %43, %cst_22 {dimension_numbers = #tpu.dot_dimension_numbers<[1], [0], [0], [1], [0, 0, 1, 1], [], []>} : vector<8x8xbf16>, vector<8x32xbf16>, vector<8x32xf32> -> vector<8x32xf32>
    %c192 = arith.constant 192 : index
    %c0_23 = arith.constant 0 : index
    %45 = vector.load %arg4[%c192, %c0_23] : memref<2016x128xbf16, #tpu.memory_space<vmem>>, vector<32x64xbf16>
    %46 = arith.truncf %44 : vector<8x32xf32> to vector<8x32xbf16>
    %cst_24 = arith.constant dense<0.000000e+00> : vector<8x64xf32>
    %47 = tpu.matmul %46, %45, %cst_24 {dimension_numbers = #tpu.dot_dimension_numbers<[1], [0], [0], [1], [0, 0, 1, 1], [], []>} : vector<8x32xbf16>, vector<32x64xbf16>, vector<8x64xf32> -> vector<8x64xf32>
    %48 = vector.extract_strided_slice %13 {offsets = [0, 32], sizes = [8, 32], strides = [1, 1]} : vector<8x64xf32> to vector<8x32xf32>
    %49 = arith.truncf %48 : vector<8x32xf32> to vector<8x32xbf16>
    %50 = vector.extract_strided_slice %18 {offsets = [0, 32], sizes = [8, 32], strides = [1, 1]} : vector<8x64xf32> to vector<8x32xf32>
    %51 = arith.truncf %50 : vector<8x32xf32> to vector<8x32xbf16>
    %cst_25 = arith.constant dense<0.000000e+00> : vector<8x8xf32>
    %52 = tpu.matmul %49, %51, %cst_25 {dimension_numbers = #tpu.dot_dimension_numbers<[1], [1], [0], [0], [0, 0, 1, 0], [], []>} : vector<8x32xbf16>, vector<8x32xbf16>, vector<8x8xf32> -> vector<8x8xf32>
    %cst_26 = arith.constant 0.176776692 : f32
    %53 = vector.broadcast %cst_26 : f32 to vector<8x8xf32>
    %54 = arith.mulf %52, %53 : vector<8x8xf32>
    %cst_27 = arith.constant dense<0xFF800000> : vector<8xf32>
    %55 = vector.multi_reduction <maximumf>, %54, %cst_27 [1] : vector<8x8xf32> to vector<8xf32>
    %56 = vector.shape_cast %55 : vector<8xf32> to vector<8x1xf32>
    %57 = vector.broadcast %56 : vector<8x1xf32> to vector<8x8xf32>
    %58 = arith.subf %54, %57 : vector<8x8xf32>
    %59 = math.exp %58 : vector<8x8xf32>
    %cst_28 = arith.constant dense<0.000000e+00> : vector<8xf32>
    %60 = vector.multi_reduction <add>, %59, %cst_28 [1] : vector<8x8xf32> to vector<8xf32>
    %61 = vector.shape_cast %60 : vector<8xf32> to vector<8x1xf32>
    %62 = tpu.reciprocal %61 {approx = true} : vector<8x1xf32> -> vector<8x1xf32>
    %63 = vector.broadcast %62 : vector<8x1xf32> to vector<8x8xf32>
    %64 = arith.mulf %59, %63 : vector<8x8xf32>
    %65 = arith.truncf %64 : vector<8x8xf32> to vector<8x8xbf16>
    %66 = vector.extract_strided_slice %23 {offsets = [0, 32], sizes = [8, 32], strides = [1, 1]} : vector<8x64xf32> to vector<8x32xf32>
    %67 = arith.truncf %66 : vector<8x32xf32> to vector<8x32xbf16>
    %cst_29 = arith.constant dense<0.000000e+00> : vector<8x32xf32>
    %68 = tpu.matmul %65, %67, %cst_29 {dimension_numbers = #tpu.dot_dimension_numbers<[1], [0], [0], [1], [0, 0, 1, 1], [], []>} : vector<8x8xbf16>, vector<8x32xbf16>, vector<8x32xf32> -> vector<8x32xf32>
    %c224 = arith.constant 224 : index
    %c0_30 = arith.constant 0 : index
    %69 = vector.load %arg4[%c224, %c0_30] : memref<2016x128xbf16, #tpu.memory_space<vmem>>, vector<32x64xbf16>
    %70 = arith.truncf %68 : vector<8x32xf32> to vector<8x32xbf16>
    %cst_31 = arith.constant dense<0.000000e+00> : vector<8x64xf32>
    %71 = tpu.matmul %70, %69, %cst_31 {dimension_numbers = #tpu.dot_dimension_numbers<[1], [0], [0], [1], [0, 0, 1, 1], [], []>} : vector<8x32xbf16>, vector<32x64xbf16>, vector<8x64xf32> -> vector<8x64xf32>
    %72 = arith.addf %47, %71 : vector<8x64xf32>
    %c3 = arith.constant 3 : index
    %c0_32 = arith.constant 0 : index
    %73 = vector.load %arg5[%c3, %c0_32] : memref<144x128xf32, #tpu.memory_space<vmem>>, vector<1x64xf32>
    %74 = vector.broadcast %73 : vector<1x64xf32> to vector<8x64xf32>
    %75 = arith.addf %72, %74 : vector<8x64xf32>
    %c8 = arith.constant 8 : index
    %c0_33 = arith.constant 0 : index
    %76 = vector.load %arg5[%c8, %c0_33] : memref<144x128xf32, #tpu.memory_space<vmem>>, vector<1x64xf32>
    %c9 = arith.constant 9 : index
    %c0_34 = arith.constant 0 : index
    %77 = vector.load %arg5[%c9, %c0_34] : memref<144x128xf32, #tpu.memory_space<vmem>>, vector<1x64xf32>
    %cst_35 = arith.constant dense<0.000000e+00> : vector<8xf32>
    %78 = vector.multi_reduction <add>, %75, %cst_35 [1] : vector<8x64xf32> to vector<8xf32>
    %79 = vector.shape_cast %78 : vector<8xf32> to vector<8x1xf32>
    %cst_36 = arith.constant 6.400000e+01 : f32
    %80 = vector.broadcast %cst_36 : f32 to vector<8x1xf32>
    %81 = arith.divf %79, %80 : vector<8x1xf32>
    %82 = vector.broadcast %81 : vector<8x1xf32> to vector<8x64xf32>
    %83 = arith.subf %75, %82 : vector<8x64xf32>
    %84 = arith.mulf %83, %83 : vector<8x64xf32>
    %cst_37 = arith.constant dense<0.000000e+00> : vector<8xf32>
    %85 = vector.multi_reduction <add>, %84, %cst_37 [1] : vector<8x64xf32> to vector<8xf32>
    %86 = vector.shape_cast %85 : vector<8xf32> to vector<8x1xf32>
    %cst_38 = arith.constant 6.400000e+01 : f32
    %87 = vector.broadcast %cst_38 : f32 to vector<8x1xf32>
    %88 = arith.divf %86, %87 : vector<8x1xf32>
    %cst_39 = arith.constant 9.99999997E-7 : f32
    %89 = vector.broadcast %cst_39 : f32 to vector<8x1xf32>
    %90 = arith.addf %88, %89 : vector<8x1xf32>
    %91 = math.rsqrt %90 : vector<8x1xf32>
    %92 = vector.broadcast %91 : vector<8x1xf32> to vector<8x64xf32>
    %93 = arith.mulf %83, %92 : vector<8x64xf32>
    %94 = vector.broadcast %76 : vector<1x64xf32> to vector<8x64xf32>
    %95 = arith.mulf %93, %94 : vector<8x64xf32>
    %96 = vector.broadcast %77 : vector<1x64xf32> to vector<8x64xf32>
    %97 = arith.addf %95, %96 : vector<8x64xf32>
    %98 = arith.addf %5, %3 : vector<64x64xf32>
    %99 = arith.addf %97, %1 : vector<8x64xf32>
    %100 = arith.truncf %99 : vector<8x64xf32> to vector<8x64xbf16>
    %101 = arith.truncf %98 : vector<64x64xf32> to vector<64x64xbf16>
    %102 = arith.truncf %5 : vector<64x64xf32> to vector<64x64xbf16>
    %c256 = arith.constant 256 : index
    %c0_40 = arith.constant 0 : index
    %103 = vector.load %arg4[%c256, %c0_40] : memref<2016x128xbf16, #tpu.memory_space<vmem>>, vector<64x32xbf16>
    %cst_41 = arith.constant dense<0.000000e+00> : vector<8x32xf32>
    %104 = tpu.matmul %100, %103, %cst_41 {dimension_numbers = #tpu.dot_dimension_numbers<[1], [0], [0], [1], [0, 0, 1, 1], [], []>} : vector<8x64xbf16>, vector<64x32xbf16>, vector<8x32xf32> -> vector<8x32xf32>
    %c16 = arith.constant 16 : index
    %c0_42 = arith.constant 0 : index
    %105 = vector.load %arg5[%c16, %c0_42] : memref<144x128xf32, #tpu.memory_space<vmem>>, vector<1x32xf32>
    %106 = vector.broadcast %105 : vector<1x32xf32> to vector<8x32xf32>
    %107 = arith.addf %104, %106 : vector<8x32xf32>
    %c320 = arith.constant 320 : index
    %c0_43 = arith.constant 0 : index
    %108 = vector.load %arg4[%c320, %c0_43] : memref<2016x128xbf16, #tpu.memory_space<vmem>>, vector<64x32xbf16>
    %cst_44 = arith.constant dense<0.000000e+00> : vector<64x32xf32>
    %109 = tpu.matmul %101, %108, %cst_44 {dimension_numbers = #tpu.dot_dimension_numbers<[1], [0], [0], [1], [0, 0, 1, 1], [], []>} : vector<64x64xbf16>, vector<64x32xbf16>, vector<64x32xf32> -> vector<64x32xf32>
    %c17 = arith.constant 17 : index
    %c0_45 = arith.constant 0 : index
    %110 = vector.load %arg5[%c17, %c0_45] : memref<144x128xf32, #tpu.memory_space<vmem>>, vector<1x32xf32>
    %111 = vector.broadcast %110 : vector<1x32xf32> to vector<64x32xf32>
    %112 = arith.addf %109, %111 : vector<64x32xf32>
    %c384 = arith.constant 384 : index
    %c0_46 = arith.constant 0 : index
    %113 = vector.load %arg4[%c384, %c0_46] : memref<2016x128xbf16, #tpu.memory_space<vmem>>, vector<64x32xbf16>
    %cst_47 = arith.constant dense<0.000000e+00> : vector<64x32xf32>
    %114 = tpu.matmul %102, %113, %cst_47 {dimension_numbers = #tpu.dot_dimension_numbers<[1], [0], [0], [1], [0, 0, 1, 1], [], []>} : vector<64x64xbf16>, vector<64x32xbf16>, vector<64x32xf32> -> vector<64x32xf32>
    %c18 = arith.constant 18 : index
    %c0_48 = arith.constant 0 : index
    %115 = vector.load %arg5[%c18, %c0_48] : memref<144x128xf32, #tpu.memory_space<vmem>>, vector<1x32xf32>
    %116 = vector.broadcast %115 : vector<1x32xf32> to vector<64x32xf32>
    %117 = arith.addf %114, %116 : vector<64x32xf32>
    %118 = vector.extract_strided_slice %107 {offsets = [0, 0], sizes = [8, 16], strides = [1, 1]} : vector<8x32xf32> to vector<8x16xf32>
    %119 = arith.truncf %118 : vector<8x16xf32> to vector<8x16xbf16>
    %120 = vector.extract_strided_slice %112 {offsets = [0, 0], sizes = [64, 16], strides = [1, 1]} : vector<64x32xf32> to vector<64x16xf32>
    %121 = arith.truncf %120 : vector<64x16xf32> to vector<64x16xbf16>
    %cst_49 = arith.constant dense<0.000000e+00> : vector<8x64xf32>
    %122 = tpu.matmul %119, %121, %cst_49 {dimension_numbers = #tpu.dot_dimension_numbers<[1], [1], [0], [0], [0, 0, 1, 0], [], []>} : vector<8x16xbf16>, vector<64x16xbf16>, vector<8x64xf32> -> vector<8x64xf32>
    %cst_50 = arith.constant 2.500000e-01 : f32
    %123 = vector.broadcast %cst_50 : f32 to vector<8x64xf32>
    %124 = arith.mulf %122, %123 : vector<8x64xf32>
    %cst_51 = arith.constant dense<0xFF800000> : vector<8xf32>
    %125 = vector.multi_reduction <maximumf>, %124, %cst_51 [1] : vector<8x64xf32> to vector<8xf32>
    %126 = vector.shape_cast %125 : vector<8xf32> to vector<8x1xf32>
    %127 = vector.broadcast %126 : vector<8x1xf32> to vector<8x64xf32>
    %128 = arith.subf %124, %127 : vector<8x64xf32>
    %129 = math.exp %128 : vector<8x64xf32>
    %cst_52 = arith.constant dense<0.000000e+00> : vector<8xf32>
    %130 = vector.multi_reduction <add>, %129, %cst_52 [1] : vector<8x64xf32> to vector<8xf32>
    %131 = vector.shape_cast %130 : vector<8xf32> to vector<8x1xf32>
    %132 = tpu.reciprocal %131 {approx = true} : vector<8x1xf32> -> vector<8x1xf32>
    %133 = vector.broadcast %132 : vector<8x1xf32> to vector<8x64xf32>
    %134 = arith.mulf %129, %133 : vector<8x64xf32>
    %135 = arith.truncf %134 : vector<8x64xf32> to vector<8x64xbf16>
    %136 = vector.extract_strided_slice %117 {offsets = [0, 0], sizes = [64, 16], strides = [1, 1]} : vector<64x32xf32> to vector<64x16xf32>
    %137 = arith.truncf %136 : vector<64x16xf32> to vector<64x16xbf16>
    %cst_53 = arith.constant dense<0.000000e+00> : vector<8x16xf32>
    %138 = tpu.matmul %135, %137, %cst_53 {dimension_numbers = #tpu.dot_dimension_numbers<[1], [0], [0], [1], [0, 0, 1, 1], [], []>} : vector<8x64xbf16>, vector<64x16xbf16>, vector<8x16xf32> -> vector<8x16xf32>
    %c448 = arith.constant 448 : index
    %c0_54 = arith.constant 0 : index
    %139 = vector.load %arg4[%c448, %c0_54] : memref<2016x128xbf16, #tpu.memory_space<vmem>>, vector<16x64xbf16>
    %140 = arith.truncf %138 : vector<8x16xf32> to vector<8x16xbf16>
    %cst_55 = arith.constant dense<0.000000e+00> : vector<8x64xf32>
    %141 = tpu.matmul %140, %139, %cst_55 {dimension_numbers = #tpu.dot_dimension_numbers<[1], [0], [0], [1], [0, 0, 1, 1], [], []>} : vector<8x16xbf16>, vector<16x64xbf16>, vector<8x64xf32> -> vector<8x64xf32>
    %142 = vector.extract_strided_slice %107 {offsets = [0, 16], sizes = [8, 16], strides = [1, 1]} : vector<8x32xf32> to vector<8x16xf32>
    %143 = arith.truncf %142 : vector<8x16xf32> to vector<8x16xbf16>
    %144 = vector.extract_strided_slice %112 {offsets = [0, 16], sizes = [64, 16], strides = [1, 1]} : vector<64x32xf32> to vector<64x16xf32>
    %145 = arith.truncf %144 : vector<64x16xf32> to vector<64x16xbf16>
    %cst_56 = arith.constant dense<0.000000e+00> : vector<8x64xf32>
    %146 = tpu.matmul %143, %145, %cst_56 {dimension_numbers = #tpu.dot_dimension_numbers<[1], [1], [0], [0], [0, 0, 1, 0], [], []>} : vector<8x16xbf16>, vector<64x16xbf16>, vector<8x64xf32> -> vector<8x64xf32>
    %cst_57 = arith.constant 2.500000e-01 : f32
    %147 = vector.broadcast %cst_57 : f32 to vector<8x64xf32>
    %148 = arith.mulf %146, %147 : vector<8x64xf32>
    %cst_58 = arith.constant dense<0xFF800000> : vector<8xf32>
    %149 = vector.multi_reduction <maximumf>, %148, %cst_58 [1] : vector<8x64xf32> to vector<8xf32>
    %150 = vector.shape_cast %149 : vector<8xf32> to vector<8x1xf32>
    %151 = vector.broadcast %150 : vector<8x1xf32> to vector<8x64xf32>
    %152 = arith.subf %148, %151 : vector<8x64xf32>
    %153 = math.exp %152 : vector<8x64xf32>
    %cst_59 = arith.constant dense<0.000000e+00> : vector<8xf32>
    %154 = vector.multi_reduction <add>, %153, %cst_59 [1] : vector<8x64xf32> to vector<8xf32>
    %155 = vector.shape_cast %154 : vector<8xf32> to vector<8x1xf32>
    %156 = tpu.reciprocal %155 {approx = true} : vector<8x1xf32> -> vector<8x1xf32>
    %157 = vector.broadcast %156 : vector<8x1xf32> to vector<8x64xf32>
    %158 = arith.mulf %153, %157 : vector<8x64xf32>
    %159 = arith.truncf %158 : vector<8x64xf32> to vector<8x64xbf16>
    %160 = vector.extract_strided_slice %117 {offsets = [0, 16], sizes = [64, 16], strides = [1, 1]} : vector<64x32xf32> to vector<64x16xf32>
    %161 = arith.truncf %160 : vector<64x16xf32> to vector<64x16xbf16>
    %cst_60 = arith.constant dense<0.000000e+00> : vector<8x16xf32>
    %162 = tpu.matmul %159, %161, %cst_60 {dimension_numbers = #tpu.dot_dimension_numbers<[1], [0], [0], [1], [0, 0, 1, 1], [], []>} : vector<8x64xbf16>, vector<64x16xbf16>, vector<8x16xf32> -> vector<8x16xf32>
    %c464 = arith.constant 464 : index
    %c0_61 = arith.constant 0 : index
    %163 = vector.load %arg4[%c464, %c0_61] : memref<2016x128xbf16, #tpu.memory_space<vmem>>, vector<16x64xbf16>
    %164 = arith.truncf %162 : vector<8x16xf32> to vector<8x16xbf16>
    %cst_62 = arith.constant dense<0.000000e+00> : vector<8x64xf32>
    %165 = tpu.matmul %164, %163, %cst_62 {dimension_numbers = #tpu.dot_dimension_numbers<[1], [0], [0], [1], [0, 0, 1, 1], [], []>} : vector<8x16xbf16>, vector<16x64xbf16>, vector<8x64xf32> -> vector<8x64xf32>
    %166 = arith.addf %141, %165 : vector<8x64xf32>
    %c19 = arith.constant 19 : index
    %c0_63 = arith.constant 0 : index
    %167 = vector.load %arg5[%c19, %c0_63] : memref<144x128xf32, #tpu.memory_space<vmem>>, vector<1x64xf32>
    %168 = vector.broadcast %167 : vector<1x64xf32> to vector<8x64xf32>
    %169 = arith.addf %166, %168 : vector<8x64xf32>
    %170 = arith.addf %97, %169 : vector<8x64xf32>
    %c24 = arith.constant 24 : index
    %c0_64 = arith.constant 0 : index
    %171 = vector.load %arg5[%c24, %c0_64] : memref<144x128xf32, #tpu.memory_space<vmem>>, vector<1x64xf32>
    %c25 = arith.constant 25 : index
    %c0_65 = arith.constant 0 : index
    %172 = vector.load %arg5[%c25, %c0_65] : memref<144x128xf32, #tpu.memory_space<vmem>>, vector<1x64xf32>
    %cst_66 = arith.constant dense<0.000000e+00> : vector<8xf32>
    %173 = vector.multi_reduction <add>, %170, %cst_66 [1] : vector<8x64xf32> to vector<8xf32>
    %174 = vector.shape_cast %173 : vector<8xf32> to vector<8x1xf32>
    %cst_67 = arith.constant 6.400000e+01 : f32
    %175 = vector.broadcast %cst_67 : f32 to vector<8x1xf32>
    %176 = arith.divf %174, %175 : vector<8x1xf32>
    %177 = vector.broadcast %176 : vector<8x1xf32> to vector<8x64xf32>
    %178 = arith.subf %170, %177 : vector<8x64xf32>
    %179 = arith.mulf %178, %178 : vector<8x64xf32>
    %cst_68 = arith.constant dense<0.000000e+00> : vector<8xf32>
    %180 = vector.multi_reduction <add>, %179, %cst_68 [1] : vector<8x64xf32> to vector<8xf32>
    %181 = vector.shape_cast %180 : vector<8xf32> to vector<8x1xf32>
    %cst_69 = arith.constant 6.400000e+01 : f32
    %182 = vector.broadcast %cst_69 : f32 to vector<8x1xf32>
    %183 = arith.divf %181, %182 : vector<8x1xf32>
    %cst_70 = arith.constant 9.99999997E-7 : f32
    %184 = vector.broadcast %cst_70 : f32 to vector<8x1xf32>
    %185 = arith.addf %183, %184 : vector<8x1xf32>
    %186 = math.rsqrt %185 : vector<8x1xf32>
    %187 = vector.broadcast %186 : vector<8x1xf32> to vector<8x64xf32>
    %188 = arith.mulf %178, %187 : vector<8x64xf32>
    %189 = vector.broadcast %171 : vector<1x64xf32> to vector<8x64xf32>
    %190 = arith.mulf %188, %189 : vector<8x64xf32>
    %191 = vector.broadcast %172 : vector<1x64xf32> to vector<8x64xf32>
    %192 = arith.addf %190, %191 : vector<8x64xf32>
    %193 = arith.truncf %192 : vector<8x64xf32> to vector<8x64xbf16>
    %c480 = arith.constant 480 : index
    %c0_71 = arith.constant 0 : index
    %194 = vector.load %arg4[%c480, %c0_71] : memref<2016x128xbf16, #tpu.memory_space<vmem>>, vector<64x128xbf16>
    %cst_72 = arith.constant dense<0.000000e+00> : vector<8x128xf32>
    %195 = tpu.matmul %193, %194, %cst_72 {dimension_numbers = #tpu.dot_dimension_numbers<[1], [0], [0], [1], [0, 0, 1, 1], [], []>} : vector<8x64xbf16>, vector<64x128xbf16>, vector<8x128xf32> -> vector<8x128xf32>
    %c32 = arith.constant 32 : index
    %c0_73 = arith.constant 0 : index
    %196 = vector.load %arg5[%c32, %c0_73] : memref<144x128xf32, #tpu.memory_space<vmem>>, vector<1x128xf32>
    %197 = vector.broadcast %196 : vector<1x128xf32> to vector<8x128xf32>
    %198 = arith.addf %195, %197 : vector<8x128xf32>
    %cst_74 = arith.constant 0.000000e+00 : f32
    %199 = vector.broadcast %cst_74 : f32 to vector<8x128xf32>
    %200 = arith.maximumf %198, %199 : vector<8x128xf32>
    %c544 = arith.constant 544 : index
    %c0_75 = arith.constant 0 : index
    %201 = vector.load %arg4[%c544, %c0_75] : memref<2016x128xbf16, #tpu.memory_space<vmem>>, vector<128x64xbf16>
    %202 = arith.truncf %200 : vector<8x128xf32> to vector<8x128xbf16>
    %cst_76 = arith.constant dense<0.000000e+00> : vector<8x64xf32>
    %203 = tpu.matmul %202, %201, %cst_76 {dimension_numbers = #tpu.dot_dimension_numbers<[1], [0], [0], [1], [0, 0, 1, 1], [], []>} : vector<8x128xbf16>, vector<128x64xbf16>, vector<8x64xf32> -> vector<8x64xf32>
    %c33 = arith.constant 33 : index
    %c0_77 = arith.constant 0 : index
    %204 = vector.load %arg5[%c33, %c0_77] : memref<144x128xf32, #tpu.memory_space<vmem>>, vector<1x64xf32>
    %205 = vector.broadcast %204 : vector<1x64xf32> to vector<8x64xf32>
    %206 = arith.addf %203, %205 : vector<8x64xf32>
    %207 = arith.addf %192, %206 : vector<8x64xf32>
    %c40 = arith.constant 40 : index
    %c0_78 = arith.constant 0 : index
    %208 = vector.load %arg5[%c40, %c0_78] : memref<144x128xf32, #tpu.memory_space<vmem>>, vector<1x64xf32>
    %c41 = arith.constant 41 : index
    %c0_79 = arith.constant 0 : index
    %209 = vector.load %arg5[%c41, %c0_79] : memref<144x128xf32, #tpu.memory_space<vmem>>, vector<1x64xf32>
    %cst_80 = arith.constant dense<0.000000e+00> : vector<8xf32>
    %210 = vector.multi_reduction <add>, %207, %cst_80 [1] : vector<8x64xf32> to vector<8xf32>
    %211 = vector.shape_cast %210 : vector<8xf32> to vector<8x1xf32>
    %cst_81 = arith.constant 6.400000e+01 : f32
    %212 = vector.broadcast %cst_81 : f32 to vector<8x1xf32>
    %213 = arith.divf %211, %212 : vector<8x1xf32>
    %214 = vector.broadcast %213 : vector<8x1xf32> to vector<8x64xf32>
    %215 = arith.subf %207, %214 : vector<8x64xf32>
    %216 = arith.mulf %215, %215 : vector<8x64xf32>
    %cst_82 = arith.constant dense<0.000000e+00> : vector<8xf32>
    %217 = vector.multi_reduction <add>, %216, %cst_82 [1] : vector<8x64xf32> to vector<8xf32>
    %218 = vector.shape_cast %217 : vector<8xf32> to vector<8x1xf32>
    %cst_83 = arith.constant 6.400000e+01 : f32
    %219 = vector.broadcast %cst_83 : f32 to vector<8x1xf32>
    %220 = arith.divf %218, %219 : vector<8x1xf32>
    %cst_84 = arith.constant 9.99999997E-7 : f32
    %221 = vector.broadcast %cst_84 : f32 to vector<8x1xf32>
    %222 = arith.addf %220, %221 : vector<8x1xf32>
    %223 = math.rsqrt %222 : vector<8x1xf32>
    %224 = vector.broadcast %223 : vector<8x1xf32> to vector<8x64xf32>
    %225 = arith.mulf %215, %224 : vector<8x64xf32>
    %226 = vector.broadcast %208 : vector<1x64xf32> to vector<8x64xf32>
    %227 = arith.mulf %225, %226 : vector<8x64xf32>
    %228 = vector.broadcast %209 : vector<1x64xf32> to vector<8x64xf32>
    %229 = arith.addf %227, %228 : vector<8x64xf32>
    %230 = arith.addf %229, %1 : vector<8x64xf32>
    %231 = arith.truncf %98 : vector<64x64xf32> to vector<64x64xbf16>
    %232 = arith.truncf %230 : vector<8x64xf32> to vector<8x64xbf16>
    %233 = arith.truncf %229 : vector<8x64xf32> to vector<8x64xbf16>
    %c672 = arith.constant 672 : index
    %c0_85 = arith.constant 0 : index
    %234 = vector.load %arg4[%c672, %c0_85] : memref<2016x128xbf16, #tpu.memory_space<vmem>>, vector<64x32xbf16>
    %cst_86 = arith.constant dense<0.000000e+00> : vector<64x32xf32>
    %235 = tpu.matmul %231, %234, %cst_86 {dimension_numbers = #tpu.dot_dimension_numbers<[1], [0], [0], [1], [0, 0, 1, 1], [], []>} : vector<64x64xbf16>, vector<64x32xbf16>, vector<64x32xf32> -> vector<64x32xf32>
    %c48 = arith.constant 48 : index
    %c0_87 = arith.constant 0 : index
    %236 = vector.load %arg5[%c48, %c0_87] : memref<144x128xf32, #tpu.memory_space<vmem>>, vector<1x32xf32>
    %237 = vector.broadcast %236 : vector<1x32xf32> to vector<64x32xf32>
    %238 = arith.addf %235, %237 : vector<64x32xf32>
    %c736 = arith.constant 736 : index
    %c0_88 = arith.constant 0 : index
    %239 = vector.load %arg4[%c736, %c0_88] : memref<2016x128xbf16, #tpu.memory_space<vmem>>, vector<64x32xbf16>
    %cst_89 = arith.constant dense<0.000000e+00> : vector<8x32xf32>
    %240 = tpu.matmul %232, %239, %cst_89 {dimension_numbers = #tpu.dot_dimension_numbers<[1], [0], [0], [1], [0, 0, 1, 1], [], []>} : vector<8x64xbf16>, vector<64x32xbf16>, vector<8x32xf32> -> vector<8x32xf32>
    %c49 = arith.constant 49 : index
    %c0_90 = arith.constant 0 : index
    %241 = vector.load %arg5[%c49, %c0_90] : memref<144x128xf32, #tpu.memory_space<vmem>>, vector<1x32xf32>
    %242 = vector.broadcast %241 : vector<1x32xf32> to vector<8x32xf32>
    %243 = arith.addf %240, %242 : vector<8x32xf32>
    %c800 = arith.constant 800 : index
    %c0_91 = arith.constant 0 : index
    %244 = vector.load %arg4[%c800, %c0_91] : memref<2016x128xbf16, #tpu.memory_space<vmem>>, vector<64x32xbf16>
    %cst_92 = arith.constant dense<0.000000e+00> : vector<8x32xf32>
    %245 = tpu.matmul %233, %244, %cst_92 {dimension_numbers = #tpu.dot_dimension_numbers<[1], [0], [0], [1], [0, 0, 1, 1], [], []>} : vector<8x64xbf16>, vector<64x32xbf16>, vector<8x32xf32> -> vector<8x32xf32>
    %c50 = arith.constant 50 : index
    %c0_93 = arith.constant 0 : index
    %246 = vector.load %arg5[%c50, %c0_93] : memref<144x128xf32, #tpu.memory_space<vmem>>, vector<1x32xf32>
    %247 = vector.broadcast %246 : vector<1x32xf32> to vector<8x32xf32>
    %248 = arith.addf %245, %247 : vector<8x32xf32>
    %249 = vector.extract_strided_slice %238 {offsets = [0, 0], sizes = [64, 16], strides = [1, 1]} : vector<64x32xf32> to vector<64x16xf32>
    %250 = arith.truncf %249 : vector<64x16xf32> to vector<64x16xbf16>
    %251 = vector.extract_strided_slice %243 {offsets = [0, 0], sizes = [8, 16], strides = [1, 1]} : vector<8x32xf32> to vector<8x16xf32>
    %252 = arith.truncf %251 : vector<8x16xf32> to vector<8x16xbf16>
    %cst_94 = arith.constant dense<0.000000e+00> : vector<64x8xf32>
    %253 = tpu.matmul %250, %252, %cst_94 {dimension_numbers = #tpu.dot_dimension_numbers<[1], [1], [0], [0], [0, 0, 1, 0], [], []>} : vector<64x16xbf16>, vector<8x16xbf16>, vector<64x8xf32> -> vector<64x8xf32>
    %cst_95 = arith.constant 2.500000e-01 : f32
    %254 = vector.broadcast %cst_95 : f32 to vector<64x8xf32>
    %255 = arith.mulf %253, %254 : vector<64x8xf32>
    %cst_96 = arith.constant dense<0xFF800000> : vector<64xf32>
    %256 = vector.multi_reduction <maximumf>, %255, %cst_96 [1] : vector<64x8xf32> to vector<64xf32>
    %257 = vector.shape_cast %256 : vector<64xf32> to vector<64x1xf32>
    %258 = vector.broadcast %257 : vector<64x1xf32> to vector<64x8xf32>
    %259 = arith.subf %255, %258 : vector<64x8xf32>
    %260 = math.exp %259 : vector<64x8xf32>
    %cst_97 = arith.constant dense<0.000000e+00> : vector<64xf32>
    %261 = vector.multi_reduction <add>, %260, %cst_97 [1] : vector<64x8xf32> to vector<64xf32>
    %262 = vector.shape_cast %261 : vector<64xf32> to vector<64x1xf32>
    %263 = tpu.reciprocal %262 {approx = true} : vector<64x1xf32> -> vector<64x1xf32>
    %264 = vector.broadcast %263 : vector<64x1xf32> to vector<64x8xf32>
    %265 = arith.mulf %260, %264 : vector<64x8xf32>
    %266 = arith.truncf %265 : vector<64x8xf32> to vector<64x8xbf16>
    %267 = vector.extract_strided_slice %248 {offsets = [0, 0], sizes = [8, 16], strides = [1, 1]} : vector<8x32xf32> to vector<8x16xf32>
    %268 = arith.truncf %267 : vector<8x16xf32> to vector<8x16xbf16>
    %cst_98 = arith.constant dense<0.000000e+00> : vector<64x16xf32>
    %269 = tpu.matmul %266, %268, %cst_98 {dimension_numbers = #tpu.dot_dimension_numbers<[1], [0], [0], [1], [0, 0, 1, 1], [], []>} : vector<64x8xbf16>, vector<8x16xbf16>, vector<64x16xf32> -> vector<64x16xf32>
    %c864 = arith.constant 864 : index
    %c0_99 = arith.constant 0 : index
    %270 = vector.load %arg4[%c864, %c0_99] : memref<2016x128xbf16, #tpu.memory_space<vmem>>, vector<16x64xbf16>
    %271 = arith.truncf %269 : vector<64x16xf32> to vector<64x16xbf16>
    %cst_100 = arith.constant dense<0.000000e+00> : vector<64x64xf32>
    %272 = tpu.matmul %271, %270, %cst_100 {dimension_numbers = #tpu.dot_dimension_numbers<[1], [0], [0], [1], [0, 0, 1, 1], [], []>} : vector<64x16xbf16>, vector<16x64xbf16>, vector<64x64xf32> -> vector<64x64xf32>
    %273 = vector.extract_strided_slice %238 {offsets = [0, 16], sizes = [64, 16], strides = [1, 1]} : vector<64x32xf32> to vector<64x16xf32>
    %274 = arith.truncf %273 : vector<64x16xf32> to vector<64x16xbf16>
    %275 = vector.extract_strided_slice %243 {offsets = [0, 16], sizes = [8, 16], strides = [1, 1]} : vector<8x32xf32> to vector<8x16xf32>
    %276 = arith.truncf %275 : vector<8x16xf32> to vector<8x16xbf16>
    %cst_101 = arith.constant dense<0.000000e+00> : vector<64x8xf32>
    %277 = tpu.matmul %274, %276, %cst_101 {dimension_numbers = #tpu.dot_dimension_numbers<[1], [1], [0], [0], [0, 0, 1, 0], [], []>} : vector<64x16xbf16>, vector<8x16xbf16>, vector<64x8xf32> -> vector<64x8xf32>
    %cst_102 = arith.constant 2.500000e-01 : f32
    %278 = vector.broadcast %cst_102 : f32 to vector<64x8xf32>
    %279 = arith.mulf %277, %278 : vector<64x8xf32>
    %cst_103 = arith.constant dense<0xFF800000> : vector<64xf32>
    %280 = vector.multi_reduction <maximumf>, %279, %cst_103 [1] : vector<64x8xf32> to vector<64xf32>
    %281 = vector.shape_cast %280 : vector<64xf32> to vector<64x1xf32>
    %282 = vector.broadcast %281 : vector<64x1xf32> to vector<64x8xf32>
    %283 = arith.subf %279, %282 : vector<64x8xf32>
    %284 = math.exp %283 : vector<64x8xf32>
    %cst_104 = arith.constant dense<0.000000e+00> : vector<64xf32>
    %285 = vector.multi_reduction <add>, %284, %cst_104 [1] : vector<64x8xf32> to vector<64xf32>
    %286 = vector.shape_cast %285 : vector<64xf32> to vector<64x1xf32>
    %287 = tpu.reciprocal %286 {approx = true} : vector<64x1xf32> -> vector<64x1xf32>
    %288 = vector.broadcast %287 : vector<64x1xf32> to vector<64x8xf32>
    %289 = arith.mulf %284, %288 : vector<64x8xf32>
    %290 = arith.truncf %289 : vector<64x8xf32> to vector<64x8xbf16>
    %291 = vector.extract_strided_slice %248 {offsets = [0, 16], sizes = [8, 16], strides = [1, 1]} : vector<8x32xf32> to vector<8x16xf32>
    %292 = arith.truncf %291 : vector<8x16xf32> to vector<8x16xbf16>
    %cst_105 = arith.constant dense<0.000000e+00> : vector<64x16xf32>
    %293 = tpu.matmul %290, %292, %cst_105 {dimension_numbers = #tpu.dot_dimension_numbers<[1], [0], [0], [1], [0, 0, 1, 1], [], []>} : vector<64x8xbf16>, vector<8x16xbf16>, vector<64x16xf32> -> vector<64x16xf32>
    %c880 = arith.constant 880 : index
    %c0_106 = arith.constant 0 : index
    %294 = vector.load %arg4[%c880, %c0_106] : memref<2016x128xbf16, #tpu.memory_space<vmem>>, vector<16x64xbf16>
    %295 = arith.truncf %293 : vector<64x16xf32> to vector<64x16xbf16>
    %cst_107 = arith.constant dense<0.000000e+00> : vector<64x64xf32>
    %296 = tpu.matmul %295, %294, %cst_107 {dimension_numbers = #tpu.dot_dimension_numbers<[1], [0], [0], [1], [0, 0, 1, 1], [], []>} : vector<64x16xbf16>, vector<16x64xbf16>, vector<64x64xf32> -> vector<64x64xf32>
    %297 = arith.addf %272, %296 : vector<64x64xf32>
    %c51 = arith.constant 51 : index
    %c0_108 = arith.constant 0 : index
    %298 = vector.load %arg5[%c51, %c0_108] : memref<144x128xf32, #tpu.memory_space<vmem>>, vector<1x64xf32>
    %299 = vector.broadcast %298 : vector<1x64xf32> to vector<64x64xf32>
    %300 = arith.addf %297, %299 : vector<64x64xf32>
    %301 = arith.addf %5, %300 : vector<64x64xf32>
    %c56 = arith.constant 56 : index
    %c0_109 = arith.constant 0 : index
    %302 = vector.load %arg5[%c56, %c0_109] : memref<144x128xf32, #tpu.memory_space<vmem>>, vector<1x64xf32>
    %c57 = arith.constant 57 : index
    %c0_110 = arith.constant 0 : index
    %303 = vector.load %arg5[%c57, %c0_110] : memref<144x128xf32, #tpu.memory_space<vmem>>, vector<1x64xf32>
    %cst_111 = arith.constant dense<0.000000e+00> : vector<64xf32>
    %304 = vector.multi_reduction <add>, %301, %cst_111 [1] : vector<64x64xf32> to vector<64xf32>
    %305 = vector.shape_cast %304 : vector<64xf32> to vector<64x1xf32>
    %cst_112 = arith.constant 6.400000e+01 : f32
    %306 = vector.broadcast %cst_112 : f32 to vector<64x1xf32>
    %307 = arith.divf %305, %306 : vector<64x1xf32>
    %308 = vector.broadcast %307 : vector<64x1xf32> to vector<64x64xf32>
    %309 = arith.subf %301, %308 : vector<64x64xf32>
    %310 = arith.mulf %309, %309 : vector<64x64xf32>
    %cst_113 = arith.constant dense<0.000000e+00> : vector<64xf32>
    %311 = vector.multi_reduction <add>, %310, %cst_113 [1] : vector<64x64xf32> to vector<64xf32>
    %312 = vector.shape_cast %311 : vector<64xf32> to vector<64x1xf32>
    %cst_114 = arith.constant 6.400000e+01 : f32
    %313 = vector.broadcast %cst_114 : f32 to vector<64x1xf32>
    %314 = arith.divf %312, %313 : vector<64x1xf32>
    %cst_115 = arith.constant 9.99999997E-7 : f32
    %315 = vector.broadcast %cst_115 : f32 to vector<64x1xf32>
    %316 = arith.addf %314, %315 : vector<64x1xf32>
    %317 = math.rsqrt %316 : vector<64x1xf32>
    %318 = vector.broadcast %317 : vector<64x1xf32> to vector<64x64xf32>
    %319 = arith.mulf %309, %318 : vector<64x64xf32>
    %320 = vector.broadcast %302 : vector<1x64xf32> to vector<64x64xf32>
    %321 = arith.mulf %319, %320 : vector<64x64xf32>
    %322 = vector.broadcast %303 : vector<1x64xf32> to vector<64x64xf32>
    %323 = arith.addf %321, %322 : vector<64x64xf32>
    %324 = arith.addf %229, %1 : vector<8x64xf32>
    %325 = arith.truncf %324 : vector<8x64xf32> to vector<8x64xbf16>
    %326 = arith.truncf %324 : vector<8x64xf32> to vector<8x64xbf16>
    %327 = arith.truncf %229 : vector<8x64xf32> to vector<8x64xbf16>
    %c896 = arith.constant 896 : index
    %c0_116 = arith.constant 0 : index
    %328 = vector.load %arg4[%c896, %c0_116] : memref<2016x128xbf16, #tpu.memory_space<vmem>>, vector<64x64xbf16>
    %cst_117 = arith.constant dense<0.000000e+00> : vector<8x64xf32>
    %329 = tpu.matmul %325, %328, %cst_117 {dimension_numbers = #tpu.dot_dimension_numbers<[1], [0], [0], [1], [0, 0, 1, 1], [], []>} : vector<8x64xbf16>, vector<64x64xbf16>, vector<8x64xf32> -> vector<8x64xf32>
    %c64_118 = arith.constant 64 : index
    %c0_119 = arith.constant 0 : index
    %330 = vector.load %arg5[%c64_118, %c0_119] : memref<144x128xf32, #tpu.memory_space<vmem>>, vector<1x64xf32>
    %331 = vector.broadcast %330 : vector<1x64xf32> to vector<8x64xf32>
    %332 = arith.addf %329, %331 : vector<8x64xf32>
    %c960 = arith.constant 960 : index
    %c0_120 = arith.constant 0 : index
    %333 = vector.load %arg4[%c960, %c0_120] : memref<2016x128xbf16, #tpu.memory_space<vmem>>, vector<64x64xbf16>
    %cst_121 = arith.constant dense<0.000000e+00> : vector<8x64xf32>
    %334 = tpu.matmul %326, %333, %cst_121 {dimension_numbers = #tpu.dot_dimension_numbers<[1], [0], [0], [1], [0, 0, 1, 1], [], []>} : vector<8x64xbf16>, vector<64x64xbf16>, vector<8x64xf32> -> vector<8x64xf32>
    %c65 = arith.constant 65 : index
    %c0_122 = arith.constant 0 : index
    %335 = vector.load %arg5[%c65, %c0_122] : memref<144x128xf32, #tpu.memory_space<vmem>>, vector<1x64xf32>
    %336 = vector.broadcast %335 : vector<1x64xf32> to vector<8x64xf32>
    %337 = arith.addf %334, %336 : vector<8x64xf32>
    %c1024 = arith.constant 1024 : index
    %c0_123 = arith.constant 0 : index
    %338 = vector.load %arg4[%c1024, %c0_123] : memref<2016x128xbf16, #tpu.memory_space<vmem>>, vector<64x64xbf16>
    %cst_124 = arith.constant dense<0.000000e+00> : vector<8x64xf32>
    %339 = tpu.matmul %327, %338, %cst_124 {dimension_numbers = #tpu.dot_dimension_numbers<[1], [0], [0], [1], [0, 0, 1, 1], [], []>} : vector<8x64xbf16>, vector<64x64xbf16>, vector<8x64xf32> -> vector<8x64xf32>
    %c66 = arith.constant 66 : index
    %c0_125 = arith.constant 0 : index
    %340 = vector.load %arg5[%c66, %c0_125] : memref<144x128xf32, #tpu.memory_space<vmem>>, vector<1x64xf32>
    %341 = vector.broadcast %340 : vector<1x64xf32> to vector<8x64xf32>
    %342 = arith.addf %339, %341 : vector<8x64xf32>
    %343 = vector.extract_strided_slice %332 {offsets = [0, 0], sizes = [8, 32], strides = [1, 1]} : vector<8x64xf32> to vector<8x32xf32>
    %344 = arith.truncf %343 : vector<8x32xf32> to vector<8x32xbf16>
    %345 = vector.extract_strided_slice %337 {offsets = [0, 0], sizes = [8, 32], strides = [1, 1]} : vector<8x64xf32> to vector<8x32xf32>
    %346 = arith.truncf %345 : vector<8x32xf32> to vector<8x32xbf16>
    %cst_126 = arith.constant dense<0.000000e+00> : vector<8x8xf32>
    %347 = tpu.matmul %344, %346, %cst_126 {dimension_numbers = #tpu.dot_dimension_numbers<[1], [1], [0], [0], [0, 0, 1, 0], [], []>} : vector<8x32xbf16>, vector<8x32xbf16>, vector<8x8xf32> -> vector<8x8xf32>
    %cst_127 = arith.constant 0.176776692 : f32
    %348 = vector.broadcast %cst_127 : f32 to vector<8x8xf32>
    %349 = arith.mulf %347, %348 : vector<8x8xf32>
    %cst_128 = arith.constant dense<0xFF800000> : vector<8xf32>
    %350 = vector.multi_reduction <maximumf>, %349, %cst_128 [1] : vector<8x8xf32> to vector<8xf32>
    %351 = vector.shape_cast %350 : vector<8xf32> to vector<8x1xf32>
    %352 = vector.broadcast %351 : vector<8x1xf32> to vector<8x8xf32>
    %353 = arith.subf %349, %352 : vector<8x8xf32>
    %354 = math.exp %353 : vector<8x8xf32>
    %cst_129 = arith.constant dense<0.000000e+00> : vector<8xf32>
    %355 = vector.multi_reduction <add>, %354, %cst_129 [1] : vector<8x8xf32> to vector<8xf32>
    %356 = vector.shape_cast %355 : vector<8xf32> to vector<8x1xf32>
    %357 = tpu.reciprocal %356 {approx = true} : vector<8x1xf32> -> vector<8x1xf32>
    %358 = vector.broadcast %357 : vector<8x1xf32> to vector<8x8xf32>
    %359 = arith.mulf %354, %358 : vector<8x8xf32>
    %360 = arith.truncf %359 : vector<8x8xf32> to vector<8x8xbf16>
    %361 = vector.extract_strided_slice %342 {offsets = [0, 0], sizes = [8, 32], strides = [1, 1]} : vector<8x64xf32> to vector<8x32xf32>
    %362 = arith.truncf %361 : vector<8x32xf32> to vector<8x32xbf16>
    %cst_130 = arith.constant dense<0.000000e+00> : vector<8x32xf32>
    %363 = tpu.matmul %360, %362, %cst_130 {dimension_numbers = #tpu.dot_dimension_numbers<[1], [0], [0], [1], [0, 0, 1, 1], [], []>} : vector<8x8xbf16>, vector<8x32xbf16>, vector<8x32xf32> -> vector<8x32xf32>
    %c1088 = arith.constant 1088 : index
    %c0_131 = arith.constant 0 : index
    %364 = vector.load %arg4[%c1088, %c0_131] : memref<2016x128xbf16, #tpu.memory_space<vmem>>, vector<32x64xbf16>
    %365 = arith.truncf %363 : vector<8x32xf32> to vector<8x32xbf16>
    %cst_132 = arith.constant dense<0.000000e+00> : vector<8x64xf32>
    %366 = tpu.matmul %365, %364, %cst_132 {dimension_numbers = #tpu.dot_dimension_numbers<[1], [0], [0], [1], [0, 0, 1, 1], [], []>} : vector<8x32xbf16>, vector<32x64xbf16>, vector<8x64xf32> -> vector<8x64xf32>
    %367 = vector.extract_strided_slice %332 {offsets = [0, 32], sizes = [8, 32], strides = [1, 1]} : vector<8x64xf32> to vector<8x32xf32>
    %368 = arith.truncf %367 : vector<8x32xf32> to vector<8x32xbf16>
    %369 = vector.extract_strided_slice %337 {offsets = [0, 32], sizes = [8, 32], strides = [1, 1]} : vector<8x64xf32> to vector<8x32xf32>
    %370 = arith.truncf %369 : vector<8x32xf32> to vector<8x32xbf16>
    %cst_133 = arith.constant dense<0.000000e+00> : vector<8x8xf32>
    %371 = tpu.matmul %368, %370, %cst_133 {dimension_numbers = #tpu.dot_dimension_numbers<[1], [1], [0], [0], [0, 0, 1, 0], [], []>} : vector<8x32xbf16>, vector<8x32xbf16>, vector<8x8xf32> -> vector<8x8xf32>
    %cst_134 = arith.constant 0.176776692 : f32
    %372 = vector.broadcast %cst_134 : f32 to vector<8x8xf32>
    %373 = arith.mulf %371, %372 : vector<8x8xf32>
    %cst_135 = arith.constant dense<0xFF800000> : vector<8xf32>
    %374 = vector.multi_reduction <maximumf>, %373, %cst_135 [1] : vector<8x8xf32> to vector<8xf32>
    %375 = vector.shape_cast %374 : vector<8xf32> to vector<8x1xf32>
    %376 = vector.broadcast %375 : vector<8x1xf32> to vector<8x8xf32>
    %377 = arith.subf %373, %376 : vector<8x8xf32>
    %378 = math.exp %377 : vector<8x8xf32>
    %cst_136 = arith.constant dense<0.000000e+00> : vector<8xf32>
    %379 = vector.multi_reduction <add>, %378, %cst_136 [1] : vector<8x8xf32> to vector<8xf32>
    %380 = vector.shape_cast %379 : vector<8xf32> to vector<8x1xf32>
    %381 = tpu.reciprocal %380 {approx = true} : vector<8x1xf32> -> vector<8x1xf32>
    %382 = vector.broadcast %381 : vector<8x1xf32> to vector<8x8xf32>
    %383 = arith.mulf %378, %382 : vector<8x8xf32>
    %384 = arith.truncf %383 : vector<8x8xf32> to vector<8x8xbf16>
    %385 = vector.extract_strided_slice %342 {offsets = [0, 32], sizes = [8, 32], strides = [1, 1]} : vector<8x64xf32> to vector<8x32xf32>
    %386 = arith.truncf %385 : vector<8x32xf32> to vector<8x32xbf16>
    %cst_137 = arith.constant dense<0.000000e+00> : vector<8x32xf32>
    %387 = tpu.matmul %384, %386, %cst_137 {dimension_numbers = #tpu.dot_dimension_numbers<[1], [0], [0], [1], [0, 0, 1, 1], [], []>} : vector<8x8xbf16>, vector<8x32xbf16>, vector<8x32xf32> -> vector<8x32xf32>
    %c1120 = arith.constant 1120 : index
    %c0_138 = arith.constant 0 : index
    %388 = vector.load %arg4[%c1120, %c0_138] : memref<2016x128xbf16, #tpu.memory_space<vmem>>, vector<32x64xbf16>
    %389 = arith.truncf %387 : vector<8x32xf32> to vector<8x32xbf16>
    %cst_139 = arith.constant dense<0.000000e+00> : vector<8x64xf32>
    %390 = tpu.matmul %389, %388, %cst_139 {dimension_numbers = #tpu.dot_dimension_numbers<[1], [0], [0], [1], [0, 0, 1, 1], [], []>} : vector<8x32xbf16>, vector<32x64xbf16>, vector<8x64xf32> -> vector<8x64xf32>
    %391 = arith.addf %366, %390 : vector<8x64xf32>
    %c67 = arith.constant 67 : index
    %c0_140 = arith.constant 0 : index
    %392 = vector.load %arg5[%c67, %c0_140] : memref<144x128xf32, #tpu.memory_space<vmem>>, vector<1x64xf32>
    %393 = vector.broadcast %392 : vector<1x64xf32> to vector<8x64xf32>
    %394 = arith.addf %391, %393 : vector<8x64xf32>
    %395 = arith.addf %229, %394 : vector<8x64xf32>
    %c72 = arith.constant 72 : index
    %c0_141 = arith.constant 0 : index
    %396 = vector.load %arg5[%c72, %c0_141] : memref<144x128xf32, #tpu.memory_space<vmem>>, vector<1x64xf32>
    %c73 = arith.constant 73 : index
    %c0_142 = arith.constant 0 : index
    %397 = vector.load %arg5[%c73, %c0_142] : memref<144x128xf32, #tpu.memory_space<vmem>>, vector<1x64xf32>
    %cst_143 = arith.constant dense<0.000000e+00> : vector<8xf32>
    %398 = vector.multi_reduction <add>, %395, %cst_143 [1] : vector<8x64xf32> to vector<8xf32>
    %399 = vector.shape_cast %398 : vector<8xf32> to vector<8x1xf32>
    %cst_144 = arith.constant 6.400000e+01 : f32
    %400 = vector.broadcast %cst_144 : f32 to vector<8x1xf32>
    %401 = arith.divf %399, %400 : vector<8x1xf32>
    %402 = vector.broadcast %401 : vector<8x1xf32> to vector<8x64xf32>
    %403 = arith.subf %395, %402 : vector<8x64xf32>
    %404 = arith.mulf %403, %403 : vector<8x64xf32>
    %cst_145 = arith.constant dense<0.000000e+00> : vector<8xf32>
    %405 = vector.multi_reduction <add>, %404, %cst_145 [1] : vector<8x64xf32> to vector<8xf32>
    %406 = vector.shape_cast %405 : vector<8xf32> to vector<8x1xf32>
    %cst_146 = arith.constant 6.400000e+01 : f32
    %407 = vector.broadcast %cst_146 : f32 to vector<8x1xf32>
    %408 = arith.divf %406, %407 : vector<8x1xf32>
    %cst_147 = arith.constant 9.99999997E-7 : f32
    %409 = vector.broadcast %cst_147 : f32 to vector<8x1xf32>
    %410 = arith.addf %408, %409 : vector<8x1xf32>
    %411 = math.rsqrt %410 : vector<8x1xf32>
    %412 = vector.broadcast %411 : vector<8x1xf32> to vector<8x64xf32>
    %413 = arith.mulf %403, %412 : vector<8x64xf32>
    %414 = vector.broadcast %396 : vector<1x64xf32> to vector<8x64xf32>
    %415 = arith.mulf %413, %414 : vector<8x64xf32>
    %416 = vector.broadcast %397 : vector<1x64xf32> to vector<8x64xf32>
    %417 = arith.addf %415, %416 : vector<8x64xf32>
    %418 = arith.addf %323, %3 : vector<64x64xf32>
    %419 = arith.addf %417, %1 : vector<8x64xf32>
    %420 = arith.truncf %419 : vector<8x64xf32> to vector<8x64xbf16>
    %421 = arith.truncf %418 : vector<64x64xf32> to vector<64x64xbf16>
    %422 = arith.truncf %323 : vector<64x64xf32> to vector<64x64xbf16>
    %c1152 = arith.constant 1152 : index
    %c0_148 = arith.constant 0 : index
    %423 = vector.load %arg4[%c1152, %c0_148] : memref<2016x128xbf16, #tpu.memory_space<vmem>>, vector<64x32xbf16>
    %cst_149 = arith.constant dense<0.000000e+00> : vector<8x32xf32>
    %424 = tpu.matmul %420, %423, %cst_149 {dimension_numbers = #tpu.dot_dimension_numbers<[1], [0], [0], [1], [0, 0, 1, 1], [], []>} : vector<8x64xbf16>, vector<64x32xbf16>, vector<8x32xf32> -> vector<8x32xf32>
    %c80 = arith.constant 80 : index
    %c0_150 = arith.constant 0 : index
    %425 = vector.load %arg5[%c80, %c0_150] : memref<144x128xf32, #tpu.memory_space<vmem>>, vector<1x32xf32>
    %426 = vector.broadcast %425 : vector<1x32xf32> to vector<8x32xf32>
    %427 = arith.addf %424, %426 : vector<8x32xf32>
    %c1216 = arith.constant 1216 : index
    %c0_151 = arith.constant 0 : index
    %428 = vector.load %arg4[%c1216, %c0_151] : memref<2016x128xbf16, #tpu.memory_space<vmem>>, vector<64x32xbf16>
    %cst_152 = arith.constant dense<0.000000e+00> : vector<64x32xf32>
    %429 = tpu.matmul %421, %428, %cst_152 {dimension_numbers = #tpu.dot_dimension_numbers<[1], [0], [0], [1], [0, 0, 1, 1], [], []>} : vector<64x64xbf16>, vector<64x32xbf16>, vector<64x32xf32> -> vector<64x32xf32>
    %c81 = arith.constant 81 : index
    %c0_153 = arith.constant 0 : index
    %430 = vector.load %arg5[%c81, %c0_153] : memref<144x128xf32, #tpu.memory_space<vmem>>, vector<1x32xf32>
    %431 = vector.broadcast %430 : vector<1x32xf32> to vector<64x32xf32>
    %432 = arith.addf %429, %431 : vector<64x32xf32>
    %c1280 = arith.constant 1280 : index
    %c0_154 = arith.constant 0 : index
    %433 = vector.load %arg4[%c1280, %c0_154] : memref<2016x128xbf16, #tpu.memory_space<vmem>>, vector<64x32xbf16>
    %cst_155 = arith.constant dense<0.000000e+00> : vector<64x32xf32>
    %434 = tpu.matmul %422, %433, %cst_155 {dimension_numbers = #tpu.dot_dimension_numbers<[1], [0], [0], [1], [0, 0, 1, 1], [], []>} : vector<64x64xbf16>, vector<64x32xbf16>, vector<64x32xf32> -> vector<64x32xf32>
    %c82 = arith.constant 82 : index
    %c0_156 = arith.constant 0 : index
    %435 = vector.load %arg5[%c82, %c0_156] : memref<144x128xf32, #tpu.memory_space<vmem>>, vector<1x32xf32>
    %436 = vector.broadcast %435 : vector<1x32xf32> to vector<64x32xf32>
    %437 = arith.addf %434, %436 : vector<64x32xf32>
    %438 = vector.extract_strided_slice %427 {offsets = [0, 0], sizes = [8, 16], strides = [1, 1]} : vector<8x32xf32> to vector<8x16xf32>
    %439 = arith.truncf %438 : vector<8x16xf32> to vector<8x16xbf16>
    %440 = vector.extract_strided_slice %432 {offsets = [0, 0], sizes = [64, 16], strides = [1, 1]} : vector<64x32xf32> to vector<64x16xf32>
    %441 = arith.truncf %440 : vector<64x16xf32> to vector<64x16xbf16>
    %cst_157 = arith.constant dense<0.000000e+00> : vector<8x64xf32>
    %442 = tpu.matmul %439, %441, %cst_157 {dimension_numbers = #tpu.dot_dimension_numbers<[1], [1], [0], [0], [0, 0, 1, 0], [], []>} : vector<8x16xbf16>, vector<64x16xbf16>, vector<8x64xf32> -> vector<8x64xf32>
    %cst_158 = arith.constant 2.500000e-01 : f32
    %443 = vector.broadcast %cst_158 : f32 to vector<8x64xf32>
    %444 = arith.mulf %442, %443 : vector<8x64xf32>
    %cst_159 = arith.constant dense<0xFF800000> : vector<8xf32>
    %445 = vector.multi_reduction <maximumf>, %444, %cst_159 [1] : vector<8x64xf32> to vector<8xf32>
    %446 = vector.shape_cast %445 : vector<8xf32> to vector<8x1xf32>
    %447 = vector.broadcast %446 : vector<8x1xf32> to vector<8x64xf32>
    %448 = arith.subf %444, %447 : vector<8x64xf32>
    %449 = math.exp %448 : vector<8x64xf32>
    %cst_160 = arith.constant dense<0.000000e+00> : vector<8xf32>
    %450 = vector.multi_reduction <add>, %449, %cst_160 [1] : vector<8x64xf32> to vector<8xf32>
    %451 = vector.shape_cast %450 : vector<8xf32> to vector<8x1xf32>
    %452 = tpu.reciprocal %451 {approx = true} : vector<8x1xf32> -> vector<8x1xf32>
    %453 = vector.broadcast %452 : vector<8x1xf32> to vector<8x64xf32>
    %454 = arith.mulf %449, %453 : vector<8x64xf32>
    %455 = arith.truncf %454 : vector<8x64xf32> to vector<8x64xbf16>
    %456 = vector.extract_strided_slice %437 {offsets = [0, 0], sizes = [64, 16], strides = [1, 1]} : vector<64x32xf32> to vector<64x16xf32>
    %457 = arith.truncf %456 : vector<64x16xf32> to vector<64x16xbf16>
    %cst_161 = arith.constant dense<0.000000e+00> : vector<8x16xf32>
    %458 = tpu.matmul %455, %457, %cst_161 {dimension_numbers = #tpu.dot_dimension_numbers<[1], [0], [0], [1], [0, 0, 1, 1], [], []>} : vector<8x64xbf16>, vector<64x16xbf16>, vector<8x16xf32> -> vector<8x16xf32>
    %c1344 = arith.constant 1344 : index
    %c0_162 = arith.constant 0 : index
    %459 = vector.load %arg4[%c1344, %c0_162] : memref<2016x128xbf16, #tpu.memory_space<vmem>>, vector<16x64xbf16>
    %460 = arith.truncf %458 : vector<8x16xf32> to vector<8x16xbf16>
    %cst_163 = arith.constant dense<0.000000e+00> : vector<8x64xf32>
    %461 = tpu.matmul %460, %459, %cst_163 {dimension_numbers = #tpu.dot_dimension_numbers<[1], [0], [0], [1], [0, 0, 1, 1], [], []>} : vector<8x16xbf16>, vector<16x64xbf16>, vector<8x64xf32> -> vector<8x64xf32>
    %462 = vector.extract_strided_slice %427 {offsets = [0, 16], sizes = [8, 16], strides = [1, 1]} : vector<8x32xf32> to vector<8x16xf32>
    %463 = arith.truncf %462 : vector<8x16xf32> to vector<8x16xbf16>
    %464 = vector.extract_strided_slice %432 {offsets = [0, 16], sizes = [64, 16], strides = [1, 1]} : vector<64x32xf32> to vector<64x16xf32>
    %465 = arith.truncf %464 : vector<64x16xf32> to vector<64x16xbf16>
    %cst_164 = arith.constant dense<0.000000e+00> : vector<8x64xf32>
    %466 = tpu.matmul %463, %465, %cst_164 {dimension_numbers = #tpu.dot_dimension_numbers<[1], [1], [0], [0], [0, 0, 1, 0], [], []>} : vector<8x16xbf16>, vector<64x16xbf16>, vector<8x64xf32> -> vector<8x64xf32>
    %cst_165 = arith.constant 2.500000e-01 : f32
    %467 = vector.broadcast %cst_165 : f32 to vector<8x64xf32>
    %468 = arith.mulf %466, %467 : vector<8x64xf32>
    %cst_166 = arith.constant dense<0xFF800000> : vector<8xf32>
    %469 = vector.multi_reduction <maximumf>, %468, %cst_166 [1] : vector<8x64xf32> to vector<8xf32>
    %470 = vector.shape_cast %469 : vector<8xf32> to vector<8x1xf32>
    %471 = vector.broadcast %470 : vector<8x1xf32> to vector<8x64xf32>
    %472 = arith.subf %468, %471 : vector<8x64xf32>
    %473 = math.exp %472 : vector<8x64xf32>
    %cst_167 = arith.constant dense<0.000000e+00> : vector<8xf32>
    %474 = vector.multi_reduction <add>, %473, %cst_167 [1] : vector<8x64xf32> to vector<8xf32>
    %475 = vector.shape_cast %474 : vector<8xf32> to vector<8x1xf32>
    %476 = tpu.reciprocal %475 {approx = true} : vector<8x1xf32> -> vector<8x1xf32>
    %477 = vector.broadcast %476 : vector<8x1xf32> to vector<8x64xf32>
    %478 = arith.mulf %473, %477 : vector<8x64xf32>
    %479 = arith.truncf %478 : vector<8x64xf32> to vector<8x64xbf16>
    %480 = vector.extract_strided_slice %437 {offsets = [0, 16], sizes = [64, 16], strides = [1, 1]} : vector<64x32xf32> to vector<64x16xf32>
    %481 = arith.truncf %480 : vector<64x16xf32> to vector<64x16xbf16>
    %cst_168 = arith.constant dense<0.000000e+00> : vector<8x16xf32>
    %482 = tpu.matmul %479, %481, %cst_168 {dimension_numbers = #tpu.dot_dimension_numbers<[1], [0], [0], [1], [0, 0, 1, 1], [], []>} : vector<8x64xbf16>, vector<64x16xbf16>, vector<8x16xf32> -> vector<8x16xf32>
    %c1360 = arith.constant 1360 : index
    %c0_169 = arith.constant 0 : index
    %483 = vector.load %arg4[%c1360, %c0_169] : memref<2016x128xbf16, #tpu.memory_space<vmem>>, vector<16x64xbf16>
    %484 = arith.truncf %482 : vector<8x16xf32> to vector<8x16xbf16>
    %cst_170 = arith.constant dense<0.000000e+00> : vector<8x64xf32>
    %485 = tpu.matmul %484, %483, %cst_170 {dimension_numbers = #tpu.dot_dimension_numbers<[1], [0], [0], [1], [0, 0, 1, 1], [], []>} : vector<8x16xbf16>, vector<16x64xbf16>, vector<8x64xf32> -> vector<8x64xf32>
    %486 = arith.addf %461, %485 : vector<8x64xf32>
    %c83 = arith.constant 83 : index
    %c0_171 = arith.constant 0 : index
    %487 = vector.load %arg5[%c83, %c0_171] : memref<144x128xf32, #tpu.memory_space<vmem>>, vector<1x64xf32>
    %488 = vector.broadcast %487 : vector<1x64xf32> to vector<8x64xf32>
    %489 = arith.addf %486, %488 : vector<8x64xf32>
    %490 = arith.addf %417, %489 : vector<8x64xf32>
    %c88 = arith.constant 88 : index
    %c0_172 = arith.constant 0 : index
    %491 = vector.load %arg5[%c88, %c0_172] : memref<144x128xf32, #tpu.memory_space<vmem>>, vector<1x64xf32>
    %c89 = arith.constant 89 : index
    %c0_173 = arith.constant 0 : index
    %492 = vector.load %arg5[%c89, %c0_173] : memref<144x128xf32, #tpu.memory_space<vmem>>, vector<1x64xf32>
    %cst_174 = arith.constant dense<0.000000e+00> : vector<8xf32>
    %493 = vector.multi_reduction <add>, %490, %cst_174 [1] : vector<8x64xf32> to vector<8xf32>
    %494 = vector.shape_cast %493 : vector<8xf32> to vector<8x1xf32>
    %cst_175 = arith.constant 6.400000e+01 : f32
    %495 = vector.broadcast %cst_175 : f32 to vector<8x1xf32>
    %496 = arith.divf %494, %495 : vector<8x1xf32>
    %497 = vector.broadcast %496 : vector<8x1xf32> to vector<8x64xf32>
    %498 = arith.subf %490, %497 : vector<8x64xf32>
    %499 = arith.mulf %498, %498 : vector<8x64xf32>
    %cst_176 = arith.constant dense<0.000000e+00> : vector<8xf32>
    %500 = vector.multi_reduction <add>, %499, %cst_176 [1] : vector<8x64xf32> to vector<8xf32>
    %501 = vector.shape_cast %500 : vector<8xf32> to vector<8x1xf32>
    %cst_177 = arith.constant 6.400000e+01 : f32
    %502 = vector.broadcast %cst_177 : f32 to vector<8x1xf32>
    %503 = arith.divf %501, %502 : vector<8x1xf32>
    %cst_178 = arith.constant 9.99999997E-7 : f32
    %504 = vector.broadcast %cst_178 : f32 to vector<8x1xf32>
    %505 = arith.addf %503, %504 : vector<8x1xf32>
    %506 = math.rsqrt %505 : vector<8x1xf32>
    %507 = vector.broadcast %506 : vector<8x1xf32> to vector<8x64xf32>
    %508 = arith.mulf %498, %507 : vector<8x64xf32>
    %509 = vector.broadcast %491 : vector<1x64xf32> to vector<8x64xf32>
    %510 = arith.mulf %508, %509 : vector<8x64xf32>
    %511 = vector.broadcast %492 : vector<1x64xf32> to vector<8x64xf32>
    %512 = arith.addf %510, %511 : vector<8x64xf32>
    %513 = arith.truncf %512 : vector<8x64xf32> to vector<8x64xbf16>
    %c1376 = arith.constant 1376 : index
    %c0_179 = arith.constant 0 : index
    %514 = vector.load %arg4[%c1376, %c0_179] : memref<2016x128xbf16, #tpu.memory_space<vmem>>, vector<64x128xbf16>
    %cst_180 = arith.constant dense<0.000000e+00> : vector<8x128xf32>
    %515 = tpu.matmul %513, %514, %cst_180 {dimension_numbers = #tpu.dot_dimension_numbers<[1], [0], [0], [1], [0, 0, 1, 1], [], []>} : vector<8x64xbf16>, vector<64x128xbf16>, vector<8x128xf32> -> vector<8x128xf32>
    %c96 = arith.constant 96 : index
    %c0_181 = arith.constant 0 : index
    %516 = vector.load %arg5[%c96, %c0_181] : memref<144x128xf32, #tpu.memory_space<vmem>>, vector<1x128xf32>
    %517 = vector.broadcast %516 : vector<1x128xf32> to vector<8x128xf32>
    %518 = arith.addf %515, %517 : vector<8x128xf32>
    %cst_182 = arith.constant 0.000000e+00 : f32
    %519 = vector.broadcast %cst_182 : f32 to vector<8x128xf32>
    %520 = arith.maximumf %518, %519 : vector<8x128xf32>
    %c1440 = arith.constant 1440 : index
    %c0_183 = arith.constant 0 : index
    %521 = vector.load %arg4[%c1440, %c0_183] : memref<2016x128xbf16, #tpu.memory_space<vmem>>, vector<128x64xbf16>
    %522 = arith.truncf %520 : vector<8x128xf32> to vector<8x128xbf16>
    %cst_184 = arith.constant dense<0.000000e+00> : vector<8x64xf32>
    %523 = tpu.matmul %522, %521, %cst_184 {dimension_numbers = #tpu.dot_dimension_numbers<[1], [0], [0], [1], [0, 0, 1, 1], [], []>} : vector<8x128xbf16>, vector<128x64xbf16>, vector<8x64xf32> -> vector<8x64xf32>
    %c97 = arith.constant 97 : index
    %c0_185 = arith.constant 0 : index
    %524 = vector.load %arg5[%c97, %c0_185] : memref<144x128xf32, #tpu.memory_space<vmem>>, vector<1x64xf32>
    %525 = vector.broadcast %524 : vector<1x64xf32> to vector<8x64xf32>
    %526 = arith.addf %523, %525 : vector<8x64xf32>
    %527 = arith.addf %512, %526 : vector<8x64xf32>
    %c104 = arith.constant 104 : index
    %c0_186 = arith.constant 0 : index
    %528 = vector.load %arg5[%c104, %c0_186] : memref<144x128xf32, #tpu.memory_space<vmem>>, vector<1x64xf32>
    %c105 = arith.constant 105 : index
    %c0_187 = arith.constant 0 : index
    %529 = vector.load %arg5[%c105, %c0_187] : memref<144x128xf32, #tpu.memory_space<vmem>>, vector<1x64xf32>
    %cst_188 = arith.constant dense<0.000000e+00> : vector<8xf32>
    %530 = vector.multi_reduction <add>, %527, %cst_188 [1] : vector<8x64xf32> to vector<8xf32>
    %531 = vector.shape_cast %530 : vector<8xf32> to vector<8x1xf32>
    %cst_189 = arith.constant 6.400000e+01 : f32
    %532 = vector.broadcast %cst_189 : f32 to vector<8x1xf32>
    %533 = arith.divf %531, %532 : vector<8x1xf32>
    %534 = vector.broadcast %533 : vector<8x1xf32> to vector<8x64xf32>
    %535 = arith.subf %527, %534 : vector<8x64xf32>
    %536 = arith.mulf %535, %535 : vector<8x64xf32>
    %cst_190 = arith.constant dense<0.000000e+00> : vector<8xf32>
    %537 = vector.multi_reduction <add>, %536, %cst_190 [1] : vector<8x64xf32> to vector<8xf32>
    %538 = vector.shape_cast %537 : vector<8xf32> to vector<8x1xf32>
    %cst_191 = arith.constant 6.400000e+01 : f32
    %539 = vector.broadcast %cst_191 : f32 to vector<8x1xf32>
    %540 = arith.divf %538, %539 : vector<8x1xf32>
    %cst_192 = arith.constant 9.99999997E-7 : f32
    %541 = vector.broadcast %cst_192 : f32 to vector<8x1xf32>
    %542 = arith.addf %540, %541 : vector<8x1xf32>
    %543 = math.rsqrt %542 : vector<8x1xf32>
    %544 = vector.broadcast %543 : vector<8x1xf32> to vector<8x64xf32>
    %545 = arith.mulf %535, %544 : vector<8x64xf32>
    %546 = vector.broadcast %528 : vector<1x64xf32> to vector<8x64xf32>
    %547 = arith.mulf %545, %546 : vector<8x64xf32>
    %548 = vector.broadcast %529 : vector<1x64xf32> to vector<8x64xf32>
    %549 = arith.addf %547, %548 : vector<8x64xf32>
    %550 = arith.addf %549, %1 : vector<8x64xf32>
    %551 = arith.truncf %418 : vector<64x64xf32> to vector<64x64xbf16>
    %552 = arith.truncf %550 : vector<8x64xf32> to vector<8x64xbf16>
    %553 = arith.truncf %549 : vector<8x64xf32> to vector<8x64xbf16>
    %c1568 = arith.constant 1568 : index
    %c0_193 = arith.constant 0 : index
    %554 = vector.load %arg4[%c1568, %c0_193] : memref<2016x128xbf16, #tpu.memory_space<vmem>>, vector<64x32xbf16>
    %cst_194 = arith.constant dense<0.000000e+00> : vector<64x32xf32>
    %555 = tpu.matmul %551, %554, %cst_194 {dimension_numbers = #tpu.dot_dimension_numbers<[1], [0], [0], [1], [0, 0, 1, 1], [], []>} : vector<64x64xbf16>, vector<64x32xbf16>, vector<64x32xf32> -> vector<64x32xf32>
    %c112 = arith.constant 112 : index
    %c0_195 = arith.constant 0 : index
    %556 = vector.load %arg5[%c112, %c0_195] : memref<144x128xf32, #tpu.memory_space<vmem>>, vector<1x32xf32>
    %557 = vector.broadcast %556 : vector<1x32xf32> to vector<64x32xf32>
    %558 = arith.addf %555, %557 : vector<64x32xf32>
    %c1632 = arith.constant 1632 : index
    %c0_196 = arith.constant 0 : index
    %559 = vector.load %arg4[%c1632, %c0_196] : memref<2016x128xbf16, #tpu.memory_space<vmem>>, vector<64x32xbf16>
    %cst_197 = arith.constant dense<0.000000e+00> : vector<8x32xf32>
    %560 = tpu.matmul %552, %559, %cst_197 {dimension_numbers = #tpu.dot_dimension_numbers<[1], [0], [0], [1], [0, 0, 1, 1], [], []>} : vector<8x64xbf16>, vector<64x32xbf16>, vector<8x32xf32> -> vector<8x32xf32>
    %c113 = arith.constant 113 : index
    %c0_198 = arith.constant 0 : index
    %561 = vector.load %arg5[%c113, %c0_198] : memref<144x128xf32, #tpu.memory_space<vmem>>, vector<1x32xf32>
    %562 = vector.broadcast %561 : vector<1x32xf32> to vector<8x32xf32>
    %563 = arith.addf %560, %562 : vector<8x32xf32>
    %c1696 = arith.constant 1696 : index
    %c0_199 = arith.constant 0 : index
    %564 = vector.load %arg4[%c1696, %c0_199] : memref<2016x128xbf16, #tpu.memory_space<vmem>>, vector<64x32xbf16>
    %cst_200 = arith.constant dense<0.000000e+00> : vector<8x32xf32>
    %565 = tpu.matmul %553, %564, %cst_200 {dimension_numbers = #tpu.dot_dimension_numbers<[1], [0], [0], [1], [0, 0, 1, 1], [], []>} : vector<8x64xbf16>, vector<64x32xbf16>, vector<8x32xf32> -> vector<8x32xf32>
    %c114 = arith.constant 114 : index
    %c0_201 = arith.constant 0 : index
    %566 = vector.load %arg5[%c114, %c0_201] : memref<144x128xf32, #tpu.memory_space<vmem>>, vector<1x32xf32>
    %567 = vector.broadcast %566 : vector<1x32xf32> to vector<8x32xf32>
    %568 = arith.addf %565, %567 : vector<8x32xf32>
    %569 = vector.extract_strided_slice %558 {offsets = [0, 0], sizes = [64, 16], strides = [1, 1]} : vector<64x32xf32> to vector<64x16xf32>
    %570 = arith.truncf %569 : vector<64x16xf32> to vector<64x16xbf16>
    %571 = vector.extract_strided_slice %563 {offsets = [0, 0], sizes = [8, 16], strides = [1, 1]} : vector<8x32xf32> to vector<8x16xf32>
    %572 = arith.truncf %571 : vector<8x16xf32> to vector<8x16xbf16>
    %cst_202 = arith.constant dense<0.000000e+00> : vector<64x8xf32>
    %573 = tpu.matmul %570, %572, %cst_202 {dimension_numbers = #tpu.dot_dimension_numbers<[1], [1], [0], [0], [0, 0, 1, 0], [], []>} : vector<64x16xbf16>, vector<8x16xbf16>, vector<64x8xf32> -> vector<64x8xf32>
    %cst_203 = arith.constant 2.500000e-01 : f32
    %574 = vector.broadcast %cst_203 : f32 to vector<64x8xf32>
    %575 = arith.mulf %573, %574 : vector<64x8xf32>
    %cst_204 = arith.constant dense<0xFF800000> : vector<64xf32>
    %576 = vector.multi_reduction <maximumf>, %575, %cst_204 [1] : vector<64x8xf32> to vector<64xf32>
    %577 = vector.shape_cast %576 : vector<64xf32> to vector<64x1xf32>
    %578 = vector.broadcast %577 : vector<64x1xf32> to vector<64x8xf32>
    %579 = arith.subf %575, %578 : vector<64x8xf32>
    %580 = math.exp %579 : vector<64x8xf32>
    %cst_205 = arith.constant dense<0.000000e+00> : vector<64xf32>
    %581 = vector.multi_reduction <add>, %580, %cst_205 [1] : vector<64x8xf32> to vector<64xf32>
    %582 = vector.shape_cast %581 : vector<64xf32> to vector<64x1xf32>
    %583 = tpu.reciprocal %582 {approx = true} : vector<64x1xf32> -> vector<64x1xf32>
    %584 = vector.broadcast %583 : vector<64x1xf32> to vector<64x8xf32>
    %585 = arith.mulf %580, %584 : vector<64x8xf32>
    %586 = arith.truncf %585 : vector<64x8xf32> to vector<64x8xbf16>
    %587 = vector.extract_strided_slice %568 {offsets = [0, 0], sizes = [8, 16], strides = [1, 1]} : vector<8x32xf32> to vector<8x16xf32>
    %588 = arith.truncf %587 : vector<8x16xf32> to vector<8x16xbf16>
    %cst_206 = arith.constant dense<0.000000e+00> : vector<64x16xf32>
    %589 = tpu.matmul %586, %588, %cst_206 {dimension_numbers = #tpu.dot_dimension_numbers<[1], [0], [0], [1], [0, 0, 1, 1], [], []>} : vector<64x8xbf16>, vector<8x16xbf16>, vector<64x16xf32> -> vector<64x16xf32>
    %c1760 = arith.constant 1760 : index
    %c0_207 = arith.constant 0 : index
    %590 = vector.load %arg4[%c1760, %c0_207] : memref<2016x128xbf16, #tpu.memory_space<vmem>>, vector<16x64xbf16>
    %591 = arith.truncf %589 : vector<64x16xf32> to vector<64x16xbf16>
    %cst_208 = arith.constant dense<0.000000e+00> : vector<64x64xf32>
    %592 = tpu.matmul %591, %590, %cst_208 {dimension_numbers = #tpu.dot_dimension_numbers<[1], [0], [0], [1], [0, 0, 1, 1], [], []>} : vector<64x16xbf16>, vector<16x64xbf16>, vector<64x64xf32> -> vector<64x64xf32>
    %593 = vector.extract_strided_slice %558 {offsets = [0, 16], sizes = [64, 16], strides = [1, 1]} : vector<64x32xf32> to vector<64x16xf32>
    %594 = arith.truncf %593 : vector<64x16xf32> to vector<64x16xbf16>
    %595 = vector.extract_strided_slice %563 {offsets = [0, 16], sizes = [8, 16], strides = [1, 1]} : vector<8x32xf32> to vector<8x16xf32>
    %596 = arith.truncf %595 : vector<8x16xf32> to vector<8x16xbf16>
    %cst_209 = arith.constant dense<0.000000e+00> : vector<64x8xf32>
    %597 = tpu.matmul %594, %596, %cst_209 {dimension_numbers = #tpu.dot_dimension_numbers<[1], [1], [0], [0], [0, 0, 1, 0], [], []>} : vector<64x16xbf16>, vector<8x16xbf16>, vector<64x8xf32> -> vector<64x8xf32>
    %cst_210 = arith.constant 2.500000e-01 : f32
    %598 = vector.broadcast %cst_210 : f32 to vector<64x8xf32>
    %599 = arith.mulf %597, %598 : vector<64x8xf32>
    %cst_211 = arith.constant dense<0xFF800000> : vector<64xf32>
    %600 = vector.multi_reduction <maximumf>, %599, %cst_211 [1] : vector<64x8xf32> to vector<64xf32>
    %601 = vector.shape_cast %600 : vector<64xf32> to vector<64x1xf32>
    %602 = vector.broadcast %601 : vector<64x1xf32> to vector<64x8xf32>
    %603 = arith.subf %599, %602 : vector<64x8xf32>
    %604 = math.exp %603 : vector<64x8xf32>
    %cst_212 = arith.constant dense<0.000000e+00> : vector<64xf32>
    %605 = vector.multi_reduction <add>, %604, %cst_212 [1] : vector<64x8xf32> to vector<64xf32>
    %606 = vector.shape_cast %605 : vector<64xf32> to vector<64x1xf32>
    %607 = tpu.reciprocal %606 {approx = true} : vector<64x1xf32> -> vector<64x1xf32>
    %608 = vector.broadcast %607 : vector<64x1xf32> to vector<64x8xf32>
    %609 = arith.mulf %604, %608 : vector<64x8xf32>
    %610 = arith.truncf %609 : vector<64x8xf32> to vector<64x8xbf16>
    %611 = vector.extract_strided_slice %568 {offsets = [0, 16], sizes = [8, 16], strides = [1, 1]} : vector<8x32xf32> to vector<8x16xf32>
    %612 = arith.truncf %611 : vector<8x16xf32> to vector<8x16xbf16>
    %cst_213 = arith.constant dense<0.000000e+00> : vector<64x16xf32>
    %613 = tpu.matmul %610, %612, %cst_213 {dimension_numbers = #tpu.dot_dimension_numbers<[1], [0], [0], [1], [0, 0, 1, 1], [], []>} : vector<64x8xbf16>, vector<8x16xbf16>, vector<64x16xf32> -> vector<64x16xf32>
    %c1776 = arith.constant 1776 : index
    %c0_214 = arith.constant 0 : index
    %614 = vector.load %arg4[%c1776, %c0_214] : memref<2016x128xbf16, #tpu.memory_space<vmem>>, vector<16x64xbf16>
    %615 = arith.truncf %613 : vector<64x16xf32> to vector<64x16xbf16>
    %cst_215 = arith.constant dense<0.000000e+00> : vector<64x64xf32>
    %616 = tpu.matmul %615, %614, %cst_215 {dimension_numbers = #tpu.dot_dimension_numbers<[1], [0], [0], [1], [0, 0, 1, 1], [], []>} : vector<64x16xbf16>, vector<16x64xbf16>, vector<64x64xf32> -> vector<64x64xf32>
    %617 = arith.addf %592, %616 : vector<64x64xf32>
    %c115 = arith.constant 115 : index
    %c0_216 = arith.constant 0 : index
    %618 = vector.load %arg5[%c115, %c0_216] : memref<144x128xf32, #tpu.memory_space<vmem>>, vector<1x64xf32>
    %619 = vector.broadcast %618 : vector<1x64xf32> to vector<64x64xf32>
    %620 = arith.addf %617, %619 : vector<64x64xf32>
    %621 = arith.addf %323, %620 : vector<64x64xf32>
    %c120 = arith.constant 120 : index
    %c0_217 = arith.constant 0 : index
    %622 = vector.load %arg5[%c120, %c0_217] : memref<144x128xf32, #tpu.memory_space<vmem>>, vector<1x64xf32>
    %c121 = arith.constant 121 : index
    %c0_218 = arith.constant 0 : index
    %623 = vector.load %arg5[%c121, %c0_218] : memref<144x128xf32, #tpu.memory_space<vmem>>, vector<1x64xf32>
    %cst_219 = arith.constant dense<0.000000e+00> : vector<64xf32>
    %624 = vector.multi_reduction <add>, %621, %cst_219 [1] : vector<64x64xf32> to vector<64xf32>
    %625 = vector.shape_cast %624 : vector<64xf32> to vector<64x1xf32>
    %cst_220 = arith.constant 6.400000e+01 : f32
    %626 = vector.broadcast %cst_220 : f32 to vector<64x1xf32>
    %627 = arith.divf %625, %626 : vector<64x1xf32>
    %628 = vector.broadcast %627 : vector<64x1xf32> to vector<64x64xf32>
    %629 = arith.subf %621, %628 : vector<64x64xf32>
    %630 = arith.mulf %629, %629 : vector<64x64xf32>
    %cst_221 = arith.constant dense<0.000000e+00> : vector<64xf32>
    %631 = vector.multi_reduction <add>, %630, %cst_221 [1] : vector<64x64xf32> to vector<64xf32>
    %632 = vector.shape_cast %631 : vector<64xf32> to vector<64x1xf32>
    %cst_222 = arith.constant 6.400000e+01 : f32
    %633 = vector.broadcast %cst_222 : f32 to vector<64x1xf32>
    %634 = arith.divf %632, %633 : vector<64x1xf32>
    %cst_223 = arith.constant 9.99999997E-7 : f32
    %635 = vector.broadcast %cst_223 : f32 to vector<64x1xf32>
    %636 = arith.addf %634, %635 : vector<64x1xf32>
    %637 = math.rsqrt %636 : vector<64x1xf32>
    %638 = vector.broadcast %637 : vector<64x1xf32> to vector<64x64xf32>
    %639 = arith.mulf %629, %638 : vector<64x64xf32>
    %640 = vector.broadcast %622 : vector<1x64xf32> to vector<64x64xf32>
    %641 = arith.mulf %639, %640 : vector<64x64xf32>
    %642 = vector.broadcast %623 : vector<1x64xf32> to vector<64x64xf32>
    %643 = arith.addf %641, %642 : vector<64x64xf32>
    %644 = arith.addf %643, %3 : vector<64x64xf32>
    %645 = arith.truncf %550 : vector<8x64xf32> to vector<8x64xbf16>
    %646 = arith.truncf %644 : vector<64x64xf32> to vector<64x64xbf16>
    %647 = arith.truncf %643 : vector<64x64xf32> to vector<64x64xbf16>
    %c1792 = arith.constant 1792 : index
    %c0_224 = arith.constant 0 : index
    %648 = vector.load %arg4[%c1792, %c0_224] : memref<2016x128xbf16, #tpu.memory_space<vmem>>, vector<64x32xbf16>
    %cst_225 = arith.constant dense<0.000000e+00> : vector<8x32xf32>
    %649 = tpu.matmul %645, %648, %cst_225 {dimension_numbers = #tpu.dot_dimension_numbers<[1], [0], [0], [1], [0, 0, 1, 1], [], []>} : vector<8x64xbf16>, vector<64x32xbf16>, vector<8x32xf32> -> vector<8x32xf32>
    %c128_226 = arith.constant 128 : index
    %c0_227 = arith.constant 0 : index
    %650 = vector.load %arg5[%c128_226, %c0_227] : memref<144x128xf32, #tpu.memory_space<vmem>>, vector<1x32xf32>
    %651 = vector.broadcast %650 : vector<1x32xf32> to vector<8x32xf32>
    %652 = arith.addf %649, %651 : vector<8x32xf32>
    %c1856 = arith.constant 1856 : index
    %c0_228 = arith.constant 0 : index
    %653 = vector.load %arg4[%c1856, %c0_228] : memref<2016x128xbf16, #tpu.memory_space<vmem>>, vector<64x32xbf16>
    %cst_229 = arith.constant dense<0.000000e+00> : vector<64x32xf32>
    %654 = tpu.matmul %646, %653, %cst_229 {dimension_numbers = #tpu.dot_dimension_numbers<[1], [0], [0], [1], [0, 0, 1, 1], [], []>} : vector<64x64xbf16>, vector<64x32xbf16>, vector<64x32xf32> -> vector<64x32xf32>
    %c129 = arith.constant 129 : index
    %c0_230 = arith.constant 0 : index
    %655 = vector.load %arg5[%c129, %c0_230] : memref<144x128xf32, #tpu.memory_space<vmem>>, vector<1x32xf32>
    %656 = vector.broadcast %655 : vector<1x32xf32> to vector<64x32xf32>
    %657 = arith.addf %654, %656 : vector<64x32xf32>
    %c1920 = arith.constant 1920 : index
    %c0_231 = arith.constant 0 : index
    %658 = vector.load %arg4[%c1920, %c0_231] : memref<2016x128xbf16, #tpu.memory_space<vmem>>, vector<64x32xbf16>
    %cst_232 = arith.constant dense<0.000000e+00> : vector<64x32xf32>
    %659 = tpu.matmul %647, %658, %cst_232 {dimension_numbers = #tpu.dot_dimension_numbers<[1], [0], [0], [1], [0, 0, 1, 1], [], []>} : vector<64x64xbf16>, vector<64x32xbf16>, vector<64x32xf32> -> vector<64x32xf32>
    %c130 = arith.constant 130 : index
    %c0_233 = arith.constant 0 : index
    %660 = vector.load %arg5[%c130, %c0_233] : memref<144x128xf32, #tpu.memory_space<vmem>>, vector<1x32xf32>
    %661 = vector.broadcast %660 : vector<1x32xf32> to vector<64x32xf32>
    %662 = arith.addf %659, %661 : vector<64x32xf32>
    %663 = vector.extract_strided_slice %652 {offsets = [0, 0], sizes = [8, 16], strides = [1, 1]} : vector<8x32xf32> to vector<8x16xf32>
    %664 = arith.truncf %663 : vector<8x16xf32> to vector<8x16xbf16>
    %665 = vector.extract_strided_slice %657 {offsets = [0, 0], sizes = [64, 16], strides = [1, 1]} : vector<64x32xf32> to vector<64x16xf32>
    %666 = arith.truncf %665 : vector<64x16xf32> to vector<64x16xbf16>
    %cst_234 = arith.constant dense<0.000000e+00> : vector<8x64xf32>
    %667 = tpu.matmul %664, %666, %cst_234 {dimension_numbers = #tpu.dot_dimension_numbers<[1], [1], [0], [0], [0, 0, 1, 0], [], []>} : vector<8x16xbf16>, vector<64x16xbf16>, vector<8x64xf32> -> vector<8x64xf32>
    %cst_235 = arith.constant 2.500000e-01 : f32
    %668 = vector.broadcast %cst_235 : f32 to vector<8x64xf32>
    %669 = arith.mulf %667, %668 : vector<8x64xf32>
    %cst_236 = arith.constant dense<0xFF800000> : vector<8xf32>
    %670 = vector.multi_reduction <maximumf>, %669, %cst_236 [1] : vector<8x64xf32> to vector<8xf32>
    %671 = vector.shape_cast %670 : vector<8xf32> to vector<8x1xf32>
    %672 = vector.broadcast %671 : vector<8x1xf32> to vector<8x64xf32>
    %673 = arith.subf %669, %672 : vector<8x64xf32>
    %674 = math.exp %673 : vector<8x64xf32>
    %cst_237 = arith.constant dense<0.000000e+00> : vector<8xf32>
    %675 = vector.multi_reduction <add>, %674, %cst_237 [1] : vector<8x64xf32> to vector<8xf32>
    %676 = vector.shape_cast %675 : vector<8xf32> to vector<8x1xf32>
    %677 = tpu.reciprocal %676 {approx = true} : vector<8x1xf32> -> vector<8x1xf32>
    %678 = vector.broadcast %677 : vector<8x1xf32> to vector<8x64xf32>
    %679 = arith.mulf %674, %678 : vector<8x64xf32>
    %680 = arith.truncf %679 : vector<8x64xf32> to vector<8x64xbf16>
    %681 = vector.extract_strided_slice %662 {offsets = [0, 0], sizes = [64, 16], strides = [1, 1]} : vector<64x32xf32> to vector<64x16xf32>
    %682 = arith.truncf %681 : vector<64x16xf32> to vector<64x16xbf16>
    %cst_238 = arith.constant dense<0.000000e+00> : vector<8x16xf32>
    %683 = tpu.matmul %680, %682, %cst_238 {dimension_numbers = #tpu.dot_dimension_numbers<[1], [0], [0], [1], [0, 0, 1, 1], [], []>} : vector<8x64xbf16>, vector<64x16xbf16>, vector<8x16xf32> -> vector<8x16xf32>
    %c1984 = arith.constant 1984 : index
    %c0_239 = arith.constant 0 : index
    %684 = vector.load %arg4[%c1984, %c0_239] : memref<2016x128xbf16, #tpu.memory_space<vmem>>, vector<16x64xbf16>
    %685 = arith.truncf %683 : vector<8x16xf32> to vector<8x16xbf16>
    %cst_240 = arith.constant dense<0.000000e+00> : vector<8x64xf32>
    %686 = tpu.matmul %685, %684, %cst_240 {dimension_numbers = #tpu.dot_dimension_numbers<[1], [0], [0], [1], [0, 0, 1, 1], [], []>} : vector<8x16xbf16>, vector<16x64xbf16>, vector<8x64xf32> -> vector<8x64xf32>
    %687 = vector.extract_strided_slice %652 {offsets = [0, 16], sizes = [8, 16], strides = [1, 1]} : vector<8x32xf32> to vector<8x16xf32>
    %688 = arith.truncf %687 : vector<8x16xf32> to vector<8x16xbf16>
    %689 = vector.extract_strided_slice %657 {offsets = [0, 16], sizes = [64, 16], strides = [1, 1]} : vector<64x32xf32> to vector<64x16xf32>
    %690 = arith.truncf %689 : vector<64x16xf32> to vector<64x16xbf16>
    %cst_241 = arith.constant dense<0.000000e+00> : vector<8x64xf32>
    %691 = tpu.matmul %688, %690, %cst_241 {dimension_numbers = #tpu.dot_dimension_numbers<[1], [1], [0], [0], [0, 0, 1, 0], [], []>} : vector<8x16xbf16>, vector<64x16xbf16>, vector<8x64xf32> -> vector<8x64xf32>
    %cst_242 = arith.constant 2.500000e-01 : f32
    %692 = vector.broadcast %cst_242 : f32 to vector<8x64xf32>
    %693 = arith.mulf %691, %692 : vector<8x64xf32>
    %cst_243 = arith.constant dense<0xFF800000> : vector<8xf32>
    %694 = vector.multi_reduction <maximumf>, %693, %cst_243 [1] : vector<8x64xf32> to vector<8xf32>
    %695 = vector.shape_cast %694 : vector<8xf32> to vector<8x1xf32>
    %696 = vector.broadcast %695 : vector<8x1xf32> to vector<8x64xf32>
    %697 = arith.subf %693, %696 : vector<8x64xf32>
    %698 = math.exp %697 : vector<8x64xf32>
    %cst_244 = arith.constant dense<0.000000e+00> : vector<8xf32>
    %699 = vector.multi_reduction <add>, %698, %cst_244 [1] : vector<8x64xf32> to vector<8xf32>
    %700 = vector.shape_cast %699 : vector<8xf32> to vector<8x1xf32>
    %701 = tpu.reciprocal %700 {approx = true} : vector<8x1xf32> -> vector<8x1xf32>
    %702 = vector.broadcast %701 : vector<8x1xf32> to vector<8x64xf32>
    %703 = arith.mulf %698, %702 : vector<8x64xf32>
    %704 = arith.truncf %703 : vector<8x64xf32> to vector<8x64xbf16>
    %705 = vector.extract_strided_slice %662 {offsets = [0, 16], sizes = [64, 16], strides = [1, 1]} : vector<64x32xf32> to vector<64x16xf32>
    %706 = arith.truncf %705 : vector<64x16xf32> to vector<64x16xbf16>
    %cst_245 = arith.constant dense<0.000000e+00> : vector<8x16xf32>
    %707 = tpu.matmul %704, %706, %cst_245 {dimension_numbers = #tpu.dot_dimension_numbers<[1], [0], [0], [1], [0, 0, 1, 1], [], []>} : vector<8x64xbf16>, vector<64x16xbf16>, vector<8x16xf32> -> vector<8x16xf32>
    %c2000 = arith.constant 2000 : index
    %c0_246 = arith.constant 0 : index
    %708 = vector.load %arg4[%c2000, %c0_246] : memref<2016x128xbf16, #tpu.memory_space<vmem>>, vector<16x64xbf16>
    %709 = arith.truncf %707 : vector<8x16xf32> to vector<8x16xbf16>
    %cst_247 = arith.constant dense<0.000000e+00> : vector<8x64xf32>
    %710 = tpu.matmul %709, %708, %cst_247 {dimension_numbers = #tpu.dot_dimension_numbers<[1], [0], [0], [1], [0, 0, 1, 1], [], []>} : vector<8x16xbf16>, vector<16x64xbf16>, vector<8x64xf32> -> vector<8x64xf32>
    %711 = arith.addf %686, %710 : vector<8x64xf32>
    %c131 = arith.constant 131 : index
    %c0_248 = arith.constant 0 : index
    %712 = vector.load %arg5[%c131, %c0_248] : memref<144x128xf32, #tpu.memory_space<vmem>>, vector<1x64xf32>
    %713 = vector.broadcast %712 : vector<1x64xf32> to vector<8x64xf32>
    %714 = arith.addf %711, %713 : vector<8x64xf32>
    %715 = arith.addf %549, %714 : vector<8x64xf32>
    %c136 = arith.constant 136 : index
    %c0_249 = arith.constant 0 : index
    %716 = vector.load %arg5[%c136, %c0_249] : memref<144x128xf32, #tpu.memory_space<vmem>>, vector<1x64xf32>
    %c137 = arith.constant 137 : index
    %c0_250 = arith.constant 0 : index
    %717 = vector.load %arg5[%c137, %c0_250] : memref<144x128xf32, #tpu.memory_space<vmem>>, vector<1x64xf32>
    %cst_251 = arith.constant dense<0.000000e+00> : vector<8xf32>
    %718 = vector.multi_reduction <add>, %715, %cst_251 [1] : vector<8x64xf32> to vector<8xf32>
    %719 = vector.shape_cast %718 : vector<8xf32> to vector<8x1xf32>
    %cst_252 = arith.constant 6.400000e+01 : f32
    %720 = vector.broadcast %cst_252 : f32 to vector<8x1xf32>
    %721 = arith.divf %719, %720 : vector<8x1xf32>
    %722 = vector.broadcast %721 : vector<8x1xf32> to vector<8x64xf32>
    %723 = arith.subf %715, %722 : vector<8x64xf32>
    %724 = arith.mulf %723, %723 : vector<8x64xf32>
    %cst_253 = arith.constant dense<0.000000e+00> : vector<8xf32>
    %725 = vector.multi_reduction <add>, %724, %cst_253 [1] : vector<8x64xf32> to vector<8xf32>
    %726 = vector.shape_cast %725 : vector<8xf32> to vector<8x1xf32>
    %cst_254 = arith.constant 6.400000e+01 : f32
    %727 = vector.broadcast %cst_254 : f32 to vector<8x1xf32>
    %728 = arith.divf %726, %727 : vector<8x1xf32>
    %cst_255 = arith.constant 9.99999974E-6 : f32
    %729 = vector.broadcast %cst_255 : f32 to vector<8x1xf32>
    %730 = arith.addf %728, %729 : vector<8x1xf32>
    %731 = math.rsqrt %730 : vector<8x1xf32>
    %732 = vector.broadcast %731 : vector<8x1xf32> to vector<8x64xf32>
    %733 = arith.mulf %723, %732 : vector<8x64xf32>
    %734 = vector.broadcast %716 : vector<1x64xf32> to vector<8x64xf32>
    %735 = arith.mulf %733, %734 : vector<8x64xf32>
    %736 = vector.broadcast %717 : vector<1x64xf32> to vector<8x64xf32>
    %737 = arith.addf %735, %736 : vector<8x64xf32>
    %c0_256 = arith.constant 0 : index
    %c0_257 = arith.constant 0 : index
    %c0_258 = arith.constant 0 : index
    %738 = vector.load %arg6[%c0_256, %c0_257, %c0_258] : memref<1x8x64xf32, #tpu.memory_space<vmem>>, vector<1x8x64xf32>
    %739 = vector.shape_cast %738 : vector<1x8x64xf32> to vector<8x64xf32>
    %740 = vector.shape_cast %737 : vector<8x64xf32> to vector<1x8x64xf32>
    tpu.vector_store %arg6[%c0_256, %c0_257, %c0_258], %740 {strides = array<i32>} : memref<1x8x64xf32, #tpu.memory_space<vmem>>, vector<1x8x64xf32>,
    %c0_259 = arith.constant 0 : index
    %c0_260 = arith.constant 0 : index
    %c0_261 = arith.constant 0 : index
    %741 = vector.load %arg7[%c0_259, %c0_260, %c0_261] : memref<1x64x64xf32, #tpu.memory_space<vmem>>, vector<1x64x64xf32>
    %742 = vector.shape_cast %741 : vector<1x64x64xf32> to vector<64x64xf32>
    %743 = vector.shape_cast %643 : vector<64x64xf32> to vector<1x64x64xf32>
    tpu.vector_store %arg7[%c0_259, %c0_260, %c0_261], %743 {strides = array<i32>} : memref<1x64x64xf32, #tpu.memory_space<vmem>>, vector<1x64x64xf32>,
    return
  }
  func.func @transform_0(%arg0: i32) -> (i32, i32, i32) {
    %c0_i32 = arith.constant 0 : i32
    %c0_i32_0 = arith.constant 0 : i32
    %c0_i32_1 = arith.constant 0 : i32
    return %arg0, %c0_i32, %c0_i32_0 : i32, i32, i32
  }
  func.func @transform_1(%arg0: i32) -> (i32, i32, i32) {
    %c0_i32 = arith.constant 0 : i32
    %c0_i32_0 = arith.constant 0 : i32
    %c0_i32_1 = arith.constant 0 : i32
    return %arg0, %c0_i32, %c0_i32_0 : i32, i32, i32
  }
  func.func @transform_2(%arg0: i32) -> (i32, i32, i32) {
    %c0_i32 = arith.constant 0 : i32
    %c0_i32_0 = arith.constant 0 : i32
    %c0_i32_1 = arith.constant 0 : i32
    return %arg0, %c0_i32, %c0_i32_0 : i32, i32, i32
  }
  func.func @transform_3(%arg0: i32) -> (i32, i32) {
    %c0_i32 = arith.constant 0 : i32
    %c0_i32_0 = arith.constant 0 : i32
    %c0_i32_1 = arith.constant 0 : i32
    return %c0_i32, %c0_i32_0 : i32, i32
  }
  func.func @transform_4(%arg0: i32) -> (i32, i32) {
    %c0_i32 = arith.constant 0 : i32
    %c0_i32_0 = arith.constant 0 : i32
    %c0_i32_1 = arith.constant 0 : i32
    return %c0_i32, %c0_i32_0 : i32, i32
  }
  func.func @transform_5(%arg0: i32) -> (i32, i32, i32) {
    %c0_i32 = arith.constant 0 : i32
    %c0_i32_0 = arith.constant 0 : i32
    %c0_i32_1 = arith.constant 0 : i32
    return %arg0, %c0_i32, %c0_i32_0 : i32, i32, i32
  }
  func.func @transform_6(%arg0: i32) -> (i32, i32, i32) {
    %c0_i32 = arith.constant 0 : i32
    %c0_i32_0 = arith.constant 0 : i32
    %c0_i32_1 = arith.constant 0 : i32
    return %arg0, %c0_i32, %c0_i32_0 : i32, i32, i32
  }
}

</mosaic_0001>

<llo_original>
// kernel: sam_two_way_transformer_pallas.1
$region0: #{sam_two_way_transformer_pallas.1}
  #allocation0 [shape = 'u32[]', space=smem, size = 0x4, offset = 0x4, fixed_abs, tag = 'smem constant byte address 0x4 - core index']
  #allocation1 [shape = 'u32[144,128]{1,0:T(1,128)}', space=vmem, size = 0x12000, scoped, tag = 'internal scratch']
  %s0 = inlined_call_operand.hbm [shape: f32[2,8,64], index: 0, kind: input, shape index: {}]
  %s1 = inlined_call_operand.hbm [shape: f32[2,64,64], index: 1, kind: input, shape index: {}]
  %s2 = inlined_call_operand.hbm [shape: f32[2,64,64], index: 2, kind: input, shape index: {}]
  %s3 = inlined_call_operand.hbm [shape: bf16[2016,128], index: 3, kind: input, shape index: {}]
  %s4 = inlined_call_operand.hbm [shape: f32[144,128], index: 4, kind: input, shape index: {}]
  %s5 = inlined_call_operand.hbm [shape: f32[2,8,64], index: 5, kind: output, shape index: {0}]
  %s6 = inlined_call_operand.hbm [shape: f32[2,64,64], index: 6, kind: output, shape index: {1}]
  %7 = xla_tuple %s5, %s6
  %s8 = sld [smem:[#allocation0]]
  $region81: #{sam_two_way_transformer_pallas.1} parent=0
    _
  %s10 = ssub.s32 1, %s8
  %s11 = scalar_select 0, %s10, %s8
  $region1: #{sam_two_way_transformer_pallas.1} parent=0
    #allocation2 [shape = 'u8[8192]{0}', space=vmem, size = 0x2000, scoped, tag = 'input window, operand 0']
    #allocation3 [shape = 's32[2]{0}', space=sflag, size = 0x8, scoped, tag = 'scoped memory for sam_two_way_transformer_pallas.1']
    #allocation4 [shape = 's32[2]{0}', space=sflag, size = 0x8, scoped, tag = 'scoped memory for sam_two_way_transformer_pallas.1']
    #allocation5 [shape = 'u8[65536]{0}', space=vmem, size = 0x10000, scoped, tag = 'input window, operand 1']
    #allocation6 [shape = 's32[2]{0}', space=sflag, size = 0x8, scoped, tag = 'scoped memory for sam_two_way_transformer_pallas.1']
    #allocation7 [shape = 'u8[65536]{0}', space=vmem, size = 0x10000, scoped, tag = 'input window, operand 2']
    #allocation8 [shape = 'u8[516096]{0}', space=vmem, size = 0x7e000, scoped, tag = 'input window, operand 3, single buffered']
    #allocation9 [shape = 's32[1]{0}', space=sflag, size = 0x4, scoped, tag = 'scoped memory for sam_two_way_transformer_pallas.1']
    #allocation10 [shape = 'u8[73728]{0}', space=vmem, size = 0x12000, scoped, tag = 'input window, operand 4, single buffered']
    #allocation11 [shape = 'u8[8192]{0}', space=vmem, size = 0x2000, scoped, tag = 'output window, operand 0']
    #allocation12 [shape = 'u8[65536]{0}', space=vmem, size = 0x10000, scoped, tag = 'output window, operand 1']
    #allocation13 [shape = 's32[2]{0}', space=sflag, size = 0x8, scoped, tag = 'scoped memory for sam_two_way_transformer_pallas.1']
    %12 = vsyncpa [#allocation3], 0
    %s13 = scalar_lea.sflag [#allocation3], 1
    %14 = vsyncpa %s13, 0
    %15 = vsyncpa [#allocation6], 0
    %s16 = scalar_lea.sflag [#allocation6], 1
    %17 = vsyncpa %s16, 0
    %18 = vsyncpa [#allocation9], 0
    %19 = vsyncpa [#allocation4], 0
    %s20 = scalar_lea.sflag [#allocation4], 1
    %21 = vsyncpa %s20, 0
    %22 = vsyncpa [#allocation13], 0
    %s23 = scalar_lea.sflag [#allocation13], 1
    %24 = vsyncpa %s23, 0
    loop: start=0, step=1, limit=4
    $region2: #{sam_two_way_transformer_pallas.1} parent=1 // loop_pre_header
      _
    $region3: #{sam_two_way_transformer_pallas.1} parent=1 // loop_header
      %s26 = sphi 0, %s30
      %p27 = scmp.ge.s32.totalorder %s26, 4
      %s36 = sphi 0, %s38
      %s39 = sphi 0, %s36
      %s40 = sphi 0, %s39
      %s56 = sphi 0, %s40
      %s62 = sphi 0, %s64
      %s65 = sphi 0, %s62
      %s66 = sphi 0, %s65
      %s82 = sphi 0, %s66
      %s88 = sphi 0, %s90
      %s91 = sphi 0, %s88
      %s92 = sphi 0, %s91
      %s108 = sphi 0, %s92
      %s112 = sphi 0, %s112
      %s114 = sphi 0, %s112
      %s115 = sphi 0, %s114
      %s129 = sphi 0, %s115
      %s133 = sphi 0, %s133
      %s135 = sphi 0, %s133
      %s136 = sphi 0, %s135
      %s150 = sphi 0, %s136
      %s156 = sphi 0, %s158
      %s159 = sphi 0, %s156
      %s160 = sphi 0, %s159
      %s176 = sphi 0, %s160
      %s182 = sphi 0, %s184
      %s185 = sphi 0, %s182
      %s186 = sphi 0, %s185
      %s202 = sphi 0, %s186
    $region4: #{sam_two_way_transformer_pallas.1} parent=1 // loop_header_branch
      %29 = sbr.rel (%p27) target = $region8
    $region5: #{sam_two_way_transformer_pallas.1} parent=1 // loop_body
      %s31 = ssub.s32 %s26, 1
      %s32 = ssub.s32 %s26, 2
      %s33 = sadd.s32 %s26, 1
      %s34 = ssub.s32 %s26, %s33
      %p35 = scmp.eq.s32.totalorder %s34, 0
      %s37 = sadd.s32 %s36, 1
      %s38 = scalar_select %p35, %s36, %s37
      %p41 = pneg %p35
      %p42 = scmp.eq.s32.totalorder %s26, 1
      %p43 = por %p41, %p42
      %p44 = scmp.ne.s32.totalorder %s36, %s39
      %p45 = scmp.eq.s32.totalorder %s26, 0
      %p46 = por %p44, %p45
      %p47 = scmp.ne.s32.totalorder %s36, %s39
      %p48 = scmp.eq.s32.totalorder %s31, 1
      %p49 = por %p47, %p48
      %p50 = scmp.ne.s32.totalorder %s39, %s40
      %p51 = scmp.eq.s32.totalorder %s31, 0
      %p52 = por %p50, %p51
      %p53 = scmp.ne.s32.totalorder %s39, %s40
      %p54 = scmp.eq.s32.totalorder %s32, 1
      %p55 = por %p53, %p54
      %p57 = scmp.ne.s32.totalorder %s40, %s56
      %p58 = scmp.eq.s32.totalorder %s32, 0
      %p59 = por %p57, %p58
      %s60 = ssub.s32 %s26, %s33
      %p61 = scmp.eq.s32.totalorder %s60, 0
      %s63 = sadd.s32 %s62, 1
      %s64 = scalar_select %p61, %s62, %s63
      %p67 = pneg %p61
      %p68 = scmp.eq.s32.totalorder %s26, 1
      %p69 = por %p67, %p68
      %p70 = scmp.ne.s32.totalorder %s62, %s65
      %p71 = scmp.eq.s32.totalorder %s26, 0
      %p72 = por %p70, %p71
      %p73 = scmp.ne.s32.totalorder %s62, %s65
      %p74 = scmp.eq.s32.totalorder %s31, 1
      %p75 = por %p73, %p74
      %p76 = scmp.ne.s32.totalorder %s65, %s66
      %p77 = scmp.eq.s32.totalorder %s31, 0
      %p78 = por %p76, %p77
      %p79 = scmp.ne.s32.totalorder %s65, %s66
      %p80 = scmp.eq.s32.totalorder %s32, 1
      %p81 = por %p79, %p80
      %p83 = scmp.ne.s32.totalorder %s66, %s82
      %p84 = scmp.eq.s32.totalorder %s32, 0
      %p85 = por %p83, %p84
      %s86 = ssub.s32 %s26, %s33
      %p87 = scmp.eq.s32.totalorder %s86, 0
      %s89 = sadd.s32 %s88, 1
      %s90 = scalar_select %p87, %s88, %s89
      %p93 = pneg %p87
      %p94 = scmp.eq.s32.totalorder %s26, 1
      %p95 = por %p93, %p94
      %p96 = scmp.ne.s32.totalorder %s88, %s91
      %p97 = scmp.eq.s32.totalorder %s26, 0
      %p98 = por %p96, %p97
      %p99 = scmp.ne.s32.totalorder %s88, %s91
      %p100 = scmp.eq.s32.totalorder %s31, 1
      %p101 = por %p99, %p100
      %p102 = scmp.ne.s32.totalorder %s91, %s92
      %p103 = scmp.eq.s32.totalorder %s31, 0
      %p104 = por %p102, %p103
      %p105 = scmp.ne.s32.totalorder %s91, %s92
      %p106 = scmp.eq.s32.totalorder %s32, 1
      %p107 = por %p105, %p106
      %p109 = scmp.ne.s32.totalorder %s92, %s108
      %p110 = scmp.eq.s32.totalorder %s32, 0
      %p111 = por %p109, %p110
      %s113 = sadd.s32 %s112, 1
      %p116 = scmp.eq.s32.totalorder %s26, 1
      %p117 = scmp.ne.s32.totalorder %s112, %s114
      %p118 = scmp.eq.s32.totalorder %s26, 0
      %p119 = por %p117, %p118
      %p120 = scmp.ne.s32.totalorder %s112, %s114
      %p121 = scmp.eq.s32.totalorder %s31, 1
      %p122 = por %p120, %p121
      %p123 = scmp.ne.s32.totalorder %s114, %s115
      %p124 = scmp.eq.s32.totalorder %s31, 0
      %p125 = por %p123, %p124
      %p126 = scmp.ne.s32.totalorder %s114, %s115
      %p127 = scmp.eq.s32.totalorder %s32, 1
      %p128 = por %p126, %p127
      %p130 = scmp.ne.s32.totalorder %s115, %s129
      %p131 = scmp.eq.s32.totalorder %s32, 0
      %p132 = por %p130, %p131
      %s134 = sadd.s32 %s133, 1
      %p137 = scmp.eq.s32.totalorder %s26, 1
      %p138 = scmp.ne.s32.totalorder %s133, %s135
      %p139 = scmp.eq.s32.totalorder %s26, 0
      %p140 = por %p138, %p139
      %p141 = scmp.ne.s32.totalorder %s133, %s135
      %p142 = scmp.eq.s32.totalorder %s31, 1
      %p143 = por %p141, %p142
      %p144 = scmp.ne.s32.totalorder %s135, %s136
      %p145 = scmp.eq.s32.totalorder %s31, 0
      %p146 = por %p144, %p145
      %p147 = scmp.ne.s32.totalorder %s135, %s136
      %p148 = scmp.eq.s32.totalorder %s32, 1
      %p149 = por %p147, %p148
      %p151 = scmp.ne.s32.totalorder %s136, %s150
      %p152 = scmp.eq.s32.totalorder %s32, 0
      %p153 = por %p151, %p152
      %s154 = ssub.s32 %s26, %s33
      %p155 = scmp.eq.s32.totalorder %s154, 0
      %s157 = sadd.s32 %s156, 1
      %s158 = scalar_select %p155, %s156, %s157
      %p161 = pneg %p155
      %p162 = scmp.eq.s32.totalorder %s26, 1
      %p163 = por %p161, %p162
      %p164 = scmp.ne.s32.totalorder %s156, %s159
      %p165 = scmp.eq.s32.totalorder %s26, 0
      %p166 = por %p164, %p165
      %p167 = scmp.ne.s32.totalorder %s156, %s159
      %p168 = scmp.eq.s32.totalorder %s31, 1
      %p169 = por %p167, %p168
      %p170 = scmp.ne.s32.totalorder %s159, %s160
      %p171 = scmp.eq.s32.totalorder %s31, 0
      %p172 = por %p170, %p171
      %p173 = scmp.ne.s32.totalorder %s159, %s160
      %p174 = scmp.eq.s32.totalorder %s32, 1
      %p175 = por %p173, %p174
      %p177 = scmp.ne.s32.totalorder %s160, %s176
      %p178 = scmp.eq.s32.totalorder %s32, 0
      %p179 = por %p177, %p178
      %s180 = ssub.s32 %s26, %s33
      %p181 = scmp.eq.s32.totalorder %s180, 0
      %s183 = sadd.s32 %s182, 1
      %s184 = scalar_select %p181, %s182, %s183
      %p187 = pneg %p181
      %p188 = scmp.eq.s32.totalorder %s26, 1
      %p189 = por %p187, %p188
      %p190 = scmp.ne.s32.totalorder %s182, %s185
      %p191 = scmp.eq.s32.totalorder %s26, 0
      %p192 = por %p190, %p191
      %p193 = scmp.ne.s32.totalorder %s182, %s185
      %p194 = scmp.eq.s32.totalorder %s31, 1
      %p195 = por %p193, %p194
      %p196 = scmp.ne.s32.totalorder %s185, %s186
      %p197 = scmp.eq.s32.totalorder %s31, 0
      %p198 = por %p196, %p197
      %p199 = scmp.ne.s32.totalorder %s185, %s186
      %p200 = scmp.eq.s32.totalorder %s32, 1
      %p201 = por %p199, %p200
      %p203 = scmp.ne.s32.totalorder %s186, %s202
      %p204 = scmp.eq.s32.totalorder %s32, 0
      %p205 = por %p203, %p204
      %p206 = scmp.le.s32.totalorder 1, %s26
      %p207 = scmp.lt.s32.totalorder %s26, 3
      %p208 = pnand %p206, %p207
      %p209 = pneg %p208
      // Predicated region
      $region9: #{sam_two_way_transformer_pallas.1} parent=5 // pred_check
        _
      $region10: #{sam_two_way_transformer_pallas.1} parent=5 // pred_check_branch
        %211 = sbr.rel (%p208) target = $region12
      $region11: #{sam_two_way_transformer_pallas.1} parent=5 // pred_region
        %s212 = ssub.s32 %s26, 1
        // Predicated region
        $region13: #{sam_two_way_transformer_pallas.1} parent=11 // pred_check
          %p213 = pneg %p125
        $region14: #{sam_two_way_transformer_pallas.1} parent=11 // pred_check_branch
          %215 = sbr.rel (%p213) target = $region16
        $region15: #{sam_two_way_transformer_pallas.1} parent=11 // pred_region
          %s217 = ssub.s32 16128, 16128
          %218 = vsyncadd [#allocation9], %s217
          %s219 = sshll.u32 [#allocation8], 4
          %s220 = int_to_ptr.vmem [resolvable:$true] %s219
          %225 = dma.hbm_to_vmem [thread:$0]  %s3, 16128, %s220, [#allocation9], 64, 64, 4
        $region16: #{sam_two_way_transformer_pallas.1} parent=11 // pred_fallthru
          _
        // Predicated region
        $region17: #{sam_two_way_transformer_pallas.1} parent=11 // pred_check
          %p226 = pneg %p146
        $region18: #{sam_two_way_transformer_pallas.1} parent=11 // pred_check_branch
          %228 = sbr.rel (%p226) target = $region20
        $region19: #{sam_two_way_transformer_pallas.1} parent=11 // pred_region
          %s230 = ssub.s32 2304, 2304
          %231 = vsyncadd [#allocation9], %s230
          %s232 = sshll.u32 [#allocation10], 4
          %s233 = int_to_ptr.vmem [resolvable:$true] %s232
          %238 = dma.hbm_to_vmem [thread:$0]  %s4, 2304, %s233, [#allocation9], 128, 128, 8
        $region20: #{sam_two_way_transformer_pallas.1} parent=11 // pred_fallthru
          _
      $region12: #{sam_two_way_transformer_pallas.1} parent=5 // pred_fallthru
        _
      %p239 = scmp.lt.s32.totalorder %s26, 2
      // Predicated region
      $region21: #{sam_two_way_transformer_pallas.1} parent=5 // pred_check
        %p240 = pneg %p239
      $region22: #{sam_two_way_transformer_pallas.1} parent=5 // pred_check_branch
        %242 = sbr.rel (%p240) target = $region24
      $region23: #{sam_two_way_transformer_pallas.1} parent=5 // pred_region
        // Predicated region
        $region25: #{sam_two_way_transformer_pallas.1} parent=23 // pred_check
          %p243 = pneg %p46
        $region26: #{sam_two_way_transformer_pallas.1} parent=23 // pred_check_branch
          %245 = sbr.rel (%p243) target = $region28
        $region27: #{sam_two_way_transformer_pallas.1} parent=23 // pred_region
          %s246 = sand.u32 %s36, 1
          %s247 = scalar_lea.sflag [#allocation3], %s246
          %s248 = sand.u32 %s36, 1
          %s249 = smul.addr %s248, 8
          %s250 = scalar_lea.vmem [#allocation2], %s249
          %s252 = ssub.s32 128, 128
          %253 = vsyncadd %s247, %s252
          %s254 = smul.addr %s26, 128
          %s255 = scalar_lea.hbm %s0, %s254
          %s257 = sshll.u32 %s250, 4
          %s258 = int_to_ptr.vmem [resolvable:$true] %s257
          %260 = dma.hbm_to_vmem [thread:$0]  %s255, 128, %s258, %s247
        $region28: #{sam_two_way_transformer_pallas.1} parent=23 // pred_fallthru
          _
        // Predicated region
        $region29: #{sam_two_way_transformer_pallas.1} parent=23 // pred_check
          %p261 = pneg %p72
        $region30: #{sam_two_way_transformer_pallas.1} parent=23 // pred_check_branch
          %263 = sbr.rel (%p261) target = $region32
        $region31: #{sam_two_way_transformer_pallas.1} parent=23 // pred_region
          %s264 = sand.u32 %s26, 1
          %s265 = scalar_lea.sflag [#allocation6], %s264
          %s266 = sand.u32 %s62, 1
          %s267 = smul.addr %s266, 64
          %s268 = scalar_lea.vmem [#allocation5], %s267
          %s270 = ssub.s32 1024, 1024
          %271 = vsyncadd %s265, %s270
          %s272 = smul.addr %s26, 8
          %s273 = smul.addr %s272, 128
          %s274 = scalar_lea.hbm %s1, %s273
          %s275 = sshll.u32 %s268, 4
          %s276 = int_to_ptr.vmem [resolvable:$true] %s275
          %281 = dma.hbm_to_vmem [thread:$0]  %s274, 1024, %s276, %s265, 128, 128, 8
        $region32: #{sam_two_way_transformer_pallas.1} parent=23 // pred_fallthru
          _
        // Predicated region
        $region33: #{sam_two_way_transformer_pallas.1} parent=23 // pred_check
          %p282 = pneg %p98
        $region34: #{sam_two_way_transformer_pallas.1} parent=23 // pred_check_branch
          %284 = sbr.rel (%p282) target = $region36
        $region35: #{sam_two_way_transformer_pallas.1} parent=23 // pred_region
          %s285 = sand.u32 %s26, 1
          %s286 = scalar_lea.sflag [#allocation6], %s285
          %s287 = sand.u32 %s88, 1
          %s288 = smul.addr %s287, 64
          %s289 = scalar_lea.vmem [#allocation7], %s288
          %s291 = ssub.s32 1024, 1024
          %292 = vsyncadd %s286, %s291
          %s293 = smul.addr %s26, 8
          %s294 = smul.addr %s293, 128
          %s295 = scalar_lea.hbm %s2, %s294
          %s296 = sshll.u32 %s289, 4
          %s297 = int_to_ptr.vmem [resolvable:$true] %s296
          %302 = dma.hbm_to_vmem [thread:$0]  %s295, 1024, %s297, %s286, 128, 128, 8
        $region36: #{sam_two_way_transformer_pallas.1} parent=23 // pred_fallthru
          _
      $region24: #{sam_two_way_transformer_pallas.1} parent=5 // pred_fallthru
        _
      %p303 = scmp.le.s32.totalorder 1, %s26
      %p304 = scmp.lt.s32.totalorder %s26, 3
      %p305 = pnand %p303, %p304
      %p306 = pneg %p305
      // Predicated region
      $region37: #{sam_two_way_transformer_pallas.1} parent=5 // pred_check
        _
      $region38: #{sam_two_way_transformer_pallas.1} parent=5 // pred_check_branch
        %308 = sbr.rel (%p305) target = $region40
      $region39: #{sam_two_way_transformer_pallas.1} parent=5 // pred_region
        %s309 = ssub.s32 %s26, 1
        %s310 = sand.u32 %s39, 1
        %s311 = scalar_lea.sflag [#allocation3], %s310
        %s312 = sand.u32 %s39, 1
        %s313 = smul.addr %s312, 8
        %s314 = scalar_lea.vmem [#allocation2], %s313
        // Predicated region
        $region41: #{sam_two_way_transformer_pallas.1} parent=39 // pred_check
          %p315 = pneg %p52
        $region42: #{sam_two_way_transformer_pallas.1} parent=39 // pred_check_branch
          %317 = sbr.rel (%p315) target = $region44
        $region43: #{sam_two_way_transformer_pallas.1} parent=39 // pred_region
          %318 = dma.done %s311, 128
        $region44: #{sam_two_way_transformer_pallas.1} parent=39 // pred_fallthru
          _
        %s319 = sand.u32 %s31, 1
        %s320 = scalar_lea.sflag [#allocation6], %s319
        %s321 = sand.u32 %s65, 1
        %s322 = smul.addr %s321, 64
        %s323 = scalar_lea.vmem [#allocation5], %s322
        // Predicated region
        $region45: #{sam_two_way_transformer_pallas.1} parent=39 // pred_check
          %p324 = pneg %p78
        $region46: #{sam_two_way_transformer_pallas.1} parent=39 // pred_check_branch
          %326 = sbr.rel (%p324) target = $region48
        $region47: #{sam_two_way_transformer_pallas.1} parent=39 // pred_region
          %327 = dma.done %s320, 1024
        $region48: #{sam_two_way_transformer_pallas.1} parent=39 // pred_fallthru
          _
        %s328 = sand.u32 %s31, 1
        %s329 = scalar_lea.sflag [#allocation6], %s328
        %s330 = sand.u32 %s91, 1
        %s331 = smul.addr %s330, 64
        %s332 = scalar_lea.vmem [#allocation7], %s331
        // Predicated region
        $region49: #{sam_two_way_transformer_pallas.1} parent=39 // pred_check
          %p333 = pneg %p104
        $region50: #{sam_two_way_transformer_pallas.1} parent=39 // pred_check_branch
          %335 = sbr.rel (%p333) target = $region52
        $region51: #{sam_two_way_transformer_pallas.1} parent=39 // pred_region
          %336 = dma.done %s329, 1024
        $region52: #{sam_two_way_transformer_pallas.1} parent=39 // pred_fallthru
          _
        // Predicated region
        $region53: #{sam_two_way_transformer_pallas.1} parent=39 // pred_check
          %p337 = pneg %p125
        $region54: #{sam_two_way_transformer_pallas.1} parent=39 // pred_check_branch
          %339 = sbr.rel (%p337) target = $region56
        $region55: #{sam_two_way_transformer_pallas.1} parent=39 // pred_region
          %340 = dma.done [#allocation9], 16128
        $region56: #{sam_two_way_transformer_pallas.1} parent=39 // pred_fallthru
          _
        // Predicated region
        $region57: #{sam_two_way_transformer_pallas.1} parent=39 // pred_check
          %p341 = pneg %p146
        $region58: #{sam_two_way_transformer_pallas.1} parent=39 // pred_check_branch
          %343 = sbr.rel (%p341) target = $region60
        $region59: #{sam_two_way_transformer_pallas.1} parent=39 // pred_region
          %344 = dma.done [#allocation9], 2304
        $region60: #{sam_two_way_transformer_pallas.1} parent=39 // pred_fallthru
          _
        %s345 = sand.u32 %s39, 1
        %s346 = scalar_lea.sflag [#allocation3], %s345
        %s347 = sand.u32 %s39, 1
        %s348 = smul.addr %s347, 8
        %s349 = scalar_lea.vmem [#allocation2], %s348
        %p350 = pneg %p52
        %p351 = pneg %p49
        %s352 = sand.u32 %s31, 1
        %s353 = scalar_lea.sflag [#allocation6], %s352
        %s354 = sand.u32 %s65, 1
        %s355 = smul.addr %s354, 64
        %s356 = scalar_lea.vmem [#allocation5], %s355
        %p357 = pneg %p78
        %p358 = pneg %p75
        %s359 = sand.u32 %s31, 1
        %s360 = scalar_lea.sflag [#allocation6], %s359
        %s361 = sand.u32 %s91, 1
        %s362 = smul.addr %s361, 64
        %s363 = scalar_lea.vmem [#allocation7], %s362
        %p364 = pneg %p104
        %p365 = pneg %p101
        %p366 = pneg %p125
        %p367 = pneg %p122
        %p368 = pneg %p146
        %p369 = pneg %p143
        %p370 = pneg %p172
        %p371 = pneg %p169
        %s372 = sand.u32 %s159, 1
        %s373 = scalar_lea.sflag [#allocation4], %s372
        %s374 = sand.u32 %s159, 1
        %s375 = smul.addr %s374, 8
        %s376 = scalar_lea.vmem [#allocation11], %s375
        %p377 = pneg %p198
        %p378 = pneg %p195
        %s379 = sand.u32 %s185, 1
        %s380 = scalar_lea.sflag [#allocation13], %s379
        %s381 = sand.u32 %s185, 1
        %s382 = smul.addr %s381, 64
        %s383 = scalar_lea.vmem [#allocation12], %s382
        %v385 = vld [vmem:[%s314] sm:$0xff]
        %v386 = vld [vmem:[%s332] sm:$0xff]
        %v387 = vld [vmem:[%s332 + $0x8] sm:$0xff]
        %v388 = vld [vmem:[%s332 + $0x10] sm:$0xff]
        %v389 = vld [vmem:[%s332 + $0x18] sm:$0xff]
        %v390 = vld [vmem:[%s332 + $0x20] sm:$0xff]
        %v391 = vld [vmem:[%s332 + $0x28] sm:$0xff]
        %v392 = vld [vmem:[%s332 + $0x30] sm:$0xff]
        %v393 = vld [vmem:[%s332 + $0x38] sm:$0xff]
        %v394 = vld [vmem:[%s323] sm:$0xff]
        %v395 = vld [vmem:[%s323 + $0x8] sm:$0xff]
        %v396 = vld [vmem:[%s323 + $0x10] sm:$0xff]
        %v397 = vld [vmem:[%s323 + $0x18] sm:$0xff]
        %v398 = vld [vmem:[%s323 + $0x20] sm:$0xff]
        %v399 = vld [vmem:[%s323 + $0x28] sm:$0xff]
        %v400 = vld [vmem:[%s323 + $0x30] sm:$0xff]
        %v401 = vld [vmem:[%s323 + $0x38] sm:$0xff]
        %v402 = vpack.c.bf16 %v385, %v385
        %v403 = vld [vmem:[#allocation8] sm:$0xf]
        %v404 = vld [vmem:[#allocation8 + $0x4] sm:$0xf]
        %v405 = vld [vmem:[#allocation8 + $0x8] sm:$0xf]
        %v406 = vld [vmem:[#allocation8 + $0xc] sm:$0xf]
        %v407 = vld [vmem:[#allocation8 + $0x10] sm:$0xf]
        %v408 = vld [vmem:[#allocation8 + $0x14] sm:$0xf]
        %v409 = vld [vmem:[#allocation8 + $0x18] sm:$0xf]
        %v410 = vld [vmem:[#allocation8 + $0x1c] sm:$0xf]
        %v411 = vld [vmem:[#allocation10] sm:$0x1]
        %v412 = vlaneseq
        %v413 = vshrl.u32 %v412, 7
        %v414 = vsub.s32 0, %v413
        %v415 = vrot.slane %v411, %v414
        %v424 = vunpack.c.l.b16 %v403
        %v425 = vunpack.c.l.b16 %v404
        %v426 = vunpack.c.l.b16 %v405
        %v427 = vunpack.c.l.b16 %v406
        %v428 = vunpack.c.l.b16 %v407
        %v429 = vunpack.c.l.b16 %v408
        %v430 = vunpack.c.l.b16 %v409
        %v431 = vunpack.c.l.b16 %v410
        %v432 = vpack.c.b16 %v425, %v424
        %v433 = vpack.c.b16 %v427, %v426
        %v434 = vpack.c.b16 %v429, %v428
        %v435 = vpack.c.b16 %v431, %v430
        %vm440 = vcmask 523264
        %v442 = vsel %vm440, %v402, 0
        %444 = vmatprep.subr.bf16.mxu0 0
        %445 = vmatpush1.bf16.msra.mxu0 %v432
        %446 = vmatprep.subr.bf16.mxu0 0
        %447 = vmatpush1.bf16.msra.mxu0 %v433
        %448 = vmatprep.subr.bf16.mxu0 0
        %449 = vmatpush1.bf16.msra.mxu0 %v434
        %450 = vmatprep.subr.bf16.mxu0 0
        %451 = vmatpush1.bf16.msra.mxu0 %v435
        %452 = vmatprep.subr.bf16.mxu0 0
        %453 = vmatpush1.bf16.msra.mxu0 0
        %454 = vmatprep.subr.bf16.mxu0 0
        %455 = vmatpush1.bf16.msra.mxu0 0
        %456 = vmatprep.subr.bf16.mxu0 0
        %457 = vmatpush1.bf16.msra.mxu0 0
        %458 = vmatprep.subr.bf16.mxu0 0
        %459 = vmatpush1.bf16.msra.mxu0 0
        %460 = vmatprep.subr.bf16.mxu0 0
        %461 = vmatpush1.bf16.msra.mxu0 0
        %462 = vmatprep.subr.bf16.mxu0 0
        %463 = vmatpush1.bf16.msra.mxu0 0
        %464 = vmatprep.subr.bf16.mxu0 0
        %465 = vmatpush1.bf16.msra.mxu0 0
        %466 = vmatprep.subr.bf16.mxu0 0
        %467 = vmatpush1.bf16.msra.mxu0 0
        %468 = vmatprep.subr.bf16.mxu0 0
        %469 = vmatpush1.bf16.msra.mxu0 0
        %470 = vmatprep.subr.bf16.mxu0 0
        %471 = vmatpush1.bf16.msra.mxu0 0
        %472 = vmatprep.subr.bf16.mxu0 0
        %473 = vmatpush1.bf16.msra.mxu0 0
        %474 = vmatprep.subr.bf16.mxu0 0
        %475 = vmatpush1.bf16.msra.mxu0 0
        %476 = vmatprep.mubr.bf16.mxu0 0
        %477 = vmatmul.mubr.bf16.gmra.mrb[0].mxu0 %v442
        %v478 = vpop.f32.mrb[0].mxu0
        %v479 = vadd.f32 %v415, %v478
        %v480 = vpop.f32.mrb[0].mxu0
        %v481 = vpop.f32.mrb[0].mxu0
        %v482 = vpop.f32.mrb[0].mxu0
        %483 = vdwg.mxu0
        %v484 = vld [vmem:[#allocation8 + $0x20] sm:$0xf]
        %v485 = vld [vmem:[#allocation8 + $0x24] sm:$0xf]
        %v486 = vld [vmem:[#allocation8 + $0x28] sm:$0xf]
        %v487 = vld [vmem:[#allocation8 + $0x2c] sm:$0xf]
        %v488 = vld [vmem:[#allocation8 + $0x30] sm:$0xf]
        %v489 = vld [vmem:[#allocation8 + $0x34] sm:$0xf]
        %v490 = vld [vmem:[#allocation8 + $0x38] sm:$0xf]
        %v491 = vld [vmem:[#allocation8 + $0x3c] sm:$0xf]
        %v492 = vld [vmem:[#allocation10 + $0x1] sm:$0x1]
        %v493 = vlaneseq
        %v494 = vshrl.u32 %v493, 7
        %v495 = vsub.s32 0, %v494
        %v496 = vrot.slane %v492, %v495
        %v505 = vunpack.c.l.b16 %v484
        %v506 = vunpack.c.l.b16 %v485
        %v507 = vunpack.c.l.b16 %v486
        %v508 = vunpack.c.l.b16 %v487
        %v509 = vunpack.c.l.b16 %v488
        %v510 = vunpack.c.l.b16 %v489
        %v511 = vunpack.c.l.b16 %v490
        %v512 = vunpack.c.l.b16 %v491
        %v513 = vpack.c.b16 %v506, %v505
        %v514 = vpack.c.b16 %v508, %v507
        %v515 = vpack.c.b16 %v510, %v509
        %v516 = vpack.c.b16 %v512, %v511
        %521 = vmatprep.subr.bf16.mxu0 0
        %522 = vmatpush1.bf16.msra.mxu0 %v513
        %523 = vmatprep.subr.bf16.mxu0 0
        %524 = vmatpush1.bf16.msra.mxu0 %v514
        %525 = vmatprep.subr.bf16.mxu0 0
        %526 = vmatpush1.bf16.msra.mxu0 %v515
        %527 = vmatprep.subr.bf16.mxu0 0
        %528 = vmatpush1.bf16.msra.mxu0 %v516
        %529 = vmatprep.subr.bf16.mxu0 0
        %530 = vmatpush1.bf16.msra.mxu0 0
        %531 = vmatprep.subr.bf16.mxu0 0
        %532 = vmatpush1.bf16.msra.mxu0 0
        %533 = vmatprep.subr.bf16.mxu0 0
        %534 = vmatpush1.bf16.msra.mxu0 0
        %535 = vmatprep.subr.bf16.mxu0 0
        %536 = vmatpush1.bf16.msra.mxu0 0
        %537 = vmatprep.subr.bf16.mxu0 0
        %538 = vmatpush1.bf16.msra.mxu0 0
        %539 = vmatprep.subr.bf16.mxu0 0
        %540 = vmatpush1.bf16.msra.mxu0 0
        %541 = vmatprep.subr.bf16.mxu0 0
        %542 = vmatpush1.bf16.msra.mxu0 0
        %543 = vmatprep.subr.bf16.mxu0 0
        %544 = vmatpush1.bf16.msra.mxu0 0
        %545 = vmatprep.subr.bf16.mxu0 0
        %546 = vmatpush1.bf16.msra.mxu0 0
        %547 = vmatprep.subr.bf16.mxu0 0
        %548 = vmatpush1.bf16.msra.mxu0 0
        %549 = vmatprep.subr.bf16.mxu0 0
        %550 = vmatpush1.bf16.msra.mxu0 0
        %551 = vmatprep.subr.bf16.mxu0 0
        %552 = vmatpush1.bf16.msra.mxu0 0
        %553 = vmatprep.mubr.bf16.mxu0 0
        %554 = vmatmul.mubr.bf16.gmra.mrb[0].mxu0 %v442
        %v555 = vpop.f32.mrb[0].mxu0
        %v556 = vadd.f32 %v496, %v555
        %v557 = vpop.f32.mrb[0].mxu0
        %v558 = vpop.f32.mrb[0].mxu0
        %v559 = vpop.f32.mrb[0].mxu0
        %560 = vdwg.mxu0
        %v561 = vld [vmem:[#allocation8 + $0x40] sm:$0xf]
        %v562 = vld [vmem:[#allocation8 + $0x44] sm:$0xf]
        %v563 = vld [vmem:[#allocation8 + $0x48] sm:$0xf]
        %v564 = vld [vmem:[#allocation8 + $0x4c] sm:$0xf]
        %v565 = vld [vmem:[#allocation8 + $0x50] sm:$0xf]
        %v566 = vld [vmem:[#allocation8 + $0x54] sm:$0xf]
        %v567 = vld [vmem:[#allocation8 + $0x58] sm:$0xf]
        %v568 = vld [vmem:[#allocation8 + $0x5c] sm:$0xf]
        %v569 = vld [vmem:[#allocation10 + $0x2] sm:$0x1]
        %v570 = vlaneseq
        %v571 = vshrl.u32 %v570, 7
        %v572 = vsub.s32 0, %v571
        %v573 = vrot.slane %v569, %v572
        %v582 = vunpack.c.l.b16 %v561
        %v583 = vunpack.c.l.b16 %v562
        %v584 = vunpack.c.l.b16 %v563
        %v585 = vunpack.c.l.b16 %v564
        %v586 = vunpack.c.l.b16 %v565
        %v587 = vunpack.c.l.b16 %v566
        %v588 = vunpack.c.l.b16 %v567
        %v589 = vunpack.c.l.b16 %v568
        %v590 = vpack.c.b16 %v583, %v582
        %v591 = vpack.c.b16 %v585, %v584
        %v592 = vpack.c.b16 %v587, %v586
        %v593 = vpack.c.b16 %v589, %v588
        %598 = vmatprep.subr.bf16.mxu0 0
        %599 = vmatpush1.bf16.msra.mxu0 %v590
        %600 = vmatprep.subr.bf16.mxu0 0
        %601 = vmatpush1.bf16.msra.mxu0 %v591
        %602 = vmatprep.subr.bf16.mxu0 0
        %603 = vmatpush1.bf16.msra.mxu0 %v592
        %604 = vmatprep.subr.bf16.mxu0 0
        %605 = vmatpush1.bf16.msra.mxu0 %v593
        %606 = vmatprep.subr.bf16.mxu0 0
        %607 = vmatpush1.bf16.msra.mxu0 0
        %608 = vmatprep.subr.bf16.mxu0 0
        %609 = vmatpush1.bf16.msra.mxu0 0
        %610 = vmatprep.subr.bf16.mxu0 0
        %611 = vmatpush1.bf16.msra.mxu0 0
        %612 = vmatprep.subr.bf16.mxu0 0
        %613 = vmatpush1.bf16.msra.mxu0 0
        %614 = vmatprep.subr.bf16.mxu0 0
        %615 = vmatpush1.bf16.msra.mxu0 0
        %616 = vmatprep.subr.bf16.mxu0 0
        %617 = vmatpush1.bf16.msra.mxu0 0
        %618 = vmatprep.subr.bf16.mxu0 0
        %619 = vmatpush1.bf16.msra.mxu0 0
        %620 = vmatprep.subr.bf16.mxu0 0
        %621 = vmatpush1.bf16.msra.mxu0 0
        %622 = vmatprep.subr.bf16.mxu0 0
        %623 = vmatpush1.bf16.msra.mxu0 0
        %624 = vmatprep.subr.bf16.mxu0 0
        %625 = vmatpush1.bf16.msra.mxu0 0
        %626 = vmatprep.subr.bf16.mxu0 0
        %627 = vmatpush1.bf16.msra.mxu0 0
        %628 = vmatprep.subr.bf16.mxu0 0
        %629 = vmatpush1.bf16.msra.mxu0 0
        %630 = vmatprep.mubr.bf16.mxu0 0
        %631 = vmatmul.mubr.bf16.gmra.mrb[0].mxu0 %v442
        %v632 = vpop.f32.mrb[0].mxu0
        %v633 = vadd.f32 %v573, %v632
        %v634 = vpop.f32.mrb[0].mxu0
        %v635 = vpop.f32.mrb[0].mxu0
        %v636 = vpop.f32.mrb[0].mxu0
        %637 = vdwg.mxu0
        %v638 = vpack.c.bf16 %v479, %v479
        %v639 = vpack.c.bf16 %v556, %v556
        %vm640 = vcmask 261120
        %v642 = vsel %vm640, %v638, 0
        %v645 = vsel %vm640, %v639, 0
        %647 = vmatprep.subr.bf16.mxu0 0
        %648 = vmatpush1.bf16.xpose.msra.mxu0 %v645
        %649 = vmatprep.subr.bf16.mxu0 0
        %650 = vmatpush1.bf16.xpose.msra.mxu0 0
        %651 = vmatprep.subr.bf16.mxu0 0
        %652 = vmatpush1.bf16.xpose.msra.mxu0 0
        %653 = vmatprep.subr.bf16.mxu0 0
        %654 = vmatpush1.bf16.xpose.msra.mxu0 0
        %655 = vmatprep.subr.bf16.mxu0 0
        %656 = vmatpush1.bf16.xpose.msra.mxu0 0
        %657 = vmatprep.subr.bf16.mxu0 0
        %658 = vmatpush1.bf16.xpose.msra.mxu0 0
        %659 = vmatprep.subr.bf16.mxu0 0
        %660 = vmatpush1.bf16.xpose.msra.mxu0 0
        %661 = vmatprep.subr.bf16.mxu0 0
        %662 = vmatpush1.bf16.xpose.msra.mxu0 0
        %663 = vmatprep.subr.bf16.mxu0 0
        %664 = vmatpush1.bf16.xpose.msra.mxu0 0
        %665 = vmatprep.subr.bf16.mxu0 0
        %666 = vmatpush1.bf16.xpose.msra.mxu0 0
        %667 = vmatprep.subr.bf16.mxu0 0
        %668 = vmatpush1.bf16.xpose.msra.mxu0 0
        %669 = vmatprep.subr.bf16.mxu0 0
        %670 = vmatpush1.bf16.xpose.msra.mxu0 0
        %671 = vmatprep.subr.bf16.mxu0 0
        %672 = vmatpush1.bf16.xpose.msra.mxu0 0
        %673 = vmatprep.subr.bf16.mxu0 0
        %674 = vmatpush1.bf16.xpose.msra.mxu0 0
        %675 = vmatprep.subr.bf16.mxu0 0
        %676 = vmatpush1.bf16.xpose.msra.mxu0 0
        %677 = vmatprep.subr.bf16.mxu0 0
        %678 = vmatpush1.bf16.xpose.msra.mxu0 0
        %679 = vmatprep.mubr.bf16.mxu0 0
        %680 = vmatmul.mubr.bf16.gmra.mrb[0].mxu0 %v642
        %v681 = vpop.f32.mrb[0].mxu0
        %v682 = vadd.f32 0.0, %v681
        %v683 = vpop.f32.mrb[0].mxu0
        %v684 = vpop.f32.mrb[0].mxu0
        %v685 = vpop.f32.mrb[0].mxu0
        %686 = vdwg.mxu0
        %v687 = vmul.f32 %v682, 0.17677669
        %vm688 = vcmask 64512
        %v689 = vsel %vm688, %v687, -inf
        %690 = vmax.xlane.f32.xlu0 %v689
        %v691 = vpop.xlane.xlu0 %690
        %v692 = vsub.f32 %v687, %v691
        %v693 = vmul.f32 %v692, 1.442695
        %v694 = vpow.pop %v693
        %v695 = vsel %vm688, %v694, 0.0
        %696 = vadd.xlane.f32.xlu0 %v695
        %v697 = vpop.xlane.xlu0 %696
        %v698 = vrcp.pop %v697
        %v699 = vmul.f32 %v694, %v698
        %v700 = vpack.c.bf16 %v699, %v699
        %v701 = vpack.c.bf16 %v633, %v633
        %v703 = vsel %vm688, %v700, 0
        %vm705 = vcmask 1043456
        %v707 = vsel %vm705, %v701, 0
        %709 = vmatprep.subr.bf16.mxu0 0
        %710 = vmatpush1.bf16.msra.mxu0 %v707
        %711 = vmatprep.subr.bf16.mxu0 0
        %712 = vmatpush1.bf16.msra.mxu0 0
        %713 = vmatprep.subr.bf16.mxu0 0
        %714 = vmatpush1.bf16.msra.mxu0 0
        %715 = vmatprep.subr.bf16.mxu0 0
        %716 = vmatpush1.bf16.msra.mxu0 0
        %717 = vmatprep.subr.bf16.mxu0 0
        %718 = vmatpush1.bf16.msra.mxu0 0
        %719 = vmatprep.subr.bf16.mxu0 0
        %720 = vmatpush1.bf16.msra.mxu0 0
        %721 = vmatprep.subr.bf16.mxu0 0
        %722 = vmatpush1.bf16.msra.mxu0 0
        %723 = vmatprep.subr.bf16.mxu0 0
        %724 = vmatpush1.bf16.msra.mxu0 0
        %725 = vmatprep.subr.bf16.mxu0 0
        %726 = vmatpush1.bf16.msra.mxu0 0
        %727 = vmatprep.subr.bf16.mxu0 0
        %728 = vmatpush1.bf16.msra.mxu0 0
        %729 = vmatprep.subr.bf16.mxu0 0
        %730 = vmatpush1.bf16.msra.mxu0 0
        %731 = vmatprep.subr.bf16.mxu0 0
        %732 = vmatpush1.bf16.msra.mxu0 0
        %733 = vmatprep.subr.bf16.mxu0 0
        %734 = vmatpush1.bf16.msra.mxu0 0
        %735 = vmatprep.subr.bf16.mxu0 0
        %736 = vmatpush1.bf16.msra.mxu0 0
        %737 = vmatprep.subr.bf16.mxu0 0
        %738 = vmatpush1.bf16.msra.mxu0 0
        %739 = vmatprep.subr.bf16.mxu0 0
        %740 = vmatpush1.bf16.msra.mxu0 0
        %741 = vmatprep.mubr.bf16.mxu0 0
        %742 = vmatmul.mubr.bf16.gmra.mrb[0].mxu0 %v703
        %v743 = vpop.f32.mrb[0].mxu0
        %v744 = vadd.f32 0.0, %v743
        %v745 = vpop.f32.mrb[0].mxu0
        %v746 = vpop.f32.mrb[0].mxu0
        %v747 = vpop.f32.mrb[0].mxu0
        %748 = vdwg.mxu0
        %v749 = vld [vmem:[#allocation8 + $0x60] sm:$0xf]
        %v750 = vld [vmem:[#allocation8 + $0x64] sm:$0xf]
        %v751 = vld [vmem:[#allocation8 + $0x68] sm:$0xf]
        %v752 = vld [vmem:[#allocation8 + $0x6c] sm:$0xf]
        %v753 = vpack.c.bf16 %v744, %v744
        %755 = vrot.lane.b32.xlu0 %v638, 96
        %v756 = vpop.permute.xlu0 %755
        %758 = vrot.lane.b32.xlu0 %v639, 96
        %v759 = vpop.permute.xlu0 %758
        %v761 = vsel %vm640, %v756, 0
        %v764 = vsel %vm640, %v759, 0
        %766 = vmatprep.subr.bf16.mxu0 0
        %767 = vmatpush1.bf16.xpose.msra.mxu0 %v764
        %768 = vmatprep.subr.bf16.mxu0 0
        %769 = vmatpush1.bf16.xpose.msra.mxu0 0
        %770 = vmatprep.subr.bf16.mxu0 0
        %771 = vmatpush1.bf16.xpose.msra.mxu0 0
        %772 = vmatprep.subr.bf16.mxu0 0
        %773 = vmatpush1.bf16.xpose.msra.mxu0 0
        %774 = vmatprep.subr.bf16.mxu0 0
        %775 = vmatpush1.bf16.xpose.msra.mxu0 0
        %776 = vmatprep.subr.bf16.mxu0 0
        %777 = vmatpush1.bf16.xpose.msra.mxu0 0
        %778 = vmatprep.subr.bf16.mxu0 0
        %779 = vmatpush1.bf16.xpose.msra.mxu0 0
        %780 = vmatprep.subr.bf16.mxu0 0
        %781 = vmatpush1.bf16.xpose.msra.mxu0 0
        %782 = vmatprep.subr.bf16.mxu0 0
        %783 = vmatpush1.bf16.xpose.msra.mxu0 0
        %784 = vmatprep.subr.bf16.mxu0 0
        %785 = vmatpush1.bf16.xpose.msra.mxu0 0
        %786 = vmatprep.subr.bf16.mxu0 0
        %787 = vmatpush1.bf16.xpose.msra.mxu0 0
        %788 = vmatprep.subr.bf16.mxu0 0
        %789 = vmatpush1.bf16.xpose.msra.mxu0 0
        %790 = vmatprep.subr.bf16.mxu0 0
        %791 = vmatpush1.bf16.xpose.msra.mxu0 0
        %792 = vmatprep.subr.bf16.mxu0 0
        %793 = vmatpush1.bf16.xpose.msra.mxu0 0
        %794 = vmatprep.subr.bf16.mxu0 0
        %795 = vmatpush1.bf16.xpose.msra.mxu0 0
        %796 = vmatprep.subr.bf16.mxu0 0
        %797 = vmatpush1.bf16.xpose.msra.mxu0 0
        %798 = vmatprep.mubr.bf16.mxu0 0
        %799 = vmatmul.mubr.bf16.gmra.mrb[0].mxu0 %v761
        %v800 = vpop.f32.mrb[0].mxu0
        %v801 = vadd.f32 0.0, %v800
        %v802 = vpop.f32.mrb[0].mxu0
        %v803 = vpop.f32.mrb[0].mxu0
        %v804 = vpop.f32.mrb[0].mxu0
        %805 = vdwg.mxu0
        %v806 = vmul.f32 %v801, 0.17677669
        %v807 = vsel %vm688, %v806, -inf
        %808 = vmax.xlane.f32.xlu0 %v807
        %v809 = vpop.xlane.xlu0 %808
        %v810 = vsub.f32 %v806, %v809
        %v811 = vmul.f32 %v810, 1.442695
        %v812 = vpow.pop %v811
        %v813 = vsel %vm688, %v812, 0.0
        %814 = vadd.xlane.f32.xlu0 %v813
        %v815 = vpop.xlane.xlu0 %814
        %v816 = vrcp.pop %v815
        %v817 = vmul.f32 %v812, %v816
        %v818 = vpack.c.bf16 %v817, %v817
        %820 = vrot.lane.b32.xlu0 %v701, 96
        %v821 = vpop.permute.xlu0 %820
        %v823 = vsel %vm688, %v818, 0
        %v826 = vsel %vm705, %v821, 0
        %828 = vmatprep.subr.bf16.mxu0 0
        %829 = vmatpush1.bf16.msra.mxu0 %v826
        %830 = vmatprep.subr.bf16.mxu0 0
        %831 = vmatpush1.bf16.msra.mxu0 0
        %832 = vmatprep.subr.bf16.mxu0 0
        %833 = vmatpush1.bf16.msra.mxu0 0
        %834 = vmatprep.subr.bf16.mxu0 0
        %835 = vmatpush1.bf16.msra.mxu0 0
        %836 = vmatprep.subr.bf16.mxu0 0
        %837 = vmatpush1.bf16.msra.mxu0 0
        %838 = vmatprep.subr.bf16.mxu0 0
        %839 = vmatpush1.bf16.msra.mxu0 0
        %840 = vmatprep.subr.bf16.mxu0 0
        %841 = vmatpush1.bf16.msra.mxu0 0
        %842 = vmatprep.subr.bf16.mxu0 0
        %843 = vmatpush1.bf16.msra.mxu0 0
        %844 = vmatprep.subr.bf16.mxu0 0
        %845 = vmatpush1.bf16.msra.mxu0 0
        %846 = vmatprep.subr.bf16.mxu0 0
        %847 = vmatpush1.bf16.msra.mxu0 0
        %848 = vmatprep.subr.bf16.mxu0 0
        %849 = vmatpush1.bf16.msra.mxu0 0
        %850 = vmatprep.subr.bf16.mxu0 0
        %851 = vmatpush1.bf16.msra.mxu0 0
        %852 = vmatprep.subr.bf16.mxu0 0
        %853 = vmatpush1.bf16.msra.mxu0 0
        %854 = vmatprep.subr.bf16.mxu0 0
        %855 = vmatpush1.bf16.msra.mxu0 0
        %856 = vmatprep.subr.bf16.mxu0 0
        %857 = vmatpush1.bf16.msra.mxu0 0
        %858 = vmatprep.subr.bf16.mxu0 0
        %859 = vmatpush1.bf16.msra.mxu0 0
        %860 = vmatprep.mubr.bf16.mxu0 0
        %861 = vmatmul.mubr.bf16.gmra.mrb[0].mxu0 %v823
        %v862 = vpop.f32.mrb[0].mxu0
        %v863 = vadd.f32 0.0, %v862
        %v864 = vpop.f32.mrb[0].mxu0
        %v865 = vpop.f32.mrb[0].mxu0
        %v866 = vpop.f32.mrb[0].mxu0
        %867 = vdwg.mxu0
        %v868 = vld [vmem:[#allocation8 + $0x70] sm:$0xf]
        %v869 = vld [vmem:[#allocation8 + $0x74] sm:$0xf]
        %v870 = vld [vmem:[#allocation8 + $0x78] sm:$0xf]
        %v871 = vld [vmem:[#allocation8 + $0x7c] sm:$0xf]
        %v872 = vpack.c.bf16 %v863, %v863
        %v877 = vunpack.c.l.b16 %v868
        %v878 = vunpack.c.l.b16 %v869
        %v879 = vunpack.c.l.b16 %v870
        %v880 = vunpack.c.l.b16 %v871
        %v881 = vpack.c.b16 %v878, %v877
        %v882 = vpack.c.b16 %v880, %v879
        %v886 = vsel %vm640, %v872, 0
        %888 = vmatprep.subr.bf16.mxu0 0
        %889 = vmatpush1.bf16.msra.mxu0 %v881
        %890 = vmatprep.subr.bf16.mxu0 0
        %891 = vmatpush1.bf16.msra.mxu0 %v882
        %892 = vmatprep.subr.bf16.mxu0 0
        %893 = vmatpush1.bf16.msra.mxu0 0
        %894 = vmatprep.subr.bf16.mxu0 0
        %895 = vmatpush1.bf16.msra.mxu0 0
        %896 = vmatprep.subr.bf16.mxu0 0
        %897 = vmatpush1.bf16.msra.mxu0 0
        %898 = vmatprep.subr.bf16.mxu0 0
        %899 = vmatpush1.bf16.msra.mxu0 0
        %900 = vmatprep.subr.bf16.mxu0 0
        %901 = vmatpush1.bf16.msra.mxu0 0
        %902 = vmatprep.subr.bf16.mxu0 0
        %903 = vmatpush1.bf16.msra.mxu0 0
        %904 = vmatprep.subr.bf16.mxu0 0
        %905 = vmatpush1.bf16.msra.mxu0 0
        %906 = vmatprep.subr.bf16.mxu0 0
        %907 = vmatpush1.bf16.msra.mxu0 0
        %908 = vmatprep.subr.bf16.mxu0 0
        %909 = vmatpush1.bf16.msra.mxu0 0
        %910 = vmatprep.subr.bf16.mxu0 0
        %911 = vmatpush1.bf16.msra.mxu0 0
        %912 = vmatprep.subr.bf16.mxu0 0
        %913 = vmatpush1.bf16.msra.mxu0 0
        %914 = vmatprep.subr.bf16.mxu0 0
        %915 = vmatpush1.bf16.msra.mxu0 0
        %916 = vmatprep.subr.bf16.mxu0 0
        %917 = vmatpush1.bf16.msra.mxu0 0
        %918 = vmatprep.subr.bf16.mxu0 0
        %919 = vmatpush1.bf16.msra.mxu0 0
        %920 = vmatprep.mubr.bf16.mxu0 0
        %921 = vmatmul.mubr.bf16.gmra.mrb[0].mxu0 %v886
        %v922 = vpop.f32.mrb[0].mxu0
        %v923 = vadd.f32 0.0, %v922
        %v924 = vpop.f32.mrb[0].mxu0
        %v925 = vpop.f32.mrb[0].mxu0
        %v926 = vpop.f32.mrb[0].mxu0
        %927 = vdwg.mxu0
        %v932 = vunpack.c.l.b16 %v749
        %v933 = vunpack.c.l.b16 %v750
        %v934 = vunpack.c.l.b16 %v751
        %v935 = vunpack.c.l.b16 %v752
        %v936 = vpack.c.b16 %v933, %v932
        %v937 = vpack.c.b16 %v935, %v934
        %v941 = vsel %vm640, %v753, 0
        %943 = vmatprep.subr.bf16.mxu0 0
        %944 = vmatpush1.bf16.msra.mxu0 %v936
        %945 = vmatprep.subr.bf16.mxu0 0
        %946 = vmatpush1.bf16.msra.mxu0 %v937
        %947 = vmatprep.subr.bf16.mxu0 0
        %948 = vmatpush1.bf16.msra.mxu0 0
        %949 = vmatprep.subr.bf16.mxu0 0
        %950 = vmatpush1.bf16.msra.mxu0 0
        %951 = vmatprep.subr.bf16.mxu0 0
        %952 = vmatpush1.bf16.msra.mxu0 0
        %953 = vmatprep.subr.bf16.mxu0 0
        %954 = vmatpush1.bf16.msra.mxu0 0
        %955 = vmatprep.subr.bf16.mxu0 0
        %956 = vmatpush1.bf16.msra.mxu0 0
        %957 = vmatprep.subr.bf16.mxu0 0
        %958 = vmatpush1.bf16.msra.mxu0 0
        %959 = vmatprep.subr.bf16.mxu0 0
        %960 = vmatpush1.bf16.msra.mxu0 0
        %961 = vmatprep.subr.bf16.mxu0 0
        %962 = vmatpush1.bf16.msra.mxu0 0
        %963 = vmatprep.subr.bf16.mxu0 0
        %964 = vmatpush1.bf16.msra.mxu0 0
        %965 = vmatprep.subr.bf16.mxu0 0
        %966 = vmatpush1.bf16.msra.mxu0 0
        %967 = vmatprep.subr.bf16.mxu0 0
        %968 = vmatpush1.bf16.msra.mxu0 0
        %969 = vmatprep.subr.bf16.mxu0 0
        %970 = vmatpush1.bf16.msra.mxu0 0
        %971 = vmatprep.subr.bf16.mxu0 0
        %972 = vmatpush1.bf16.msra.mxu0 0
        %973 = vmatprep.subr.bf16.mxu0 0
        %974 = vmatpush1.bf16.msra.mxu0 0
        %975 = vmatprep.mubr.bf16.mxu0 0
        %976 = vmatmul.mubr.bf16.gmra.mrb[0].mxu0 %v941
        %v977 = vpop.f32.mrb[0].mxu0
        %v978 = vadd.f32 %v923, %v977
        %v979 = vpop.f32.mrb[0].mxu0
        %v980 = vpop.f32.mrb[0].mxu0
        %v981 = vpop.f32.mrb[0].mxu0
        %982 = vdwg.mxu0
        %v983 = vld [vmem:[#allocation10 + $0x3] sm:$0x1]
        %v984 = vlaneseq
        %v985 = vshrl.u32 %v984, 7
        %v986 = vsub.s32 0, %v985
        %v987 = vrot.slane %v983, %v986
        %v988 = vadd.f32 %v978, %v987
        %v989 = vld [vmem:[#allocation10 + $0x8] sm:$0x1]
        %v990 = vld [vmem:[#allocation10 + $0x9] sm:$0x1]
        %v991 = vsel %vm440, %v988, 0.0
        %992 = vadd.xlane.f32.xlu0 %v991
        %v993 = vpop.xlane.xlu0 %992
        %v994 = vrcp.pop 64.0
        %v995 = vmul.f32 %v993, %v994
        %v996 = vsub.f32 %v988, %v995
        %v997 = vmul.f32 %v996, %v996
        %v998 = vsel %vm440, %v997, 0.0
        %999 = vadd.xlane.f32.xlu0 %v998
        %v1000 = vpop.xlane.xlu0 %999
        %v1001 = vmul.f32 %v1000, %v994
        %v1002 = vadd.f32 %v1001, 1e-06
        %v1003 = vrsqrt.pop %v1002
        %v1004 = vmul.f32 %v996, %v1003
        %v1005 = vlaneseq
        %v1006 = vshrl.u32 %v1005, 7
        %v1007 = vsub.s32 0, %v1006
        %v1008 = vrot.slane %v989, %v1007
        %v1009 = vmul.f32 %v1004, %v1008
        %v1010 = vlaneseq
        %v1011 = vshrl.u32 %v1010, 7
        %v1012 = vsub.s32 0, %v1011
        %v1013 = vrot.slane %v990, %v1012
        %v1014 = vadd.f32 %v1009, %v1013
        %v1015 = vadd.f32 %v394, %v386
        %v1016 = vadd.f32 %v395, %v387
        %v1017 = vadd.f32 %v396, %v388
        %v1018 = vadd.f32 %v397, %v389
        %v1019 = vadd.f32 %v398, %v390
        %v1020 = vadd.f32 %v399, %v391
        %v1021 = vadd.f32 %v400, %v392
        %v1022 = vadd.f32 %v401, %v393
        %v1023 = vadd.f32 %v1014, %v385
        %v1024 = vpack.c.bf16 %v1023, %v1023
        %v1025 = vpack.c.bf16 %v1016, %v1015
        %v1026 = vpack.c.bf16 %v1018, %v1017
        %v1027 = vpack.c.bf16 %v1020, %v1019
        %v1028 = vpack.c.bf16 %v1022, %v1021
        %v1029 = vpack.c.bf16 %v395, %v394
        %v1030 = vpack.c.bf16 %v397, %v396
        %v1031 = vpack.c.bf16 %v399, %v398
        %v1032 = vpack.c.bf16 %v401, %v400
        %v1033 = vld [vmem:[#allocation8 + $0x80] sm:$0xf]
        %v1034 = vld [vmem:[#allocation8 + $0x84] sm:$0xf]
        %v1035 = vld [vmem:[#allocation8 + $0x88] sm:$0xf]
        %v1036 = vld [vmem:[#allocation8 + $0x8c] sm:$0xf]
        %v1037 = vld [vmem:[#allocation8 + $0x90] sm:$0xf]
        %v1038 = vld [vmem:[#allocation8 + $0x94] sm:$0xf]
        %v1039 = vld [vmem:[#allocation8 + $0x98] sm:$0xf]
        %v1040 = vld [vmem:[#allocation8 + $0x9c] sm:$0xf]
        %v1041 = vld [vmem:[#allocation10 + $0x10] sm:$0x1]
        %v1042 = vlaneseq
        %v1043 = vshrl.u32 %v1042, 7
        %v1044 = vsub.s32 0, %v1043
        %v1045 = vrot.slane %v1041, %v1044
        %v1054 = vunpack.c.l.b16 %v1033
        %v1055 = vunpack.c.l.b16 %v1034
        %v1056 = vunpack.c.l.b16 %v1035
        %v1057 = vunpack.c.l.b16 %v1036
        %v1058 = vunpack.c.l.b16 %v1037
        %v1059 = vunpack.c.l.b16 %v1038
        %v1060 = vunpack.c.l.b16 %v1039
        %v1061 = vunpack.c.l.b16 %v1040
        %v1062 = vpack.c.b16 %v1055, %v1054
        %v1063 = vpack.c.b16 %v1057, %v1056
        %v1064 = vpack.c.b16 %v1059, %v1058
        %v1065 = vpack.c.b16 %v1061, %v1060
        %v1071 = vsel %vm440, %v1024, 0
        %1073 = vmatprep.subr.bf16.mxu0 0
        %1074 = vmatpush1.bf16.msra.mxu0 %v1062
        %1075 = vmatprep.subr.bf16.mxu0 0
        %1076 = vmatpush1.bf16.msra.mxu0 %v1063
        %1077 = vmatprep.subr.bf16.mxu0 0
        %1078 = vmatpush1.bf16.msra.mxu0 %v1064
        %1079 = vmatprep.subr.bf16.mxu0 0
        %1080 = vmatpush1.bf16.msra.mxu0 %v1065
        %1081 = vmatprep.subr.bf16.mxu0 0
        %1082 = vmatpush1.bf16.msra.mxu0 0
        %1083 = vmatprep.subr.bf16.mxu0 0
        %1084 = vmatpush1.bf16.msra.mxu0 0
        %1085 = vmatprep.subr.bf16.mxu0 0
        %1086 = vmatpush1.bf16.msra.mxu0 0
        %1087 = vmatprep.subr.bf16.mxu0 0
        %1088 = vmatpush1.bf16.msra.mxu0 0
        %1089 = vmatprep.subr.bf16.mxu0 0
        %1090 = vmatpush1.bf16.msra.mxu0 0
        %1091 = vmatprep.subr.bf16.mxu0 0
        %1092 = vmatpush1.bf16.msra.mxu0 0
        %1093 = vmatprep.subr.bf16.mxu0 0
        %1094 = vmatpush1.bf16.msra.mxu0 0
        %1095 = vmatprep.subr.bf16.mxu0 0
        %1096 = vmatpush1.bf16.msra.mxu0 0
        %1097 = vmatprep.subr.bf16.mxu0 0
        %1098 = vmatpush1.bf16.msra.mxu0 0
        %1099 = vmatprep.subr.bf16.mxu0 0
        %1100 = vmatpush1.bf16.msra.mxu0 0
        %1101 = vmatprep.subr.bf16.mxu0 0
        %1102 = vmatpush1.bf16.msra.mxu0 0
        %1103 = vmatprep.subr.bf16.mxu0 0
        %1104 = vmatpush1.bf16.msra.mxu0 0
        %1105 = vmatprep.mubr.bf16.mxu0 0
        %1106 = vmatmul.mubr.bf16.gmra.mrb[0].mxu0 %v1071
        %v1107 = vpop.f32.mrb[0].mxu0
        %v1108 = vadd.f32 %v1045, %v1107
        %v1109 = vpop.f32.mrb[0].mxu0
        %v1110 = vpop.f32.mrb[0].mxu0
        %v1111 = vpop.f32.mrb[0].mxu0
        %1112 = vdwg.mxu0
        %v1113 = vld [vmem:[#allocation8 + $0xa0] sm:$0xf]
        %v1114 = vld [vmem:[#allocation8 + $0xa4] sm:$0xf]
        %v1115 = vld [vmem:[#allocation8 + $0xa8] sm:$0xf]
        %v1116 = vld [vmem:[#allocation8 + $0xac] sm:$0xf]
        %v1117 = vld [vmem:[#allocation8 + $0xb0] sm:$0xf]
        %v1118 = vld [vmem:[#allocation8 + $0xb4] sm:$0xf]
        %v1119 = vld [vmem:[#allocation8 + $0xb8] sm:$0xf]
        %v1120 = vld [vmem:[#allocation8 + $0xbc] sm:$0xf]
        %v1121 = vld [vmem:[#allocation10 + $0x11] sm:$0x1]
        %v1122 = vlaneseq
        %v1123 = vshrl.u32 %v1122, 7
        %v1124 = vsub.s32 0, %v1123
        %v1125 = vrot.slane %v1121, %v1124
        %v1134 = vunpack.c.l.b16 %v1113
        %v1135 = vunpack.c.l.b16 %v1114
        %v1136 = vunpack.c.l.b16 %v1115
        %v1137 = vunpack.c.l.b16 %v1116
        %v1138 = vunpack.c.l.b16 %v1117
        %v1139 = vunpack.c.l.b16 %v1118
        %v1140 = vunpack.c.l.b16 %v1119
        %v1141 = vunpack.c.l.b16 %v1120
        %v1142 = vpack.c.b16 %v1135, %v1134
        %v1143 = vpack.c.b16 %v1137, %v1136
        %v1144 = vpack.c.b16 %v1139, %v1138
        %v1145 = vpack.c.b16 %v1141, %v1140
        %v1151 = vsel %vm440, %v1025, 0
        %v1154 = vsel %vm440, %v1026, 0
        %v1157 = vsel %vm440, %v1027, 0
        %v1160 = vsel %vm440, %v1028, 0
        %1162 = vmatprep.subr.bf16.mxu0 0
        %1163 = vmatpush1.bf16.msra.mxu0 %v1142
        %1164 = vmatprep.subr.bf16.mxu0 0
        %1165 = vmatpush1.bf16.msra.mxu0 %v1143
        %1166 = vmatprep.subr.bf16.mxu0 0
        %1167 = vmatpush1.bf16.msra.mxu0 %v1144
        %1168 = vmatprep.subr.bf16.mxu0 0
        %1169 = vmatpush1.bf16.msra.mxu0 %v1145
        %1170 = vmatprep.subr.bf16.mxu0 0
        %1171 = vmatpush1.bf16.msra.mxu0 0
        %1172 = vmatprep.subr.bf16.mxu0 0
        %1173 = vmatpush1.bf16.msra.mxu0 0
        %1174 = vmatprep.subr.bf16.mxu0 0
        %1175 = vmatpush1.bf16.msra.mxu0 0
        %1176 = vmatprep.subr.bf16.mxu0 0
        %1177 = vmatpush1.bf16.msra.mxu0 0
        %1178 = vmatprep.subr.bf16.mxu0 0
        %1179 = vmatpush1.bf16.msra.mxu0 0
        %1180 = vmatprep.subr.bf16.mxu0 0
        %1181 = vmatpush1.bf16.msra.mxu0 0
        %1182 = vmatprep.subr.bf16.mxu0 0
        %1183 = vmatpush1.bf16.msra.mxu0 0
        %1184 = vmatprep.subr.bf16.mxu0 0
        %1185 = vmatpush1.bf16.msra.mxu0 0
        %1186 = vmatprep.subr.bf16.mxu0 0
        %1187 = vmatpush1.bf16.msra.mxu0 0
        %1188 = vmatprep.subr.bf16.mxu0 0
        %1189 = vmatpush1.bf16.msra.mxu0 0
        %1190 = vmatprep.subr.bf16.mxu0 0
        %1191 = vmatpush1.bf16.msra.mxu0 0
        %1192 = vmatprep.subr.bf16.mxu0 0
        %1193 = vmatpush1.bf16.msra.mxu0 0
        %1194 = vmatprep.mubr.bf16.mxu0 0
        %1195 = vmatmul.mubr.bf16.gmra.mrb[0].mxu0 %v1151
        %v1196 = vpop.f32.mrb[0].mxu0
        %v1197 = vadd.f32 %v1125, %v1196
        %v1198 = vpop.f32.mrb[0].mxu0
        %v1199 = vpop.f32.mrb[0].mxu0
        %v1200 = vadd.f32 %v1125, %v1199
        %v1201 = vpop.f32.mrb[0].mxu0
        %1202 = vmatprep.mubr.bf16.mxu0 0
        %1203 = vmatmul.mubr.bf16.gmra.mrb[0].mxu0 %v1154
        %v1204 = vpop.f32.mrb[0].mxu0
        %v1205 = vadd.f32 %v1125, %v1204
        %v1206 = vpop.f32.mrb[0].mxu0
        %v1207 = vpop.f32.mrb[0].mxu0
        %v1208 = vadd.f32 %v1125, %v1207
        %v1209 = vpop.f32.mrb[0].mxu0
        %1210 = vmatprep.mubr.bf16.mxu0 0
        %1211 = vmatmul.mubr.bf16.gmra.mrb[0].mxu0 %v1157
        %v1212 = vpop.f32.mrb[0].mxu0
        %v1213 = vadd.f32 %v1125, %v1212
        %v1214 = vpop.f32.mrb[0].mxu0
        %v1215 = vpop.f32.mrb[0].mxu0
        %v1216 = vadd.f32 %v1125, %v1215
        %v1217 = vpop.f32.mrb[0].mxu0
        %1218 = vmatprep.mubr.bf16.mxu0 0
        %1219 = vmatmul.mubr.bf16.gmra.mrb[0].mxu0 %v1160
        %v1220 = vpop.f32.mrb[0].mxu0
        %v1221 = vadd.f32 %v1125, %v1220
        %v1222 = vpop.f32.mrb[0].mxu0
        %v1223 = vpop.f32.mrb[0].mxu0
        %v1224 = vadd.f32 %v1125, %v1223
        %v1225 = vpop.f32.mrb[0].mxu0
        %1226 = vdwg.mxu0
        %v1227 = vld [vmem:[#allocation8 + $0xc0] sm:$0xf]
        %v1228 = vld [vmem:[#allocation8 + $0xc4] sm:$0xf]
        %v1229 = vld [vmem:[#allocation8 + $0xc8] sm:$0xf]
        %v1230 = vld [vmem:[#allocation8 + $0xcc] sm:$0xf]
        %v1231 = vld [vmem:[#allocation8 + $0xd0] sm:$0xf]
        %v1232 = vld [vmem:[#allocation8 + $0xd4] sm:$0xf]
        %v1233 = vld [vmem:[#allocation8 + $0xd8] sm:$0xf]
        %v1234 = vld [vmem:[#allocation8 + $0xdc] sm:$0xf]
        %v1235 = vld [vmem:[#allocation10 + $0x12] sm:$0x1]
        %v1236 = vlaneseq
        %v1237 = vshrl.u32 %v1236, 7
        %v1238 = vsub.s32 0, %v1237
        %v1239 = vrot.slane %v1235, %v1238
        %v1248 = vunpack.c.l.b16 %v1227
        %v1249 = vunpack.c.l.b16 %v1228
        %v1250 = vunpack.c.l.b16 %v1229
        %v1251 = vunpack.c.l.b16 %v1230
        %v1252 = vunpack.c.l.b16 %v1231
        %v1253 = vunpack.c.l.b16 %v1232
        %v1254 = vunpack.c.l.b16 %v1233
        %v1255 = vunpack.c.l.b16 %v1234
        %v1256 = vpack.c.b16 %v1249, %v1248
        %v1257 = vpack.c.b16 %v1251, %v1250
        %v1258 = vpack.c.b16 %v1253, %v1252
        %v1259 = vpack.c.b16 %v1255, %v1254
        %v1265 = vsel %vm440, %v1029, 0
        %v1268 = vsel %vm440, %v1030, 0
        %v1271 = vsel %vm440, %v1031, 0
        %v1274 = vsel %vm440, %v1032, 0
        %1276 = vmatprep.subr.bf16.mxu0 0
        %1277 = vmatpush1.bf16.msra.mxu0 %v1256
        %1278 = vmatprep.subr.bf16.mxu0 0
        %1279 = vmatpush1.bf16.msra.mxu0 %v1257
        %1280 = vmatprep.subr.bf16.mxu0 0
        %1281 = vmatpush1.bf16.msra.mxu0 %v1258
        %1282 = vmatprep.subr.bf16.mxu0 0
        %1283 = vmatpush1.bf16.msra.mxu0 %v1259
        %1284 = vmatprep.subr.bf16.mxu0 0
        %1285 = vmatpush1.bf16.msra.mxu0 0
        %1286 = vmatprep.subr.bf16.mxu0 0
        %1287 = vmatpush1.bf16.msra.mxu0 0
        %1288 = vmatprep.subr.bf16.mxu0 0
        %1289 = vmatpush1.bf16.msra.mxu0 0
        %1290 = vmatprep.subr.bf16.mxu0 0
        %1291 = vmatpush1.bf16.msra.mxu0 0
        %1292 = vmatprep.subr.bf16.mxu0 0
        %1293 = vmatpush1.bf16.msra.mxu0 0
        %1294 = vmatprep.subr.bf16.mxu0 0
        %1295 = vmatpush1.bf16.msra.mxu0 0
        %1296 = vmatprep.subr.bf16.mxu0 0
        %1297 = vmatpush1.bf16.msra.mxu0 0
        %1298 = vmatprep.subr.bf16.mxu0 0
        %1299 = vmatpush1.bf16.msra.mxu0 0
        %1300 = vmatprep.subr.bf16.mxu0 0
        %1301 = vmatpush1.bf16.msra.mxu0 0
        %1302 = vmatprep.subr.bf16.mxu0 0
        %1303 = vmatpush1.bf16.msra.mxu0 0
        %1304 = vmatprep.subr.bf16.mxu0 0
        %1305 = vmatpush1.bf16.msra.mxu0 0
        %1306 = vmatprep.subr.bf16.mxu0 0
        %1307 = vmatpush1.bf16.msra.mxu0 0
        %1308 = vmatprep.mubr.bf16.mxu0 0
        %1309 = vmatmul.mubr.bf16.gmra.mrb[0].mxu0 %v1265
        %v1310 = vpop.f32.mrb[0].mxu0
        %v1311 = vadd.f32 %v1239, %v1310
        %v1312 = vpop.f32.mrb[0].mxu0
        %v1313 = vpop.f32.mrb[0].mxu0
        %v1314 = vadd.f32 %v1239, %v1313
        %v1315 = vpop.f32.mrb[0].mxu0
        %1316 = vmatprep.mubr.bf16.mxu0 0
        %1317 = vmatmul.mubr.bf16.gmra.mrb[0].mxu0 %v1268
        %v1318 = vpop.f32.mrb[0].mxu0
        %v1319 = vadd.f32 %v1239, %v1318
        %v1320 = vpop.f32.mrb[0].mxu0
        %v1321 = vpop.f32.mrb[0].mxu0
        %v1322 = vadd.f32 %v1239, %v1321
        %v1323 = vpop.f32.mrb[0].mxu0
        %1324 = vmatprep.mubr.bf16.mxu0 0
        %1325 = vmatmul.mubr.bf16.gmra.mrb[0].mxu0 %v1271
        %v1326 = vpop.f32.mrb[0].mxu0
        %v1327 = vadd.f32 %v1239, %v1326
        %v1328 = vpop.f32.mrb[0].mxu0
        %v1329 = vpop.f32.mrb[0].mxu0
        %v1330 = vadd.f32 %v1239, %v1329
        %v1331 = vpop.f32.mrb[0].mxu0
        %1332 = vmatprep.mubr.bf16.mxu0 0
        %1333 = vmatmul.mubr.bf16.gmra.mrb[0].mxu0 %v1274
        %v1334 = vpop.f32.mrb[0].mxu0
        %v1335 = vadd.f32 %v1239, %v1334
        %v1336 = vpop.f32.mrb[0].mxu0
        %v1337 = vpop.f32.mrb[0].mxu0
        %v1338 = vadd.f32 %v1239, %v1337
        %v1339 = vpop.f32.mrb[0].mxu0
        %1340 = vdwg.mxu0
        %v1341 = vpack.c.bf16 %v1108, %v1108
        %v1342 = vpack.c.bf16 %v1200, %v1197
        %v1343 = vpack.c.bf16 %v1208, %v1205
        %v1344 = vpack.c.bf16 %v1216, %v1213
        %v1345 = vpack.c.bf16 %v1224, %v1221
        %vm1346 = vcmask 130048
        %v1348 = vsel %vm1346, %v1341, 0
        %v1351 = vsel %vm1346, %v1342, 0
        %v1354 = vsel %vm1346, %v1343, 0
        %v1357 = vsel %vm1346, %v1344, 0
        %v1360 = vsel %vm1346, %v1345, 0
        %1362 = vmatprep.subr.bf16.mxu0 0
        %1363 = vmatpush1.bf16.xpose.msra.mxu0 %v1351
        %1364 = vmatprep.subr.bf16.mxu0 0
        %1365 = vmatpush1.bf16.xpose.msra.mxu0 %v1354
        %1366 = vmatprep.subr.bf16.mxu0 0
        %1367 = vmatpush1.bf16.xpose.msra.mxu0 %v1357
        %1368 = vmatprep.subr.bf16.mxu0 0
        %1369 = vmatpush1.bf16.xpose.msra.mxu0 %v1360
        %1370 = vmatprep.subr.bf16.mxu0 0
        %1371 = vmatpush1.bf16.xpose.msra.mxu0 0
        %1372 = vmatprep.subr.bf16.mxu0 0
        %1373 = vmatpush1.bf16.xpose.msra.mxu0 0
        %1374 = vmatprep.subr.bf16.mxu0 0
        %1375 = vmatpush1.bf16.xpose.msra.mxu0 0
        %1376 = vmatprep.subr.bf16.mxu0 0
        %1377 = vmatpush1.bf16.xpose.msra.mxu0 0
        %1378 = vmatprep.subr.bf16.mxu0 0
        %1379 = vmatpush1.bf16.xpose.msra.mxu0 0
        %1380 = vmatprep.subr.bf16.mxu0 0
        %1381 = vmatpush1.bf16.xpose.msra.mxu0 0
        %1382 = vmatprep.subr.bf16.mxu0 0
        %1383 = vmatpush1.bf16.xpose.msra.mxu0 0
        %1384 = vmatprep.subr.bf16.mxu0 0
        %1385 = vmatpush1.bf16.xpose.msra.mxu0 0
        %1386 = vmatprep.subr.bf16.mxu0 0
        %1387 = vmatpush1.bf16.xpose.msra.mxu0 0
        %1388 = vmatprep.subr.bf16.mxu0 0
        %1389 = vmatpush1.bf16.xpose.msra.mxu0 0
        %1390 = vmatprep.subr.bf16.mxu0 0
        %1391 = vmatpush1.bf16.xpose.msra.mxu0 0
        %1392 = vmatprep.subr.bf16.mxu0 0
        %1393 = vmatpush1.bf16.xpose.msra.mxu0 0
        %1394 = vmatprep.mubr.bf16.mxu0 0
        %1395 = vmatmul.mubr.bf16.gmra.mrb[0].mxu0 %v1348
        %v1396 = vpop.f32.mrb[0].mxu0
        %v1397 = vadd.f32 0.0, %v1396
        %v1398 = vpop.f32.mrb[0].mxu0
        %v1399 = vpop.f32.mrb[0].mxu0
        %v1400 = vpop.f32.mrb[0].mxu0
        %1401 = vdwg.mxu0
        %v1402 = vmul.f32 %v1397, 0.25
        %v1403 = vsel %vm440, %v1402, -inf
        %1404 = vmax.xlane.f32.xlu0 %v1403
        %v1405 = vpop.xlane.xlu0 %1404
        %v1406 = vsub.f32 %v1402, %v1405
        %v1407 = vmul.f32 %v1406, 1.442695
        %v1408 = vpow.pop %v1407
        %v1409 = vsel %vm440, %v1408, 0.0
        %1410 = vadd.xlane.f32.xlu0 %v1409
        %v1411 = vpop.xlane.xlu0 %1410
        %v1412 = vrcp.pop %v1411
        %v1413 = vmul.f32 %v1408, %v1412
        %v1414 = vpack.c.bf16 %v1413, %v1413
        %v1415 = vpack.c.bf16 %v1314, %v1311
        %v1416 = vpack.c.bf16 %v1322, %v1319
        %v1417 = vpack.c.bf16 %v1330, %v1327
        %v1418 = vpack.c.bf16 %v1338, %v1335
        %v1420 = vsel %vm440, %v1414, 0
        %1422 = vmatprep.subr.bf16.mxu0 0
        %1423 = vmatpush1.bf16.msra.mxu0 %v1415
        %1424 = vmatprep.subr.bf16.mxu0 0
        %1425 = vmatpush1.bf16.msra.mxu0 %v1416
        %1426 = vmatprep.subr.bf16.mxu0 0
        %1427 = vmatpush1.bf16.msra.mxu0 %v1417
        %1428 = vmatprep.subr.bf16.mxu0 0
        %1429 = vmatpush1.bf16.msra.mxu0 %v1418
        %1430 = vmatprep.subr.bf16.mxu0 0
        %1431 = vmatpush1.bf16.msra.mxu0 0
        %1432 = vmatprep.subr.bf16.mxu0 0
        %1433 = vmatpush1.bf16.msra.mxu0 0
        %1434 = vmatprep.subr.bf16.mxu0 0
        %1435 = vmatpush1.bf16.msra.mxu0 0
        %1436 = vmatprep.subr.bf16.mxu0 0
        %1437 = vmatpush1.bf16.msra.mxu0 0
        %1438 = vmatprep.subr.bf16.mxu0 0
        %1439 = vmatpush1.bf16.msra.mxu0 0
        %1440 = vmatprep.subr.bf16.mxu0 0
        %1441 = vmatpush1.bf16.msra.mxu0 0
        %1442 = vmatprep.subr.bf16.mxu0 0
        %1443 = vmatpush1.bf16.msra.mxu0 0
        %1444 = vmatprep.subr.bf16.mxu0 0
        %1445 = vmatpush1.bf16.msra.mxu0 0
        %1446 = vmatprep.subr.bf16.mxu0 0
        %1447 = vmatpush1.bf16.msra.mxu0 0
        %1448 = vmatprep.subr.bf16.mxu0 0
        %1449 = vmatpush1.bf16.msra.mxu0 0
        %1450 = vmatprep.subr.bf16.mxu0 0
        %1451 = vmatpush1.bf16.msra.mxu0 0
        %1452 = vmatprep.subr.bf16.mxu0 0
        %1453 = vmatpush1.bf16.msra.mxu0 0
        %1454 = vmatprep.mubr.bf16.mxu0 0
        %1455 = vmatmul.mubr.bf16.gmra.mrb[0].mxu0 %v1420
        %v1456 = vpop.f32.mrb[0].mxu0
        %v1457 = vadd.f32 0.0, %v1456
        %v1458 = vpop.f32.mrb[0].mxu0
        %v1459 = vpop.f32.mrb[0].mxu0
        %v1460 = vpop.f32.mrb[0].mxu0
        %1461 = vdwg.mxu0
        %v1462 = vld [vmem:[#allocation8 + $0xe0] sm:$0xf]
        %v1463 = vld [vmem:[#allocation8 + $0xe4] sm:$0xf]
        %v1464 = vpack.c.bf16 %v1457, %v1457
        %1466 = vrot.lane.b32.xlu0 %v1341, 112
        %v1467 = vpop.permute.xlu0 %1466
        %1472 = vrot.lane.b32.xlu0 %v1342, 112
        %v1473 = vpop.permute.xlu0 %1472
        %1474 = vrot.lane.b32.xlu0 %v1343, 112
        %v1475 = vpop.permute.xlu0 %1474
        %1476 = vrot.lane.b32.xlu0 %v1344, 112
        %v1477 = vpop.permute.xlu0 %1476
        %1478 = vrot.lane.b32.xlu0 %v1345, 112
        %v1479 = vpop.permute.xlu0 %1478
        %v1481 = vsel %vm1346, %v1467, 0
        %v1484 = vsel %vm1346, %v1473, 0
        %v1487 = vsel %vm1346, %v1475, 0
        %v1490 = vsel %vm1346, %v1477, 0
        %v1493 = vsel %vm1346, %v1479, 0
        %1495 = vmatprep.subr.bf16.mxu0 0
        %1496 = vmatpush1.bf16.xpose.msra.mxu0 %v1484
        %1497 = vmatprep.subr.bf16.mxu0 0
        %1498 = vmatpush1.bf16.xpose.msra.mxu0 %v1487
        %1499 = vmatprep.subr.bf16.mxu0 0
        %1500 = vmatpush1.bf16.xpose.msra.mxu0 %v1490
        %1501 = vmatprep.subr.bf16.mxu0 0
        %1502 = vmatpush1.bf16.xpose.msra.mxu0 %v1493
        %1503 = vmatprep.subr.bf16.mxu0 0
        %1504 = vmatpush1.bf16.xpose.msra.mxu0 0
        %1505 = vmatprep.subr.bf16.mxu0 0
        %1506 = vmatpush1.bf16.xpose.msra.mxu0 0
        %1507 = vmatprep.subr.bf16.mxu0 0
        %1508 = vmatpush1.bf16.xpose.msra.mxu0 0
        %1509 = vmatprep.subr.bf16.mxu0 0
        %1510 = vmatpush1.bf16.xpose.msra.mxu0 0
        %1511 = vmatprep.subr.bf16.mxu0 0
        %1512 = vmatpush1.bf16.xpose.msra.mxu0 0
        %1513 = vmatprep.subr.bf16.mxu0 0
        %1514 = vmatpush1.bf16.xpose.msra.mxu0 0
        %1515 = vmatprep.subr.bf16.mxu0 0
        %1516 = vmatpush1.bf16.xpose.msra.mxu0 0
        %1517 = vmatprep.subr.bf16.mxu0 0
        %1518 = vmatpush1.bf16.xpose.msra.mxu0 0
        %1519 = vmatprep.subr.bf16.mxu0 0
        %1520 = vmatpush1.bf16.xpose.msra.mxu0 0
        %1521 = vmatprep.subr.bf16.mxu0 0
        %1522 = vmatpush1.bf16.xpose.msra.mxu0 0
        %1523 = vmatprep.subr.bf16.mxu0 0
        %1524 = vmatpush1.bf16.xpose.msra.mxu0 0
        %1525 = vmatprep.subr.bf16.mxu0 0
        %1526 = vmatpush1.bf16.xpose.msra.mxu0 0
        %1527 = vmatprep.mubr.bf16.mxu0 0
        %1528 = vmatmul.mubr.bf16.gmra.mrb[0].mxu0 %v1481
        %v1529 = vpop.f32.mrb[0].mxu0
        %v1530 = vadd.f32 0.0, %v1529
        %v1531 = vpop.f32.mrb[0].mxu0
        %v1532 = vpop.f32.mrb[0].mxu0
        %v1533 = vpop.f32.mrb[0].mxu0
        %1534 = vdwg.mxu0
        %v1535 = vmul.f32 %v1530, 0.25
        %v1536 = vsel %vm440, %v1535, -inf
        %1537 = vmax.xlane.f32.xlu0 %v1536
        %v1538 = vpop.xlane.xlu0 %1537
        %v1539 = vsub.f32 %v1535, %v1538
        %v1540 = vmul.f32 %v1539, 1.442695
        %v1541 = vpow.pop %v1540
        %v1542 = vsel %vm440, %v1541, 0.0
        %1543 = vadd.xlane.f32.xlu0 %v1542
        %v1544 = vpop.xlane.xlu0 %1543
        %v1545 = vrcp.pop %v1544
        %v1546 = vmul.f32 %v1541, %v1545
        %v1547 = vpack.c.bf16 %v1546, %v1546
        %1552 = vrot.lane.b32.xlu0 %v1415, 112
        %v1553 = vpop.permute.xlu0 %1552
        %1554 = vrot.lane.b32.xlu0 %v1416, 112
        %v1555 = vpop.permute.xlu0 %1554
        %1556 = vrot.lane.b32.xlu0 %v1417, 112
        %v1557 = vpop.permute.xlu0 %1556
        %1558 = vrot.lane.b32.xlu0 %v1418, 112
        %v1559 = vpop.permute.xlu0 %1558
        %v1565 = vsel %vm440, %v1547, 0
        %1567 = vmatprep.subr.bf16.mxu0 0
        %1568 = vmatpush1.bf16.msra.mxu0 %v1553
        %1569 = vmatprep.subr.bf16.mxu0 0
        %1570 = vmatpush1.bf16.msra.mxu0 %v1555
        %1571 = vmatprep.subr.bf16.mxu0 0
        %1572 = vmatpush1.bf16.msra.mxu0 %v1557
        %1573 = vmatprep.subr.bf16.mxu0 0
        %1574 = vmatpush1.bf16.msra.mxu0 %v1559
        %1575 = vmatprep.subr.bf16.mxu0 0
        %1576 = vmatpush1.bf16.msra.mxu0 0
        %1577 = vmatprep.subr.bf16.mxu0 0
        %1578 = vmatpush1.bf16.msra.mxu0 0
        %1579 = vmatprep.subr.bf16.mxu0 0
        %1580 = vmatpush1.bf16.msra.mxu0 0
        %1581 = vmatprep.subr.bf16.mxu0 0
        %1582 = vmatpush1.bf16.msra.mxu0 0
        %1583 = vmatprep.subr.bf16.mxu0 0
        %1584 = vmatpush1.bf16.msra.mxu0 0
        %1585 = vmatprep.subr.bf16.mxu0 0
        %1586 = vmatpush1.bf16.msra.mxu0 0
        %1587 = vmatprep.subr.bf16.mxu0 0
        %1588 = vmatpush1.bf16.msra.mxu0 0
        %1589 = vmatprep.subr.bf16.mxu0 0
        %1590 = vmatpush1.bf16.msra.mxu0 0
        %1591 = vmatprep.subr.bf16.mxu0 0
        %1592 = vmatpush1.bf16.msra.mxu0 0
        %1593 = vmatprep.subr.bf16.mxu0 0
        %1594 = vmatpush1.bf16.msra.mxu0 0
        %1595 = vmatprep.subr.bf16.mxu0 0
        %1596 = vmatpush1.bf16.msra.mxu0 0
        %1597 = vmatprep.subr.bf16.mxu0 0
        %1598 = vmatpush1.bf16.msra.mxu0 0
        %1599 = vmatprep.mubr.bf16.mxu0 0
        %1600 = vmatmul.mubr.bf16.gmra.mrb[0].mxu0 %v1565
        %v1601 = vpop.f32.mrb[0].mxu0
        %v1602 = vadd.f32 0.0, %v1601
        %v1603 = vpop.f32.mrb[0].mxu0
        %v1604 = vpop.f32.mrb[0].mxu0
        %v1605 = vpop.f32.mrb[0].mxu0
        %1606 = vdwg.mxu0
        %v1607 = vld [vmem:[#allocation8 + $0xe8] sm:$0xf]
        %v1608 = vld [vmem:[#allocation8 + $0xec] sm:$0xf]
        %v1609 = vpack.c.bf16 %v1602, %v1602
        %v1612 = vunpack.c.l.b16 %v1607
        %v1613 = vunpack.c.l.b16 %v1608
        %v1614 = vpack.c.b16 %v1613, %v1612
        %v1617 = vsel %vm1346, %v1609, 0
        %1619 = vmatprep.subr.bf16.mxu0 0
        %1620 = vmatpush1.bf16.msra.mxu0 %v1614
        %1621 = vmatprep.subr.bf16.mxu0 0
        %1622 = vmatpush1.bf16.msra.mxu0 0
        %1623 = vmatprep.subr.bf16.mxu0 0
        %1624 = vmatpush1.bf16.msra.mxu0 0
        %1625 = vmatprep.subr.bf16.mxu0 0
        %1626 = vmatpush1.bf16.msra.mxu0 0
        %1627 = vmatprep.subr.bf16.mxu0 0
        %1628 = vmatpush1.bf16.msra.mxu0 0
        %1629 = vmatprep.subr.bf16.mxu0 0
        %1630 = vmatpush1.bf16.msra.mxu0 0
        %1631 = vmatprep.subr.bf16.mxu0 0
        %1632 = vmatpush1.bf16.msra.mxu0 0
        %1633 = vmatprep.subr.bf16.mxu0 0
        %1634 = vmatpush1.bf16.msra.mxu0 0
        %1635 = vmatprep.subr.bf16.mxu0 0
        %1636 = vmatpush1.bf16.msra.mxu0 0
        %1637 = vmatprep.subr.bf16.mxu0 0
        %1638 = vmatpush1.bf16.msra.mxu0 0
        %1639 = vmatprep.subr.bf16.mxu0 0
        %1640 = vmatpush1.bf16.msra.mxu0 0
        %1641 = vmatprep.subr.bf16.mxu0 0
        %1642 = vmatpush1.bf16.msra.mxu0 0
        %1643 = vmatprep.subr.bf16.mxu0 0
        %1644 = vmatpush1.bf16.msra.mxu0 0
        %1645 = vmatprep.subr.bf16.mxu0 0
        %1646 = vmatpush1.bf16.msra.mxu0 0
        %1647 = vmatprep.subr.bf16.mxu0 0
        %1648 = vmatpush1.bf16.msra.mxu0 0
        %1649 = vmatprep.subr.bf16.mxu0 0
        %1650 = vmatpush1.bf16.msra.mxu0 0
        %1651 = vmatprep.mubr.bf16.mxu0 0
        %1652 = vmatmul.mubr.bf16.gmra.mrb[0].mxu0 %v1617
        %v1653 = vpop.f32.mrb[0].mxu0
        %v1654 = vadd.f32 0.0, %v1653
        %v1655 = vpop.f32.mrb[0].mxu0
        %v1656 = vpop.f32.mrb[0].mxu0
        %v1657 = vpop.f32.mrb[0].mxu0
        %1658 = vdwg.mxu0
        %v1661 = vunpack.c.l.b16 %v1462
        %v1662 = vunpack.c.l.b16 %v1463
        %v1663 = vpack.c.b16 %v1662, %v1661
        %v1666 = vsel %vm1346, %v1464, 0
        %1668 = vmatprep.subr.bf16.mxu0 0
        %1669 = vmatpush1.bf16.msra.mxu0 %v1663
        %1670 = vmatprep.subr.bf16.mxu0 0
        %1671 = vmatpush1.bf16.msra.mxu0 0
        %1672 = vmatprep.subr.bf16.mxu0 0
        %1673 = vmatpush1.bf16.msra.mxu0 0
        %1674 = vmatprep.subr.bf16.mxu0 0
        %1675 = vmatpush1.bf16.msra.mxu0 0
        %1676 = vmatprep.subr.bf16.mxu0 0
        %1677 = vmatpush1.bf16.msra.mxu0 0
        %1678 = vmatprep.subr.bf16.mxu0 0
        %1679 = vmatpush1.bf16.msra.mxu0 0
        %1680 = vmatprep.subr.bf16.mxu0 0
        %1681 = vmatpush1.bf16.msra.mxu0 0
        %1682 = vmatprep.subr.bf16.mxu0 0
        %1683 = vmatpush1.bf16.msra.mxu0 0
        %1684 = vmatprep.subr.bf16.mxu0 0
        %1685 = vmatpush1.bf16.msra.mxu0 0
        %1686 = vmatprep.subr.bf16.mxu0 0
        %1687 = vmatpush1.bf16.msra.mxu0 0
        %1688 = vmatprep.subr.bf16.mxu0 0
        %1689 = vmatpush1.bf16.msra.mxu0 0
        %1690 = vmatprep.subr.bf16.mxu0 0
        %1691 = vmatpush1.bf16.msra.mxu0 0
        %1692 = vmatprep.subr.bf16.mxu0 0
        %1693 = vmatpush1.bf16.msra.mxu0 0
        %1694 = vmatprep.subr.bf16.mxu0 0
        %1695 = vmatpush1.bf16.msra.mxu0 0
        %1696 = vmatprep.subr.bf16.mxu0 0
        %1697 = vmatpush1.bf16.msra.mxu0 0
        %1698 = vmatprep.subr.bf16.mxu0 0
        %1699 = vmatpush1.bf16.msra.mxu0 0
        %1700 = vmatprep.mubr.bf16.mxu0 0
        %1701 = vmatmul.mubr.bf16.gmra.mrb[0].mxu0 %v1666
        %v1702 = vpop.f32.mrb[0].mxu0
        %v1703 = vadd.f32 %v1654, %v1702
        %v1704 = vpop.f32.mrb[0].mxu0
        %v1705 = vpop.f32.mrb[0].mxu0
        %v1706 = vpop.f32.mrb[0].mxu0
        %1707 = vdwg.mxu0
        %v1708 = vld [vmem:[#allocation10 + $0x13] sm:$0x1]
        %v1709 = vlaneseq
        %v1710 = vshrl.u32 %v1709, 7
        %v1711 = vsub.s32 0, %v1710
        %v1712 = vrot.slane %v1708, %v1711
        %v1713 = vadd.f32 %v1703, %v1712
        %v1714 = vadd.f32 %v1014, %v1713
        %v1715 = vld [vmem:[#allocation10 + $0x18] sm:$0x1]
        %v1716 = vld [vmem:[#allocation10 + $0x19] sm:$0x1]
        %v1717 = vsel %vm440, %v1714, 0.0
        %1718 = vadd.xlane.f32.xlu0 %v1717
        %v1719 = vpop.xlane.xlu0 %1718
        %v1720 = vmul.f32 %v1719, %v994
        %v1721 = vsub.f32 %v1714, %v1720
        %v1722 = vmul.f32 %v1721, %v1721
        %v1723 = vsel %vm440, %v1722, 0.0
        %1724 = vadd.xlane.f32.xlu0 %v1723
        %v1725 = vpop.xlane.xlu0 %1724
        %v1726 = vmul.f32 %v1725, %v994
        %v1727 = vadd.f32 %v1726, 1e-06
        %v1728 = vrsqrt.pop %v1727
        %v1729 = vmul.f32 %v1721, %v1728
        %v1730 = vlaneseq
        %v1731 = vshrl.u32 %v1730, 7
        %v1732 = vsub.s32 0, %v1731
        %v1733 = vrot.slane %v1715, %v1732
        %v1734 = vmul.f32 %v1729, %v1733
        %v1735 = vlaneseq
        %v1736 = vshrl.u32 %v1735, 7
        %v1737 = vsub.s32 0, %v1736
        %v1738 = vrot.slane %v1716, %v1737
        %v1739 = vadd.f32 %v1734, %v1738
        %v1740 = vpack.c.bf16 %v1739, %v1739
        %v1741 = vld [vmem:[#allocation8 + $0xf0] sm:$0xf]
        %v1742 = vld [vmem:[#allocation8 + $0xf4] sm:$0xf]
        %v1743 = vld [vmem:[#allocation8 + $0xf8] sm:$0xf]
        %v1744 = vld [vmem:[#allocation8 + $0xfc] sm:$0xf]
        %v1745 = vld [vmem:[#allocation8 + $0x100] sm:$0xf]
        %v1746 = vld [vmem:[#allocation8 + $0x104] sm:$0xf]
        %v1747 = vld [vmem:[#allocation8 + $0x108] sm:$0xf]
        %v1748 = vld [vmem:[#allocation8 + $0x10c] sm:$0xf]
        %v1749 = vld [vmem:[#allocation10 + $0x20] sm:$0x1]
        %v1750 = vlaneseq
        %v1751 = vshrl.u32 %v1750, 7
        %v1752 = vsub.s32 0, %v1751
        %v1753 = vrot.slane %v1749, %v1752
        %v1762 = vunpack.c.l.b16 %v1741
        %v1763 = vunpack.c.l.b16 %v1742
        %v1764 = vunpack.c.l.b16 %v1743
        %v1765 = vunpack.c.l.b16 %v1744
        %v1766 = vunpack.c.l.b16 %v1745
        %v1767 = vunpack.c.l.b16 %v1746
        %v1768 = vunpack.c.l.b16 %v1747
        %v1769 = vunpack.c.l.b16 %v1748
        %v1770 = vpack.c.b16 %v1763, %v1762
        %v1771 = vpack.c.b16 %v1765, %v1764
        %v1772 = vpack.c.b16 %v1767, %v1766
        %v1773 = vpack.c.b16 %v1769, %v1768
        %v1779 = vsel %vm440, %v1740, 0
        %1781 = vmatprep.subr.bf16.mxu0 0
        %1782 = vmatpush1.bf16.msra.mxu0 %v1770
        %1783 = vmatprep.subr.bf16.mxu0 0
        %1784 = vmatpush1.bf16.msra.mxu0 %v1771
        %1785 = vmatprep.subr.bf16.mxu0 0
        %1786 = vmatpush1.bf16.msra.mxu0 %v1772
        %1787 = vmatprep.subr.bf16.mxu0 0
        %1788 = vmatpush1.bf16.msra.mxu0 %v1773
        %1789 = vmatprep.subr.bf16.mxu0 0
        %1790 = vmatpush1.bf16.msra.mxu0 0
        %1791 = vmatprep.subr.bf16.mxu0 0
        %1792 = vmatpush1.bf16.msra.mxu0 0
        %1793 = vmatprep.subr.bf16.mxu0 0
        %1794 = vmatpush1.bf16.msra.mxu0 0
        %1795 = vmatprep.subr.bf16.mxu0 0
        %1796 = vmatpush1.bf16.msra.mxu0 0
        %1797 = vmatprep.subr.bf16.mxu0 0
        %1798 = vmatpush1.bf16.msra.mxu0 0
        %1799 = vmatprep.subr.bf16.mxu0 0
        %1800 = vmatpush1.bf16.msra.mxu0 0
        %1801 = vmatprep.subr.bf16.mxu0 0
        %1802 = vmatpush1.bf16.msra.mxu0 0
        %1803 = vmatprep.subr.bf16.mxu0 0
        %1804 = vmatpush1.bf16.msra.mxu0 0
        %1805 = vmatprep.subr.bf16.mxu0 0
        %1806 = vmatpush1.bf16.msra.mxu0 0
        %1807 = vmatprep.subr.bf16.mxu0 0
        %1808 = vmatpush1.bf16.msra.mxu0 0
        %1809 = vmatprep.subr.bf16.mxu0 0
        %1810 = vmatpush1.bf16.msra.mxu0 0
        %1811 = vmatprep.subr.bf16.mxu0 0
        %1812 = vmatpush1.bf16.msra.mxu0 0
        %1813 = vmatprep.mubr.bf16.mxu0 0
        %1814 = vmatmul.mubr.bf16.gmra.mrb[0].mxu0 %v1779
        %v1815 = vpop.f32.mrb[0].mxu0
        %v1816 = vadd.f32 %v1753, %v1815
        %v1817 = vpop.f32.mrb[0].mxu0
        %v1818 = vpop.f32.mrb[0].mxu0
        %v1819 = vpop.f32.mrb[0].mxu0
        %1820 = vdwg.mxu0
        %v1821 = vmax.f32 %v1816, 0.0
        %v1822 = vld [vmem:[#allocation8 + $0x110] sm:$0xf]
        %v1823 = vld [vmem:[#allocation8 + $0x114] sm:$0xf]
        %v1824 = vld [vmem:[#allocation8 + $0x118] sm:$0xf]
        %v1825 = vld [vmem:[#allocation8 + $0x11c] sm:$0xf]
        %v1826 = vld [vmem:[#allocation8 + $0x120] sm:$0xf]
        %v1827 = vld [vmem:[#allocation8 + $0x124] sm:$0xf]
        %v1828 = vld [vmem:[#allocation8 + $0x128] sm:$0xf]
        %v1829 = vld [vmem:[#allocation8 + $0x12c] sm:$0xf]
        %v1830 = vld [vmem:[#allocation8 + $0x130] sm:$0xf]
        %v1831 = vld [vmem:[#allocation8 + $0x134] sm:$0xf]
        %v1832 = vld [vmem:[#allocation8 + $0x138] sm:$0xf]
        %v1833 = vld [vmem:[#allocation8 + $0x13c] sm:$0xf]
        %v1834 = vld [vmem:[#allocation8 + $0x140] sm:$0xf]
        %v1835 = vld [vmem:[#allocation8 + $0x144] sm:$0xf]
        %v1836 = vld [vmem:[#allocation8 + $0x148] sm:$0xf]
        %v1837 = vld [vmem:[#allocation8 + $0x14c] sm:$0xf]
        %v1838 = vpack.c.bf16 %v1821, %v1821
        %v1839 = vld [vmem:[#allocation10 + $0x21] sm:$0x1]
        %v1840 = vlaneseq
        %v1841 = vshrl.u32 %v1840, 7
        %v1842 = vsub.s32 0, %v1841
        %v1843 = vrot.slane %v1839, %v1842
        %v1860 = vunpack.c.l.b16 %v1822
        %v1861 = vunpack.c.l.b16 %v1823
        %v1862 = vunpack.c.l.b16 %v1824
        %v1863 = vunpack.c.l.b16 %v1825
        %v1864 = vunpack.c.l.b16 %v1826
        %v1865 = vunpack.c.l.b16 %v1827
        %v1866 = vunpack.c.l.b16 %v1828
        %v1867 = vunpack.c.l.b16 %v1829
        %v1868 = vunpack.c.l.b16 %v1830
        %v1869 = vunpack.c.l.b16 %v1831
        %v1870 = vunpack.c.l.b16 %v1832
        %v1871 = vunpack.c.l.b16 %v1833
        %v1872 = vunpack.c.l.b16 %v1834
        %v1873 = vunpack.c.l.b16 %v1835
        %v1874 = vunpack.c.l.b16 %v1836
        %v1875 = vunpack.c.l.b16 %v1837
        %v1876 = vpack.c.b16 %v1861, %v1860
        %v1877 = vpack.c.b16 %v1863, %v1862
        %v1878 = vpack.c.b16 %v1865, %v1864
        %v1879 = vpack.c.b16 %v1867, %v1866
        %v1880 = vpack.c.b16 %v1869, %v1868
        %v1881 = vpack.c.b16 %v1871, %v1870
        %v1882 = vpack.c.b16 %v1873, %v1872
        %v1883 = vpack.c.b16 %v1875, %v1874
        %1892 = vmatprep.subr.bf16.mxu0 0
        %1893 = vmatpush1.bf16.msra.mxu0 %v1876
        %1894 = vmatprep.subr.bf16.mxu0 0
        %1895 = vmatpush1.bf16.msra.mxu0 %v1877
        %1896 = vmatprep.subr.bf16.mxu0 0
        %1897 = vmatpush1.bf16.msra.mxu0 %v1878
        %1898 = vmatprep.subr.bf16.mxu0 0
        %1899 = vmatpush1.bf16.msra.mxu0 %v1879
        %1900 = vmatprep.subr.bf16.mxu0 0
        %1901 = vmatpush1.bf16.msra.mxu0 %v1880
        %1902 = vmatprep.subr.bf16.mxu0 0
        %1903 = vmatpush1.bf16.msra.mxu0 %v1881
        %1904 = vmatprep.subr.bf16.mxu0 0
        %1905 = vmatpush1.bf16.msra.mxu0 %v1882
        %1906 = vmatprep.subr.bf16.mxu0 0
        %1907 = vmatpush1.bf16.msra.mxu0 %v1883
        %1908 = vmatprep.subr.bf16.mxu0 0
        %1909 = vmatpush1.bf16.msra.mxu0 0
        %1910 = vmatprep.subr.bf16.mxu0 0
        %1911 = vmatpush1.bf16.msra.mxu0 0
        %1912 = vmatprep.subr.bf16.mxu0 0
        %1913 = vmatpush1.bf16.msra.mxu0 0
        %1914 = vmatprep.subr.bf16.mxu0 0
        %1915 = vmatpush1.bf16.msra.mxu0 0
        %1916 = vmatprep.subr.bf16.mxu0 0
        %1917 = vmatpush1.bf16.msra.mxu0 0
        %1918 = vmatprep.subr.bf16.mxu0 0
        %1919 = vmatpush1.bf16.msra.mxu0 0
        %1920 = vmatprep.subr.bf16.mxu0 0
        %1921 = vmatpush1.bf16.msra.mxu0 0
        %1922 = vmatprep.subr.bf16.mxu0 0
        %1923 = vmatpush1.bf16.msra.mxu0 0
        %1924 = vmatprep.mubr.bf16.mxu0 0
        %1925 = vmatmul.mubr.bf16.gmra.mrb[0].mxu0 %v1838
        %v1926 = vpop.f32.mrb[0].mxu0
        %v1927 = vadd.f32 %v1843, %v1926
        %v1928 = vpop.f32.mrb[0].mxu0
        %v1929 = vpop.f32.mrb[0].mxu0
        %v1930 = vpop.f32.mrb[0].mxu0
        %1931 = vdwg.mxu0
        %v1932 = vadd.f32 %v1739, %v1927
        %v1933 = vld [vmem:[#allocation10 + $0x28] sm:$0x1]
        %v1934 = vld [vmem:[#allocation10 + $0x29] sm:$0x1]
        %v1935 = vsel %vm440, %v1932, 0.0
        %1936 = vadd.xlane.f32.xlu0 %v1935
        %v1937 = vpop.xlane.xlu0 %1936
        %v1938 = vmul.f32 %v1937, %v994
        %v1939 = vsub.f32 %v1932, %v1938
        %v1940 = vmul.f32 %v1939, %v1939
        %v1941 = vsel %vm440, %v1940, 0.0
        %1942 = vadd.xlane.f32.xlu0 %v1941
        %v1943 = vpop.xlane.xlu0 %1942
        %v1944 = vmul.f32 %v1943, %v994
        %v1945 = vadd.f32 %v1944, 1e-06
        %v1946 = vrsqrt.pop %v1945
        %v1947 = vmul.f32 %v1939, %v1946
        %v1948 = vlaneseq
        %v1949 = vshrl.u32 %v1948, 7
        %v1950 = vsub.s32 0, %v1949
        %v1951 = vrot.slane %v1933, %v1950
        %v1952 = vmul.f32 %v1947, %v1951
        %v1953 = vlaneseq
        %v1954 = vshrl.u32 %v1953, 7
        %v1955 = vsub.s32 0, %v1954
        %v1956 = vrot.slane %v1934, %v1955
        %v1957 = vadd.f32 %v1952, %v1956
        %v1958 = vadd.f32 %v1957, %v385
        %v1959 = vpack.c.bf16 %v1958, %v1958
        %v1960 = vpack.c.bf16 %v1957, %v1957
        %v1961 = vld [vmem:[#allocation8 + $0x150] sm:$0xf]
        %v1962 = vld [vmem:[#allocation8 + $0x154] sm:$0xf]
        %v1963 = vld [vmem:[#allocation8 + $0x158] sm:$0xf]
        %v1964 = vld [vmem:[#allocation8 + $0x15c] sm:$0xf]
        %v1965 = vld [vmem:[#allocation8 + $0x160] sm:$0xf]
        %v1966 = vld [vmem:[#allocation8 + $0x164] sm:$0xf]
        %v1967 = vld [vmem:[#allocation8 + $0x168] sm:$0xf]
        %v1968 = vld [vmem:[#allocation8 + $0x16c] sm:$0xf]
        %v1969 = vld [vmem:[#allocation10 + $0x30] sm:$0x1]
        %v1970 = vlaneseq
        %v1971 = vshrl.u32 %v1970, 7
        %v1972 = vsub.s32 0, %v1971
        %v1973 = vrot.slane %v1969, %v1972
        %v1982 = vunpack.c.l.b16 %v1961
        %v1983 = vunpack.c.l.b16 %v1962
        %v1984 = vunpack.c.l.b16 %v1963
        %v1985 = vunpack.c.l.b16 %v1964
        %v1986 = vunpack.c.l.b16 %v1965
        %v1987 = vunpack.c.l.b16 %v1966
        %v1988 = vunpack.c.l.b16 %v1967
        %v1989 = vunpack.c.l.b16 %v1968
        %v1990 = vpack.c.b16 %v1983, %v1982
        %v1991 = vpack.c.b16 %v1985, %v1984
        %v1992 = vpack.c.b16 %v1987, %v1986
        %v1993 = vpack.c.b16 %v1989, %v1988
        %1998 = vmatprep.subr.bf16.mxu0 0
        %1999 = vmatpush1.bf16.msra.mxu0 %v1990
        %2000 = vmatprep.subr.bf16.mxu0 0
        %2001 = vmatpush1.bf16.msra.mxu0 %v1991
        %2002 = vmatprep.subr.bf16.mxu0 0
        %2003 = vmatpush1.bf16.msra.mxu0 %v1992
        %2004 = vmatprep.subr.bf16.mxu0 0
        %2005 = vmatpush1.bf16.msra.mxu0 %v1993
        %2006 = vmatprep.subr.bf16.mxu0 0
        %2007 = vmatpush1.bf16.msra.mxu0 0
        %2008 = vmatprep.subr.bf16.mxu0 0
        %2009 = vmatpush1.bf16.msra.mxu0 0
        %2010 = vmatprep.subr.bf16.mxu0 0
        %2011 = vmatpush1.bf16.msra.mxu0 0
        %2012 = vmatprep.subr.bf16.mxu0 0
        %2013 = vmatpush1.bf16.msra.mxu0 0
        %2014 = vmatprep.subr.bf16.mxu0 0
        %2015 = vmatpush1.bf16.msra.mxu0 0
        %2016 = vmatprep.subr.bf16.mxu0 0
        %2017 = vmatpush1.bf16.msra.mxu0 0
        %2018 = vmatprep.subr.bf16.mxu0 0
        %2019 = vmatpush1.bf16.msra.mxu0 0
        %2020 = vmatprep.subr.bf16.mxu0 0
        %2021 = vmatpush1.bf16.msra.mxu0 0
        %2022 = vmatprep.subr.bf16.mxu0 0
        %2023 = vmatpush1.bf16.msra.mxu0 0
        %2024 = vmatprep.subr.bf16.mxu0 0
        %2025 = vmatpush1.bf16.msra.mxu0 0
        %2026 = vmatprep.subr.bf16.mxu0 0
        %2027 = vmatpush1.bf16.msra.mxu0 0
        %2028 = vmatprep.subr.bf16.mxu0 0
        %2029 = vmatpush1.bf16.msra.mxu0 0
        %2030 = vmatprep.mubr.bf16.mxu0 0
        %2031 = vmatmul.mubr.bf16.gmra.mrb[0].mxu0 %v1151
        %v2032 = vpop.f32.mrb[0].mxu0
        %v2033 = vadd.f32 %v1973, %v2032
        %v2034 = vpop.f32.mrb[0].mxu0
        %v2035 = vpop.f32.mrb[0].mxu0
        %v2036 = vadd.f32 %v1973, %v2035
        %v2037 = vpop.f32.mrb[0].mxu0
        %2038 = vmatprep.mubr.bf16.mxu0 0
        %2039 = vmatmul.mubr.bf16.gmra.mrb[0].mxu0 %v1154
        %v2040 = vpop.f32.mrb[0].mxu0
        %v2041 = vadd.f32 %v1973, %v2040
        %v2042 = vpop.f32.mrb[0].mxu0
        %v2043 = vpop.f32.mrb[0].mxu0
        %v2044 = vadd.f32 %v1973, %v2043
        %v2045 = vpop.f32.mrb[0].mxu0
        %2046 = vmatprep.mubr.bf16.mxu0 0
        %2047 = vmatmul.mubr.bf16.gmra.mrb[0].mxu0 %v1157
        %v2048 = vpop.f32.mrb[0].mxu0
        %v2049 = vadd.f32 %v1973, %v2048
        %v2050 = vpop.f32.mrb[0].mxu0
        %v2051 = vpop.f32.mrb[0].mxu0
        %v2052 = vadd.f32 %v1973, %v2051
        %v2053 = vpop.f32.mrb[0].mxu0
        %2054 = vmatprep.mubr.bf16.mxu0 0
        %2055 = vmatmul.mubr.bf16.gmra.mrb[0].mxu0 %v1160
        %v2056 = vpop.f32.mrb[0].mxu0
        %v2057 = vadd.f32 %v1973, %v2056
        %v2058 = vpop.f32.mrb[0].mxu0
        %v2059 = vpop.f32.mrb[0].mxu0
        %v2060 = vadd.f32 %v1973, %v2059
        %v2061 = vpop.f32.mrb[0].mxu0
        %2062 = vdwg.mxu0
        %v2063 = vld [vmem:[#allocation8 + $0x170] sm:$0xf]
        %v2064 = vld [vmem:[#allocation8 + $0x174] sm:$0xf]
        %v2065 = vld [vmem:[#allocation8 + $0x178] sm:$0xf]
        %v2066 = vld [vmem:[#allocation8 + $0x17c] sm:$0xf]
        %v2067 = vld [vmem:[#allocation8 + $0x180] sm:$0xf]
        %v2068 = vld [vmem:[#allocation8 + $0x184] sm:$0xf]
        %v2069 = vld [vmem:[#allocation8 + $0x188] sm:$0xf]
        %v2070 = vld [vmem:[#allocation8 + $0x18c] sm:$0xf]
        %v2071 = vld [vmem:[#allocation10 + $0x31] sm:$0x1]
        %v2072 = vlaneseq
        %v2073 = vshrl.u32 %v2072, 7
        %v2074 = vsub.s32 0, %v2073
        %v2075 = vrot.slane %v2071, %v2074
        %v2084 = vunpack.c.l.b16 %v2063
        %v2085 = vunpack.c.l.b16 %v2064
        %v2086 = vunpack.c.l.b16 %v2065
        %v2087 = vunpack.c.l.b16 %v2066
        %v2088 = vunpack.c.l.b16 %v2067
        %v2089 = vunpack.c.l.b16 %v2068
        %v2090 = vunpack.c.l.b16 %v2069
        %v2091 = vunpack.c.l.b16 %v2070
        %v2092 = vpack.c.b16 %v2085, %v2084
        %v2093 = vpack.c.b16 %v2087, %v2086
        %v2094 = vpack.c.b16 %v2089, %v2088
        %v2095 = vpack.c.b16 %v2091, %v2090
        %v2101 = vsel %vm440, %v1959, 0
        %2103 = vmatprep.subr.bf16.mxu0 0
        %2104 = vmatpush1.bf16.msra.mxu0 %v2092
        %2105 = vmatprep.subr.bf16.mxu0 0
        %2106 = vmatpush1.bf16.msra.mxu0 %v2093
        %2107 = vmatprep.subr.bf16.mxu0 0
        %2108 = vmatpush1.bf16.msra.mxu0 %v2094
        %2109 = vmatprep.subr.bf16.mxu0 0
        %2110 = vmatpush1.bf16.msra.mxu0 %v2095
        %2111 = vmatprep.subr.bf16.mxu0 0
        %2112 = vmatpush1.bf16.msra.mxu0 0
        %2113 = vmatprep.subr.bf16.mxu0 0
        %2114 = vmatpush1.bf16.msra.mxu0 0
        %2115 = vmatprep.subr.bf16.mxu0 0
        %2116 = vmatpush1.bf16.msra.mxu0 0
        %2117 = vmatprep.subr.bf16.mxu0 0
        %2118 = vmatpush1.bf16.msra.mxu0 0
        %2119 = vmatprep.subr.bf16.mxu0 0
        %2120 = vmatpush1.bf16.msra.mxu0 0
        %2121 = vmatprep.subr.bf16.mxu0 0
        %2122 = vmatpush1.bf16.msra.mxu0 0
        %2123 = vmatprep.subr.bf16.mxu0 0
        %2124 = vmatpush1.bf16.msra.mxu0 0
        %2125 = vmatprep.subr.bf16.mxu0 0
        %2126 = vmatpush1.bf16.msra.mxu0 0
        %2127 = vmatprep.subr.bf16.mxu0 0
        %2128 = vmatpush1.bf16.msra.mxu0 0
        %2129 = vmatprep.subr.bf16.mxu0 0
        %2130 = vmatpush1.bf16.msra.mxu0 0
        %2131 = vmatprep.subr.bf16.mxu0 0
        %2132 = vmatpush1.bf16.msra.mxu0 0
        %2133 = vmatprep.subr.bf16.mxu0 0
        %2134 = vmatpush1.bf16.msra.mxu0 0
        %2135 = vmatprep.mubr.bf16.mxu0 0
        %2136 = vmatmul.mubr.bf16.gmra.mrb[0].mxu0 %v2101
        %v2137 = vpop.f32.mrb[0].mxu0
        %v2138 = vadd.f32 %v2075, %v2137
        %v2139 = vpop.f32.mrb[0].mxu0
        %v2140 = vpop.f32.mrb[0].mxu0
        %v2141 = vpop.f32.mrb[0].mxu0
        %2142 = vdwg.mxu0
        %v2143 = vld [vmem:[#allocation8 + $0x190] sm:$0xf]
        %v2144 = vld [vmem:[#allocation8 + $0x194] sm:$0xf]
        %v2145 = vld [vmem:[#allocation8 + $0x198] sm:$0xf]
        %v2146 = vld [vmem:[#allocation8 + $0x19c] sm:$0xf]
        %v2147 = vld [vmem:[#allocation8 + $0x1a0] sm:$0xf]
        %v2148 = vld [vmem:[#allocation8 + $0x1a4] sm:$0xf]
        %v2149 = vld [vmem:[#allocation8 + $0x1a8] sm:$0xf]
        %v2150 = vld [vmem:[#allocation8 + $0x1ac] sm:$0xf]
        %v2151 = vld [vmem:[#allocation10 + $0x32] sm:$0x1]
        %v2152 = vlaneseq
        %v2153 = vshrl.u32 %v2152, 7
        %v2154 = vsub.s32 0, %v2153
        %v2155 = vrot.slane %v2151, %v2154
        %v2164 = vunpack.c.l.b16 %v2143
        %v2165 = vunpack.c.l.b16 %v2144
        %v2166 = vunpack.c.l.b16 %v2145
        %v2167 = vunpack.c.l.b16 %v2146
        %v2168 = vunpack.c.l.b16 %v2147
        %v2169 = vunpack.c.l.b16 %v2148
        %v2170 = vunpack.c.l.b16 %v2149
        %v2171 = vunpack.c.l.b16 %v2150
        %v2172 = vpack.c.b16 %v2165, %v2164
        %v2173 = vpack.c.b16 %v2167, %v2166
        %v2174 = vpack.c.b16 %v2169, %v2168
        %v2175 = vpack.c.b16 %v2171, %v2170
        %v2181 = vsel %vm440, %v1960, 0
        %2183 = vmatprep.subr.bf16.mxu0 0
        %2184 = vmatpush1.bf16.msra.mxu0 %v2172
        %2185 = vmatprep.subr.bf16.mxu0 0
        %2186 = vmatpush1.bf16.msra.mxu0 %v2173
        %2187 = vmatprep.subr.bf16.mxu0 0
        %2188 = vmatpush1.bf16.msra.mxu0 %v2174
        %2189 = vmatprep.subr.bf16.mxu0 0
        %2190 = vmatpush1.bf16.msra.mxu0 %v2175
        %2191 = vmatprep.subr.bf16.mxu0 0
        %2192 = vmatpush1.bf16.msra.mxu0 0
        %2193 = vmatprep.subr.bf16.mxu0 0
        %2194 = vmatpush1.bf16.msra.mxu0 0
        %2195 = vmatprep.subr.bf16.mxu0 0
        %2196 = vmatpush1.bf16.msra.mxu0 0
        %2197 = vmatprep.subr.bf16.mxu0 0
        %2198 = vmatpush1.bf16.msra.mxu0 0
        %2199 = vmatprep.subr.bf16.mxu0 0
        %2200 = vmatpush1.bf16.msra.mxu0 0
        %2201 = vmatprep.subr.bf16.mxu0 0
        %2202 = vmatpush1.bf16.msra.mxu0 0
        %2203 = vmatprep.subr.bf16.mxu0 0
        %2204 = vmatpush1.bf16.msra.mxu0 0
        %2205 = vmatprep.subr.bf16.mxu0 0
        %2206 = vmatpush1.bf16.msra.mxu0 0
        %2207 = vmatprep.subr.bf16.mxu0 0
        %2208 = vmatpush1.bf16.msra.mxu0 0
        %2209 = vmatprep.subr.bf16.mxu0 0
        %2210 = vmatpush1.bf16.msra.mxu0 0
        %2211 = vmatprep.subr.bf16.mxu0 0
        %2212 = vmatpush1.bf16.msra.mxu0 0
        %2213 = vmatprep.subr.bf16.mxu0 0
        %2214 = vmatpush1.bf16.msra.mxu0 0
        %2215 = vmatprep.mubr.bf16.mxu0 0
        %2216 = vmatmul.mubr.bf16.gmra.mrb[0].mxu0 %v2181
        %v2217 = vpop.f32.mrb[0].mxu0
        %v2218 = vadd.f32 %v2155, %v2217
        %v2219 = vpop.f32.mrb[0].mxu0
        %v2220 = vpop.f32.mrb[0].mxu0
        %v2221 = vpop.f32.mrb[0].mxu0
        %2222 = vdwg.mxu0
        %v2223 = vpack.c.bf16 %v2036, %v2033
        %v2224 = vpack.c.bf16 %v2044, %v2041
        %v2225 = vpack.c.bf16 %v2052, %v2049
        %v2226 = vpack.c.bf16 %v2060, %v2057
        %v2227 = vpack.c.bf16 %v2138, %v2138
        %v2229 = vsel %vm1346, %v2223, 0
        %v2232 = vsel %vm1346, %v2224, 0
        %v2235 = vsel %vm1346, %v2225, 0
        %v2238 = vsel %vm1346, %v2226, 0
        %v2241 = vsel %vm1346, %v2227, 0
        %2243 = vmatprep.subr.bf16.mxu0 0
        %2244 = vmatpush1.bf16.xpose.msra.mxu0 %v2241
        %2245 = vmatprep.subr.bf16.mxu0 0
        %2246 = vmatpush1.bf16.xpose.msra.mxu0 0
        %2247 = vmatprep.subr.bf16.mxu0 0
        %2248 = vmatpush1.bf16.xpose.msra.mxu0 0
        %2249 = vmatprep.subr.bf16.mxu0 0
        %2250 = vmatpush1.bf16.xpose.msra.mxu0 0
        %2251 = vmatprep.subr.bf16.mxu0 0
        %2252 = vmatpush1.bf16.xpose.msra.mxu0 0
        %2253 = vmatprep.subr.bf16.mxu0 0
        %2254 = vmatpush1.bf16.xpose.msra.mxu0 0
        %2255 = vmatprep.subr.bf16.mxu0 0
        %2256 = vmatpush1.bf16.xpose.msra.mxu0 0
        %2257 = vmatprep.subr.bf16.mxu0 0
        %2258 = vmatpush1.bf16.xpose.msra.mxu0 0
        %2259 = vmatprep.subr.bf16.mxu0 0
        %2260 = vmatpush1.bf16.xpose.msra.mxu0 0
        %2261 = vmatprep.subr.bf16.mxu0 0
        %2262 = vmatpush1.bf16.xpose.msra.mxu0 0
        %2263 = vmatprep.subr.bf16.mxu0 0
        %2264 = vmatpush1.bf16.xpose.msra.mxu0 0
        %2265 = vmatprep.subr.bf16.mxu0 0
        %2266 = vmatpush1.bf16.xpose.msra.mxu0 0
        %2267 = vmatprep.subr.bf16.mxu0 0
        %2268 = vmatpush1.bf16.xpose.msra.mxu0 0
        %2269 = vmatprep.subr.bf16.mxu0 0
        %2270 = vmatpush1.bf16.xpose.msra.mxu0 0
        %2271 = vmatprep.subr.bf16.mxu0 0
        %2272 = vmatpush1.bf16.xpose.msra.mxu0 0
        %2273 = vmatprep.subr.bf16.mxu0 0
        %2274 = vmatpush1.bf16.xpose.msra.mxu0 0
        %2275 = vmatprep.mubr.bf16.mxu0 0
        %2276 = vmatmul.mubr.bf16.gmra.mrb[0].mxu0 %v2229
        %v2277 = vpop.f32.mrb[0].mxu0
        %v2278 = vadd.f32 0.0, %v2277
        %v2279 = vpop.f32.mrb[0].mxu0
        %v2280 = vpop.f32.mrb[0].mxu0
        %v2281 = vadd.f32 0.0, %v2280
        %v2282 = vpop.f32.mrb[0].mxu0
        %2283 = vmatprep.mubr.bf16.mxu0 0
        %2284 = vmatmul.mubr.bf16.gmra.mrb[0].mxu0 %v2232
        %v2285 = vpop.f32.mrb[0].mxu0
        %v2286 = vadd.f32 0.0, %v2285
        %v2287 = vpop.f32.mrb[0].mxu0
        %v2288 = vpop.f32.mrb[0].mxu0
        %v2289 = vadd.f32 0.0, %v2288
        %v2290 = vpop.f32.mrb[0].mxu0
        %2291 = vmatprep.mubr.bf16.mxu0 0
        %2292 = vmatmul.mubr.bf16.gmra.mrb[0].mxu0 %v2235
        %v2293 = vpop.f32.mrb[0].mxu0
        %v2294 = vadd.f32 0.0, %v2293
        %v2295 = vpop.f32.mrb[0].mxu0
        %v2296 = vpop.f32.mrb[0].mxu0
        %v2297 = vadd.f32 0.0, %v2296
        %v2298 = vpop.f32.mrb[0].mxu0
        %2299 = vmatprep.mubr.bf16.mxu0 0
        %2300 = vmatmul.mubr.bf16.gmra.mrb[0].mxu0 %v2238
        %v2301 = vpop.f32.mrb[0].mxu0
        %v2302 = vadd.f32 0.0, %v2301
        %v2303 = vpop.f32.mrb[0].mxu0
        %v2304 = vpop.f32.mrb[0].mxu0
        %v2305 = vadd.f32 0.0, %v2304
        %v2306 = vpop.f32.mrb[0].mxu0
        %2307 = vdwg.mxu0
        %v2308 = vmul.f32 %v2278, 0.25
        %v2309 = vmul.f32 %v2281, 0.25
        %v2310 = vmul.f32 %v2286, 0.25
        %v2311 = vmul.f32 %v2289, 0.25
        %v2312 = vmul.f32 %v2294, 0.25
        %v2313 = vmul.f32 %v2297, 0.25
        %v2314 = vmul.f32 %v2302, 0.25
        %v2315 = vmul.f32 %v2305, 0.25
        %v2316 = vsel %vm688, %v2308, -inf
        %2317 = vmax.xlane.f32.xlu0 %v2316
        %v2318 = vpop.xlane.xlu0 %2317
        %v2319 = vsel %vm688, %v2309, -inf
        %2320 = vmax.xlane.f32.xlu0 %v2319
        %v2321 = vpop.xlane.xlu0 %2320
        %v2322 = vsel %vm688, %v2310, -inf
        %2323 = vmax.xlane.f32.xlu0 %v2322
        %v2324 = vpop.xlane.xlu0 %2323
        %v2325 = vsel %vm688, %v2311, -inf
        %2326 = vmax.xlane.f32.xlu0 %v2325
        %v2327 = vpop.xlane.xlu0 %2326
        %v2328 = vsel %vm688, %v2312, -inf
        %2329 = vmax.xlane.f32.xlu0 %v2328
        %v2330 = vpop.xlane.xlu0 %2329
        %v2331 = vsel %vm688, %v2313, -inf
        %2332 = vmax.xlane.f32.xlu0 %v2331
        %v2333 = vpop.xlane.xlu0 %2332
        %v2334 = vsel %vm688, %v2314, -inf
        %2335 = vmax.xlane.f32.xlu0 %v2334
        %v2336 = vpop.xlane.xlu0 %2335
        %v2337 = vsel %vm688, %v2315, -inf
        %2338 = vmax.xlane.f32.xlu0 %v2337
        %v2339 = vpop.xlane.xlu0 %2338
        %v2340 = vsub.f32 %v2308, %v2318
        %v2341 = vsub.f32 %v2309, %v2321
        %v2342 = vsub.f32 %v2310, %v2324
        %v2343 = vsub.f32 %v2311, %v2327
        %v2344 = vsub.f32 %v2312, %v2330
        %v2345 = vsub.f32 %v2313, %v2333
        %v2346 = vsub.f32 %v2314, %v2336
        %v2347 = vsub.f32 %v2315, %v2339
        %v2348 = vmul.f32 %v2340, 1.442695
        %v2349 = vpow.pop %v2348
        %v2350 = vmul.f32 %v2341, 1.442695
        %v2351 = vpow.pop %v2350
        %v2352 = vmul.f32 %v2342, 1.442695
        %v2353 = vpow.pop %v2352
        %v2354 = vmul.f32 %v2343, 1.442695
        %v2355 = vpow.pop %v2354
        %v2356 = vmul.f32 %v2344, 1.442695
        %v2357 = vpow.pop %v2356
        %v2358 = vmul.f32 %v2345, 1.442695
        %v2359 = vpow.pop %v2358
        %v2360 = vmul.f32 %v2346, 1.442695
        %v2361 = vpow.pop %v2360
        %v2362 = vmul.f32 %v2347, 1.442695
        %v2363 = vpow.pop %v2362
        %v2364 = vsel %vm688, %v2349, 0.0
        %2365 = vadd.xlane.f32.xlu0 %v2364
        %v2366 = vpop.xlane.xlu0 %2365
        %v2367 = vsel %vm688, %v2351, 0.0
        %2368 = vadd.xlane.f32.xlu0 %v2367
        %v2369 = vpop.xlane.xlu0 %2368
        %v2370 = vsel %vm688, %v2353, 0.0
        %2371 = vadd.xlane.f32.xlu0 %v2370
        %v2372 = vpop.xlane.xlu0 %2371
        %v2373 = vsel %vm688, %v2355, 0.0
        %2374 = vadd.xlane.f32.xlu0 %v2373
        %v2375 = vpop.xlane.xlu0 %2374
        %v2376 = vsel %vm688, %v2357, 0.0
        %2377 = vadd.xlane.f32.xlu0 %v2376
        %v2378 = vpop.xlane.xlu0 %2377
        %v2379 = vsel %vm688, %v2359, 0.0
        %2380 = vadd.xlane.f32.xlu0 %v2379
        %v2381 = vpop.xlane.xlu0 %2380
        %v2382 = vsel %vm688, %v2361, 0.0
        %2383 = vadd.xlane.f32.xlu0 %v2382
        %v2384 = vpop.xlane.xlu0 %2383
        %v2385 = vsel %vm688, %v2363, 0.0
        %2386 = vadd.xlane.f32.xlu0 %v2385
        %v2387 = vpop.xlane.xlu0 %2386
        %v2388 = vrcp.pop %v2366
        %v2389 = vrcp.pop %v2369
        %v2390 = vrcp.pop %v2372
        %v2391 = vrcp.pop %v2375
        %v2392 = vrcp.pop %v2378
        %v2393 = vrcp.pop %v2381
        %v2394 = vrcp.pop %v2384
        %v2395 = vrcp.pop %v2387
        %v2396 = vmul.f32 %v2349, %v2388
        %v2397 = vmul.f32 %v2351, %v2389
        %v2398 = vmul.f32 %v2353, %v2390
        %v2399 = vmul.f32 %v2355, %v2391
        %v2400 = vmul.f32 %v2357, %v2392
        %v2401 = vmul.f32 %v2359, %v2393
        %v2402 = vmul.f32 %v2361, %v2394
        %v2403 = vmul.f32 %v2363, %v2395
        %v2404 = vpack.c.bf16 %v2397, %v2396
        %v2405 = vpack.c.bf16 %v2399, %v2398
        %v2406 = vpack.c.bf16 %v2401, %v2400
        %v2407 = vpack.c.bf16 %v2403, %v2402
        %v2408 = vpack.c.bf16 %v2218, %v2218
        %v2410 = vsel %vm688, %v2404, 0
        %v2413 = vsel %vm688, %v2405, 0
        %v2416 = vsel %vm688, %v2406, 0
        %v2419 = vsel %vm688, %v2407, 0
        %v2422 = vsel %vm705, %v2408, 0
        %2424 = vmatprep.subr.bf16.mxu0 0
        %2425 = vmatpush1.bf16.msra.mxu0 %v2422
        %2426 = vmatprep.subr.bf16.mxu0 0
        %2427 = vmatpush1.bf16.msra.mxu0 0
        %2428 = vmatprep.subr.bf16.mxu0 0
        %2429 = vmatpush1.bf16.msra.mxu0 0
        %2430 = vmatprep.subr.bf16.mxu0 0
        %2431 = vmatpush1.bf16.msra.mxu0 0
        %2432 = vmatprep.subr.bf16.mxu0 0
        %2433 = vmatpush1.bf16.msra.mxu0 0
        %2434 = vmatprep.subr.bf16.mxu0 0
        %2435 = vmatpush1.bf16.msra.mxu0 0
        %2436 = vmatprep.subr.bf16.mxu0 0
        %2437 = vmatpush1.bf16.msra.mxu0 0
        %2438 = vmatprep.subr.bf16.mxu0 0
        %2439 = vmatpush1.bf16.msra.mxu0 0
        %2440 = vmatprep.subr.bf16.mxu0 0
        %2441 = vmatpush1.bf16.msra.mxu0 0
        %2442 = vmatprep.subr.bf16.mxu0 0
        %2443 = vmatpush1.bf16.msra.mxu0 0
        %2444 = vmatprep.subr.bf16.mxu0 0
        %2445 = vmatpush1.bf16.msra.mxu0 0
        %2446 = vmatprep.subr.bf16.mxu0 0
        %2447 = vmatpush1.bf16.msra.mxu0 0
        %2448 = vmatprep.subr.bf16.mxu0 0
        %2449 = vmatpush1.bf16.msra.mxu0 0
        %2450 = vmatprep.subr.bf16.mxu0 0
        %2451 = vmatpush1.bf16.msra.mxu0 0
        %2452 = vmatprep.subr.bf16.mxu0 0
        %2453 = vmatpush1.bf16.msra.mxu0 0
        %2454 = vmatprep.subr.bf16.mxu0 0
        %2455 = vmatpush1.bf16.msra.mxu0 0
        %2456 = vmatprep.mubr.bf16.mxu0 0
        %2457 = vmatmul.mubr.bf16.gmra.mrb[0].mxu0 %v2410
        %v2458 = vpop.f32.mrb[0].mxu0
        %v2459 = vadd.f32 0.0, %v2458
        %v2460 = vpop.f32.mrb[0].mxu0
        %v2461 = vpop.f32.mrb[0].mxu0
        %v2462 = vadd.f32 0.0, %v2461
        %v2463 = vpop.f32.mrb[0].mxu0
        %2464 = vmatprep.mubr.bf16.mxu0 0
        %2465 = vmatmul.mubr.bf16.gmra.mrb[0].mxu0 %v2413
        %v2466 = vpop.f32.mrb[0].mxu0
        %v2467 = vadd.f32 0.0, %v2466
        %v2468 = vpop.f32.mrb[0].mxu0
        %v2469 = vpop.f32.mrb[0].mxu0
        %v2470 = vadd.f32 0.0, %v2469
        %v2471 = vpop.f32.mrb[0].mxu0
        %2472 = vmatprep.mubr.bf16.mxu0 0
        %2473 = vmatmul.mubr.bf16.gmra.mrb[0].mxu0 %v2416
        %v2474 = vpop.f32.mrb[0].mxu0
        %v2475 = vadd.f32 0.0, %v2474
        %v2476 = vpop.f32.mrb[0].mxu0
        %v2477 = vpop.f32.mrb[0].mxu0
        %v2478 = vadd.f32 0.0, %v2477
        %v2479 = vpop.f32.mrb[0].mxu0
        %2480 = vmatprep.mubr.bf16.mxu0 0
        %2481 = vmatmul.mubr.bf16.gmra.mrb[0].mxu0 %v2419
        %v2482 = vpop.f32.mrb[0].mxu0
        %v2483 = vadd.f32 0.0, %v2482
        %v2484 = vpop.f32.mrb[0].mxu0
        %v2485 = vpop.f32.mrb[0].mxu0
        %v2486 = vadd.f32 0.0, %v2485
        %v2487 = vpop.f32.mrb[0].mxu0
        %2488 = vdwg.mxu0
        %v2489 = vld [vmem:[#allocation8 + $0x1b0] sm:$0xf]
        %v2490 = vld [vmem:[#allocation8 + $0x1b4] sm:$0xf]
        %v2491 = vpack.c.bf16 %v2462, %v2459
        %v2492 = vpack.c.bf16 %v2470, %v2467
        %v2493 = vpack.c.bf16 %v2478, %v2475
        %v2494 = vpack.c.bf16 %v2486, %v2483
        %2499 = vrot.lane.b32.xlu0 %v2223, 112
        %v2500 = vpop.permute.xlu0 %2499
        %2501 = vrot.lane.b32.xlu0 %v2224, 112
        %v2502 = vpop.permute.xlu0 %2501
        %2503 = vrot.lane.b32.xlu0 %v2225, 112
        %v2504 = vpop.permute.xlu0 %2503
        %2505 = vrot.lane.b32.xlu0 %v2226, 112
        %v2506 = vpop.permute.xlu0 %2505
        %2508 = vrot.lane.b32.xlu0 %v2227, 112
        %v2509 = vpop.permute.xlu0 %2508
        %v2511 = vsel %vm1346, %v2500, 0
        %v2514 = vsel %vm1346, %v2502, 0
        %v2517 = vsel %vm1346, %v2504, 0
        %v2520 = vsel %vm1346, %v2506, 0
        %v2523 = vsel %vm1346, %v2509, 0
        %2525 = vmatprep.subr.bf16.mxu0 0
        %2526 = vmatpush1.bf16.xpose.msra.mxu0 %v2523
        %2527 = vmatprep.subr.bf16.mxu0 0
        %2528 = vmatpush1.bf16.xpose.msra.mxu0 0
        %2529 = vmatprep.subr.bf16.mxu0 0
        %2530 = vmatpush1.bf16.xpose.msra.mxu0 0
        %2531 = vmatprep.subr.bf16.mxu0 0
        %2532 = vmatpush1.bf16.xpose.msra.mxu0 0
        %2533 = vmatprep.subr.bf16.mxu0 0
        %2534 = vmatpush1.bf16.xpose.msra.mxu0 0
        %2535 = vmatprep.subr.bf16.mxu0 0
        %2536 = vmatpush1.bf16.xpose.msra.mxu0 0
        %2537 = vmatprep.subr.bf16.mxu0 0
        %2538 = vmatpush1.bf16.xpose.msra.mxu0 0
        %2539 = vmatprep.subr.bf16.mxu0 0
        %2540 = vmatpush1.bf16.xpose.msra.mxu0 0
        %2541 = vmatprep.subr.bf16.mxu0 0
        %2542 = vmatpush1.bf16.xpose.msra.mxu0 0
        %2543 = vmatprep.subr.bf16.mxu0 0
        %2544 = vmatpush1.bf16.xpose.msra.mxu0 0
        %2545 = vmatprep.subr.bf16.mxu0 0
        %2546 = vmatpush1.bf16.xpose.msra.mxu0 0
        %2547 = vmatprep.subr.bf16.mxu0 0
        %2548 = vmatpush1.bf16.xpose.msra.mxu0 0
        %2549 = vmatprep.subr.bf16.mxu0 0
        %2550 = vmatpush1.bf16.xpose.msra.mxu0 0
        %2551 = vmatprep.subr.bf16.mxu0 0
        %2552 = vmatpush1.bf16.xpose.msra.mxu0 0
        %2553 = vmatprep.subr.bf16.mxu0 0
        %2554 = vmatpush1.bf16.xpose.msra.mxu0 0
        %2555 = vmatprep.subr.bf16.mxu0 0
        %2556 = vmatpush1.bf16.xpose.msra.mxu0 0
        %2557 = vmatprep.mubr.bf16.mxu0 0
        %2558 = vmatmul.mubr.bf16.gmra.mrb[0].mxu0 %v2511
        %v2559 = vpop.f32.mrb[0].mxu0
        %v2560 = vadd.f32 0.0, %v2559
        %v2561 = vpop.f32.mrb[0].mxu0
        %v2562 = vpop.f32.mrb[0].mxu0
        %v2563 = vadd.f32 0.0, %v2562
        %v2564 = vpop.f32.mrb[0].mxu0
        %2565 = vmatprep.mubr.bf16.mxu0 0
        %2566 = vmatmul.mubr.bf16.gmra.mrb[0].mxu0 %v2514
        %v2567 = vpop.f32.mrb[0].mxu0
        %v2568 = vadd.f32 0.0, %v2567
        %v2569 = vpop.f32.mrb[0].mxu0
        %v2570 = vpop.f32.mrb[0].mxu0
        %v2571 = vadd.f32 0.0, %v2570
        %v2572 = vpop.f32.mrb[0].mxu0
        %2573 = vmatprep.mubr.bf16.mxu0 0
        %2574 = vmatmul.mubr.bf16.gmra.mrb[0].mxu0 %v2517
        %v2575 = vpop.f32.mrb[0].mxu0
        %v2576 = vadd.f32 0.0, %v2575
        %v2577 = vpop.f32.mrb[0].mxu0
        %v2578 = vpop.f32.mrb[0].mxu0
        %v2579 = vadd.f32 0.0, %v2578
        %v2580 = vpop.f32.mrb[0].mxu0
        %2581 = vmatprep.mubr.bf16.mxu0 0
        %2582 = vmatmul.mubr.bf16.gmra.mrb[0].mxu0 %v2520
        %v2583 = vpop.f32.mrb[0].mxu0
        %v2584 = vadd.f32 0.0, %v2583
        %v2585 = vpop.f32.mrb[0].mxu0
        %v2586 = vpop.f32.mrb[0].mxu0
        %v2587 = vadd.f32 0.0, %v2586
        %v2588 = vpop.f32.mrb[0].mxu0
        %2589 = vdwg.mxu0
        %v2590 = vmul.f32 %v2560, 0.25
        %v2591 = vmul.f32 %v2563, 0.25
        %v2592 = vmul.f32 %v2568, 0.25
        %v2593 = vmul.f32 %v2571, 0.25
        %v2594 = vmul.f32 %v2576, 0.25
        %v2595 = vmul.f32 %v2579, 0.25
        %v2596 = vmul.f32 %v2584, 0.25
        %v2597 = vmul.f32 %v2587, 0.25
        %v2598 = vsel %vm688, %v2590, -inf
        %2599 = vmax.xlane.f32.xlu0 %v2598
        %v2600 = vpop.xlane.xlu0 %2599
        %v2601 = vsel %vm688, %v2591, -inf
        %2602 = vmax.xlane.f32.xlu0 %v2601
        %v2603 = vpop.xlane.xlu0 %2602
        %v2604 = vsel %vm688, %v2592, -inf
        %2605 = vmax.xlane.f32.xlu0 %v2604
        %v2606 = vpop.xlane.xlu0 %2605
        %v2607 = vsel %vm688, %v2593, -inf
        %2608 = vmax.xlane.f32.xlu0 %v2607
        %v2609 = vpop.xlane.xlu0 %2608
        %v2610 = vsel %vm688, %v2594, -inf
        %2611 = vmax.xlane.f32.xlu0 %v2610
        %v2612 = vpop.xlane.xlu0 %2611
        %v2613 = vsel %vm688, %v2595, -inf
        %2614 = vmax.xlane.f32.xlu0 %v2613
        %v2615 = vpop.xlane.xlu0 %2614
        %v2616 = vsel %vm688, %v2596, -inf
        %2617 = vmax.xlane.f32.xlu0 %v2616
        %v2618 = vpop.xlane.xlu0 %2617
        %v2619 = vsel %vm688, %v2597, -inf
        %2620 = vmax.xlane.f32.xlu0 %v2619
        %v2621 = vpop.xlane.xlu0 %2620
        %v2622 = vsub.f32 %v2590, %v2600
        %v2623 = vsub.f32 %v2591, %v2603
        %v2624 = vsub.f32 %v2592, %v2606
        %v2625 = vsub.f32 %v2593, %v2609
        %v2626 = vsub.f32 %v2594, %v2612
        %v2627 = vsub.f32 %v2595, %v2615
        %v2628 = vsub.f32 %v2596, %v2618
        %v2629 = vsub.f32 %v2597, %v2621
        %v2630 = vmul.f32 %v2622, 1.442695
        %v2631 = vpow.pop %v2630
        %v2632 = vmul.f32 %v2623, 1.442695
        %v2633 = vpow.pop %v2632
        %v2634 = vmul.f32 %v2624, 1.442695
        %v2635 = vpow.pop %v2634
        %v2636 = vmul.f32 %v2625, 1.442695
        %v2637 = vpow.pop %v2636
        %v2638 = vmul.f32 %v2626, 1.442695
        %v2639 = vpow.pop %v2638
        %v2640 = vmul.f32 %v2627, 1.442695
        %v2641 = vpow.pop %v2640
        %v2642 = vmul.f32 %v2628, 1.442695
        %v2643 = vpow.pop %v2642
        %v2644 = vmul.f32 %v2629, 1.442695
        %v2645 = vpow.pop %v2644
        %v2646 = vsel %vm688, %v2631, 0.0
        %2647 = vadd.xlane.f32.xlu0 %v2646
        %v2648 = vpop.xlane.xlu0 %2647
        %v2649 = vsel %vm688, %v2633, 0.0
        %2650 = vadd.xlane.f32.xlu0 %v2649
        %v2651 = vpop.xlane.xlu0 %2650
        %v2652 = vsel %vm688, %v2635, 0.0
        %2653 = vadd.xlane.f32.xlu0 %v2652
        %v2654 = vpop.xlane.xlu0 %2653
        %v2655 = vsel %vm688, %v2637, 0.0
        %2656 = vadd.xlane.f32.xlu0 %v2655
        %v2657 = vpop.xlane.xlu0 %2656
        %v2658 = vsel %vm688, %v2639, 0.0
        %2659 = vadd.xlane.f32.xlu0 %v2658
        %v2660 = vpop.xlane.xlu0 %2659
        %v2661 = vsel %vm688, %v2641, 0.0
        %2662 = vadd.xlane.f32.xlu0 %v2661
        %v2663 = vpop.xlane.xlu0 %2662
        %v2664 = vsel %vm688, %v2643, 0.0
        %2665 = vadd.xlane.f32.xlu0 %v2664
        %v2666 = vpop.xlane.xlu0 %2665
        %v2667 = vsel %vm688, %v2645, 0.0
        %2668 = vadd.xlane.f32.xlu0 %v2667
        %v2669 = vpop.xlane.xlu0 %2668
        %v2670 = vrcp.pop %v2648
        %v2671 = vrcp.pop %v2651
        %v2672 = vrcp.pop %v2654
        %v2673 = vrcp.pop %v2657
        %v2674 = vrcp.pop %v2660
        %v2675 = vrcp.pop %v2663
        %v2676 = vrcp.pop %v2666
        %v2677 = vrcp.pop %v2669
        %v2678 = vmul.f32 %v2631, %v2670
        %v2679 = vmul.f32 %v2633, %v2671
        %v2680 = vmul.f32 %v2635, %v2672
        %v2681 = vmul.f32 %v2637, %v2673
        %v2682 = vmul.f32 %v2639, %v2674
        %v2683 = vmul.f32 %v2641, %v2675
        %v2684 = vmul.f32 %v2643, %v2676
        %v2685 = vmul.f32 %v2645, %v2677
        %v2686 = vpack.c.bf16 %v2679, %v2678
        %v2687 = vpack.c.bf16 %v2681, %v2680
        %v2688 = vpack.c.bf16 %v2683, %v2682
        %v2689 = vpack.c.bf16 %v2685, %v2684
        %2691 = vrot.lane.b32.xlu0 %v2408, 112
        %v2692 = vpop.permute.xlu0 %2691
        %v2694 = vsel %vm688, %v2686, 0
        %v2697 = vsel %vm688, %v2687, 0
        %v2700 = vsel %vm688, %v2688, 0
        %v2703 = vsel %vm688, %v2689, 0
        %v2706 = vsel %vm705, %v2692, 0
        %2708 = vmatprep.subr.bf16.mxu0 0
        %2709 = vmatpush1.bf16.msra.mxu0 %v2706
        %2710 = vmatprep.subr.bf16.mxu0 0
        %2711 = vmatpush1.bf16.msra.mxu0 0
        %2712 = vmatprep.subr.bf16.mxu0 0
        %2713 = vmatpush1.bf16.msra.mxu0 0
        %2714 = vmatprep.subr.bf16.mxu0 0
        %2715 = vmatpush1.bf16.msra.mxu0 0
        %2716 = vmatprep.subr.bf16.mxu0 0
        %2717 = vmatpush1.bf16.msra.mxu0 0
        %2718 = vmatprep.subr.bf16.mxu0 0
        %2719 = vmatpush1.bf16.msra.mxu0 0
        %2720 = vmatprep.subr.bf16.mxu0 0
        %2721 = vmatpush1.bf16.msra.mxu0 0
        %2722 = vmatprep.subr.bf16.mxu0 0
        %2723 = vmatpush1.bf16.msra.mxu0 0
        %2724 = vmatprep.subr.bf16.mxu0 0
        %2725 = vmatpush1.bf16.msra.mxu0 0
        %2726 = vmatprep.subr.bf16.mxu0 0
        %2727 = vmatpush1.bf16.msra.mxu0 0
        %2728 = vmatprep.subr.bf16.mxu0 0
        %2729 = vmatpush1.bf16.msra.mxu0 0
        %2730 = vmatprep.subr.bf16.mxu0 0
        %2731 = vmatpush1.bf16.msra.mxu0 0
        %2732 = vmatprep.subr.bf16.mxu0 0
        %2733 = vmatpush1.bf16.msra.mxu0 0
        %2734 = vmatprep.subr.bf16.mxu0 0
        %2735 = vmatpush1.bf16.msra.mxu0 0
        %2736 = vmatprep.subr.bf16.mxu0 0
        %2737 = vmatpush1.bf16.msra.mxu0 0
        %2738 = vmatprep.subr.bf16.mxu0 0
        %2739 = vmatpush1.bf16.msra.mxu0 0
        %2740 = vmatprep.mubr.bf16.mxu0 0
        %2741 = vmatmul.mubr.bf16.gmra.mrb[0].mxu0 %v2694
        %v2742 = vpop.f32.mrb[0].mxu0
        %v2743 = vadd.f32 0.0, %v2742
        %v2744 = vpop.f32.mrb[0].mxu0
        %v2745 = vpop.f32.mrb[0].mxu0
        %v2746 = vadd.f32 0.0, %v2745
        %v2747 = vpop.f32.mrb[0].mxu0
        %2748 = vmatprep.mubr.bf16.mxu0 0
        %2749 = vmatmul.mubr.bf16.gmra.mrb[0].mxu0 %v2697
        %v2750 = vpop.f32.mrb[0].mxu0
        %v2751 = vadd.f32 0.0, %v2750
        %v2752 = vpop.f32.mrb[0].mxu0
        %v2753 = vpop.f32.mrb[0].mxu0
        %v2754 = vadd.f32 0.0, %v2753
        %v2755 = vpop.f32.mrb[0].mxu0
        %2756 = vmatprep.mubr.bf16.mxu0 0
        %2757 = vmatmul.mubr.bf16.gmra.mrb[0].mxu0 %v2700
        %v2758 = vpop.f32.mrb[0].mxu0
        %v2759 = vadd.f32 0.0, %v2758
        %v2760 = vpop.f32.mrb[0].mxu0
        %v2761 = vpop.f32.mrb[0].mxu0
        %v2762 = vadd.f32 0.0, %v2761
        %v2763 = vpop.f32.mrb[0].mxu0
        %2764 = vmatprep.mubr.bf16.mxu0 0
        %2765 = vmatmul.mubr.bf16.gmra.mrb[0].mxu0 %v2703
        %v2766 = vpop.f32.mrb[0].mxu0
        %v2767 = vadd.f32 0.0, %v2766
        %v2768 = vpop.f32.mrb[0].mxu0
        %v2769 = vpop.f32.mrb[0].mxu0
        %v2770 = vadd.f32 0.0, %v2769
        %v2771 = vpop.f32.mrb[0].mxu0
        %2772 = vdwg.mxu0
        %v2773 = vld [vmem:[#allocation8 + $0x1b8] sm:$0xf]
        %v2774 = vld [vmem:[#allocation8 + $0x1bc] sm:$0xf]
        %v2775 = vpack.c.bf16 %v2746, %v2743
        %v2776 = vpack.c.bf16 %v2754, %v2751
        %v2777 = vpack.c.bf16 %v2762, %v2759
        %v2778 = vpack.c.bf16 %v2770, %v2767
        %v2781 = vunpack.c.l.b16 %v2773
        %v2782 = vunpack.c.l.b16 %v2774
        %v2783 = vpack.c.b16 %v2782, %v2781
        %v2786 = vsel %vm1346, %v2775, 0
        %v2789 = vsel %vm1346, %v2776, 0
        %v2792 = vsel %vm1346, %v2777, 0
        %v2795 = vsel %vm1346, %v2778, 0
        %2797 = vmatprep.subr.bf16.mxu0 0
        %2798 = vmatpush1.bf16.msra.mxu0 %v2783
        %2799 = vmatprep.subr.bf16.mxu0 0
        %2800 = vmatpush1.bf16.msra.mxu0 0
        %2801 = vmatprep.subr.bf16.mxu0 0
        %2802 = vmatpush1.bf16.msra.mxu0 0
        %2803 = vmatprep.subr.bf16.mxu0 0
        %2804 = vmatpush1.bf16.msra.mxu0 0
        %2805 = vmatprep.subr.bf16.mxu0 0
        %2806 = vmatpush1.bf16.msra.mxu0 0
        %2807 = vmatprep.subr.bf16.mxu0 0
        %2808 = vmatpush1.bf16.msra.mxu0 0
        %2809 = vmatprep.subr.bf16.mxu0 0
        %2810 = vmatpush1.bf16.msra.mxu0 0
        %2811 = vmatprep.subr.bf16.mxu0 0
        %2812 = vmatpush1.bf16.msra.mxu0 0
        %2813 = vmatprep.subr.bf16.mxu0 0
        %2814 = vmatpush1.bf16.msra.mxu0 0
        %2815 = vmatprep.subr.bf16.mxu0 0
        %2816 = vmatpush1.bf16.msra.mxu0 0
        %2817 = vmatprep.subr.bf16.mxu0 0
        %2818 = vmatpush1.bf16.msra.mxu0 0
        %2819 = vmatprep.subr.bf16.mxu0 0
        %2820 = vmatpush1.bf16.msra.mxu0 0
        %2821 = vmatprep.subr.bf16.mxu0 0
        %2822 = vmatpush1.bf16.msra.mxu0 0
        %2823 = vmatprep.subr.bf16.mxu0 0
        %2824 = vmatpush1.bf16.msra.mxu0 0
        %2825 = vmatprep.subr.bf16.mxu0 0
        %2826 = vmatpush1.bf16.msra.mxu0 0
        %2827 = vmatprep.subr.bf16.mxu0 0
        %2828 = vmatpush1.bf16.msra.mxu0 0
        %2829 = vmatprep.mubr.bf16.mxu0 0
        %2830 = vmatmul.mubr.bf16.gmra.mrb[0].mxu0 %v2786
        %v2831 = vpop.f32.mrb[0].mxu0
        %v2832 = vadd.f32 0.0, %v2831
        %v2833 = vpop.f32.mrb[0].mxu0
        %v2834 = vpop.f32.mrb[0].mxu0
        %v2835 = vadd.f32 0.0, %v2834
        %v2836 = vpop.f32.mrb[0].mxu0
        %2837 = vmatprep.mubr.bf16.mxu0 0
        %2838 = vmatmul.mubr.bf16.gmra.mrb[0].mxu0 %v2789
        %v2839 = vpop.f32.mrb[0].mxu0
        %v2840 = vadd.f32 0.0, %v2839
        %v2841 = vpop.f32.mrb[0].mxu0
        %v2842 = vpop.f32.mrb[0].mxu0
        %v2843 = vadd.f32 0.0, %v2842
        %v2844 = vpop.f32.mrb[0].mxu0
        %2845 = vmatprep.mubr.bf16.mxu0 0
        %2846 = vmatmul.mubr.bf16.gmra.mrb[0].mxu0 %v2792
        %v2847 = vpop.f32.mrb[0].mxu0
        %v2848 = vadd.f32 0.0, %v2847
        %v2849 = vpop.f32.mrb[0].mxu0
        %v2850 = vpop.f32.mrb[0].mxu0
        %v2851 = vadd.f32 0.0, %v2850
        %v2852 = vpop.f32.mrb[0].mxu0
        %2853 = vmatprep.mubr.bf16.mxu0 0
        %2854 = vmatmul.mubr.bf16.gmra.mrb[0].mxu0 %v2795
        %v2855 = vpop.f32.mrb[0].mxu0
        %v2856 = vadd.f32 0.0, %v2855
        %v2857 = vpop.f32.mrb[0].mxu0
        %v2858 = vpop.f32.mrb[0].mxu0
        %v2859 = vadd.f32 0.0, %v2858
        %v2860 = vpop.f32.mrb[0].mxu0
        %2861 = vdwg.mxu0
        %v2864 = vunpack.c.l.b16 %v2489
        %v2865 = vunpack.c.l.b16 %v2490
        %v2866 = vpack.c.b16 %v2865, %v2864
        %v2869 = vsel %vm1346, %v2491, 0
        %v2872 = vsel %vm1346, %v2492, 0
        %v2875 = vsel %vm1346, %v2493, 0
        %v2878 = vsel %vm1346, %v2494, 0
        %2880 = vmatprep.subr.bf16.mxu0 0
        %2881 = vmatpush1.bf16.msra.mxu0 %v2866
        %2882 = vmatprep.subr.bf16.mxu0 0
        %2883 = vmatpush1.bf16.msra.mxu0 0
        %2884 = vmatprep.subr.bf16.mxu0 0
        %2885 = vmatpush1.bf16.msra.mxu0 0
        %2886 = vmatprep.subr.bf16.mxu0 0
        %2887 = vmatpush1.bf16.msra.mxu0 0
        %2888 = vmatprep.subr.bf16.mxu0 0
        %2889 = vmatpush1.bf16.msra.mxu0 0
        %2890 = vmatprep.subr.bf16.mxu0 0
        %2891 = vmatpush1.bf16.msra.mxu0 0
        %2892 = vmatprep.subr.bf16.mxu0 0
        %2893 = vmatpush1.bf16.msra.mxu0 0
        %2894 = vmatprep.subr.bf16.mxu0 0
        %2895 = vmatpush1.bf16.msra.mxu0 0
        %2896 = vmatprep.subr.bf16.mxu0 0
        %2897 = vmatpush1.bf16.msra.mxu0 0
        %2898 = vmatprep.subr.bf16.mxu0 0
        %2899 = vmatpush1.bf16.msra.mxu0 0
        %2900 = vmatprep.subr.bf16.mxu0 0
        %2901 = vmatpush1.bf16.msra.mxu0 0
        %2902 = vmatprep.subr.bf16.mxu0 0
        %2903 = vmatpush1.bf16.msra.mxu0 0
        %2904 = vmatprep.subr.bf16.mxu0 0
        %2905 = vmatpush1.bf16.msra.mxu0 0
        %2906 = vmatprep.subr.bf16.mxu0 0
        %2907 = vmatpush1.bf16.msra.mxu0 0
        %2908 = vmatprep.subr.bf16.mxu0 0
        %2909 = vmatpush1.bf16.msra.mxu0 0
        %2910 = vmatprep.subr.bf16.mxu0 0
        %2911 = vmatpush1.bf16.msra.mxu0 0
        %2912 = vmatprep.mubr.bf16.mxu0 0
        %2913 = vmatmul.mubr.bf16.gmra.mrb[0].mxu0 %v2869
        %v2914 = vpop.f32.mrb[0].mxu0
        %v2915 = vadd.f32 %v2832, %v2914
        %v2916 = vpop.f32.mrb[0].mxu0
        %v2917 = vpop.f32.mrb[0].mxu0
        %v2918 = vadd.f32 %v2835, %v2917
        %v2919 = vpop.f32.mrb[0].mxu0
        %2920 = vmatprep.mubr.bf16.mxu0 0
        %2921 = vmatmul.mubr.bf16.gmra.mrb[0].mxu0 %v2872
        %v2922 = vpop.f32.mrb[0].mxu0
        %v2923 = vadd.f32 %v2840, %v2922
        %v2924 = vpop.f32.mrb[0].mxu0
        %v2925 = vpop.f32.mrb[0].mxu0
        %v2926 = vadd.f32 %v2843, %v2925
        %v2927 = vpop.f32.mrb[0].mxu0
        %2928 = vmatprep.mubr.bf16.mxu0 0
        %2929 = vmatmul.mubr.bf16.gmra.mrb[0].mxu0 %v2875
        %v2930 = vpop.f32.mrb[0].mxu0
        %v2931 = vadd.f32 %v2848, %v2930
        %v2932 = vpop.f32.mrb[0].mxu0
        %v2933 = vpop.f32.mrb[0].mxu0
        %v2934 = vadd.f32 %v2851, %v2933
        %v2935 = vpop.f32.mrb[0].mxu0
        %2936 = vmatprep.mubr.bf16.mxu0 0
        %2937 = vmatmul.mubr.bf16.gmra.mrb[0].mxu0 %v2878
        %v2938 = vpop.f32.mrb[0].mxu0
        %v2939 = vadd.f32 %v2856, %v2938
        %v2940 = vpop.f32.mrb[0].mxu0
        %v2941 = vpop.f32.mrb[0].mxu0
        %v2942 = vadd.f32 %v2859, %v2941
        %v2943 = vpop.f32.mrb[0].mxu0
        %2944 = vdwg.mxu0
        %v2945 = vld [vmem:[#allocation10 + $0x33] sm:$0x1]
        %v2946 = vlaneseq
        %v2947 = vshrl.u32 %v2946, 7
        %v2948 = vsub.s32 0, %v2947
        %v2949 = vrot.slane %v2945, %v2948
        %v2950 = vadd.f32 %v2915, %v2949
        %v2951 = vadd.f32 %v2918, %v2949
        %v2952 = vadd.f32 %v2923, %v2949
        %v2953 = vadd.f32 %v2926, %v2949
        %v2954 = vadd.f32 %v2931, %v2949
        %v2955 = vadd.f32 %v2934, %v2949
        %v2956 = vadd.f32 %v2939, %v2949
        %v2957 = vadd.f32 %v2942, %v2949
        %v2958 = vadd.f32 %v394, %v2950
        %v2959 = vadd.f32 %v395, %v2951
        %v2960 = vadd.f32 %v396, %v2952
        %v2961 = vadd.f32 %v397, %v2953
        %v2962 = vadd.f32 %v398, %v2954
        %v2963 = vadd.f32 %v399, %v2955
        %v2964 = vadd.f32 %v400, %v2956
        %v2965 = vadd.f32 %v401, %v2957
        %v2966 = vld [vmem:[#allocation10 + $0x38] sm:$0x1]
        %v2967 = vld [vmem:[#allocation10 + $0x39] sm:$0x1]
        %v2968 = vsel %vm440, %v2958, 0.0
        %2969 = vadd.xlane.f32.xlu0 %v2968
        %v2970 = vpop.xlane.xlu0 %2969
        %v2971 = vsel %vm440, %v2959, 0.0
        %2972 = vadd.xlane.f32.xlu0 %v2971
        %v2973 = vpop.xlane.xlu0 %2972
        %v2974 = vsel %vm440, %v2960, 0.0
        %2975 = vadd.xlane.f32.xlu0 %v2974
        %v2976 = vpop.xlane.xlu0 %2975
        %v2977 = vsel %vm440, %v2961, 0.0
        %2978 = vadd.xlane.f32.xlu0 %v2977
        %v2979 = vpop.xlane.xlu0 %2978
        %v2980 = vsel %vm440, %v2962, 0.0
        %2981 = vadd.xlane.f32.xlu0 %v2980
        %v2982 = vpop.xlane.xlu0 %2981
        %v2983 = vsel %vm440, %v2963, 0.0
        %2984 = vadd.xlane.f32.xlu0 %v2983
        %v2985 = vpop.xlane.xlu0 %2984
        %v2986 = vsel %vm440, %v2964, 0.0
        %2987 = vadd.xlane.f32.xlu0 %v2986
        %v2988 = vpop.xlane.xlu0 %2987
        %v2989 = vsel %vm440, %v2965, 0.0
        %2990 = vadd.xlane.f32.xlu0 %v2989
        %v2991 = vpop.xlane.xlu0 %2990
        %v2992 = vmul.f32 %v2970, %v994
        %v2993 = vmul.f32 %v2973, %v994
        %v2994 = vmul.f32 %v2976, %v994
        %v2995 = vmul.f32 %v2979, %v994
        %v2996 = vmul.f32 %v2982, %v994
        %v2997 = vmul.f32 %v2985, %v994
        %v2998 = vmul.f32 %v2988, %v994
        %v2999 = vmul.f32 %v2991, %v994
        %v3000 = vsub.f32 %v2958, %v2992
        %v3001 = vsub.f32 %v2959, %v2993
        %v3002 = vsub.f32 %v2960, %v2994
        %v3003 = vsub.f32 %v2961, %v2995
        %v3004 = vsub.f32 %v2962, %v2996
        %v3005 = vsub.f32 %v2963, %v2997
        %v3006 = vsub.f32 %v2964, %v2998
        %v3007 = vsub.f32 %v2965, %v2999
        %v3008 = vmul.f32 %v3000, %v3000
        %v3009 = vmul.f32 %v3001, %v3001
        %v3010 = vmul.f32 %v3002, %v3002
        %v3011 = vmul.f32 %v3003, %v3003
        %v3012 = vmul.f32 %v3004, %v3004
        %v3013 = vmul.f32 %v3005, %v3005
        %v3014 = vmul.f32 %v3006, %v3006
        %v3015 = vmul.f32 %v3007, %v3007
        %v3016 = vsel %vm440, %v3008, 0.0
        %3017 = vadd.xlane.f32.xlu0 %v3016
        %v3018 = vpop.xlane.xlu0 %3017
        %v3019 = vsel %vm440, %v3009, 0.0
        %3020 = vadd.xlane.f32.xlu0 %v3019
        %v3021 = vpop.xlane.xlu0 %3020
        %v3022 = vsel %vm440, %v3010, 0.0
        %3023 = vadd.xlane.f32.xlu0 %v3022
        %v3024 = vpop.xlane.xlu0 %3023
        %v3025 = vsel %vm440, %v3011, 0.0
        %3026 = vadd.xlane.f32.xlu0 %v3025
        %v3027 = vpop.xlane.xlu0 %3026
        %v3028 = vsel %vm440, %v3012, 0.0
        %3029 = vadd.xlane.f32.xlu0 %v3028
        %v3030 = vpop.xlane.xlu0 %3029
        %v3031 = vsel %vm440, %v3013, 0.0
        %3032 = vadd.xlane.f32.xlu0 %v3031
        %v3033 = vpop.xlane.xlu0 %3032
        %v3034 = vsel %vm440, %v3014, 0.0
        %3035 = vadd.xlane.f32.xlu0 %v3034
        %v3036 = vpop.xlane.xlu0 %3035
        %v3037 = vsel %vm440, %v3015, 0.0
        %3038 = vadd.xlane.f32.xlu0 %v3037
        %v3039 = vpop.xlane.xlu0 %3038
        %v3040 = vmul.f32 %v3018, %v994
        %v3041 = vmul.f32 %v3021, %v994
        %v3042 = vmul.f32 %v3024, %v994
        %v3043 = vmul.f32 %v3027, %v994
        %v3044 = vmul.f32 %v3030, %v994
        %v3045 = vmul.f32 %v3033, %v994
        %v3046 = vmul.f32 %v3036, %v994
        %v3047 = vmul.f32 %v3039, %v994
        %v3048 = vadd.f32 %v3040, 1e-06
        %v3049 = vadd.f32 %v3041, 1e-06
        %v3050 = vadd.f32 %v3042, 1e-06
        %v3051 = vadd.f32 %v3043, 1e-06
        %v3052 = vadd.f32 %v3044, 1e-06
        %v3053 = vadd.f32 %v3045, 1e-06
        %v3054 = vadd.f32 %v3046, 1e-06
        %v3055 = vadd.f32 %v3047, 1e-06
        %v3056 = vrsqrt.pop %v3048
        %v3057 = vrsqrt.pop %v3049
        %v3058 = vrsqrt.pop %v3050
        %v3059 = vrsqrt.pop %v3051
        %v3060 = vrsqrt.pop %v3052
        %v3061 = vrsqrt.pop %v3053
        %v3062 = vrsqrt.pop %v3054
        %v3063 = vrsqrt.pop %v3055
        %v3064 = vmul.f32 %v3000, %v3056
        %v3065 = vmul.f32 %v3001, %v3057
        %v3066 = vmul.f32 %v3002, %v3058
        %v3067 = vmul.f32 %v3003, %v3059
        %v3068 = vmul.f32 %v3004, %v3060
        %v3069 = vmul.f32 %v3005, %v3061
        %v3070 = vmul.f32 %v3006, %v3062
        %v3071 = vmul.f32 %v3007, %v3063
        %v3072 = vlaneseq
        %v3073 = vshrl.u32 %v3072, 7
        %v3074 = vsub.s32 0, %v3073
        %v3075 = vrot.slane %v2966, %v3074
        %v3076 = vmul.f32 %v3064, %v3075
        %v3077 = vmul.f32 %v3065, %v3075
        %v3078 = vmul.f32 %v3066, %v3075
        %v3079 = vmul.f32 %v3067, %v3075
        %v3080 = vmul.f32 %v3068, %v3075
        %v3081 = vmul.f32 %v3069, %v3075
        %v3082 = vmul.f32 %v3070, %v3075
        %v3083 = vmul.f32 %v3071, %v3075
        %v3084 = vlaneseq
        %v3085 = vshrl.u32 %v3084, 7
        %v3086 = vsub.s32 0, %v3085
        %v3087 = vrot.slane %v2967, %v3086
        %v3088 = vadd.f32 %v3076, %v3087
        %v3089 = vadd.f32 %v3077, %v3087
        %v3090 = vadd.f32 %v3078, %v3087
        %v3091 = vadd.f32 %v3079, %v3087
        %v3092 = vadd.f32 %v3080, %v3087
        %v3093 = vadd.f32 %v3081, %v3087
        %v3094 = vadd.f32 %v3082, %v3087
        %v3095 = vadd.f32 %v3083, %v3087
        %v3096 = vld [vmem:[#allocation8 + $0x1c0] sm:$0xf]
        %v3097 = vld [vmem:[#allocation8 + $0x1c4] sm:$0xf]
        %v3098 = vld [vmem:[#allocation8 + $0x1c8] sm:$0xf]
        %v3099 = vld [vmem:[#allocation8 + $0x1cc] sm:$0xf]
        %v3100 = vld [vmem:[#allocation8 + $0x1d0] sm:$0xf]
        %v3101 = vld [vmem:[#allocation8 + $0x1d4] sm:$0xf]
        %v3102 = vld [vmem:[#allocation8 + $0x1d8] sm:$0xf]
        %v3103 = vld [vmem:[#allocation8 + $0x1dc] sm:$0xf]
        %v3104 = vld [vmem:[#allocation10 + $0x40] sm:$0x1]
        %v3105 = vlaneseq
        %v3106 = vshrl.u32 %v3105, 7
        %v3107 = vsub.s32 0, %v3106
        %v3108 = vrot.slane %v3104, %v3107
        %v3117 = vunpack.c.l.b16 %v3096
        %v3118 = vunpack.c.l.b16 %v3097
        %v3119 = vunpack.c.l.b16 %v3098
        %v3120 = vunpack.c.l.b16 %v3099
        %v3121 = vunpack.c.l.b16 %v3100
        %v3122 = vunpack.c.l.b16 %v3101
        %v3123 = vunpack.c.l.b16 %v3102
        %v3124 = vunpack.c.l.b16 %v3103
        %v3125 = vpack.c.b16 %v3118, %v3117
        %v3126 = vpack.c.b16 %v3120, %v3119
        %v3127 = vpack.c.b16 %v3122, %v3121
        %v3128 = vpack.c.b16 %v3124, %v3123
        %3133 = vmatprep.subr.bf16.mxu0 0
        %3134 = vmatpush1.bf16.msra.mxu0 %v3125
        %3135 = vmatprep.subr.bf16.mxu0 0
        %3136 = vmatpush1.bf16.msra.mxu0 %v3126
        %3137 = vmatprep.subr.bf16.mxu0 0
        %3138 = vmatpush1.bf16.msra.mxu0 %v3127
        %3139 = vmatprep.subr.bf16.mxu0 0
        %3140 = vmatpush1.bf16.msra.mxu0 %v3128
        %3141 = vmatprep.subr.bf16.mxu0 0
        %3142 = vmatpush1.bf16.msra.mxu0 0
        %3143 = vmatprep.subr.bf16.mxu0 0
        %3144 = vmatpush1.bf16.msra.mxu0 0
        %3145 = vmatprep.subr.bf16.mxu0 0
        %3146 = vmatpush1.bf16.msra.mxu0 0
        %3147 = vmatprep.subr.bf16.mxu0 0
        %3148 = vmatpush1.bf16.msra.mxu0 0
        %3149 = vmatprep.subr.bf16.mxu0 0
        %3150 = vmatpush1.bf16.msra.mxu0 0
        %3151 = vmatprep.subr.bf16.mxu0 0
        %3152 = vmatpush1.bf16.msra.mxu0 0
        %3153 = vmatprep.subr.bf16.mxu0 0
        %3154 = vmatpush1.bf16.msra.mxu0 0
        %3155 = vmatprep.subr.bf16.mxu0 0
        %3156 = vmatpush1.bf16.msra.mxu0 0
        %3157 = vmatprep.subr.bf16.mxu0 0
        %3158 = vmatpush1.bf16.msra.mxu0 0
        %3159 = vmatprep.subr.bf16.mxu0 0
        %3160 = vmatpush1.bf16.msra.mxu0 0
        %3161 = vmatprep.subr.bf16.mxu0 0
        %3162 = vmatpush1.bf16.msra.mxu0 0
        %3163 = vmatprep.subr.bf16.mxu0 0
        %3164 = vmatpush1.bf16.msra.mxu0 0
        %3165 = vmatprep.mubr.bf16.mxu0 0
        %3166 = vmatmul.mubr.bf16.gmra.mrb[0].mxu0 %v2101
        %v3167 = vpop.f32.mrb[0].mxu0
        %v3168 = vadd.f32 %v3108, %v3167
        %v3169 = vpop.f32.mrb[0].mxu0
        %v3170 = vpop.f32.mrb[0].mxu0
        %v3171 = vpop.f32.mrb[0].mxu0
        %3172 = vdwg.mxu0
        %v3173 = vld [vmem:[#allocation8 + $0x1e0] sm:$0xf]
        %v3174 = vld [vmem:[#allocation8 + $0x1e4] sm:$0xf]
        %v3175 = vld [vmem:[#allocation8 + $0x1e8] sm:$0xf]
        %v3176 = vld [vmem:[#allocation8 + $0x1ec] sm:$0xf]
        %v3177 = vld [vmem:[#allocation8 + $0x1f0] sm:$0xf]
        %v3178 = vld [vmem:[#allocation8 + $0x1f4] sm:$0xf]
        %v3179 = vld [vmem:[#allocation8 + $0x1f8] sm:$0xf]
        %v3180 = vld [vmem:[#allocation8 + $0x1fc] sm:$0xf]
        %v3181 = vld [vmem:[#allocation10 + $0x41] sm:$0x1]
        %v3182 = vlaneseq
        %v3183 = vshrl.u32 %v3182, 7
        %v3184 = vsub.s32 0, %v3183
        %v3185 = vrot.slane %v3181, %v3184
        %v3194 = vunpack.c.l.b16 %v3173
        %v3195 = vunpack.c.l.b16 %v3174
        %v3196 = vunpack.c.l.b16 %v3175
        %v3197 = vunpack.c.l.b16 %v3176
        %v3198 = vunpack.c.l.b16 %v3177
        %v3199 = vunpack.c.l.b16 %v3178
        %v3200 = vunpack.c.l.b16 %v3179
        %v3201 = vunpack.c.l.b16 %v3180
        %v3202 = vpack.c.b16 %v3195, %v3194
        %v3203 = vpack.c.b16 %v3197, %v3196
        %v3204 = vpack.c.b16 %v3199, %v3198
        %v3205 = vpack.c.b16 %v3201, %v3200
        %3210 = vmatprep.subr.bf16.mxu0 0
        %3211 = vmatpush1.bf16.msra.mxu0 %v3202
        %3212 = vmatprep.subr.bf16.mxu0 0
        %3213 = vmatpush1.bf16.msra.mxu0 %v3203
        %3214 = vmatprep.subr.bf16.mxu0 0
        %3215 = vmatpush1.bf16.msra.mxu0 %v3204
        %3216 = vmatprep.subr.bf16.mxu0 0
        %3217 = vmatpush1.bf16.msra.mxu0 %v3205
        %3218 = vmatprep.subr.bf16.mxu0 0
        %3219 = vmatpush1.bf16.msra.mxu0 0
        %3220 = vmatprep.subr.bf16.mxu0 0
        %3221 = vmatpush1.bf16.msra.mxu0 0
        %3222 = vmatprep.subr.bf16.mxu0 0
        %3223 = vmatpush1.bf16.msra.mxu0 0
        %3224 = vmatprep.subr.bf16.mxu0 0
        %3225 = vmatpush1.bf16.msra.mxu0 0
        %3226 = vmatprep.subr.bf16.mxu0 0
        %3227 = vmatpush1.bf16.msra.mxu0 0
        %3228 = vmatprep.subr.bf16.mxu0 0
        %3229 = vmatpush1.bf16.msra.mxu0 0
        %3230 = vmatprep.subr.bf16.mxu0 0
        %3231 = vmatpush1.bf16.msra.mxu0 0
        %3232 = vmatprep.subr.bf16.mxu0 0
        %3233 = vmatpush1.bf16.msra.mxu0 0
        %3234 = vmatprep.subr.bf16.mxu0 0
        %3235 = vmatpush1.bf16.msra.mxu0 0
        %3236 = vmatprep.subr.bf16.mxu0 0
        %3237 = vmatpush1.bf16.msra.mxu0 0
        %3238 = vmatprep.subr.bf16.mxu0 0
        %3239 = vmatpush1.bf16.msra.mxu0 0
        %3240 = vmatprep.subr.bf16.mxu0 0
        %3241 = vmatpush1.bf16.msra.mxu0 0
        %3242 = vmatprep.mubr.bf16.mxu0 0
        %3243 = vmatmul.mubr.bf16.gmra.mrb[0].mxu0 %v2101
        %v3244 = vpop.f32.mrb[0].mxu0
        %v3245 = vadd.f32 %v3185, %v3244
        %v3246 = vpop.f32.mrb[0].mxu0
        %v3247 = vpop.f32.mrb[0].mxu0
        %v3248 = vpop.f32.mrb[0].mxu0
        %3249 = vdwg.mxu0
        %v3250 = vld [vmem:[#allocation8 + $0x200] sm:$0xf]
        %v3251 = vld [vmem:[#allocation8 + $0x204] sm:$0xf]
        %v3252 = vld [vmem:[#allocation8 + $0x208] sm:$0xf]
        %v3253 = vld [vmem:[#allocation8 + $0x20c] sm:$0xf]
        %v3254 = vld [vmem:[#allocation8 + $0x210] sm:$0xf]
        %v3255 = vld [vmem:[#allocation8 + $0x214] sm:$0xf]
        %v3256 = vld [vmem:[#allocation8 + $0x218] sm:$0xf]
        %v3257 = vld [vmem:[#allocation8 + $0x21c] sm:$0xf]
        %v3258 = vld [vmem:[#allocation10 + $0x42] sm:$0x1]
        %v3259 = vlaneseq
        %v3260 = vshrl.u32 %v3259, 7
        %v3261 = vsub.s32 0, %v3260
        %v3262 = vrot.slane %v3258, %v3261
        %v3271 = vunpack.c.l.b16 %v3250
        %v3272 = vunpack.c.l.b16 %v3251
        %v3273 = vunpack.c.l.b16 %v3252
        %v3274 = vunpack.c.l.b16 %v3253
        %v3275 = vunpack.c.l.b16 %v3254
        %v3276 = vunpack.c.l.b16 %v3255
        %v3277 = vunpack.c.l.b16 %v3256
        %v3278 = vunpack.c.l.b16 %v3257
        %v3279 = vpack.c.b16 %v3272, %v3271
        %v3280 = vpack.c.b16 %v3274, %v3273
        %v3281 = vpack.c.b16 %v3276, %v3275
        %v3282 = vpack.c.b16 %v3278, %v3277
        %3287 = vmatprep.subr.bf16.mxu0 0
        %3288 = vmatpush1.bf16.msra.mxu0 %v3279
        %3289 = vmatprep.subr.bf16.mxu0 0
        %3290 = vmatpush1.bf16.msra.mxu0 %v3280
        %3291 = vmatprep.subr.bf16.mxu0 0
        %3292 = vmatpush1.bf16.msra.mxu0 %v3281
        %3293 = vmatprep.subr.bf16.mxu0 0
        %3294 = vmatpush1.bf16.msra.mxu0 %v3282
        %3295 = vmatprep.subr.bf16.mxu0 0
        %3296 = vmatpush1.bf16.msra.mxu0 0
        %3297 = vmatprep.subr.bf16.mxu0 0
        %3298 = vmatpush1.bf16.msra.mxu0 0
        %3299 = vmatprep.subr.bf16.mxu0 0
        %3300 = vmatpush1.bf16.msra.mxu0 0
        %3301 = vmatprep.subr.bf16.mxu0 0
        %3302 = vmatpush1.bf16.msra.mxu0 0
        %3303 = vmatprep.subr.bf16.mxu0 0
        %3304 = vmatpush1.bf16.msra.mxu0 0
        %3305 = vmatprep.subr.bf16.mxu0 0
        %3306 = vmatpush1.bf16.msra.mxu0 0
        %3307 = vmatprep.subr.bf16.mxu0 0
        %3308 = vmatpush1.bf16.msra.mxu0 0
        %3309 = vmatprep.subr.bf16.mxu0 0
        %3310 = vmatpush1.bf16.msra.mxu0 0
        %3311 = vmatprep.subr.bf16.mxu0 0
        %3312 = vmatpush1.bf16.msra.mxu0 0
        %3313 = vmatprep.subr.bf16.mxu0 0
        %3314 = vmatpush1.bf16.msra.mxu0 0
        %3315 = vmatprep.subr.bf16.mxu0 0
        %3316 = vmatpush1.bf16.msra.mxu0 0
        %3317 = vmatprep.subr.bf16.mxu0 0
        %3318 = vmatpush1.bf16.msra.mxu0 0
        %3319 = vmatprep.mubr.bf16.mxu0 0
        %3320 = vmatmul.mubr.bf16.gmra.mrb[0].mxu0 %v2181
        %v3321 = vpop.f32.mrb[0].mxu0
        %v3322 = vadd.f32 %v3262, %v3321
        %v3323 = vpop.f32.mrb[0].mxu0
        %v3324 = vpop.f32.mrb[0].mxu0
        %v3325 = vpop.f32.mrb[0].mxu0
        %3326 = vdwg.mxu0
        %v3327 = vpack.c.bf16 %v3168, %v3168
        %v3328 = vpack.c.bf16 %v3245, %v3245
        %v3330 = vsel %vm640, %v3327, 0
        %v3333 = vsel %vm640, %v3328, 0
        %3335 = vmatprep.subr.bf16.mxu0 0
        %3336 = vmatpush1.bf16.xpose.msra.mxu0 %v3333
        %3337 = vmatprep.subr.bf16.mxu0 0
        %3338 = vmatpush1.bf16.xpose.msra.mxu0 0
        %3339 = vmatprep.subr.bf16.mxu0 0
        %3340 = vmatpush1.bf16.xpose.msra.mxu0 0
        %3341 = vmatprep.subr.bf16.mxu0 0
        %3342 = vmatpush1.bf16.xpose.msra.mxu0 0
        %3343 = vmatprep.subr.bf16.mxu0 0
        %3344 = vmatpush1.bf16.xpose.msra.mxu0 0
        %3345 = vmatprep.subr.bf16.mxu0 0
        %3346 = vmatpush1.bf16.xpose.msra.mxu0 0
        %3347 = vmatprep.subr.bf16.mxu0 0
        %3348 = vmatpush1.bf16.xpose.msra.mxu0 0
        %3349 = vmatprep.subr.bf16.mxu0 0
        %3350 = vmatpush1.bf16.xpose.msra.mxu0 0
        %3351 = vmatprep.subr.bf16.mxu0 0
        %3352 = vmatpush1.bf16.xpose.msra.mxu0 0
        %3353 = vmatprep.subr.bf16.mxu0 0
        %3354 = vmatpush1.bf16.xpose.msra.mxu0 0
        %3355 = vmatprep.subr.bf16.mxu0 0
        %3356 = vmatpush1.bf16.xpose.msra.mxu0 0
        %3357 = vmatprep.subr.bf16.mxu0 0
        %3358 = vmatpush1.bf16.xpose.msra.mxu0 0
        %3359 = vmatprep.subr.bf16.mxu0 0
        %3360 = vmatpush1.bf16.xpose.msra.mxu0 0
        %3361 = vmatprep.subr.bf16.mxu0 0
        %3362 = vmatpush1.bf16.xpose.msra.mxu0 0
        %3363 = vmatprep.subr.bf16.mxu0 0
        %3364 = vmatpush1.bf16.xpose.msra.mxu0 0
        %3365 = vmatprep.subr.bf16.mxu0 0
        %3366 = vmatpush1.bf16.xpose.msra.mxu0 0
        %3367 = vmatprep.mubr.bf16.mxu0 0
        %3368 = vmatmul.mubr.bf16.gmra.mrb[0].mxu0 %v3330
        %v3369 = vpop.f32.mrb[0].mxu0
        %v3370 = vadd.f32 0.0, %v3369
        %v3371 = vpop.f32.mrb[0].mxu0
        %v3372 = vpop.f32.mrb[0].mxu0
        %v3373 = vpop.f32.mrb[0].mxu0
        %3374 = vdwg.mxu0
        %v3375 = vmul.f32 %v3370, 0.17677669
        %v3376 = vsel %vm688, %v3375, -inf
        %3377 = vmax.xlane.f32.xlu0 %v3376
        %v3378 = vpop.xlane.xlu0 %3377
        %v3379 = vsub.f32 %v3375, %v3378
        %v3380 = vmul.f32 %v3379, 1.442695
        %v3381 = vpow.pop %v3380
        %v3382 = vsel %vm688, %v3381, 0.0
        %3383 = vadd.xlane.f32.xlu0 %v3382
        %v3384 = vpop.xlane.xlu0 %3383
        %v3385 = vrcp.pop %v3384
        %v3386 = vmul.f32 %v3381, %v3385
        %v3387 = vpack.c.bf16 %v3386, %v3386
        %v3388 = vpack.c.bf16 %v3322, %v3322
        %v3390 = vsel %vm688, %v3387, 0
        %v3393 = vsel %vm705, %v3388, 0
        %3395 = vmatprep.subr.bf16.mxu0 0
        %3396 = vmatpush1.bf16.msra.mxu0 %v3393
        %3397 = vmatprep.subr.bf16.mxu0 0
        %3398 = vmatpush1.bf16.msra.mxu0 0
        %3399 = vmatprep.subr.bf16.mxu0 0
        %3400 = vmatpush1.bf16.msra.mxu0 0
        %3401 = vmatprep.subr.bf16.mxu0 0
        %3402 = vmatpush1.bf16.msra.mxu0 0
        %3403 = vmatprep.subr.bf16.mxu0 0
        %3404 = vmatpush1.bf16.msra.mxu0 0
        %3405 = vmatprep.subr.bf16.mxu0 0
        %3406 = vmatpush1.bf16.msra.mxu0 0
        %3407 = vmatprep.subr.bf16.mxu0 0
        %3408 = vmatpush1.bf16.msra.mxu0 0
        %3409 = vmatprep.subr.bf16.mxu0 0
        %3410 = vmatpush1.bf16.msra.mxu0 0
        %3411 = vmatprep.subr.bf16.mxu0 0
        %3412 = vmatpush1.bf16.msra.mxu0 0
        %3413 = vmatprep.subr.bf16.mxu0 0
        %3414 = vmatpush1.bf16.msra.mxu0 0
        %3415 = vmatprep.subr.bf16.mxu0 0
        %3416 = vmatpush1.bf16.msra.mxu0 0
        %3417 = vmatprep.subr.bf16.mxu0 0
        %3418 = vmatpush1.bf16.msra.mxu0 0
        %3419 = vmatprep.subr.bf16.mxu0 0
        %3420 = vmatpush1.bf16.msra.mxu0 0
        %3421 = vmatprep.subr.bf16.mxu0 0
        %3422 = vmatpush1.bf16.msra.mxu0 0
        %3423 = vmatprep.subr.bf16.mxu0 0
        %3424 = vmatpush1.bf16.msra.mxu0 0
        %3425 = vmatprep.subr.bf16.mxu0 0
        %3426 = vmatpush1.bf16.msra.mxu0 0
        %3427 = vmatprep.mubr.bf16.mxu0 0
        %3428 = vmatmul.mubr.bf16.gmra.mrb[0].mxu0 %v3390
        %v3429 = vpop.f32.mrb[0].mxu0
        %v3430 = vadd.f32 0.0, %v3429
        %v3431 = vpop.f32.mrb[0].mxu0
        %v3432 = vpop.f32.mrb[0].mxu0
        %v3433 = vpop.f32.mrb[0].mxu0
        %3434 = vdwg.mxu0
        %v3435 = vld [vmem:[#allocation8 + $0x220] sm:$0xf]
        %v3436 = vld [vmem:[#allocation8 + $0x224] sm:$0xf]
        %v3437 = vld [vmem:[#allocation8 + $0x228] sm:$0xf]
        %v3438 = vld [vmem:[#allocation8 + $0x22c] sm:$0xf]
        %v3439 = vpack.c.bf16 %v3430, %v3430
        %3441 = vrot.lane.b32.xlu0 %v3327, 96
        %v3442 = vpop.permute.xlu0 %3441
        %3444 = vrot.lane.b32.xlu0 %v3328, 96
        %v3445 = vpop.permute.xlu0 %3444
        %v3447 = vsel %vm640, %v3442, 0
        %v3450 = vsel %vm640, %v3445, 0
        %3452 = vmatprep.subr.bf16.mxu0 0
        %3453 = vmatpush1.bf16.xpose.msra.mxu0 %v3450
        %3454 = vmatprep.subr.bf16.mxu0 0
        %3455 = vmatpush1.bf16.xpose.msra.mxu0 0
        %3456 = vmatprep.subr.bf16.mxu0 0
        %3457 = vmatpush1.bf16.xpose.msra.mxu0 0
        %3458 = vmatprep.subr.bf16.mxu0 0
        %3459 = vmatpush1.bf16.xpose.msra.mxu0 0
        %3460 = vmatprep.subr.bf16.mxu0 0
        %3461 = vmatpush1.bf16.xpose.msra.mxu0 0
        %3462 = vmatprep.subr.bf16.mxu0 0
        %3463 = vmatpush1.bf16.xpose.msra.mxu0 0
        %3464 = vmatprep.subr.bf16.mxu0 0
        %3465 = vmatpush1.bf16.xpose.msra.mxu0 0
        %3466 = vmatprep.subr.bf16.mxu0 0
        %3467 = vmatpush1.bf16.xpose.msra.mxu0 0
        %3468 = vmatprep.subr.bf16.mxu0 0
        %3469 = vmatpush1.bf16.xpose.msra.mxu0 0
        %3470 = vmatprep.subr.bf16.mxu0 0
        %3471 = vmatpush1.bf16.xpose.msra.mxu0 0
        %3472 = vmatprep.subr.bf16.mxu0 0
        %3473 = vmatpush1.bf16.xpose.msra.mxu0 0
        %3474 = vmatprep.subr.bf16.mxu0 0
        %3475 = vmatpush1.bf16.xpose.msra.mxu0 0
        %3476 = vmatprep.subr.bf16.mxu0 0
        %3477 = vmatpush1.bf16.xpose.msra.mxu0 0
        %3478 = vmatprep.subr.bf16.mxu0 0
        %3479 = vmatpush1.bf16.xpose.msra.mxu0 0
        %3480 = vmatprep.subr.bf16.mxu0 0
        %3481 = vmatpush1.bf16.xpose.msra.mxu0 0
        %3482 = vmatprep.subr.bf16.mxu0 0
        %3483 = vmatpush1.bf16.xpose.msra.mxu0 0
        %3484 = vmatprep.mubr.bf16.mxu0 0
        %3485 = vmatmul.mubr.bf16.gmra.mrb[0].mxu0 %v3447
        %v3486 = vpop.f32.mrb[0].mxu0
        %v3487 = vadd.f32 0.0, %v3486
        %v3488 = vpop.f32.mrb[0].mxu0
        %v3489 = vpop.f32.mrb[0].mxu0
        %v3490 = vpop.f32.mrb[0].mxu0
        %3491 = vdwg.mxu0
        %v3492 = vmul.f32 %v3487, 0.17677669
        %v3493 = vsel %vm688, %v3492, -inf
        %3494 = vmax.xlane.f32.xlu0 %v3493
        %v3495 = vpop.xlane.xlu0 %3494
        %v3496 = vsub.f32 %v3492, %v3495
        %v3497 = vmul.f32 %v3496, 1.442695
        %v3498 = vpow.pop %v3497
        %v3499 = vsel %vm688, %v3498, 0.0
        %3500 = vadd.xlane.f32.xlu0 %v3499
        %v3501 = vpop.xlane.xlu0 %3500
        %v3502 = vrcp.pop %v3501
        %v3503 = vmul.f32 %v3498, %v3502
        %v3504 = vpack.c.bf16 %v3503, %v3503
        %3506 = vrot.lane.b32.xlu0 %v3388, 96
        %v3507 = vpop.permute.xlu0 %3506
        %v3509 = vsel %vm688, %v3504, 0
        %v3512 = vsel %vm705, %v3507, 0
        %3514 = vmatprep.subr.bf16.mxu0 0
        %3515 = vmatpush1.bf16.msra.mxu0 %v3512
        %3516 = vmatprep.subr.bf16.mxu0 0
        %3517 = vmatpush1.bf16.msra.mxu0 0
        %3518 = vmatprep.subr.bf16.mxu0 0
        %3519 = vmatpush1.bf16.msra.mxu0 0
        %3520 = vmatprep.subr.bf16.mxu0 0
        %3521 = vmatpush1.bf16.msra.mxu0 0
        %3522 = vmatprep.subr.bf16.mxu0 0
        %3523 = vmatpush1.bf16.msra.mxu0 0
        %3524 = vmatprep.subr.bf16.mxu0 0
        %3525 = vmatpush1.bf16.msra.mxu0 0
        %3526 = vmatprep.subr.bf16.mxu0 0
        %3527 = vmatpush1.bf16.msra.mxu0 0
        %3528 = vmatprep.subr.bf16.mxu0 0
        %3529 = vmatpush1.bf16.msra.mxu0 0
        %3530 = vmatprep.subr.bf16.mxu0 0
        %3531 = vmatpush1.bf16.msra.mxu0 0
        %3532 = vmatprep.subr.bf16.mxu0 0
        %3533 = vmatpush1.bf16.msra.mxu0 0
        %3534 = vmatprep.subr.bf16.mxu0 0
        %3535 = vmatpush1.bf16.msra.mxu0 0
        %3536 = vmatprep.subr.bf16.mxu0 0
        %3537 = vmatpush1.bf16.msra.mxu0 0
        %3538 = vmatprep.subr.bf16.mxu0 0
        %3539 = vmatpush1.bf16.msra.mxu0 0
        %3540 = vmatprep.subr.bf16.mxu0 0
        %3541 = vmatpush1.bf16.msra.mxu0 0
        %3542 = vmatprep.subr.bf16.mxu0 0
        %3543 = vmatpush1.bf16.msra.mxu0 0
        %3544 = vmatprep.subr.bf16.mxu0 0
        %3545 = vmatpush1.bf16.msra.mxu0 0
        %3546 = vmatprep.mubr.bf16.mxu0 0
        %3547 = vmatmul.mubr.bf16.gmra.mrb[0].mxu0 %v3509
        %v3548 = vpop.f32.mrb[0].mxu0
        %v3549 = vadd.f32 0.0, %v3548
        %v3550 = vpop.f32.mrb[0].mxu0
        %v3551 = vpop.f32.mrb[0].mxu0
        %v3552 = vpop.f32.mrb[0].mxu0
        %3553 = vdwg.mxu0
        %v3554 = vld [vmem:[#allocation8 + $0x230] sm:$0xf]
        %v3555 = vld [vmem:[#allocation8 + $0x234] sm:$0xf]
        %v3556 = vld [vmem:[#allocation8 + $0x238] sm:$0xf]
        %v3557 = vld [vmem:[#allocation8 + $0x23c] sm:$0xf]
        %v3558 = vpack.c.bf16 %v3549, %v3549
        %v3563 = vunpack.c.l.b16 %v3554
        %v3564 = vunpack.c.l.b16 %v3555
        %v3565 = vunpack.c.l.b16 %v3556
        %v3566 = vunpack.c.l.b16 %v3557
        %v3567 = vpack.c.b16 %v3564, %v3563
        %v3568 = vpack.c.b16 %v3566, %v3565
        %v3572 = vsel %vm640, %v3558, 0
        %3574 = vmatprep.subr.bf16.mxu0 0
        %3575 = vmatpush1.bf16.msra.mxu0 %v3567
        %3576 = vmatprep.subr.bf16.mxu0 0
        %3577 = vmatpush1.bf16.msra.mxu0 %v3568
        %3578 = vmatprep.subr.bf16.mxu0 0
        %3579 = vmatpush1.bf16.msra.mxu0 0
        %3580 = vmatprep.subr.bf16.mxu0 0
        %3581 = vmatpush1.bf16.msra.mxu0 0
        %3582 = vmatprep.subr.bf16.mxu0 0
        %3583 = vmatpush1.bf16.msra.mxu0 0
        %3584 = vmatprep.subr.bf16.mxu0 0
        %3585 = vmatpush1.bf16.msra.mxu0 0
        %3586 = vmatprep.subr.bf16.mxu0 0
        %3587 = vmatpush1.bf16.msra.mxu0 0
        %3588 = vmatprep.subr.bf16.mxu0 0
        %3589 = vmatpush1.bf16.msra.mxu0 0
        %3590 = vmatprep.subr.bf16.mxu0 0
        %3591 = vmatpush1.bf16.msra.mxu0 0
        %3592 = vmatprep.subr.bf16.mxu0 0
        %3593 = vmatpush1.bf16.msra.mxu0 0
        %3594 = vmatprep.subr.bf16.mxu0 0
        %3595 = vmatpush1.bf16.msra.mxu0 0
        %3596 = vmatprep.subr.bf16.mxu0 0
        %3597 = vmatpush1.bf16.msra.mxu0 0
        %3598 = vmatprep.subr.bf16.mxu0 0
        %3599 = vmatpush1.bf16.msra.mxu0 0
        %3600 = vmatprep.subr.bf16.mxu0 0
        %3601 = vmatpush1.bf16.msra.mxu0 0
        %3602 = vmatprep.subr.bf16.mxu0 0
        %3603 = vmatpush1.bf16.msra.mxu0 0
        %3604 = vmatprep.subr.bf16.mxu0 0
        %3605 = vmatpush1.bf16.msra.mxu0 0
        %3606 = vmatprep.mubr.bf16.mxu0 0
        %3607 = vmatmul.mubr.bf16.gmra.mrb[0].mxu0 %v3572
        %v3608 = vpop.f32.mrb[0].mxu0
        %v3609 = vadd.f32 0.0, %v3608
        %v3610 = vpop.f32.mrb[0].mxu0
        %v3611 = vpop.f32.mrb[0].mxu0
        %v3612 = vpop.f32.mrb[0].mxu0
        %3613 = vdwg.mxu0
        %v3618 = vunpack.c.l.b16 %v3435
        %v3619 = vunpack.c.l.b16 %v3436
        %v3620 = vunpack.c.l.b16 %v3437
        %v3621 = vunpack.c.l.b16 %v3438
        %v3622 = vpack.c.b16 %v3619, %v3618
        %v3623 = vpack.c.b16 %v3621, %v3620
        %v3627 = vsel %vm640, %v3439, 0
        %3629 = vmatprep.subr.bf16.mxu0 0
        %3630 = vmatpush1.bf16.msra.mxu0 %v3622
        %3631 = vmatprep.subr.bf16.mxu0 0
        %3632 = vmatpush1.bf16.msra.mxu0 %v3623
        %3633 = vmatprep.subr.bf16.mxu0 0
        %3634 = vmatpush1.bf16.msra.mxu0 0
        %3635 = vmatprep.subr.bf16.mxu0 0
        %3636 = vmatpush1.bf16.msra.mxu0 0
        %3637 = vmatprep.subr.bf16.mxu0 0
        %3638 = vmatpush1.bf16.msra.mxu0 0
        %3639 = vmatprep.subr.bf16.mxu0 0
        %3640 = vmatpush1.bf16.msra.mxu0 0
        %3641 = vmatprep.subr.bf16.mxu0 0
        %3642 = vmatpush1.bf16.msra.mxu0 0
        %3643 = vmatprep.subr.bf16.mxu0 0
        %3644 = vmatpush1.bf16.msra.mxu0 0
        %3645 = vmatprep.subr.bf16.mxu0 0
        %3646 = vmatpush1.bf16.msra.mxu0 0
        %3647 = vmatprep.subr.bf16.mxu0 0
        %3648 = vmatpush1.bf16.msra.mxu0 0
        %3649 = vmatprep.subr.bf16.mxu0 0
        %3650 = vmatpush1.bf16.msra.mxu0 0
        %3651 = vmatprep.subr.bf16.mxu0 0
        %3652 = vmatpush1.bf16.msra.mxu0 0
        %3653 = vmatprep.subr.bf16.mxu0 0
        %3654 = vmatpush1.bf16.msra.mxu0 0
        %3655 = vmatprep.subr.bf16.mxu0 0
        %3656 = vmatpush1.bf16.msra.mxu0 0
        %3657 = vmatprep.subr.bf16.mxu0 0
        %3658 = vmatpush1.bf16.msra.mxu0 0
        %3659 = vmatprep.subr.bf16.mxu0 0
        %3660 = vmatpush1.bf16.msra.mxu0 0
        %3661 = vmatprep.mubr.bf16.mxu0 0
        %3662 = vmatmul.mubr.bf16.gmra.mrb[0].mxu0 %v3627
        %v3663 = vpop.f32.mrb[0].mxu0
        %v3664 = vadd.f32 %v3609, %v3663
        %v3665 = vpop.f32.mrb[0].mxu0
        %v3666 = vpop.f32.mrb[0].mxu0
        %v3667 = vpop.f32.mrb[0].mxu0
        %3668 = vdwg.mxu0
        %v3669 = vld [vmem:[#allocation10 + $0x43] sm:$0x1]
        %v3670 = vlaneseq
        %v3671 = vshrl.u32 %v3670, 7
        %v3672 = vsub.s32 0, %v3671
        %v3673 = vrot.slane %v3669, %v3672
        %v3674 = vadd.f32 %v3664, %v3673
        %v3675 = vadd.f32 %v1957, %v3674
        %v3676 = vld [vmem:[#allocation10 + $0x48] sm:$0x1]
        %v3677 = vld [vmem:[#allocation10 + $0x49] sm:$0x1]
        %v3678 = vsel %vm440, %v3675, 0.0
        %3679 = vadd.xlane.f32.xlu0 %v3678
        %v3680 = vpop.xlane.xlu0 %3679
        %v3681 = vmul.f32 %v3680, %v994
        %v3682 = vsub.f32 %v3675, %v3681
        %v3683 = vmul.f32 %v3682, %v3682
        %v3684 = vsel %vm440, %v3683, 0.0
        %3685 = vadd.xlane.f32.xlu0 %v3684
        %v3686 = vpop.xlane.xlu0 %3685
        %v3687 = vmul.f32 %v3686, %v994
        %v3688 = vadd.f32 %v3687, 1e-06
        %v3689 = vrsqrt.pop %v3688
        %v3690 = vmul.f32 %v3682, %v3689
        %v3691 = vlaneseq
        %v3692 = vshrl.u32 %v3691, 7
        %v3693 = vsub.s32 0, %v3692
        %v3694 = vrot.slane %v3676, %v3693
        %v3695 = vmul.f32 %v3690, %v3694
        %v3696 = vlaneseq
        %v3697 = vshrl.u32 %v3696, 7
        %v3698 = vsub.s32 0, %v3697
        %v3699 = vrot.slane %v3677, %v3698
        %v3700 = vadd.f32 %v3695, %v3699
        %v3701 = vadd.f32 %v3088, %v386
        %v3702 = vadd.f32 %v3089, %v387
        %v3703 = vadd.f32 %v3090, %v388
        %v3704 = vadd.f32 %v3091, %v389
        %v3705 = vadd.f32 %v3092, %v390
        %v3706 = vadd.f32 %v3093, %v391
        %v3707 = vadd.f32 %v3094, %v392
        %v3708 = vadd.f32 %v3095, %v393
        %v3709 = vadd.f32 %v3700, %v385
        %v3710 = vpack.c.bf16 %v3709, %v3709
        %v3711 = vpack.c.bf16 %v3702, %v3701
        %v3712 = vpack.c.bf16 %v3704, %v3703
        %v3713 = vpack.c.bf16 %v3706, %v3705
        %v3714 = vpack.c.bf16 %v3708, %v3707
        %v3715 = vpack.c.bf16 %v3089, %v3088
        %v3716 = vpack.c.bf16 %v3091, %v3090
        %v3717 = vpack.c.bf16 %v3093, %v3092
        %v3718 = vpack.c.bf16 %v3095, %v3094
        %v3719 = vld [vmem:[#allocation8 + $0x240] sm:$0xf]
        %v3720 = vld [vmem:[#allocation8 + $0x244] sm:$0xf]
        %v3721 = vld [vmem:[#allocation8 + $0x248] sm:$0xf]
        %v3722 = vld [vmem:[#allocation8 + $0x24c] sm:$0xf]
        %v3723 = vld [vmem:[#allocation8 + $0x250] sm:$0xf]
        %v3724 = vld [vmem:[#allocation8 + $0x254] sm:$0xf]
        %v3725 = vld [vmem:[#allocation8 + $0x258] sm:$0xf]
        %v3726 = vld [vmem:[#allocation8 + $0x25c] sm:$0xf]
        %v3727 = vld [vmem:[#allocation10 + $0x50] sm:$0x1]
        %v3728 = vlaneseq
        %v3729 = vshrl.u32 %v3728, 7
        %v3730 = vsub.s32 0, %v3729
        %v3731 = vrot.slane %v3727, %v3730
        %v3740 = vunpack.c.l.b16 %v3719
        %v3741 = vunpack.c.l.b16 %v3720
        %v3742 = vunpack.c.l.b16 %v3721
        %v3743 = vunpack.c.l.b16 %v3722
        %v3744 = vunpack.c.l.b16 %v3723
        %v3745 = vunpack.c.l.b16 %v3724
        %v3746 = vunpack.c.l.b16 %v3725
        %v3747 = vunpack.c.l.b16 %v3726
        %v3748 = vpack.c.b16 %v3741, %v3740
        %v3749 = vpack.c.b16 %v3743, %v3742
        %v3750 = vpack.c.b16 %v3745, %v3744
        %v3751 = vpack.c.b16 %v3747, %v3746
        %v3757 = vsel %vm440, %v3710, 0
        %3759 = vmatprep.subr.bf16.mxu0 0
        %3760 = vmatpush1.bf16.msra.mxu0 %v3748
        %3761 = vmatprep.subr.bf16.mxu0 0
        %3762 = vmatpush1.bf16.msra.mxu0 %v3749
        %3763 = vmatprep.subr.bf16.mxu0 0
        %3764 = vmatpush1.bf16.msra.mxu0 %v3750
        %3765 = vmatprep.subr.bf16.mxu0 0
        %3766 = vmatpush1.bf16.msra.mxu0 %v3751
        %3767 = vmatprep.subr.bf16.mxu0 0
        %3768 = vmatpush1.bf16.msra.mxu0 0
        %3769 = vmatprep.subr.bf16.mxu0 0
        %3770 = vmatpush1.bf16.msra.mxu0 0
        %3771 = vmatprep.subr.bf16.mxu0 0
        %3772 = vmatpush1.bf16.msra.mxu0 0
        %3773 = vmatprep.subr.bf16.mxu0 0
        %3774 = vmatpush1.bf16.msra.mxu0 0
        %3775 = vmatprep.subr.bf16.mxu0 0
        %3776 = vmatpush1.bf16.msra.mxu0 0
        %3777 = vmatprep.subr.bf16.mxu0 0
        %3778 = vmatpush1.bf16.msra.mxu0 0
        %3779 = vmatprep.subr.bf16.mxu0 0
        %3780 = vmatpush1.bf16.msra.mxu0 0
        %3781 = vmatprep.subr.bf16.mxu0 0
        %3782 = vmatpush1.bf16.msra.mxu0 0
        %3783 = vmatprep.subr.bf16.mxu0 0
        %3784 = vmatpush1.bf16.msra.mxu0 0
        %3785 = vmatprep.subr.bf16.mxu0 0
        %3786 = vmatpush1.bf16.msra.mxu0 0
        %3787 = vmatprep.subr.bf16.mxu0 0
        %3788 = vmatpush1.bf16.msra.mxu0 0
        %3789 = vmatprep.subr.bf16.mxu0 0
        %3790 = vmatpush1.bf16.msra.mxu0 0
        %3791 = vmatprep.mubr.bf16.mxu0 0
        %3792 = vmatmul.mubr.bf16.gmra.mrb[0].mxu0 %v3757
        %v3793 = vpop.f32.mrb[0].mxu0
        %v3794 = vadd.f32 %v3731, %v3793
        %v3795 = vpop.f32.mrb[0].mxu0
        %v3796 = vpop.f32.mrb[0].mxu0
        %v3797 = vpop.f32.mrb[0].mxu0
        %3798 = vdwg.mxu0
        %v3799 = vld [vmem:[#allocation8 + $0x260] sm:$0xf]
        %v3800 = vld [vmem:[#allocation8 + $0x264] sm:$0xf]
        %v3801 = vld [vmem:[#allocation8 + $0x268] sm:$0xf]
        %v3802 = vld [vmem:[#allocation8 + $0x26c] sm:$0xf]
        %v3803 = vld [vmem:[#allocation8 + $0x270] sm:$0xf]
        %v3804 = vld [vmem:[#allocation8 + $0x274] sm:$0xf]
        %v3805 = vld [vmem:[#allocation8 + $0x278] sm:$0xf]
        %v3806 = vld [vmem:[#allocation8 + $0x27c] sm:$0xf]
        %v3807 = vld [vmem:[#allocation10 + $0x51] sm:$0x1]
        %v3808 = vlaneseq
        %v3809 = vshrl.u32 %v3808, 7
        %v3810 = vsub.s32 0, %v3809
        %v3811 = vrot.slane %v3807, %v3810
        %v3820 = vunpack.c.l.b16 %v3799
        %v3821 = vunpack.c.l.b16 %v3800
        %v3822 = vunpack.c.l.b16 %v3801
        %v3823 = vunpack.c.l.b16 %v3802
        %v3824 = vunpack.c.l.b16 %v3803
        %v3825 = vunpack.c.l.b16 %v3804
        %v3826 = vunpack.c.l.b16 %v3805
        %v3827 = vunpack.c.l.b16 %v3806
        %v3828 = vpack.c.b16 %v3821, %v3820
        %v3829 = vpack.c.b16 %v3823, %v3822
        %v3830 = vpack.c.b16 %v3825, %v3824
        %v3831 = vpack.c.b16 %v3827, %v3826
        %v3837 = vsel %vm440, %v3711, 0
        %v3840 = vsel %vm440, %v3712, 0
        %v3843 = vsel %vm440, %v3713, 0
        %v3846 = vsel %vm440, %v3714, 0
        %3848 = vmatprep.subr.bf16.mxu0 0
        %3849 = vmatpush1.bf16.msra.mxu0 %v3828
        %3850 = vmatprep.subr.bf16.mxu0 0
        %3851 = vmatpush1.bf16.msra.mxu0 %v3829
        %3852 = vmatprep.subr.bf16.mxu0 0
        %3853 = vmatpush1.bf16.msra.mxu0 %v3830
        %3854 = vmatprep.subr.bf16.mxu0 0
        %3855 = vmatpush1.bf16.msra.mxu0 %v3831
        %3856 = vmatprep.subr.bf16.mxu0 0
        %3857 = vmatpush1.bf16.msra.mxu0 0
        %3858 = vmatprep.subr.bf16.mxu0 0
        %3859 = vmatpush1.bf16.msra.mxu0 0
        %3860 = vmatprep.subr.bf16.mxu0 0
        %3861 = vmatpush1.bf16.msra.mxu0 0
        %3862 = vmatprep.subr.bf16.mxu0 0
        %3863 = vmatpush1.bf16.msra.mxu0 0
        %3864 = vmatprep.subr.bf16.mxu0 0
        %3865 = vmatpush1.bf16.msra.mxu0 0
        %3866 = vmatprep.subr.bf16.mxu0 0
        %3867 = vmatpush1.bf16.msra.mxu0 0
        %3868 = vmatprep.subr.bf16.mxu0 0
        %3869 = vmatpush1.bf16.msra.mxu0 0
        %3870 = vmatprep.subr.bf16.mxu0 0
        %3871 = vmatpush1.bf16.msra.mxu0 0
        %3872 = vmatprep.subr.bf16.mxu0 0
        %3873 = vmatpush1.bf16.msra.mxu0 0
        %3874 = vmatprep.subr.bf16.mxu0 0
        %3875 = vmatpush1.bf16.msra.mxu0 0
        %3876 = vmatprep.subr.bf16.mxu0 0
        %3877 = vmatpush1.bf16.msra.mxu0 0
        %3878 = vmatprep.subr.bf16.mxu0 0
        %3879 = vmatpush1.bf16.msra.mxu0 0
        %3880 = vmatprep.mubr.bf16.mxu0 0
        %3881 = vmatmul.mubr.bf16.gmra.mrb[0].mxu0 %v3837
        %v3882 = vpop.f32.mrb[0].mxu0
        %v3883 = vadd.f32 %v3811, %v3882
        %v3884 = vpop.f32.mrb[0].mxu0
        %v3885 = vpop.f32.mrb[0].mxu0
        %v3886 = vadd.f32 %v3811, %v3885
        %v3887 = vpop.f32.mrb[0].mxu0
        %3888 = vmatprep.mubr.bf16.mxu0 0
        %3889 = vmatmul.mubr.bf16.gmra.mrb[0].mxu0 %v3840
        %v3890 = vpop.f32.mrb[0].mxu0
        %v3891 = vadd.f32 %v3811, %v3890
        %v3892 = vpop.f32.mrb[0].mxu0
        %v3893 = vpop.f32.mrb[0].mxu0
        %v3894 = vadd.f32 %v3811, %v3893
        %v3895 = vpop.f32.mrb[0].mxu0
        %3896 = vmatprep.mubr.bf16.mxu0 0
        %3897 = vmatmul.mubr.bf16.gmra.mrb[0].mxu0 %v3843
        %v3898 = vpop.f32.mrb[0].mxu0
        %v3899 = vadd.f32 %v3811, %v3898
        %v3900 = vpop.f32.mrb[0].mxu0
        %v3901 = vpop.f32.mrb[0].mxu0
        %v3902 = vadd.f32 %v3811, %v3901
        %v3903 = vpop.f32.mrb[0].mxu0
        %3904 = vmatprep.mubr.bf16.mxu0 0
        %3905 = vmatmul.mubr.bf16.gmra.mrb[0].mxu0 %v3846
        %v3906 = vpop.f32.mrb[0].mxu0
        %v3907 = vadd.f32 %v3811, %v3906
        %v3908 = vpop.f32.mrb[0].mxu0
        %v3909 = vpop.f32.mrb[0].mxu0
        %v3910 = vadd.f32 %v3811, %v3909
        %v3911 = vpop.f32.mrb[0].mxu0
        %3912 = vdwg.mxu0
        %v3913 = vld [vmem:[#allocation8 + $0x280] sm:$0xf]
        %v3914 = vld [vmem:[#allocation8 + $0x284] sm:$0xf]
        %v3915 = vld [vmem:[#allocation8 + $0x288] sm:$0xf]
        %v3916 = vld [vmem:[#allocation8 + $0x28c] sm:$0xf]
        %v3917 = vld [vmem:[#allocation8 + $0x290] sm:$0xf]
        %v3918 = vld [vmem:[#allocation8 + $0x294] sm:$0xf]
        %v3919 = vld [vmem:[#allocation8 + $0x298] sm:$0xf]
        %v3920 = vld [vmem:[#allocation8 + $0x29c] sm:$0xf]
        %v3921 = vld [vmem:[#allocation10 + $0x52] sm:$0x1]
        %v3922 = vlaneseq
        %v3923 = vshrl.u32 %v3922, 7
        %v3924 = vsub.s32 0, %v3923
        %v3925 = vrot.slane %v3921, %v3924
        %v3934 = vunpack.c.l.b16 %v3913
        %v3935 = vunpack.c.l.b16 %v3914
        %v3936 = vunpack.c.l.b16 %v3915
        %v3937 = vunpack.c.l.b16 %v3916
        %v3938 = vunpack.c.l.b16 %v3917
        %v3939 = vunpack.c.l.b16 %v3918
        %v3940 = vunpack.c.l.b16 %v3919
        %v3941 = vunpack.c.l.b16 %v3920
        %v3942 = vpack.c.b16 %v3935, %v3934
        %v3943 = vpack.c.b16 %v3937, %v3936
        %v3944 = vpack.c.b16 %v3939, %v3938
        %v3945 = vpack.c.b16 %v3941, %v3940
        %v3951 = vsel %vm440, %v3715, 0
        %v3954 = vsel %vm440, %v3716, 0
        %v3957 = vsel %vm440, %v3717, 0
        %v3960 = vsel %vm440, %v3718, 0
        %3962 = vmatprep.subr.bf16.mxu0 0
        %3963 = vmatpush1.bf16.msra.mxu0 %v3942
        %3964 = vmatprep.subr.bf16.mxu0 0
        %3965 = vmatpush1.bf16.msra.mxu0 %v3943
        %3966 = vmatprep.subr.bf16.mxu0 0
        %3967 = vmatpush1.bf16.msra.mxu0 %v3944
        %3968 = vmatprep.subr.bf16.mxu0 0
        %3969 = vmatpush1.bf16.msra.mxu0 %v3945
        %3970 = vmatprep.subr.bf16.mxu0 0
        %3971 = vmatpush1.bf16.msra.mxu0 0
        %3972 = vmatprep.subr.bf16.mxu0 0
        %3973 = vmatpush1.bf16.msra.mxu0 0
        %3974 = vmatprep.subr.bf16.mxu0 0
        %3975 = vmatpush1.bf16.msra.mxu0 0
        %3976 = vmatprep.subr.bf16.mxu0 0
        %3977 = vmatpush1.bf16.msra.mxu0 0
        %3978 = vmatprep.subr.bf16.mxu0 0
        %3979 = vmatpush1.bf16.msra.mxu0 0
        %3980 = vmatprep.subr.bf16.mxu0 0
        %3981 = vmatpush1.bf16.msra.mxu0 0
        %3982 = vmatprep.subr.bf16.mxu0 0
        %3983 = vmatpush1.bf16.msra.mxu0 0
        %3984 = vmatprep.subr.bf16.mxu0 0
        %3985 = vmatpush1.bf16.msra.mxu0 0
        %3986 = vmatprep.subr.bf16.mxu0 0
        %3987 = vmatpush1.bf16.msra.mxu0 0
        %3988 = vmatprep.subr.bf16.mxu0 0
        %3989 = vmatpush1.bf16.msra.mxu0 0
        %3990 = vmatprep.subr.bf16.mxu0 0
        %3991 = vmatpush1.bf16.msra.mxu0 0
        %3992 = vmatprep.subr.bf16.mxu0 0
        %3993 = vmatpush1.bf16.msra.mxu0 0
        %3994 = vmatprep.mubr.bf16.mxu0 0
        %3995 = vmatmul.mubr.bf16.gmra.mrb[0].mxu0 %v3951
        %v3996 = vpop.f32.mrb[0].mxu0
        %v3997 = vadd.f32 %v3925, %v3996
        %v3998 = vpop.f32.mrb[0].mxu0
        %v3999 = vpop.f32.mrb[0].mxu0
        %v4000 = vadd.f32 %v3925, %v3999
        %v4001 = vpop.f32.mrb[0].mxu0
        %4002 = vmatprep.mubr.bf16.mxu0 0
        %4003 = vmatmul.mubr.bf16.gmra.mrb[0].mxu0 %v3954
        %v4004 = vpop.f32.mrb[0].mxu0
        %v4005 = vadd.f32 %v3925, %v4004
        %v4006 = vpop.f32.mrb[0].mxu0
        %v4007 = vpop.f32.mrb[0].mxu0
        %v4008 = vadd.f32 %v3925, %v4007
        %v4009 = vpop.f32.mrb[0].mxu0
        %4010 = vmatprep.mubr.bf16.mxu0 0
        %4011 = vmatmul.mubr.bf16.gmra.mrb[0].mxu0 %v3957
        %v4012 = vpop.f32.mrb[0].mxu0
        %v4013 = vadd.f32 %v3925, %v4012
        %v4014 = vpop.f32.mrb[0].mxu0
        %v4015 = vpop.f32.mrb[0].mxu0
        %v4016 = vadd.f32 %v3925, %v4015
        %v4017 = vpop.f32.mrb[0].mxu0
        %4018 = vmatprep.mubr.bf16.mxu0 0
        %4019 = vmatmul.mubr.bf16.gmra.mrb[0].mxu0 %v3960
        %v4020 = vpop.f32.mrb[0].mxu0
        %v4021 = vadd.f32 %v3925, %v4020
        %v4022 = vpop.f32.mrb[0].mxu0
        %v4023 = vpop.f32.mrb[0].mxu0
        %v4024 = vadd.f32 %v3925, %v4023
        %v4025 = vpop.f32.mrb[0].mxu0
        %4026 = vdwg.mxu0
        %v4027 = vpack.c.bf16 %v3794, %v3794
        %v4028 = vpack.c.bf16 %v3886, %v3883
        %v4029 = vpack.c.bf16 %v3894, %v3891
        %v4030 = vpack.c.bf16 %v3902, %v3899
        %v4031 = vpack.c.bf16 %v3910, %v3907
        %v4033 = vsel %vm1346, %v4027, 0
        %v4036 = vsel %vm1346, %v4028, 0
        %v4039 = vsel %vm1346, %v4029, 0
        %v4042 = vsel %vm1346, %v4030, 0
        %v4045 = vsel %vm1346, %v4031, 0
        %4047 = vmatprep.subr.bf16.mxu0 0
        %4048 = vmatpush1.bf16.xpose.msra.mxu0 %v4036
        %4049 = vmatprep.subr.bf16.mxu0 0
        %4050 = vmatpush1.bf16.xpose.msra.mxu0 %v4039
        %4051 = vmatprep.subr.bf16.mxu0 0
        %4052 = vmatpush1.bf16.xpose.msra.mxu0 %v4042
        %4053 = vmatprep.subr.bf16.mxu0 0
        %4054 = vmatpush1.bf16.xpose.msra.mxu0 %v4045
        %4055 = vmatprep.subr.bf16.mxu0 0
        %4056 = vmatpush1.bf16.xpose.msra.mxu0 0
        %4057 = vmatprep.subr.bf16.mxu0 0
        %4058 = vmatpush1.bf16.xpose.msra.mxu0 0
        %4059 = vmatprep.subr.bf16.mxu0 0
        %4060 = vmatpush1.bf16.xpose.msra.mxu0 0
        %4061 = vmatprep.subr.bf16.mxu0 0
        %4062 = vmatpush1.bf16.xpose.msra.mxu0 0
        %4063 = vmatprep.subr.bf16.mxu0 0
        %4064 = vmatpush1.bf16.xpose.msra.mxu0 0
        %4065 = vmatprep.subr.bf16.mxu0 0
        %4066 = vmatpush1.bf16.xpose.msra.mxu0 0
        %4067 = vmatprep.subr.bf16.mxu0 0
        %4068 = vmatpush1.bf16.xpose.msra.mxu0 0
        %4069 = vmatprep.subr.bf16.mxu0 0
        %4070 = vmatpush1.bf16.xpose.msra.mxu0 0
        %4071 = vmatprep.subr.bf16.mxu0 0
        %4072 = vmatpush1.bf16.xpose.msra.mxu0 0
        %4073 = vmatprep.subr.bf16.mxu0 0
        %4074 = vmatpush1.bf16.xpose.msra.mxu0 0
        %4075 = vmatprep.subr.bf16.mxu0 0
        %4076 = vmatpush1.bf16.xpose.msra.mxu0 0
        %4077 = vmatprep.subr.bf16.mxu0 0
        %4078 = vmatpush1.bf16.xpose.msra.mxu0 0
        %4079 = vmatprep.mubr.bf16.mxu0 0
        %4080 = vmatmul.mubr.bf16.gmra.mrb[0].mxu0 %v4033
        %v4081 = vpop.f32.mrb[0].mxu0
        %v4082 = vadd.f32 0.0, %v4081
        %v4083 = vpop.f32.mrb[0].mxu0
        %v4084 = vpop.f32.mrb[0].mxu0
        %v4085 = vpop.f32.mrb[0].mxu0
        %4086 = vdwg.mxu0
        %v4087 = vmul.f32 %v4082, 0.25
        %v4088 = vsel %vm440, %v4087, -inf
        %4089 = vmax.xlane.f32.xlu0 %v4088
        %v4090 = vpop.xlane.xlu0 %4089
        %v4091 = vsub.f32 %v4087, %v4090
        %v4092 = vmul.f32 %v4091, 1.442695
        %v4093 = vpow.pop %v4092
        %v4094 = vsel %vm440, %v4093, 0.0
        %4095 = vadd.xlane.f32.xlu0 %v4094
        %v4096 = vpop.xlane.xlu0 %4095
        %v4097 = vrcp.pop %v4096
        %v4098 = vmul.f32 %v4093, %v4097
        %v4099 = vpack.c.bf16 %v4098, %v4098
        %v4100 = vpack.c.bf16 %v4000, %v3997
        %v4101 = vpack.c.bf16 %v4008, %v4005
        %v4102 = vpack.c.bf16 %v4016, %v4013
        %v4103 = vpack.c.bf16 %v4024, %v4021
        %v4105 = vsel %vm440, %v4099, 0
        %4107 = vmatprep.subr.bf16.mxu0 0
        %4108 = vmatpush1.bf16.msra.mxu0 %v4100
        %4109 = vmatprep.subr.bf16.mxu0 0
        %4110 = vmatpush1.bf16.msra.mxu0 %v4101
        %4111 = vmatprep.subr.bf16.mxu0 0
        %4112 = vmatpush1.bf16.msra.mxu0 %v4102
        %4113 = vmatprep.subr.bf16.mxu0 0
        %4114 = vmatpush1.bf16.msra.mxu0 %v4103
        %4115 = vmatprep.subr.bf16.mxu0 0
        %4116 = vmatpush1.bf16.msra.mxu0 0
        %4117 = vmatprep.subr.bf16.mxu0 0
        %4118 = vmatpush1.bf16.msra.mxu0 0
        %4119 = vmatprep.subr.bf16.mxu0 0
        %4120 = vmatpush1.bf16.msra.mxu0 0
        %4121 = vmatprep.subr.bf16.mxu0 0
        %4122 = vmatpush1.bf16.msra.mxu0 0
        %4123 = vmatprep.subr.bf16.mxu0 0
        %4124 = vmatpush1.bf16.msra.mxu0 0
        %4125 = vmatprep.subr.bf16.mxu0 0
        %4126 = vmatpush1.bf16.msra.mxu0 0
        %4127 = vmatprep.subr.bf16.mxu0 0
        %4128 = vmatpush1.bf16.msra.mxu0 0
        %4129 = vmatprep.subr.bf16.mxu0 0
        %4130 = vmatpush1.bf16.msra.mxu0 0
        %4131 = vmatprep.subr.bf16.mxu0 0
        %4132 = vmatpush1.bf16.msra.mxu0 0
        %4133 = vmatprep.subr.bf16.mxu0 0
        %4134 = vmatpush1.bf16.msra.mxu0 0
        %4135 = vmatprep.subr.bf16.mxu0 0
        %4136 = vmatpush1.bf16.msra.mxu0 0
        %4137 = vmatprep.subr.bf16.mxu0 0
        %4138 = vmatpush1.bf16.msra.mxu0 0
        %4139 = vmatprep.mubr.bf16.mxu0 0
        %4140 = vmatmul.mubr.bf16.gmra.mrb[0].mxu0 %v4105
        %v4141 = vpop.f32.mrb[0].mxu0
        %v4142 = vadd.f32 0.0, %v4141
        %v4143 = vpop.f32.mrb[0].mxu0
        %v4144 = vpop.f32.mrb[0].mxu0
        %v4145 = vpop.f32.mrb[0].mxu0
        %4146 = vdwg.mxu0
        %v4147 = vld [vmem:[#allocation8 + $0x2a0] sm:$0xf]
        %v4148 = vld [vmem:[#allocation8 + $0x2a4] sm:$0xf]
        %v4149 = vpack.c.bf16 %v4142, %v4142
        %4151 = vrot.lane.b32.xlu0 %v4027, 112
        %v4152 = vpop.permute.xlu0 %4151
        %4157 = vrot.lane.b32.xlu0 %v4028, 112
        %v4158 = vpop.permute.xlu0 %4157
        %4159 = vrot.lane.b32.xlu0 %v4029, 112
        %v4160 = vpop.permute.xlu0 %4159
        %4161 = vrot.lane.b32.xlu0 %v4030, 112
        %v4162 = vpop.permute.xlu0 %4161
        %4163 = vrot.lane.b32.xlu0 %v4031, 112
        %v4164 = vpop.permute.xlu0 %4163
        %v4166 = vsel %vm1346, %v4152, 0
        %v4169 = vsel %vm1346, %v4158, 0
        %v4172 = vsel %vm1346, %v4160, 0
        %v4175 = vsel %vm1346, %v4162, 0
        %v4178 = vsel %vm1346, %v4164, 0
        %4180 = vmatprep.subr.bf16.mxu0 0
        %4181 = vmatpush1.bf16.xpose.msra.mxu0 %v4169
        %4182 = vmatprep.subr.bf16.mxu0 0
        %4183 = vmatpush1.bf16.xpose.msra.mxu0 %v4172
        %4184 = vmatprep.subr.bf16.mxu0 0
        %4185 = vmatpush1.bf16.xpose.msra.mxu0 %v4175
        %4186 = vmatprep.subr.bf16.mxu0 0
        %4187 = vmatpush1.bf16.xpose.msra.mxu0 %v4178
        %4188 = vmatprep.subr.bf16.mxu0 0
        %4189 = vmatpush1.bf16.xpose.msra.mxu0 0
        %4190 = vmatprep.subr.bf16.mxu0 0
        %4191 = vmatpush1.bf16.xpose.msra.mxu0 0
        %4192 = vmatprep.subr.bf16.mxu0 0
        %4193 = vmatpush1.bf16.xpose.msra.mxu0 0
        %4194 = vmatprep.subr.bf16.mxu0 0
        %4195 = vmatpush1.bf16.xpose.msra.mxu0 0
        %4196 = vmatprep.subr.bf16.mxu0 0
        %4197 = vmatpush1.bf16.xpose.msra.mxu0 0
        %4198 = vmatprep.subr.bf16.mxu0 0
        %4199 = vmatpush1.bf16.xpose.msra.mxu0 0
        %4200 = vmatprep.subr.bf16.mxu0 0
        %4201 = vmatpush1.bf16.xpose.msra.mxu0 0
        %4202 = vmatprep.subr.bf16.mxu0 0
        %4203 = vmatpush1.bf16.xpose.msra.mxu0 0
        %4204 = vmatprep.subr.bf16.mxu0 0
        %4205 = vmatpush1.bf16.xpose.msra.mxu0 0
        %4206 = vmatprep.subr.bf16.mxu0 0
        %4207 = vmatpush1.bf16.xpose.msra.mxu0 0
        %4208 = vmatprep.subr.bf16.mxu0 0
        %4209 = vmatpush1.bf16.xpose.msra.mxu0 0
        %4210 = vmatprep.subr.bf16.mxu0 0
        %4211 = vmatpush1.bf16.xpose.msra.mxu0 0
        %4212 = vmatprep.mubr.bf16.mxu0 0
        %4213 = vmatmul.mubr.bf16.gmra.mrb[0].mxu0 %v4166
        %v4214 = vpop.f32.mrb[0].mxu0
        %v4215 = vadd.f32 0.0, %v4214
        %v4216 = vpop.f32.mrb[0].mxu0
        %v4217 = vpop.f32.mrb[0].mxu0
        %v4218 = vpop.f32.mrb[0].mxu0
        %4219 = vdwg.mxu0
        %v4220 = vmul.f32 %v4215, 0.25
        %v4221 = vsel %vm440, %v4220, -inf
        %4222 = vmax.xlane.f32.xlu0 %v4221
        %v4223 = vpop.xlane.xlu0 %4222
        %v4224 = vsub.f32 %v4220, %v4223
        %v4225 = vmul.f32 %v4224, 1.442695
        %v4226 = vpow.pop %v4225
        %v4227 = vsel %vm440, %v4226, 0.0
        %4228 = vadd.xlane.f32.xlu0 %v4227
        %v4229 = vpop.xlane.xlu0 %4228
        %v4230 = vrcp.pop %v4229
        %v4231 = vmul.f32 %v4226, %v4230
        %v4232 = vpack.c.bf16 %v4231, %v4231
        %4237 = vrot.lane.b32.xlu0 %v4100, 112
        %v4238 = vpop.permute.xlu0 %4237
        %4239 = vrot.lane.b32.xlu0 %v4101, 112
        %v4240 = vpop.permute.xlu0 %4239
        %4241 = vrot.lane.b32.xlu0 %v4102, 112
        %v4242 = vpop.permute.xlu0 %4241
        %4243 = vrot.lane.b32.xlu0 %v4103, 112
        %v4244 = vpop.permute.xlu0 %4243
        %v4250 = vsel %vm440, %v4232, 0
        %4252 = vmatprep.subr.bf16.mxu0 0
        %4253 = vmatpush1.bf16.msra.mxu0 %v4238
        %4254 = vmatprep.subr.bf16.mxu0 0
        %4255 = vmatpush1.bf16.msra.mxu0 %v4240
        %4256 = vmatprep.subr.bf16.mxu0 0
        %4257 = vmatpush1.bf16.msra.mxu0 %v4242
        %4258 = vmatprep.subr.bf16.mxu0 0
        %4259 = vmatpush1.bf16.msra.mxu0 %v4244
        %4260 = vmatprep.subr.bf16.mxu0 0
        %4261 = vmatpush1.bf16.msra.mxu0 0
        %4262 = vmatprep.subr.bf16.mxu0 0
        %4263 = vmatpush1.bf16.msra.mxu0 0
        %4264 = vmatprep.subr.bf16.mxu0 0
        %4265 = vmatpush1.bf16.msra.mxu0 0
        %4266 = vmatprep.subr.bf16.mxu0 0
        %4267 = vmatpush1.bf16.msra.mxu0 0
        %4268 = vmatprep.subr.bf16.mxu0 0
        %4269 = vmatpush1.bf16.msra.mxu0 0
        %4270 = vmatprep.subr.bf16.mxu0 0
        %4271 = vmatpush1.bf16.msra.mxu0 0
        %4272 = vmatprep.subr.bf16.mxu0 0
        %4273 = vmatpush1.bf16.msra.mxu0 0
        %4274 = vmatprep.subr.bf16.mxu0 0
        %4275 = vmatpush1.bf16.msra.mxu0 0
        %4276 = vmatprep.subr.bf16.mxu0 0
        %4277 = vmatpush1.bf16.msra.mxu0 0
        %4278 = vmatprep.subr.bf16.mxu0 0
        %4279 = vmatpush1.bf16.msra.mxu0 0
        %4280 = vmatprep.subr.bf16.mxu0 0
        %4281 = vmatpush1.bf16.msra.mxu0 0
        %4282 = vmatprep.subr.bf16.mxu0 0
        %4283 = vmatpush1.bf16.msra.mxu0 0
        %4284 = vmatprep.mubr.bf16.mxu0 0
        %4285 = vmatmul.mubr.bf16.gmra.mrb[0].mxu0 %v4250
        %v4286 = vpop.f32.mrb[0].mxu0
        %v4287 = vadd.f32 0.0, %v4286
        %v4288 = vpop.f32.mrb[0].mxu0
        %v4289 = vpop.f32.mrb[0].mxu0
        %v4290 = vpop.f32.mrb[0].mxu0
        %4291 = vdwg.mxu0
        %v4292 = vld [vmem:[#allocation8 + $0x2a8] sm:$0xf]
        %v4293 = vld [vmem:[#allocation8 + $0x2ac] sm:$0xf]
        %v4294 = vpack.c.bf16 %v4287, %v4287
        %v4297 = vunpack.c.l.b16 %v4292
        %v4298 = vunpack.c.l.b16 %v4293
        %v4299 = vpack.c.b16 %v4298, %v4297
        %v4302 = vsel %vm1346, %v4294, 0
        %4304 = vmatprep.subr.bf16.mxu0 0
        %4305 = vmatpush1.bf16.msra.mxu0 %v4299
        %4306 = vmatprep.subr.bf16.mxu0 0
        %4307 = vmatpush1.bf16.msra.mxu0 0
        %4308 = vmatprep.subr.bf16.mxu0 0
        %4309 = vmatpush1.bf16.msra.mxu0 0
        %4310 = vmatprep.subr.bf16.mxu0 0
        %4311 = vmatpush1.bf16.msra.mxu0 0
        %4312 = vmatprep.subr.bf16.mxu0 0
        %4313 = vmatpush1.bf16.msra.mxu0 0
        %4314 = vmatprep.subr.bf16.mxu0 0
        %4315 = vmatpush1.bf16.msra.mxu0 0
        %4316 = vmatprep.subr.bf16.mxu0 0
        %4317 = vmatpush1.bf16.msra.mxu0 0
        %4318 = vmatprep.subr.bf16.mxu0 0
        %4319 = vmatpush1.bf16.msra.mxu0 0
        %4320 = vmatprep.subr.bf16.mxu0 0
        %4321 = vmatpush1.bf16.msra.mxu0 0
        %4322 = vmatprep.subr.bf16.mxu0 0
        %4323 = vmatpush1.bf16.msra.mxu0 0
        %4324 = vmatprep.subr.bf16.mxu0 0
        %4325 = vmatpush1.bf16.msra.mxu0 0
        %4326 = vmatprep.subr.bf16.mxu0 0
        %4327 = vmatpush1.bf16.msra.mxu0 0
        %4328 = vmatprep.subr.bf16.mxu0 0
        %4329 = vmatpush1.bf16.msra.mxu0 0
        %4330 = vmatprep.subr.bf16.mxu0 0
        %4331 = vmatpush1.bf16.msra.mxu0 0
        %4332 = vmatprep.subr.bf16.mxu0 0
        %4333 = vmatpush1.bf16.msra.mxu0 0
        %4334 = vmatprep.subr.bf16.mxu0 0
        %4335 = vmatpush1.bf16.msra.mxu0 0
        %4336 = vmatprep.mubr.bf16.mxu0 0
        %4337 = vmatmul.mubr.bf16.gmra.mrb[0].mxu0 %v4302
        %v4338 = vpop.f32.mrb[0].mxu0
        %v4339 = vadd.f32 0.0, %v4338
        %v4340 = vpop.f32.mrb[0].mxu0
        %v4341 = vpop.f32.mrb[0].mxu0
        %v4342 = vpop.f32.mrb[0].mxu0
        %4343 = vdwg.mxu0
        %v4346 = vunpack.c.l.b16 %v4147
        %v4347 = vunpack.c.l.b16 %v4148
        %v4348 = vpack.c.b16 %v4347, %v4346
        %v4351 = vsel %vm1346, %v4149, 0
        %4353 = vmatprep.subr.bf16.mxu0 0
        %4354 = vmatpush1.bf16.msra.mxu0 %v4348
        %4355 = vmatprep.subr.bf16.mxu0 0
        %4356 = vmatpush1.bf16.msra.mxu0 0
        %4357 = vmatprep.subr.bf16.mxu0 0
        %4358 = vmatpush1.bf16.msra.mxu0 0
        %4359 = vmatprep.subr.bf16.mxu0 0
        %4360 = vmatpush1.bf16.msra.mxu0 0
        %4361 = vmatprep.subr.bf16.mxu0 0
        %4362 = vmatpush1.bf16.msra.mxu0 0
        %4363 = vmatprep.subr.bf16.mxu0 0
        %4364 = vmatpush1.bf16.msra.mxu0 0
        %4365 = vmatprep.subr.bf16.mxu0 0
        %4366 = vmatpush1.bf16.msra.mxu0 0
        %4367 = vmatprep.subr.bf16.mxu0 0
        %4368 = vmatpush1.bf16.msra.mxu0 0
        %4369 = vmatprep.subr.bf16.mxu0 0
        %4370 = vmatpush1.bf16.msra.mxu0 0
        %4371 = vmatprep.subr.bf16.mxu0 0
        %4372 = vmatpush1.bf16.msra.mxu0 0
        %4373 = vmatprep.subr.bf16.mxu0 0
        %4374 = vmatpush1.bf16.msra.mxu0 0
        %4375 = vmatprep.subr.bf16.mxu0 0
        %4376 = vmatpush1.bf16.msra.mxu0 0
        %4377 = vmatprep.subr.bf16.mxu0 0
        %4378 = vmatpush1.bf16.msra.mxu0 0
        %4379 = vmatprep.subr.bf16.mxu0 0
        %4380 = vmatpush1.bf16.msra.mxu0 0
        %4381 = vmatprep.subr.bf16.mxu0 0
        %4382 = vmatpush1.bf16.msra.mxu0 0
        %4383 = vmatprep.subr.bf16.mxu0 0
        %4384 = vmatpush1.bf16.msra.mxu0 0
        %4385 = vmatprep.mubr.bf16.mxu0 0
        %4386 = vmatmul.mubr.bf16.gmra.mrb[0].mxu0 %v4351
        %v4387 = vpop.f32.mrb[0].mxu0
        %v4388 = vadd.f32 %v4339, %v4387
        %v4389 = vpop.f32.mrb[0].mxu0
        %v4390 = vpop.f32.mrb[0].mxu0
        %v4391 = vpop.f32.mrb[0].mxu0
        %4392 = vdwg.mxu0
        %v4393 = vld [vmem:[#allocation10 + $0x53] sm:$0x1]
        %v4394 = vlaneseq
        %v4395 = vshrl.u32 %v4394, 7
        %v4396 = vsub.s32 0, %v4395
        %v4397 = vrot.slane %v4393, %v4396
        %v4398 = vadd.f32 %v4388, %v4397
        %v4399 = vadd.f32 %v3700, %v4398
        %v4400 = vld [vmem:[#allocation10 + $0x58] sm:$0x1]
        %v4401 = vld [vmem:[#allocation10 + $0x59] sm:$0x1]
        %v4402 = vsel %vm440, %v4399, 0.0
        %4403 = vadd.xlane.f32.xlu0 %v4402
        %v4404 = vpop.xlane.xlu0 %4403
        %v4405 = vmul.f32 %v4404, %v994
        %v4406 = vsub.f32 %v4399, %v4405
        %v4407 = vmul.f32 %v4406, %v4406
        %v4408 = vsel %vm440, %v4407, 0.0
        %4409 = vadd.xlane.f32.xlu0 %v4408
        %v4410 = vpop.xlane.xlu0 %4409
        %v4411 = vmul.f32 %v4410, %v994
        %v4412 = vadd.f32 %v4411, 1e-06
        %v4413 = vrsqrt.pop %v4412
        %v4414 = vmul.f32 %v4406, %v4413
        %v4415 = vlaneseq
        %v4416 = vshrl.u32 %v4415, 7
        %v4417 = vsub.s32 0, %v4416
        %v4418 = vrot.slane %v4400, %v4417
        %v4419 = vmul.f32 %v4414, %v4418
        %v4420 = vlaneseq
        %v4421 = vshrl.u32 %v4420, 7
        %v4422 = vsub.s32 0, %v4421
        %v4423 = vrot.slane %v4401, %v4422
        %v4424 = vadd.f32 %v4419, %v4423
        %v4425 = vpack.c.bf16 %v4424, %v4424
        %v4426 = vld [vmem:[#allocation8 + $0x2b0] sm:$0xf]
        %v4427 = vld [vmem:[#allocation8 + $0x2b4] sm:$0xf]
        %v4428 = vld [vmem:[#allocation8 + $0x2b8] sm:$0xf]
        %v4429 = vld [vmem:[#allocation8 + $0x2bc] sm:$0xf]
        %v4430 = vld [vmem:[#allocation8 + $0x2c0] sm:$0xf]
        %v4431 = vld [vmem:[#allocation8 + $0x2c4] sm:$0xf]
        %v4432 = vld [vmem:[#allocation8 + $0x2c8] sm:$0xf]
        %v4433 = vld [vmem:[#allocation8 + $0x2cc] sm:$0xf]
        %v4434 = vld [vmem:[#allocation10 + $0x60] sm:$0x1]
        %v4435 = vlaneseq
        %v4436 = vshrl.u32 %v4435, 7
        %v4437 = vsub.s32 0, %v4436
        %v4438 = vrot.slane %v4434, %v4437
        %v4447 = vunpack.c.l.b16 %v4426
        %v4448 = vunpack.c.l.b16 %v4427
        %v4449 = vunpack.c.l.b16 %v4428
        %v4450 = vunpack.c.l.b16 %v4429
        %v4451 = vunpack.c.l.b16 %v4430
        %v4452 = vunpack.c.l.b16 %v4431
        %v4453 = vunpack.c.l.b16 %v4432
        %v4454 = vunpack.c.l.b16 %v4433
        %v4455 = vpack.c.b16 %v4448, %v4447
        %v4456 = vpack.c.b16 %v4450, %v4449
        %v4457 = vpack.c.b16 %v4452, %v4451
        %v4458 = vpack.c.b16 %v4454, %v4453
        %v4464 = vsel %vm440, %v4425, 0
        %4466 = vmatprep.subr.bf16.mxu0 0
        %4467 = vmatpush1.bf16.msra.mxu0 %v4455
        %4468 = vmatprep.subr.bf16.mxu0 0
        %4469 = vmatpush1.bf16.msra.mxu0 %v4456
        %4470 = vmatprep.subr.bf16.mxu0 0
        %4471 = vmatpush1.bf16.msra.mxu0 %v4457
        %4472 = vmatprep.subr.bf16.mxu0 0
        %4473 = vmatpush1.bf16.msra.mxu0 %v4458
        %4474 = vmatprep.subr.bf16.mxu0 0
        %4475 = vmatpush1.bf16.msra.mxu0 0
        %4476 = vmatprep.subr.bf16.mxu0 0
        %4477 = vmatpush1.bf16.msra.mxu0 0
        %4478 = vmatprep.subr.bf16.mxu0 0
        %4479 = vmatpush1.bf16.msra.mxu0 0
        %4480 = vmatprep.subr.bf16.mxu0 0
        %4481 = vmatpush1.bf16.msra.mxu0 0
        %4482 = vmatprep.subr.bf16.mxu0 0
        %4483 = vmatpush1.bf16.msra.mxu0 0
        %4484 = vmatprep.subr.bf16.mxu0 0
        %4485 = vmatpush1.bf16.msra.mxu0 0
        %4486 = vmatprep.subr.bf16.mxu0 0
        %4487 = vmatpush1.bf16.msra.mxu0 0
        %4488 = vmatprep.subr.bf16.mxu0 0
        %4489 = vmatpush1.bf16.msra.mxu0 0
        %4490 = vmatprep.subr.bf16.mxu0 0
        %4491 = vmatpush1.bf16.msra.mxu0 0
        %4492 = vmatprep.subr.bf16.mxu0 0
        %4493 = vmatpush1.bf16.msra.mxu0 0
        %4494 = vmatprep.subr.bf16.mxu0 0
        %4495 = vmatpush1.bf16.msra.mxu0 0
        %4496 = vmatprep.subr.bf16.mxu0 0
        %4497 = vmatpush1.bf16.msra.mxu0 0
        %4498 = vmatprep.mubr.bf16.mxu0 0
        %4499 = vmatmul.mubr.bf16.gmra.mrb[0].mxu0 %v4464
        %v4500 = vpop.f32.mrb[0].mxu0
        %v4501 = vadd.f32 %v4438, %v4500
        %v4502 = vpop.f32.mrb[0].mxu0
        %v4503 = vpop.f32.mrb[0].mxu0
        %v4504 = vpop.f32.mrb[0].mxu0
        %4505 = vdwg.mxu0
        %v4506 = vmax.f32 %v4501, 0.0
        %v4507 = vld [vmem:[#allocation8 + $0x2d0] sm:$0xf]
        %v4508 = vld [vmem:[#allocation8 + $0x2d4] sm:$0xf]
        %v4509 = vld [vmem:[#allocation8 + $0x2d8] sm:$0xf]
        %v4510 = vld [vmem:[#allocation8 + $0x2dc] sm:$0xf]
        %v4511 = vld [vmem:[#allocation8 + $0x2e0] sm:$0xf]
        %v4512 = vld [vmem:[#allocation8 + $0x2e4] sm:$0xf]
        %v4513 = vld [vmem:[#allocation8 + $0x2e8] sm:$0xf]
        %v4514 = vld [vmem:[#allocation8 + $0x2ec] sm:$0xf]
        %v4515 = vld [vmem:[#allocation8 + $0x2f0] sm:$0xf]
        %v4516 = vld [vmem:[#allocation8 + $0x2f4] sm:$0xf]
        %v4517 = vld [vmem:[#allocation8 + $0x2f8] sm:$0xf]
        %v4518 = vld [vmem:[#allocation8 + $0x2fc] sm:$0xf]
        %v4519 = vld [vmem:[#allocation8 + $0x300] sm:$0xf]
        %v4520 = vld [vmem:[#allocation8 + $0x304] sm:$0xf]
        %v4521 = vld [vmem:[#allocation8 + $0x308] sm:$0xf]
        %v4522 = vld [vmem:[#allocation8 + $0x30c] sm:$0xf]
        %v4523 = vpack.c.bf16 %v4506, %v4506
        %v4524 = vld [vmem:[#allocation10 + $0x61] sm:$0x1]
        %v4525 = vlaneseq
        %v4526 = vshrl.u32 %v4525, 7
        %v4527 = vsub.s32 0, %v4526
        %v4528 = vrot.slane %v4524, %v4527
        %v4545 = vunpack.c.l.b16 %v4507
        %v4546 = vunpack.c.l.b16 %v4508
        %v4547 = vunpack.c.l.b16 %v4509
        %v4548 = vunpack.c.l.b16 %v4510
        %v4549 = vunpack.c.l.b16 %v4511
        %v4550 = vunpack.c.l.b16 %v4512
        %v4551 = vunpack.c.l.b16 %v4513
        %v4552 = vunpack.c.l.b16 %v4514
        %v4553 = vunpack.c.l.b16 %v4515
        %v4554 = vunpack.c.l.b16 %v4516
        %v4555 = vunpack.c.l.b16 %v4517
        %v4556 = vunpack.c.l.b16 %v4518
        %v4557 = vunpack.c.l.b16 %v4519
        %v4558 = vunpack.c.l.b16 %v4520
        %v4559 = vunpack.c.l.b16 %v4521
        %v4560 = vunpack.c.l.b16 %v4522
        %v4561 = vpack.c.b16 %v4546, %v4545
        %v4562 = vpack.c.b16 %v4548, %v4547
        %v4563 = vpack.c.b16 %v4550, %v4549
        %v4564 = vpack.c.b16 %v4552, %v4551
        %v4565 = vpack.c.b16 %v4554, %v4553
        %v4566 = vpack.c.b16 %v4556, %v4555
        %v4567 = vpack.c.b16 %v4558, %v4557
        %v4568 = vpack.c.b16 %v4560, %v4559
        %4577 = vmatprep.subr.bf16.mxu0 0
        %4578 = vmatpush1.bf16.msra.mxu0 %v4561
        %4579 = vmatprep.subr.bf16.mxu0 0
        %4580 = vmatpush1.bf16.msra.mxu0 %v4562
        %4581 = vmatprep.subr.bf16.mxu0 0
        %4582 = vmatpush1.bf16.msra.mxu0 %v4563
        %4583 = vmatprep.subr.bf16.mxu0 0
        %4584 = vmatpush1.bf16.msra.mxu0 %v4564
        %4585 = vmatprep.subr.bf16.mxu0 0
        %4586 = vmatpush1.bf16.msra.mxu0 %v4565
        %4587 = vmatprep.subr.bf16.mxu0 0
        %4588 = vmatpush1.bf16.msra.mxu0 %v4566
        %4589 = vmatprep.subr.bf16.mxu0 0
        %4590 = vmatpush1.bf16.msra.mxu0 %v4567
        %4591 = vmatprep.subr.bf16.mxu0 0
        %4592 = vmatpush1.bf16.msra.mxu0 %v4568
        %4593 = vmatprep.subr.bf16.mxu0 0
        %4594 = vmatpush1.bf16.msra.mxu0 0
        %4595 = vmatprep.subr.bf16.mxu0 0
        %4596 = vmatpush1.bf16.msra.mxu0 0
        %4597 = vmatprep.subr.bf16.mxu0 0
        %4598 = vmatpush1.bf16.msra.mxu0 0
        %4599 = vmatprep.subr.bf16.mxu0 0
        %4600 = vmatpush1.bf16.msra.mxu0 0
        %4601 = vmatprep.subr.bf16.mxu0 0
        %4602 = vmatpush1.bf16.msra.mxu0 0
        %4603 = vmatprep.subr.bf16.mxu0 0
        %4604 = vmatpush1.bf16.msra.mxu0 0
        %4605 = vmatprep.subr.bf16.mxu0 0
        %4606 = vmatpush1.bf16.msra.mxu0 0
        %4607 = vmatprep.subr.bf16.mxu0 0
        %4608 = vmatpush1.bf16.msra.mxu0 0
        %4609 = vmatprep.mubr.bf16.mxu0 0
        %4610 = vmatmul.mubr.bf16.gmra.mrb[0].mxu0 %v4523
        %v4611 = vpop.f32.mrb[0].mxu0
        %v4612 = vadd.f32 %v4528, %v4611
        %v4613 = vpop.f32.mrb[0].mxu0
        %v4614 = vpop.f32.mrb[0].mxu0
        %v4615 = vpop.f32.mrb[0].mxu0
        %4616 = vdwg.mxu0
        %v4617 = vadd.f32 %v4424, %v4612
        %v4618 = vld [vmem:[#allocation10 + $0x68] sm:$0x1]
        %v4619 = vld [vmem:[#allocation10 + $0x69] sm:$0x1]
        %v4620 = vsel %vm440, %v4617, 0.0
        %4621 = vadd.xlane.f32.xlu0 %v4620
        %v4622 = vpop.xlane.xlu0 %4621
        %v4623 = vmul.f32 %v4622, %v994
        %v4624 = vsub.f32 %v4617, %v4623
        %v4625 = vmul.f32 %v4624, %v4624
        %v4626 = vsel %vm440, %v4625, 0.0
        %4627 = vadd.xlane.f32.xlu0 %v4626
        %v4628 = vpop.xlane.xlu0 %4627
        %v4629 = vmul.f32 %v4628, %v994
        %v4630 = vadd.f32 %v4629, 1e-06
        %v4631 = vrsqrt.pop %v4630
        %v4632 = vmul.f32 %v4624, %v4631
        %v4633 = vlaneseq
        %v4634 = vshrl.u32 %v4633, 7
        %v4635 = vsub.s32 0, %v4634
        %v4636 = vrot.slane %v4618, %v4635
        %v4637 = vmul.f32 %v4632, %v4636
        %v4638 = vlaneseq
        %v4639 = vshrl.u32 %v4638, 7
        %v4640 = vsub.s32 0, %v4639
        %v4641 = vrot.slane %v4619, %v4640
        %v4642 = vadd.f32 %v4637, %v4641
        %v4643 = vadd.f32 %v4642, %v385
        %v4644 = vpack.c.bf16 %v4643, %v4643
        %v4645 = vpack.c.bf16 %v4642, %v4642
        %v4646 = vld [vmem:[#allocation8 + $0x310] sm:$0xf]
        %v4647 = vld [vmem:[#allocation8 + $0x314] sm:$0xf]
        %v4648 = vld [vmem:[#allocation8 + $0x318] sm:$0xf]
        %v4649 = vld [vmem:[#allocation8 + $0x31c] sm:$0xf]
        %v4650 = vld [vmem:[#allocation8 + $0x320] sm:$0xf]
        %v4651 = vld [vmem:[#allocation8 + $0x324] sm:$0xf]
        %v4652 = vld [vmem:[#allocation8 + $0x328] sm:$0xf]
        %v4653 = vld [vmem:[#allocation8 + $0x32c] sm:$0xf]
        %v4654 = vld [vmem:[#allocation10 + $0x70] sm:$0x1]
        %v4655 = vlaneseq
        %v4656 = vshrl.u32 %v4655, 7
        %v4657 = vsub.s32 0, %v4656
        %v4658 = vrot.slane %v4654, %v4657
        %v4667 = vunpack.c.l.b16 %v4646
        %v4668 = vunpack.c.l.b16 %v4647
        %v4669 = vunpack.c.l.b16 %v4648
        %v4670 = vunpack.c.l.b16 %v4649
        %v4671 = vunpack.c.l.b16 %v4650
        %v4672 = vunpack.c.l.b16 %v4651
        %v4673 = vunpack.c.l.b16 %v4652
        %v4674 = vunpack.c.l.b16 %v4653
        %v4675 = vpack.c.b16 %v4668, %v4667
        %v4676 = vpack.c.b16 %v4670, %v4669
        %v4677 = vpack.c.b16 %v4672, %v4671
        %v4678 = vpack.c.b16 %v4674, %v4673
        %4683 = vmatprep.subr.bf16.mxu0 0
        %4684 = vmatpush1.bf16.msra.mxu0 %v4675
        %4685 = vmatprep.subr.bf16.mxu0 0
        %4686 = vmatpush1.bf16.msra.mxu0 %v4676
        %4687 = vmatprep.subr.bf16.mxu0 0
        %4688 = vmatpush1.bf16.msra.mxu0 %v4677
        %4689 = vmatprep.subr.bf16.mxu0 0
        %4690 = vmatpush1.bf16.msra.mxu0 %v4678
        %4691 = vmatprep.subr.bf16.mxu0 0
        %4692 = vmatpush1.bf16.msra.mxu0 0
        %4693 = vmatprep.subr.bf16.mxu0 0
        %4694 = vmatpush1.bf16.msra.mxu0 0
        %4695 = vmatprep.subr.bf16.mxu0 0
        %4696 = vmatpush1.bf16.msra.mxu0 0
        %4697 = vmatprep.subr.bf16.mxu0 0
        %4698 = vmatpush1.bf16.msra.mxu0 0
        %4699 = vmatprep.subr.bf16.mxu0 0
        %4700 = vmatpush1.bf16.msra.mxu0 0
        %4701 = vmatprep.subr.bf16.mxu0 0
        %4702 = vmatpush1.bf16.msra.mxu0 0
        %4703 = vmatprep.subr.bf16.mxu0 0
        %4704 = vmatpush1.bf16.msra.mxu0 0
        %4705 = vmatprep.subr.bf16.mxu0 0
        %4706 = vmatpush1.bf16.msra.mxu0 0
        %4707 = vmatprep.subr.bf16.mxu0 0
        %4708 = vmatpush1.bf16.msra.mxu0 0
        %4709 = vmatprep.subr.bf16.mxu0 0
        %4710 = vmatpush1.bf16.msra.mxu0 0
        %4711 = vmatprep.subr.bf16.mxu0 0
        %4712 = vmatpush1.bf16.msra.mxu0 0
        %4713 = vmatprep.subr.bf16.mxu0 0
        %4714 = vmatpush1.bf16.msra.mxu0 0
        %4715 = vmatprep.mubr.bf16.mxu0 0
        %4716 = vmatmul.mubr.bf16.gmra.mrb[0].mxu0 %v3837
        %v4717 = vpop.f32.mrb[0].mxu0
        %v4718 = vadd.f32 %v4658, %v4717
        %v4719 = vpop.f32.mrb[0].mxu0
        %v4720 = vpop.f32.mrb[0].mxu0
        %v4721 = vadd.f32 %v4658, %v4720
        %v4722 = vpop.f32.mrb[0].mxu0
        %4723 = vmatprep.mubr.bf16.mxu0 0
        %4724 = vmatmul.mubr.bf16.gmra.mrb[0].mxu0 %v3840
        %v4725 = vpop.f32.mrb[0].mxu0
        %v4726 = vadd.f32 %v4658, %v4725
        %v4727 = vpop.f32.mrb[0].mxu0
        %v4728 = vpop.f32.mrb[0].mxu0
        %v4729 = vadd.f32 %v4658, %v4728
        %v4730 = vpop.f32.mrb[0].mxu0
        %4731 = vmatprep.mubr.bf16.mxu0 0
        %4732 = vmatmul.mubr.bf16.gmra.mrb[0].mxu0 %v3843
        %v4733 = vpop.f32.mrb[0].mxu0
        %v4734 = vadd.f32 %v4658, %v4733
        %v4735 = vpop.f32.mrb[0].mxu0
        %v4736 = vpop.f32.mrb[0].mxu0
        %v4737 = vadd.f32 %v4658, %v4736
        %v4738 = vpop.f32.mrb[0].mxu0
        %4739 = vmatprep.mubr.bf16.mxu0 0
        %4740 = vmatmul.mubr.bf16.gmra.mrb[0].mxu0 %v3846
        %v4741 = vpop.f32.mrb[0].mxu0
        %v4742 = vadd.f32 %v4658, %v4741
        %v4743 = vpop.f32.mrb[0].mxu0
        %v4744 = vpop.f32.mrb[0].mxu0
        %v4745 = vadd.f32 %v4658, %v4744
        %v4746 = vpop.f32.mrb[0].mxu0
        %4747 = vdwg.mxu0
        %v4748 = vld [vmem:[#allocation8 + $0x330] sm:$0xf]
        %v4749 = vld [vmem:[#allocation8 + $0x334] sm:$0xf]
        %v4750 = vld [vmem:[#allocation8 + $0x338] sm:$0xf]
        %v4751 = vld [vmem:[#allocation8 + $0x33c] sm:$0xf]
        %v4752 = vld [vmem:[#allocation8 + $0x340] sm:$0xf]
        %v4753 = vld [vmem:[#allocation8 + $0x344] sm:$0xf]
        %v4754 = vld [vmem:[#allocation8 + $0x348] sm:$0xf]
        %v4755 = vld [vmem:[#allocation8 + $0x34c] sm:$0xf]
        %v4756 = vld [vmem:[#allocation10 + $0x71] sm:$0x1]
        %v4757 = vlaneseq
        %v4758 = vshrl.u32 %v4757, 7
        %v4759 = vsub.s32 0, %v4758
        %v4760 = vrot.slane %v4756, %v4759
        %v4769 = vunpack.c.l.b16 %v4748
        %v4770 = vunpack.c.l.b16 %v4749
        %v4771 = vunpack.c.l.b16 %v4750
        %v4772 = vunpack.c.l.b16 %v4751
        %v4773 = vunpack.c.l.b16 %v4752
        %v4774 = vunpack.c.l.b16 %v4753
        %v4775 = vunpack.c.l.b16 %v4754
        %v4776 = vunpack.c.l.b16 %v4755
        %v4777 = vpack.c.b16 %v4770, %v4769
        %v4778 = vpack.c.b16 %v4772, %v4771
        %v4779 = vpack.c.b16 %v4774, %v4773
        %v4780 = vpack.c.b16 %v4776, %v4775
        %v4786 = vsel %vm440, %v4644, 0
        %4788 = vmatprep.subr.bf16.mxu0 0
        %4789 = vmatpush1.bf16.msra.mxu0 %v4777
        %4790 = vmatprep.subr.bf16.mxu0 0
        %4791 = vmatpush1.bf16.msra.mxu0 %v4778
        %4792 = vmatprep.subr.bf16.mxu0 0
        %4793 = vmatpush1.bf16.msra.mxu0 %v4779
        %4794 = vmatprep.subr.bf16.mxu0 0
        %4795 = vmatpush1.bf16.msra.mxu0 %v4780
        %4796 = vmatprep.subr.bf16.mxu0 0
        %4797 = vmatpush1.bf16.msra.mxu0 0
        %4798 = vmatprep.subr.bf16.mxu0 0
        %4799 = vmatpush1.bf16.msra.mxu0 0
        %4800 = vmatprep.subr.bf16.mxu0 0
        %4801 = vmatpush1.bf16.msra.mxu0 0
        %4802 = vmatprep.subr.bf16.mxu0 0
        %4803 = vmatpush1.bf16.msra.mxu0 0
        %4804 = vmatprep.subr.bf16.mxu0 0
        %4805 = vmatpush1.bf16.msra.mxu0 0
        %4806 = vmatprep.subr.bf16.mxu0 0
        %4807 = vmatpush1.bf16.msra.mxu0 0
        %4808 = vmatprep.subr.bf16.mxu0 0
        %4809 = vmatpush1.bf16.msra.mxu0 0
        %4810 = vmatprep.subr.bf16.mxu0 0
        %4811 = vmatpush1.bf16.msra.mxu0 0
        %4812 = vmatprep.subr.bf16.mxu0 0
        %4813 = vmatpush1.bf16.msra.mxu0 0
        %4814 = vmatprep.subr.bf16.mxu0 0
        %4815 = vmatpush1.bf16.msra.mxu0 0
        %4816 = vmatprep.subr.bf16.mxu0 0
        %4817 = vmatpush1.bf16.msra.mxu0 0
        %4818 = vmatprep.subr.bf16.mxu0 0
        %4819 = vmatpush1.bf16.msra.mxu0 0
        %4820 = vmatprep.mubr.bf16.mxu0 0
        %4821 = vmatmul.mubr.bf16.gmra.mrb[0].mxu0 %v4786
        %v4822 = vpop.f32.mrb[0].mxu0
        %v4823 = vadd.f32 %v4760, %v4822
        %v4824 = vpop.f32.mrb[0].mxu0
        %v4825 = vpop.f32.mrb[0].mxu0
        %v4826 = vpop.f32.mrb[0].mxu0
        %4827 = vdwg.mxu0
        %v4828 = vld [vmem:[#allocation8 + $0x350] sm:$0xf]
        %v4829 = vld [vmem:[#allocation8 + $0x354] sm:$0xf]
        %v4830 = vld [vmem:[#allocation8 + $0x358] sm:$0xf]
        %v4831 = vld [vmem:[#allocation8 + $0x35c] sm:$0xf]
        %v4832 = vld [vmem:[#allocation8 + $0x360] sm:$0xf]
        %v4833 = vld [vmem:[#allocation8 + $0x364] sm:$0xf]
        %v4834 = vld [vmem:[#allocation8 + $0x368] sm:$0xf]
        %v4835 = vld [vmem:[#allocation8 + $0x36c] sm:$0xf]
        %v4836 = vld [vmem:[#allocation10 + $0x72] sm:$0x1]
        %v4837 = vlaneseq
        %v4838 = vshrl.u32 %v4837, 7
        %v4839 = vsub.s32 0, %v4838
        %v4840 = vrot.slane %v4836, %v4839
        %v4849 = vunpack.c.l.b16 %v4828
        %v4850 = vunpack.c.l.b16 %v4829
        %v4851 = vunpack.c.l.b16 %v4830
        %v4852 = vunpack.c.l.b16 %v4831
        %v4853 = vunpack.c.l.b16 %v4832
        %v4854 = vunpack.c.l.b16 %v4833
        %v4855 = vunpack.c.l.b16 %v4834
        %v4856 = vunpack.c.l.b16 %v4835
        %v4857 = vpack.c.b16 %v4850, %v4849
        %v4858 = vpack.c.b16 %v4852, %v4851
        %v4859 = vpack.c.b16 %v4854, %v4853
        %v4860 = vpack.c.b16 %v4856, %v4855
        %v4866 = vsel %vm440, %v4645, 0
        %4868 = vmatprep.subr.bf16.mxu0 0
        %4869 = vmatpush1.bf16.msra.mxu0 %v4857
        %4870 = vmatprep.subr.bf16.mxu0 0
        %4871 = vmatpush1.bf16.msra.mxu0 %v4858
        %4872 = vmatprep.subr.bf16.mxu0 0
        %4873 = vmatpush1.bf16.msra.mxu0 %v4859
        %4874 = vmatprep.subr.bf16.mxu0 0
        %4875 = vmatpush1.bf16.msra.mxu0 %v4860
        %4876 = vmatprep.subr.bf16.mxu0 0
        %4877 = vmatpush1.bf16.msra.mxu0 0
        %4878 = vmatprep.subr.bf16.mxu0 0
        %4879 = vmatpush1.bf16.msra.mxu0 0
        %4880 = vmatprep.subr.bf16.mxu0 0
        %4881 = vmatpush1.bf16.msra.mxu0 0
        %4882 = vmatprep.subr.bf16.mxu0 0
        %4883 = vmatpush1.bf16.msra.mxu0 0
        %4884 = vmatprep.subr.bf16.mxu0 0
        %4885 = vmatpush1.bf16.msra.mxu0 0
        %4886 = vmatprep.subr.bf16.mxu0 0
        %4887 = vmatpush1.bf16.msra.mxu0 0
        %4888 = vmatprep.subr.bf16.mxu0 0
        %4889 = vmatpush1.bf16.msra.mxu0 0
        %4890 = vmatprep.subr.bf16.mxu0 0
        %4891 = vmatpush1.bf16.msra.mxu0 0
        %4892 = vmatprep.subr.bf16.mxu0 0
        %4893 = vmatpush1.bf16.msra.mxu0 0
        %4894 = vmatprep.subr.bf16.mxu0 0
        %4895 = vmatpush1.bf16.msra.mxu0 0
        %4896 = vmatprep.subr.bf16.mxu0 0
        %4897 = vmatpush1.bf16.msra.mxu0 0
        %4898 = vmatprep.subr.bf16.mxu0 0
        %4899 = vmatpush1.bf16.msra.mxu0 0
        %4900 = vmatprep.mubr.bf16.mxu0 0
        %4901 = vmatmul.mubr.bf16.gmra.mrb[0].mxu0 %v4866
        %v4902 = vpop.f32.mrb[0].mxu0
        %v4903 = vadd.f32 %v4840, %v4902
        %v4904 = vpop.f32.mrb[0].mxu0
        %v4905 = vpop.f32.mrb[0].mxu0
        %v4906 = vpop.f32.mrb[0].mxu0
        %4907 = vdwg.mxu0
        %v4908 = vpack.c.bf16 %v4721, %v4718
        %v4909 = vpack.c.bf16 %v4729, %v4726
        %v4910 = vpack.c.bf16 %v4737, %v4734
        %v4911 = vpack.c.bf16 %v4745, %v4742
        %v4912 = vpack.c.bf16 %v4823, %v4823
        %v4914 = vsel %vm1346, %v4908, 0
        %v4917 = vsel %vm1346, %v4909, 0
        %v4920 = vsel %vm1346, %v4910, 0
        %v4923 = vsel %vm1346, %v4911, 0
        %v4926 = vsel %vm1346, %v4912, 0
        %4928 = vmatprep.subr.bf16.mxu0 0
        %4929 = vmatpush1.bf16.xpose.msra.mxu0 %v4926
        %4930 = vmatprep.subr.bf16.mxu0 0
        %4931 = vmatpush1.bf16.xpose.msra.mxu0 0
        %4932 = vmatprep.subr.bf16.mxu0 0
        %4933 = vmatpush1.bf16.xpose.msra.mxu0 0
        %4934 = vmatprep.subr.bf16.mxu0 0
        %4935 = vmatpush1.bf16.xpose.msra.mxu0 0
        %4936 = vmatprep.subr.bf16.mxu0 0
        %4937 = vmatpush1.bf16.xpose.msra.mxu0 0
        %4938 = vmatprep.subr.bf16.mxu0 0
        %4939 = vmatpush1.bf16.xpose.msra.mxu0 0
        %4940 = vmatprep.subr.bf16.mxu0 0
        %4941 = vmatpush1.bf16.xpose.msra.mxu0 0
        %4942 = vmatprep.subr.bf16.mxu0 0
        %4943 = vmatpush1.bf16.xpose.msra.mxu0 0
        %4944 = vmatprep.subr.bf16.mxu0 0
        %4945 = vmatpush1.bf16.xpose.msra.mxu0 0
        %4946 = vmatprep.subr.bf16.mxu0 0
        %4947 = vmatpush1.bf16.xpose.msra.mxu0 0
        %4948 = vmatprep.subr.bf16.mxu0 0
        %4949 = vmatpush1.bf16.xpose.msra.mxu0 0
        %4950 = vmatprep.subr.bf16.mxu0 0
        %4951 = vmatpush1.bf16.xpose.msra.mxu0 0
        %4952 = vmatprep.subr.bf16.mxu0 0
        %4953 = vmatpush1.bf16.xpose.msra.mxu0 0
        %4954 = vmatprep.subr.bf16.mxu0 0
        %4955 = vmatpush1.bf16.xpose.msra.mxu0 0
        %4956 = vmatprep.subr.bf16.mxu0 0
        %4957 = vmatpush1.bf16.xpose.msra.mxu0 0
        %4958 = vmatprep.subr.bf16.mxu0 0
        %4959 = vmatpush1.bf16.xpose.msra.mxu0 0
        %4960 = vmatprep.mubr.bf16.mxu0 0
        %4961 = vmatmul.mubr.bf16.gmra.mrb[0].mxu0 %v4914
        %v4962 = vpop.f32.mrb[0].mxu0
        %v4963 = vadd.f32 0.0, %v4962
        %v4964 = vpop.f32.mrb[0].mxu0
        %v4965 = vpop.f32.mrb[0].mxu0
        %v4966 = vadd.f32 0.0, %v4965
        %v4967 = vpop.f32.mrb[0].mxu0
        %4968 = vmatprep.mubr.bf16.mxu0 0
        %4969 = vmatmul.mubr.bf16.gmra.mrb[0].mxu0 %v4917
        %v4970 = vpop.f32.mrb[0].mxu0
        %v4971 = vadd.f32 0.0, %v4970
        %v4972 = vpop.f32.mrb[0].mxu0
        %v4973 = vpop.f32.mrb[0].mxu0
        %v4974 = vadd.f32 0.0, %v4973
        %v4975 = vpop.f32.mrb[0].mxu0
        %4976 = vmatprep.mubr.bf16.mxu0 0
        %4977 = vmatmul.mubr.bf16.gmra.mrb[0].mxu0 %v4920
        %v4978 = vpop.f32.mrb[0].mxu0
        %v4979 = vadd.f32 0.0, %v4978
        %v4980 = vpop.f32.mrb[0].mxu0
        %v4981 = vpop.f32.mrb[0].mxu0
        %v4982 = vadd.f32 0.0, %v4981
        %v4983 = vpop.f32.mrb[0].mxu0
        %4984 = vmatprep.mubr.bf16.mxu0 0
        %4985 = vmatmul.mubr.bf16.gmra.mrb[0].mxu0 %v4923
        %v4986 = vpop.f32.mrb[0].mxu0
        %v4987 = vadd.f32 0.0, %v4986
        %v4988 = vpop.f32.mrb[0].mxu0
        %v4989 = vpop.f32.mrb[0].mxu0
        %v4990 = vadd.f32 0.0, %v4989
        %v4991 = vpop.f32.mrb[0].mxu0
        %4992 = vdwg.mxu0
        %v4993 = vmul.f32 %v4963, 0.25
        %v4994 = vmul.f32 %v4966, 0.25
        %v4995 = vmul.f32 %v4971, 0.25
        %v4996 = vmul.f32 %v4974, 0.25
        %v4997 = vmul.f32 %v4979, 0.25
        %v4998 = vmul.f32 %v4982, 0.25
        %v4999 = vmul.f32 %v4987, 0.25
        %v5000 = vmul.f32 %v4990, 0.25
        %v5001 = vsel %vm688, %v4993, -inf
        %5002 = vmax.xlane.f32.xlu0 %v5001
        %v5003 = vpop.xlane.xlu0 %5002
        %v5004 = vsel %vm688, %v4994, -inf
        %5005 = vmax.xlane.f32.xlu0 %v5004
        %v5006 = vpop.xlane.xlu0 %5005
        %v5007 = vsel %vm688, %v4995, -inf
        %5008 = vmax.xlane.f32.xlu0 %v5007
        %v5009 = vpop.xlane.xlu0 %5008
        %v5010 = vsel %vm688, %v4996, -inf
        %5011 = vmax.xlane.f32.xlu0 %v5010
        %v5012 = vpop.xlane.xlu0 %5011
        %v5013 = vsel %vm688, %v4997, -inf
        %5014 = vmax.xlane.f32.xlu0 %v5013
        %v5015 = vpop.xlane.xlu0 %5014
        %v5016 = vsel %vm688, %v4998, -inf
        %5017 = vmax.xlane.f32.xlu0 %v5016
        %v5018 = vpop.xlane.xlu0 %5017
        %v5019 = vsel %vm688, %v4999, -inf
        %5020 = vmax.xlane.f32.xlu0 %v5019
        %v5021 = vpop.xlane.xlu0 %5020
        %v5022 = vsel %vm688, %v5000, -inf
        %5023 = vmax.xlane.f32.xlu0 %v5022
        %v5024 = vpop.xlane.xlu0 %5023
        %v5025 = vsub.f32 %v4993, %v5003
        %v5026 = vsub.f32 %v4994, %v5006
        %v5027 = vsub.f32 %v4995, %v5009
        %v5028 = vsub.f32 %v4996, %v5012
        %v5029 = vsub.f32 %v4997, %v5015
        %v5030 = vsub.f32 %v4998, %v5018
        %v5031 = vsub.f32 %v4999, %v5021
        %v5032 = vsub.f32 %v5000, %v5024
        %v5033 = vmul.f32 %v5025, 1.442695
        %v5034 = vpow.pop %v5033
        %v5035 = vmul.f32 %v5026, 1.442695
        %v5036 = vpow.pop %v5035
        %v5037 = vmul.f32 %v5027, 1.442695
        %v5038 = vpow.pop %v5037
        %v5039 = vmul.f32 %v5028, 1.442695
        %v5040 = vpow.pop %v5039
        %v5041 = vmul.f32 %v5029, 1.442695
        %v5042 = vpow.pop %v5041
        %v5043 = vmul.f32 %v5030, 1.442695
        %v5044 = vpow.pop %v5043
        %v5045 = vmul.f32 %v5031, 1.442695
        %v5046 = vpow.pop %v5045
        %v5047 = vmul.f32 %v5032, 1.442695
        %v5048 = vpow.pop %v5047
        %v5049 = vsel %vm688, %v5034, 0.0
        %5050 = vadd.xlane.f32.xlu0 %v5049
        %v5051 = vpop.xlane.xlu0 %5050
        %v5052 = vsel %vm688, %v5036, 0.0
        %5053 = vadd.xlane.f32.xlu0 %v5052
        %v5054 = vpop.xlane.xlu0 %5053
        %v5055 = vsel %vm688, %v5038, 0.0
        %5056 = vadd.xlane.f32.xlu0 %v5055
        %v5057 = vpop.xlane.xlu0 %5056
        %v5058 = vsel %vm688, %v5040, 0.0
        %5059 = vadd.xlane.f32.xlu0 %v5058
        %v5060 = vpop.xlane.xlu0 %5059
        %v5061 = vsel %vm688, %v5042, 0.0
        %5062 = vadd.xlane.f32.xlu0 %v5061
        %v5063 = vpop.xlane.xlu0 %5062
        %v5064 = vsel %vm688, %v5044, 0.0
        %5065 = vadd.xlane.f32.xlu0 %v5064
        %v5066 = vpop.xlane.xlu0 %5065
        %v5067 = vsel %vm688, %v5046, 0.0
        %5068 = vadd.xlane.f32.xlu0 %v5067
        %v5069 = vpop.xlane.xlu0 %5068
        %v5070 = vsel %vm688, %v5048, 0.0
        %5071 = vadd.xlane.f32.xlu0 %v5070
        %v5072 = vpop.xlane.xlu0 %5071
        %v5073 = vrcp.pop %v5051
        %v5074 = vrcp.pop %v5054
        %v5075 = vrcp.pop %v5057
        %v5076 = vrcp.pop %v5060
        %v5077 = vrcp.pop %v5063
        %v5078 = vrcp.pop %v5066
        %v5079 = vrcp.pop %v5069
        %v5080 = vrcp.pop %v5072
        %v5081 = vmul.f32 %v5034, %v5073
        %v5082 = vmul.f32 %v5036, %v5074
        %v5083 = vmul.f32 %v5038, %v5075
        %v5084 = vmul.f32 %v5040, %v5076
        %v5085 = vmul.f32 %v5042, %v5077
        %v5086 = vmul.f32 %v5044, %v5078
        %v5087 = vmul.f32 %v5046, %v5079
        %v5088 = vmul.f32 %v5048, %v5080
        %v5089 = vpack.c.bf16 %v5082, %v5081
        %v5090 = vpack.c.bf16 %v5084, %v5083
        %v5091 = vpack.c.bf16 %v5086, %v5085
        %v5092 = vpack.c.bf16 %v5088, %v5087
        %v5093 = vpack.c.bf16 %v4903, %v4903
        %v5095 = vsel %vm688, %v5089, 0
        %v5098 = vsel %vm688, %v5090, 0
        %v5101 = vsel %vm688, %v5091, 0
        %v5104 = vsel %vm688, %v5092, 0
        %v5107 = vsel %vm705, %v5093, 0
        %5109 = vmatprep.subr.bf16.mxu0 0
        %5110 = vmatpush1.bf16.msra.mxu0 %v5107
        %5111 = vmatprep.subr.bf16.mxu0 0
        %5112 = vmatpush1.bf16.msra.mxu0 0
        %5113 = vmatprep.subr.bf16.mxu0 0
        %5114 = vmatpush1.bf16.msra.mxu0 0
        %5115 = vmatprep.subr.bf16.mxu0 0
        %5116 = vmatpush1.bf16.msra.mxu0 0
        %5117 = vmatprep.subr.bf16.mxu0 0
        %5118 = vmatpush1.bf16.msra.mxu0 0
        %5119 = vmatprep.subr.bf16.mxu0 0
        %5120 = vmatpush1.bf16.msra.mxu0 0
        %5121 = vmatprep.subr.bf16.mxu0 0
        %5122 = vmatpush1.bf16.msra.mxu0 0
        %5123 = vmatprep.subr.bf16.mxu0 0
        %5124 = vmatpush1.bf16.msra.mxu0 0
        %5125 = vmatprep.subr.bf16.mxu0 0
        %5126 = vmatpush1.bf16.msra.mxu0 0
        %5127 = vmatprep.subr.bf16.mxu0 0
        %5128 = vmatpush1.bf16.msra.mxu0 0
        %5129 = vmatprep.subr.bf16.mxu0 0
        %5130 = vmatpush1.bf16.msra.mxu0 0
        %5131 = vmatprep.subr.bf16.mxu0 0
        %5132 = vmatpush1.bf16.msra.mxu0 0
        %5133 = vmatprep.subr.bf16.mxu0 0
        %5134 = vmatpush1.bf16.msra.mxu0 0
        %5135 = vmatprep.subr.bf16.mxu0 0
        %5136 = vmatpush1.bf16.msra.mxu0 0
        %5137 = vmatprep.subr.bf16.mxu0 0
        %5138 = vmatpush1.bf16.msra.mxu0 0
        %5139 = vmatprep.subr.bf16.mxu0 0
        %5140 = vmatpush1.bf16.msra.mxu0 0
        %5141 = vmatprep.mubr.bf16.mxu0 0
        %5142 = vmatmul.mubr.bf16.gmra.mrb[0].mxu0 %v5095
        %v5143 = vpop.f32.mrb[0].mxu0
        %v5144 = vadd.f32 0.0, %v5143
        %v5145 = vpop.f32.mrb[0].mxu0
        %v5146 = vpop.f32.mrb[0].mxu0
        %v5147 = vadd.f32 0.0, %v5146
        %v5148 = vpop.f32.mrb[0].mxu0
        %5149 = vmatprep.mubr.bf16.mxu0 0
        %5150 = vmatmul.mubr.bf16.gmra.mrb[0].mxu0 %v5098
        %v5151 = vpop.f32.mrb[0].mxu0
        %v5152 = vadd.f32 0.0, %v5151
        %v5153 = vpop.f32.mrb[0].mxu0
        %v5154 = vpop.f32.mrb[0].mxu0
        %v5155 = vadd.f32 0.0, %v5154
        %v5156 = vpop.f32.mrb[0].mxu0
        %5157 = vmatprep.mubr.bf16.mxu0 0
        %5158 = vmatmul.mubr.bf16.gmra.mrb[0].mxu0 %v5101
        %v5159 = vpop.f32.mrb[0].mxu0
        %v5160 = vadd.f32 0.0, %v5159
        %v5161 = vpop.f32.mrb[0].mxu0
        %v5162 = vpop.f32.mrb[0].mxu0
        %v5163 = vadd.f32 0.0, %v5162
        %v5164 = vpop.f32.mrb[0].mxu0
        %5165 = vmatprep.mubr.bf16.mxu0 0
        %5166 = vmatmul.mubr.bf16.gmra.mrb[0].mxu0 %v5104
        %v5167 = vpop.f32.mrb[0].mxu0
        %v5168 = vadd.f32 0.0, %v5167
        %v5169 = vpop.f32.mrb[0].mxu0
        %v5170 = vpop.f32.mrb[0].mxu0
        %v5171 = vadd.f32 0.0, %v5170
        %v5172 = vpop.f32.mrb[0].mxu0
        %5173 = vdwg.mxu0
        %v5174 = vld [vmem:[#allocation8 + $0x370] sm:$0xf]
        %v5175 = vld [vmem:[#allocation8 + $0x374] sm:$0xf]
        %v5176 = vpack.c.bf16 %v5147, %v5144
        %v5177 = vpack.c.bf16 %v5155, %v5152
        %v5178 = vpack.c.bf16 %v5163, %v5160
        %v5179 = vpack.c.bf16 %v5171, %v5168
        %5184 = vrot.lane.b32.xlu0 %v4908, 112
        %v5185 = vpop.permute.xlu0 %5184
        %5186 = vrot.lane.b32.xlu0 %v4909, 112
        %v5187 = vpop.permute.xlu0 %5186
        %5188 = vrot.lane.b32.xlu0 %v4910, 112
        %v5189 = vpop.permute.xlu0 %5188
        %5190 = vrot.lane.b32.xlu0 %v4911, 112
        %v5191 = vpop.permute.xlu0 %5190
        %5193 = vrot.lane.b32.xlu0 %v4912, 112
        %v5194 = vpop.permute.xlu0 %5193
        %v5196 = vsel %vm1346, %v5185, 0
        %v5199 = vsel %vm1346, %v5187, 0
        %v5202 = vsel %vm1346, %v5189, 0
        %v5205 = vsel %vm1346, %v5191, 0
        %v5208 = vsel %vm1346, %v5194, 0
        %5210 = vmatprep.subr.bf16.mxu0 0
        %5211 = vmatpush1.bf16.xpose.msra.mxu0 %v5208
        %5212 = vmatprep.subr.bf16.mxu0 0
        %5213 = vmatpush1.bf16.xpose.msra.mxu0 0
        %5214 = vmatprep.subr.bf16.mxu0 0
        %5215 = vmatpush1.bf16.xpose.msra.mxu0 0
        %5216 = vmatprep.subr.bf16.mxu0 0
        %5217 = vmatpush1.bf16.xpose.msra.mxu0 0
        %5218 = vmatprep.subr.bf16.mxu0 0
        %5219 = vmatpush1.bf16.xpose.msra.mxu0 0
        %5220 = vmatprep.subr.bf16.mxu0 0
        %5221 = vmatpush1.bf16.xpose.msra.mxu0 0
        %5222 = vmatprep.subr.bf16.mxu0 0
        %5223 = vmatpush1.bf16.xpose.msra.mxu0 0
        %5224 = vmatprep.subr.bf16.mxu0 0
        %5225 = vmatpush1.bf16.xpose.msra.mxu0 0
        %5226 = vmatprep.subr.bf16.mxu0 0
        %5227 = vmatpush1.bf16.xpose.msra.mxu0 0
        %5228 = vmatprep.subr.bf16.mxu0 0
        %5229 = vmatpush1.bf16.xpose.msra.mxu0 0
        %5230 = vmatprep.subr.bf16.mxu0 0
        %5231 = vmatpush1.bf16.xpose.msra.mxu0 0
        %5232 = vmatprep.subr.bf16.mxu0 0
        %5233 = vmatpush1.bf16.xpose.msra.mxu0 0
        %5234 = vmatprep.subr.bf16.mxu0 0
        %5235 = vmatpush1.bf16.xpose.msra.mxu0 0
        %5236 = vmatprep.subr.bf16.mxu0 0
        %5237 = vmatpush1.bf16.xpose.msra.mxu0 0
        %5238 = vmatprep.subr.bf16.mxu0 0
        %5239 = vmatpush1.bf16.xpose.msra.mxu0 0
        %5240 = vmatprep.subr.bf16.mxu0 0
        %5241 = vmatpush1.bf16.xpose.msra.mxu0 0
        %5242 = vmatprep.mubr.bf16.mxu0 0
        %5243 = vmatmul.mubr.bf16.gmra.mrb[0].mxu0 %v5196
        %v5244 = vpop.f32.mrb[0].mxu0
        %v5245 = vadd.f32 0.0, %v5244
        %v5246 = vpop.f32.mrb[0].mxu0
        %v5247 = vpop.f32.mrb[0].mxu0
        %v5248 = vadd.f32 0.0, %v5247
        %v5249 = vpop.f32.mrb[0].mxu0
        %5250 = vmatprep.mubr.bf16.mxu0 0
        %5251 = vmatmul.mubr.bf16.gmra.mrb[0].mxu0 %v5199
        %v5252 = vpop.f32.mrb[0].mxu0
        %v5253 = vadd.f32 0.0, %v5252
        %v5254 = vpop.f32.mrb[0].mxu0
        %v5255 = vpop.f32.mrb[0].mxu0
        %v5256 = vadd.f32 0.0, %v5255
        %v5257 = vpop.f32.mrb[0].mxu0
        %5258 = vmatprep.mubr.bf16.mxu0 0
        %5259 = vmatmul.mubr.bf16.gmra.mrb[0].mxu0 %v5202
        %v5260 = vpop.f32.mrb[0].mxu0
        %v5261 = vadd.f32 0.0, %v5260
        %v5262 = vpop.f32.mrb[0].mxu0
        %v5263 = vpop.f32.mrb[0].mxu0
        %v5264 = vadd.f32 0.0, %v5263
        %v5265 = vpop.f32.mrb[0].mxu0
        %5266 = vmatprep.mubr.bf16.mxu0 0
        %5267 = vmatmul.mubr.bf16.gmra.mrb[0].mxu0 %v5205
        %v5268 = vpop.f32.mrb[0].mxu0
        %v5269 = vadd.f32 0.0, %v5268
        %v5270 = vpop.f32.mrb[0].mxu0
        %v5271 = vpop.f32.mrb[0].mxu0
        %v5272 = vadd.f32 0.0, %v5271
        %v5273 = vpop.f32.mrb[0].mxu0
        %5274 = vdwg.mxu0
        %v5275 = vmul.f32 %v5245, 0.25
        %v5276 = vmul.f32 %v5248, 0.25
        %v5277 = vmul.f32 %v5253, 0.25
        %v5278 = vmul.f32 %v5256, 0.25
        %v5279 = vmul.f32 %v5261, 0.25
        %v5280 = vmul.f32 %v5264, 0.25
        %v5281 = vmul.f32 %v5269, 0.25
        %v5282 = vmul.f32 %v5272, 0.25
        %v5283 = vsel %vm688, %v5275, -inf
        %5284 = vmax.xlane.f32.xlu0 %v5283
        %v5285 = vpop.xlane.xlu0 %5284
        %v5286 = vsel %vm688, %v5276, -inf
        %5287 = vmax.xlane.f32.xlu0 %v5286
        %v5288 = vpop.xlane.xlu0 %5287
        %v5289 = vsel %vm688, %v5277, -inf
        %5290 = vmax.xlane.f32.xlu0 %v5289
        %v5291 = vpop.xlane.xlu0 %5290
        %v5292 = vsel %vm688, %v5278, -inf
        %5293 = vmax.xlane.f32.xlu0 %v5292
        %v5294 = vpop.xlane.xlu0 %5293
        %v5295 = vsel %vm688, %v5279, -inf
        %5296 = vmax.xlane.f32.xlu0 %v5295
        %v5297 = vpop.xlane.xlu0 %5296
        %v5298 = vsel %vm688, %v5280, -inf
        %5299 = vmax.xlane.f32.xlu0 %v5298
        %v5300 = vpop.xlane.xlu0 %5299
        %v5301 = vsel %vm688, %v5281, -inf
        %5302 = vmax.xlane.f32.xlu0 %v5301
        %v5303 = vpop.xlane.xlu0 %5302
        %v5304 = vsel %vm688, %v5282, -inf
        %5305 = vmax.xlane.f32.xlu0 %v5304
        %v5306 = vpop.xlane.xlu0 %5305
        %v5307 = vsub.f32 %v5275, %v5285
        %v5308 = vsub.f32 %v5276, %v5288
        %v5309 = vsub.f32 %v5277, %v5291
        %v5310 = vsub.f32 %v5278, %v5294
        %v5311 = vsub.f32 %v5279, %v5297
        %v5312 = vsub.f32 %v5280, %v5300
        %v5313 = vsub.f32 %v5281, %v5303
        %v5314 = vsub.f32 %v5282, %v5306
        %v5315 = vmul.f32 %v5307, 1.442695
        %v5316 = vpow.pop %v5315
        %v5317 = vmul.f32 %v5308, 1.442695
        %v5318 = vpow.pop %v5317
        %v5319 = vmul.f32 %v5309, 1.442695
        %v5320 = vpow.pop %v5319
        %v5321 = vmul.f32 %v5310, 1.442695
        %v5322 = vpow.pop %v5321
        %v5323 = vmul.f32 %v5311, 1.442695
        %v5324 = vpow.pop %v5323
        %v5325 = vmul.f32 %v5312, 1.442695
        %v5326 = vpow.pop %v5325
        %v5327 = vmul.f32 %v5313, 1.442695
        %v5328 = vpow.pop %v5327
        %v5329 = vmul.f32 %v5314, 1.442695
        %v5330 = vpow.pop %v5329
        %v5331 = vsel %vm688, %v5316, 0.0
        %5332 = vadd.xlane.f32.xlu0 %v5331
        %v5333 = vpop.xlane.xlu0 %5332
        %v5334 = vsel %vm688, %v5318, 0.0
        %5335 = vadd.xlane.f32.xlu0 %v5334
        %v5336 = vpop.xlane.xlu0 %5335
        %v5337 = vsel %vm688, %v5320, 0.0
        %5338 = vadd.xlane.f32.xlu0 %v5337
        %v5339 = vpop.xlane.xlu0 %5338
        %v5340 = vsel %vm688, %v5322, 0.0
        %5341 = vadd.xlane.f32.xlu0 %v5340
        %v5342 = vpop.xlane.xlu0 %5341
        %v5343 = vsel %vm688, %v5324, 0.0
        %5344 = vadd.xlane.f32.xlu0 %v5343
        %v5345 = vpop.xlane.xlu0 %5344
        %v5346 = vsel %vm688, %v5326, 0.0
        %5347 = vadd.xlane.f32.xlu0 %v5346
        %v5348 = vpop.xlane.xlu0 %5347
        %v5349 = vsel %vm688, %v5328, 0.0
        %5350 = vadd.xlane.f32.xlu0 %v5349
        %v5351 = vpop.xlane.xlu0 %5350
        %v5352 = vsel %vm688, %v5330, 0.0
        %5353 = vadd.xlane.f32.xlu0 %v5352
        %v5354 = vpop.xlane.xlu0 %5353
        %v5355 = vrcp.pop %v5333
        %v5356 = vrcp.pop %v5336
        %v5357 = vrcp.pop %v5339
        %v5358 = vrcp.pop %v5342
        %v5359 = vrcp.pop %v5345
        %v5360 = vrcp.pop %v5348
        %v5361 = vrcp.pop %v5351
        %v5362 = vrcp.pop %v5354
        %v5363 = vmul.f32 %v5316, %v5355
        %v5364 = vmul.f32 %v5318, %v5356
        %v5365 = vmul.f32 %v5320, %v5357
        %v5366 = vmul.f32 %v5322, %v5358
        %v5367 = vmul.f32 %v5324, %v5359
        %v5368 = vmul.f32 %v5326, %v5360
        %v5369 = vmul.f32 %v5328, %v5361
        %v5370 = vmul.f32 %v5330, %v5362
        %v5371 = vpack.c.bf16 %v5364, %v5363
        %v5372 = vpack.c.bf16 %v5366, %v5365
        %v5373 = vpack.c.bf16 %v5368, %v5367
        %v5374 = vpack.c.bf16 %v5370, %v5369
        %5376 = vrot.lane.b32.xlu0 %v5093, 112
        %v5377 = vpop.permute.xlu0 %5376
        %v5379 = vsel %vm688, %v5371, 0
        %v5382 = vsel %vm688, %v5372, 0
        %v5385 = vsel %vm688, %v5373, 0
        %v5388 = vsel %vm688, %v5374, 0
        %v5391 = vsel %vm705, %v5377, 0
        %5393 = vmatprep.subr.bf16.mxu0 0
        %5394 = vmatpush1.bf16.msra.mxu0 %v5391
        %5395 = vmatprep.subr.bf16.mxu0 0
        %5396 = vmatpush1.bf16.msra.mxu0 0
        %5397 = vmatprep.subr.bf16.mxu0 0
        %5398 = vmatpush1.bf16.msra.mxu0 0
        %5399 = vmatprep.subr.bf16.mxu0 0
        %5400 = vmatpush1.bf16.msra.mxu0 0
        %5401 = vmatprep.subr.bf16.mxu0 0
        %5402 = vmatpush1.bf16.msra.mxu0 0
        %5403 = vmatprep.subr.bf16.mxu0 0
        %5404 = vmatpush1.bf16.msra.mxu0 0
        %5405 = vmatprep.subr.bf16.mxu0 0
        %5406 = vmatpush1.bf16.msra.mxu0 0
        %5407 = vmatprep.subr.bf16.mxu0 0
        %5408 = vmatpush1.bf16.msra.mxu0 0
        %5409 = vmatprep.subr.bf16.mxu0 0
        %5410 = vmatpush1.bf16.msra.mxu0 0
        %5411 = vmatprep.subr.bf16.mxu0 0
        %5412 = vmatpush1.bf16.msra.mxu0 0
        %5413 = vmatprep.subr.bf16.mxu0 0
        %5414 = vmatpush1.bf16.msra.mxu0 0
        %5415 = vmatprep.subr.bf16.mxu0 0
        %5416 = vmatpush1.bf16.msra.mxu0 0
        %5417 = vmatprep.subr.bf16.mxu0 0
        %5418 = vmatpush1.bf16.msra.mxu0 0
        %5419 = vmatprep.subr.bf16.mxu0 0
        %5420 = vmatpush1.bf16.msra.mxu0 0
        %5421 = vmatprep.subr.bf16.mxu0 0
        %5422 = vmatpush1.bf16.msra.mxu0 0
        %5423 = vmatprep.subr.bf16.mxu0 0
        %5424 = vmatpush1.bf16.msra.mxu0 0
        %5425 = vmatprep.mubr.bf16.mxu0 0
        %5426 = vmatmul.mubr.bf16.gmra.mrb[0].mxu0 %v5379
        %v5427 = vpop.f32.mrb[0].mxu0
        %v5428 = vadd.f32 0.0, %v5427
        %v5429 = vpop.f32.mrb[0].mxu0
        %v5430 = vpop.f32.mrb[0].mxu0
        %v5431 = vadd.f32 0.0, %v5430
        %v5432 = vpop.f32.mrb[0].mxu0
        %5433 = vmatprep.mubr.bf16.mxu0 0
        %5434 = vmatmul.mubr.bf16.gmra.mrb[0].mxu0 %v5382
        %v5435 = vpop.f32.mrb[0].mxu0
        %v5436 = vadd.f32 0.0, %v5435
        %v5437 = vpop.f32.mrb[0].mxu0
        %v5438 = vpop.f32.mrb[0].mxu0
        %v5439 = vadd.f32 0.0, %v5438
        %v5440 = vpop.f32.mrb[0].mxu0
        %5441 = vmatprep.mubr.bf16.mxu0 0
        %5442 = vmatmul.mubr.bf16.gmra.mrb[0].mxu0 %v5385
        %v5443 = vpop.f32.mrb[0].mxu0
        %v5444 = vadd.f32 0.0, %v5443
        %v5445 = vpop.f32.mrb[0].mxu0
        %v5446 = vpop.f32.mrb[0].mxu0
        %v5447 = vadd.f32 0.0, %v5446
        %v5448 = vpop.f32.mrb[0].mxu0
        %5449 = vmatprep.mubr.bf16.mxu0 0
        %5450 = vmatmul.mubr.bf16.gmra.mrb[0].mxu0 %v5388
        %v5451 = vpop.f32.mrb[0].mxu0
        %v5452 = vadd.f32 0.0, %v5451
        %v5453 = vpop.f32.mrb[0].mxu0
        %v5454 = vpop.f32.mrb[0].mxu0
        %v5455 = vadd.f32 0.0, %v5454
        %v5456 = vpop.f32.mrb[0].mxu0
        %5457 = vdwg.mxu0
        %v5458 = vld [vmem:[#allocation8 + $0x378] sm:$0xf]
        %v5459 = vld [vmem:[#allocation8 + $0x37c] sm:$0xf]
        %v5460 = vpack.c.bf16 %v5431, %v5428
        %v5461 = vpack.c.bf16 %v5439, %v5436
        %v5462 = vpack.c.bf16 %v5447, %v5444
        %v5463 = vpack.c.bf16 %v5455, %v5452
        %v5466 = vunpack.c.l.b16 %v5458
        %v5467 = vunpack.c.l.b16 %v5459
        %v5468 = vpack.c.b16 %v5467, %v5466
        %v5471 = vsel %vm1346, %v5460, 0
        %v5474 = vsel %vm1346, %v5461, 0
        %v5477 = vsel %vm1346, %v5462, 0
        %v5480 = vsel %vm1346, %v5463, 0
        %5482 = vmatprep.subr.bf16.mxu0 0
        %5483 = vmatpush1.bf16.msra.mxu0 %v5468
        %5484 = vmatprep.subr.bf16.mxu0 0
        %5485 = vmatpush1.bf16.msra.mxu0 0
        %5486 = vmatprep.subr.bf16.mxu0 0
        %5487 = vmatpush1.bf16.msra.mxu0 0
        %5488 = vmatprep.subr.bf16.mxu0 0
        %5489 = vmatpush1.bf16.msra.mxu0 0
        %5490 = vmatprep.subr.bf16.mxu0 0
        %5491 = vmatpush1.bf16.msra.mxu0 0
        %5492 = vmatprep.subr.bf16.mxu0 0
        %5493 = vmatpush1.bf16.msra.mxu0 0
        %5494 = vmatprep.subr.bf16.mxu0 0
        %5495 = vmatpush1.bf16.msra.mxu0 0
        %5496 = vmatprep.subr.bf16.mxu0 0
        %5497 = vmatpush1.bf16.msra.mxu0 0
        %5498 = vmatprep.subr.bf16.mxu0 0
        %5499 = vmatpush1.bf16.msra.mxu0 0
        %5500 = vmatprep.subr.bf16.mxu0 0
        %5501 = vmatpush1.bf16.msra.mxu0 0
        %5502 = vmatprep.subr.bf16.mxu0 0
        %5503 = vmatpush1.bf16.msra.mxu0 0
        %5504 = vmatprep.subr.bf16.mxu0 0
        %5505 = vmatpush1.bf16.msra.mxu0 0
        %5506 = vmatprep.subr.bf16.mxu0 0
        %5507 = vmatpush1.bf16.msra.mxu0 0
        %5508 = vmatprep.subr.bf16.mxu0 0
        %5509 = vmatpush1.bf16.msra.mxu0 0
        %5510 = vmatprep.subr.bf16.mxu0 0
        %5511 = vmatpush1.bf16.msra.mxu0 0
        %5512 = vmatprep.subr.bf16.mxu0 0
        %5513 = vmatpush1.bf16.msra.mxu0 0
        %5514 = vmatprep.mubr.bf16.mxu0 0
        %5515 = vmatmul.mubr.bf16.gmra.mrb[0].mxu0 %v5471
        %v5516 = vpop.f32.mrb[0].mxu0
        %v5517 = vadd.f32 0.0, %v5516
        %v5518 = vpop.f32.mrb[0].mxu0
        %v5519 = vpop.f32.mrb[0].mxu0
        %v5520 = vadd.f32 0.0, %v5519
        %v5521 = vpop.f32.mrb[0].mxu0
        %5522 = vmatprep.mubr.bf16.mxu0 0
        %5523 = vmatmul.mubr.bf16.gmra.mrb[0].mxu0 %v5474
        %v5524 = vpop.f32.mrb[0].mxu0
        %v5525 = vadd.f32 0.0, %v5524
        %v5526 = vpop.f32.mrb[0].mxu0
        %v5527 = vpop.f32.mrb[0].mxu0
        %v5528 = vadd.f32 0.0, %v5527
        %v5529 = vpop.f32.mrb[0].mxu0
        %5530 = vmatprep.mubr.bf16.mxu0 0
        %5531 = vmatmul.mubr.bf16.gmra.mrb[0].mxu0 %v5477
        %v5532 = vpop.f32.mrb[0].mxu0
        %v5533 = vadd.f32 0.0, %v5532
        %v5534 = vpop.f32.mrb[0].mxu0
        %v5535 = vpop.f32.mrb[0].mxu0
        %v5536 = vadd.f32 0.0, %v5535
        %v5537 = vpop.f32.mrb[0].mxu0
        %5538 = vmatprep.mubr.bf16.mxu0 0
        %5539 = vmatmul.mubr.bf16.gmra.mrb[0].mxu0 %v5480
        %v5540 = vpop.f32.mrb[0].mxu0
        %v5541 = vadd.f32 0.0, %v5540
        %v5542 = vpop.f32.mrb[0].mxu0
        %v5543 = vpop.f32.mrb[0].mxu0
        %v5544 = vadd.f32 0.0, %v5543
        %v5545 = vpop.f32.mrb[0].mxu0
        %5546 = vdwg.mxu0
        %v5549 = vunpack.c.l.b16 %v5174
        %v5550 = vunpack.c.l.b16 %v5175
        %v5551 = vpack.c.b16 %v5550, %v5549
        %v5554 = vsel %vm1346, %v5176, 0
        %v5557 = vsel %vm1346, %v5177, 0
        %v5560 = vsel %vm1346, %v5178, 0
        %v5563 = vsel %vm1346, %v5179, 0
        %5565 = vmatprep.subr.bf16.mxu0 0
        %5566 = vmatpush1.bf16.msra.mxu0 %v5551
        %5567 = vmatprep.subr.bf16.mxu0 0
        %5568 = vmatpush1.bf16.msra.mxu0 0
        %5569 = vmatprep.subr.bf16.mxu0 0
        %5570 = vmatpush1.bf16.msra.mxu0 0
        %5571 = vmatprep.subr.bf16.mxu0 0
        %5572 = vmatpush1.bf16.msra.mxu0 0
        %5573 = vmatprep.subr.bf16.mxu0 0
        %5574 = vmatpush1.bf16.msra.mxu0 0
        %5575 = vmatprep.subr.bf16.mxu0 0
        %5576 = vmatpush1.bf16.msra.mxu0 0
        %5577 = vmatprep.subr.bf16.mxu0 0
        %5578 = vmatpush1.bf16.msra.mxu0 0
        %5579 = vmatprep.subr.bf16.mxu0 0
        %5580 = vmatpush1.bf16.msra.mxu0 0
        %5581 = vmatprep.subr.bf16.mxu0 0
        %5582 = vmatpush1.bf16.msra.mxu0 0
        %5583 = vmatprep.subr.bf16.mxu0 0
        %5584 = vmatpush1.bf16.msra.mxu0 0
        %5585 = vmatprep.subr.bf16.mxu0 0
        %5586 = vmatpush1.bf16.msra.mxu0 0
        %5587 = vmatprep.subr.bf16.mxu0 0
        %5588 = vmatpush1.bf16.msra.mxu0 0
        %5589 = vmatprep.subr.bf16.mxu0 0
        %5590 = vmatpush1.bf16.msra.mxu0 0
        %5591 = vmatprep.subr.bf16.mxu0 0
        %5592 = vmatpush1.bf16.msra.mxu0 0
        %5593 = vmatprep.subr.bf16.mxu0 0
        %5594 = vmatpush1.bf16.msra.mxu0 0
        %5595 = vmatprep.subr.bf16.mxu0 0
        %5596 = vmatpush1.bf16.msra.mxu0 0
        %5597 = vmatprep.mubr.bf16.mxu0 0
        %5598 = vmatmul.mubr.bf16.gmra.mrb[0].mxu0 %v5554
        %v5599 = vpop.f32.mrb[0].mxu0
        %v5600 = vadd.f32 %v5517, %v5599
        %v5601 = vpop.f32.mrb[0].mxu0
        %v5602 = vpop.f32.mrb[0].mxu0
        %v5603 = vadd.f32 %v5520, %v5602
        %v5604 = vpop.f32.mrb[0].mxu0
        %5605 = vmatprep.mubr.bf16.mxu0 0
        %5606 = vmatmul.mubr.bf16.gmra.mrb[0].mxu0 %v5557
        %v5607 = vpop.f32.mrb[0].mxu0
        %v5608 = vadd.f32 %v5525, %v5607
        %v5609 = vpop.f32.mrb[0].mxu0
        %v5610 = vpop.f32.mrb[0].mxu0
        %v5611 = vadd.f32 %v5528, %v5610
        %v5612 = vpop.f32.mrb[0].mxu0
        %5613 = vmatprep.mubr.bf16.mxu0 0
        %5614 = vmatmul.mubr.bf16.gmra.mrb[0].mxu0 %v5560
        %v5615 = vpop.f32.mrb[0].mxu0
        %v5616 = vadd.f32 %v5533, %v5615
        %v5617 = vpop.f32.mrb[0].mxu0
        %v5618 = vpop.f32.mrb[0].mxu0
        %v5619 = vadd.f32 %v5536, %v5618
        %v5620 = vpop.f32.mrb[0].mxu0
        %5621 = vmatprep.mubr.bf16.mxu0 0
        %5622 = vmatmul.mubr.bf16.gmra.mrb[0].mxu0 %v5563
        %v5623 = vpop.f32.mrb[0].mxu0
        %v5624 = vadd.f32 %v5541, %v5623
        %v5625 = vpop.f32.mrb[0].mxu0
        %v5626 = vpop.f32.mrb[0].mxu0
        %v5627 = vadd.f32 %v5544, %v5626
        %v5628 = vpop.f32.mrb[0].mxu0
        %5629 = vdwg.mxu0
        %v5630 = vld [vmem:[#allocation10 + $0x73] sm:$0x1]
        %v5631 = vlaneseq
        %v5632 = vshrl.u32 %v5631, 7
        %v5633 = vsub.s32 0, %v5632
        %v5634 = vrot.slane %v5630, %v5633
        %v5635 = vadd.f32 %v5600, %v5634
        %v5636 = vadd.f32 %v5603, %v5634
        %v5637 = vadd.f32 %v5608, %v5634
        %v5638 = vadd.f32 %v5611, %v5634
        %v5639 = vadd.f32 %v5616, %v5634
        %v5640 = vadd.f32 %v5619, %v5634
        %v5641 = vadd.f32 %v5624, %v5634
        %v5642 = vadd.f32 %v5627, %v5634
        %v5643 = vadd.f32 %v3088, %v5635
        %v5644 = vadd.f32 %v3089, %v5636
        %v5645 = vadd.f32 %v3090, %v5637
        %v5646 = vadd.f32 %v3091, %v5638
        %v5647 = vadd.f32 %v3092, %v5639
        %v5648 = vadd.f32 %v3093, %v5640
        %v5649 = vadd.f32 %v3094, %v5641
        %v5650 = vadd.f32 %v3095, %v5642
        %v5651 = vld [vmem:[#allocation10 + $0x78] sm:$0x1]
        %v5652 = vld [vmem:[#allocation10 + $0x79] sm:$0x1]
        %v5653 = vsel %vm440, %v5643, 0.0
        %5654 = vadd.xlane.f32.xlu0 %v5653
        %v5655 = vpop.xlane.xlu0 %5654
        %v5656 = vsel %vm440, %v5644, 0.0
        %5657 = vadd.xlane.f32.xlu0 %v5656
        %v5658 = vpop.xlane.xlu0 %5657
        %v5659 = vsel %vm440, %v5645, 0.0
        %5660 = vadd.xlane.f32.xlu0 %v5659
        %v5661 = vpop.xlane.xlu0 %5660
        %v5662 = vsel %vm440, %v5646, 0.0
        %5663 = vadd.xlane.f32.xlu0 %v5662
        %v5664 = vpop.xlane.xlu0 %5663
        %v5665 = vsel %vm440, %v5647, 0.0
        %5666 = vadd.xlane.f32.xlu0 %v5665
        %v5667 = vpop.xlane.xlu0 %5666
        %v5668 = vsel %vm440, %v5648, 0.0
        %5669 = vadd.xlane.f32.xlu0 %v5668
        %v5670 = vpop.xlane.xlu0 %5669
        %v5671 = vsel %vm440, %v5649, 0.0
        %5672 = vadd.xlane.f32.xlu0 %v5671
        %v5673 = vpop.xlane.xlu0 %5672
        %v5674 = vsel %vm440, %v5650, 0.0
        %5675 = vadd.xlane.f32.xlu0 %v5674
        %v5676 = vpop.xlane.xlu0 %5675
        %v5677 = vmul.f32 %v5655, %v994
        %v5678 = vmul.f32 %v5658, %v994
        %v5679 = vmul.f32 %v5661, %v994
        %v5680 = vmul.f32 %v5664, %v994
        %v5681 = vmul.f32 %v5667, %v994
        %v5682 = vmul.f32 %v5670, %v994
        %v5683 = vmul.f32 %v5673, %v994
        %v5684 = vmul.f32 %v5676, %v994
        %v5685 = vsub.f32 %v5643, %v5677
        %v5686 = vsub.f32 %v5644, %v5678
        %v5687 = vsub.f32 %v5645, %v5679
        %v5688 = vsub.f32 %v5646, %v5680
        %v5689 = vsub.f32 %v5647, %v5681
        %v5690 = vsub.f32 %v5648, %v5682
        %v5691 = vsub.f32 %v5649, %v5683
        %v5692 = vsub.f32 %v5650, %v5684
        %v5693 = vmul.f32 %v5685, %v5685
        %v5694 = vmul.f32 %v5686, %v5686
        %v5695 = vmul.f32 %v5687, %v5687
        %v5696 = vmul.f32 %v5688, %v5688
        %v5697 = vmul.f32 %v5689, %v5689
        %v5698 = vmul.f32 %v5690, %v5690
        %v5699 = vmul.f32 %v5691, %v5691
        %v5700 = vmul.f32 %v5692, %v5692
        %v5701 = vsel %vm440, %v5693, 0.0
        %5702 = vadd.xlane.f32.xlu0 %v5701
        %v5703 = vpop.xlane.xlu0 %5702
        %v5704 = vsel %vm440, %v5694, 0.0
        %5705 = vadd.xlane.f32.xlu0 %v5704
        %v5706 = vpop.xlane.xlu0 %5705
        %v5707 = vsel %vm440, %v5695, 0.0
        %5708 = vadd.xlane.f32.xlu0 %v5707
        %v5709 = vpop.xlane.xlu0 %5708
        %v5710 = vsel %vm440, %v5696, 0.0
        %5711 = vadd.xlane.f32.xlu0 %v5710
        %v5712 = vpop.xlane.xlu0 %5711
        %v5713 = vsel %vm440, %v5697, 0.0
        %5714 = vadd.xlane.f32.xlu0 %v5713
        %v5715 = vpop.xlane.xlu0 %5714
        %v5716 = vsel %vm440, %v5698, 0.0
        %5717 = vadd.xlane.f32.xlu0 %v5716
        %v5718 = vpop.xlane.xlu0 %5717
        %v5719 = vsel %vm440, %v5699, 0.0
        %5720 = vadd.xlane.f32.xlu0 %v5719
        %v5721 = vpop.xlane.xlu0 %5720
        %v5722 = vsel %vm440, %v5700, 0.0
        %5723 = vadd.xlane.f32.xlu0 %v5722
        %v5724 = vpop.xlane.xlu0 %5723
        %v5725 = vmul.f32 %v5703, %v994
        %v5726 = vmul.f32 %v5706, %v994
        %v5727 = vmul.f32 %v5709, %v994
        %v5728 = vmul.f32 %v5712, %v994
        %v5729 = vmul.f32 %v5715, %v994
        %v5730 = vmul.f32 %v5718, %v994
        %v5731 = vmul.f32 %v5721, %v994
        %v5732 = vmul.f32 %v5724, %v994
        %v5733 = vadd.f32 %v5725, 1e-06
        %v5734 = vadd.f32 %v5726, 1e-06
        %v5735 = vadd.f32 %v5727, 1e-06
        %v5736 = vadd.f32 %v5728, 1e-06
        %v5737 = vadd.f32 %v5729, 1e-06
        %v5738 = vadd.f32 %v5730, 1e-06
        %v5739 = vadd.f32 %v5731, 1e-06
        %v5740 = vadd.f32 %v5732, 1e-06
        %v5741 = vrsqrt.pop %v5733
        %v5742 = vrsqrt.pop %v5734
        %v5743 = vrsqrt.pop %v5735
        %v5744 = vrsqrt.pop %v5736
        %v5745 = vrsqrt.pop %v5737
        %v5746 = vrsqrt.pop %v5738
        %v5747 = vrsqrt.pop %v5739
        %v5748 = vrsqrt.pop %v5740
        %v5749 = vmul.f32 %v5685, %v5741
        %v5750 = vmul.f32 %v5686, %v5742
        %v5751 = vmul.f32 %v5687, %v5743
        %v5752 = vmul.f32 %v5688, %v5744
        %v5753 = vmul.f32 %v5689, %v5745
        %v5754 = vmul.f32 %v5690, %v5746
        %v5755 = vmul.f32 %v5691, %v5747
        %v5756 = vmul.f32 %v5692, %v5748
        %v5757 = vlaneseq
        %v5758 = vshrl.u32 %v5757, 7
        %v5759 = vsub.s32 0, %v5758
        %v5760 = vrot.slane %v5651, %v5759
        %v5761 = vmul.f32 %v5749, %v5760
        %v5762 = vmul.f32 %v5750, %v5760
        %v5763 = vmul.f32 %v5751, %v5760
        %v5764 = vmul.f32 %v5752, %v5760
        %v5765 = vmul.f32 %v5753, %v5760
        %v5766 = vmul.f32 %v5754, %v5760
        %v5767 = vmul.f32 %v5755, %v5760
        %v5768 = vmul.f32 %v5756, %v5760
        %v5769 = vlaneseq
        %v5770 = vshrl.u32 %v5769, 7
        %v5771 = vsub.s32 0, %v5770
        %v5772 = vrot.slane %v5652, %v5771
        %v5773 = vadd.f32 %v5761, %v5772
        %v5774 = vadd.f32 %v5762, %v5772
        %v5775 = vadd.f32 %v5763, %v5772
        %v5776 = vadd.f32 %v5764, %v5772
        %v5777 = vadd.f32 %v5765, %v5772
        %v5778 = vadd.f32 %v5766, %v5772
        %v5779 = vadd.f32 %v5767, %v5772
        %v5780 = vadd.f32 %v5768, %v5772
        %v5781 = vadd.f32 %v5773, %v386
        %v5782 = vadd.f32 %v5774, %v387
        %v5783 = vadd.f32 %v5775, %v388
        %v5784 = vadd.f32 %v5776, %v389
        %v5785 = vadd.f32 %v5777, %v390
        %v5786 = vadd.f32 %v5778, %v391
        %v5787 = vadd.f32 %v5779, %v392
        %v5788 = vadd.f32 %v5780, %v393
        %v5789 = vpack.c.bf16 %v5782, %v5781
        %v5790 = vpack.c.bf16 %v5784, %v5783
        %v5791 = vpack.c.bf16 %v5786, %v5785
        %v5792 = vpack.c.bf16 %v5788, %v5787
        %v5793 = vpack.c.bf16 %v5774, %v5773
        %v5794 = vpack.c.bf16 %v5776, %v5775
        %v5795 = vpack.c.bf16 %v5778, %v5777
        %v5796 = vpack.c.bf16 %v5780, %v5779
        %v5797 = vld [vmem:[#allocation8 + $0x380] sm:$0xf]
        %v5798 = vld [vmem:[#allocation8 + $0x384] sm:$0xf]
        %v5799 = vld [vmem:[#allocation8 + $0x388] sm:$0xf]
        %v5800 = vld [vmem:[#allocation8 + $0x38c] sm:$0xf]
        %v5801 = vld [vmem:[#allocation8 + $0x390] sm:$0xf]
        %v5802 = vld [vmem:[#allocation8 + $0x394] sm:$0xf]
        %v5803 = vld [vmem:[#allocation8 + $0x398] sm:$0xf]
        %v5804 = vld [vmem:[#allocation8 + $0x39c] sm:$0xf]
        %v5805 = vld [vmem:[#allocation10 + $0x80] sm:$0x1]
        %v5806 = vlaneseq
        %v5807 = vshrl.u32 %v5806, 7
        %v5808 = vsub.s32 0, %v5807
        %v5809 = vrot.slane %v5805, %v5808
        %v5818 = vunpack.c.l.b16 %v5797
        %v5819 = vunpack.c.l.b16 %v5798
        %v5820 = vunpack.c.l.b16 %v5799
        %v5821 = vunpack.c.l.b16 %v5800
        %v5822 = vunpack.c.l.b16 %v5801
        %v5823 = vunpack.c.l.b16 %v5802
        %v5824 = vunpack.c.l.b16 %v5803
        %v5825 = vunpack.c.l.b16 %v5804
        %v5826 = vpack.c.b16 %v5819, %v5818
        %v5827 = vpack.c.b16 %v5821, %v5820
        %v5828 = vpack.c.b16 %v5823, %v5822
        %v5829 = vpack.c.b16 %v5825, %v5824
        %5834 = vmatprep.subr.bf16.mxu0 0
        %5835 = vmatpush1.bf16.msra.mxu0 %v5826
        %5836 = vmatprep.subr.bf16.mxu0 0
        %5837 = vmatpush1.bf16.msra.mxu0 %v5827
        %5838 = vmatprep.subr.bf16.mxu0 0
        %5839 = vmatpush1.bf16.msra.mxu0 %v5828
        %5840 = vmatprep.subr.bf16.mxu0 0
        %5841 = vmatpush1.bf16.msra.mxu0 %v5829
        %5842 = vmatprep.subr.bf16.mxu0 0
        %5843 = vmatpush1.bf16.msra.mxu0 0
        %5844 = vmatprep.subr.bf16.mxu0 0
        %5845 = vmatpush1.bf16.msra.mxu0 0
        %5846 = vmatprep.subr.bf16.mxu0 0
        %5847 = vmatpush1.bf16.msra.mxu0 0
        %5848 = vmatprep.subr.bf16.mxu0 0
        %5849 = vmatpush1.bf16.msra.mxu0 0
        %5850 = vmatprep.subr.bf16.mxu0 0
        %5851 = vmatpush1.bf16.msra.mxu0 0
        %5852 = vmatprep.subr.bf16.mxu0 0
        %5853 = vmatpush1.bf16.msra.mxu0 0
        %5854 = vmatprep.subr.bf16.mxu0 0
        %5855 = vmatpush1.bf16.msra.mxu0 0
        %5856 = vmatprep.subr.bf16.mxu0 0
        %5857 = vmatpush1.bf16.msra.mxu0 0
        %5858 = vmatprep.subr.bf16.mxu0 0
        %5859 = vmatpush1.bf16.msra.mxu0 0
        %5860 = vmatprep.subr.bf16.mxu0 0
        %5861 = vmatpush1.bf16.msra.mxu0 0
        %5862 = vmatprep.subr.bf16.mxu0 0
        %5863 = vmatpush1.bf16.msra.mxu0 0
        %5864 = vmatprep.subr.bf16.mxu0 0
        %5865 = vmatpush1.bf16.msra.mxu0 0
        %5866 = vmatprep.mubr.bf16.mxu0 0
        %5867 = vmatmul.mubr.bf16.gmra.mrb[0].mxu0 %v4786
        %v5868 = vpop.f32.mrb[0].mxu0
        %v5869 = vadd.f32 %v5809, %v5868
        %v5870 = vpop.f32.mrb[0].mxu0
        %v5871 = vpop.f32.mrb[0].mxu0
        %v5872 = vpop.f32.mrb[0].mxu0
        %5873 = vdwg.mxu0
        %v5874 = vld [vmem:[#allocation8 + $0x3a0] sm:$0xf]
        %v5875 = vld [vmem:[#allocation8 + $0x3a4] sm:$0xf]
        %v5876 = vld [vmem:[#allocation8 + $0x3a8] sm:$0xf]
        %v5877 = vld [vmem:[#allocation8 + $0x3ac] sm:$0xf]
        %v5878 = vld [vmem:[#allocation8 + $0x3b0] sm:$0xf]
        %v5879 = vld [vmem:[#allocation8 + $0x3b4] sm:$0xf]
        %v5880 = vld [vmem:[#allocation8 + $0x3b8] sm:$0xf]
        %v5881 = vld [vmem:[#allocation8 + $0x3bc] sm:$0xf]
        %v5882 = vld [vmem:[#allocation10 + $0x81] sm:$0x1]
        %v5883 = vlaneseq
        %v5884 = vshrl.u32 %v5883, 7
        %v5885 = vsub.s32 0, %v5884
        %v5886 = vrot.slane %v5882, %v5885
        %v5895 = vunpack.c.l.b16 %v5874
        %v5896 = vunpack.c.l.b16 %v5875
        %v5897 = vunpack.c.l.b16 %v5876
        %v5898 = vunpack.c.l.b16 %v5877
        %v5899 = vunpack.c.l.b16 %v5878
        %v5900 = vunpack.c.l.b16 %v5879
        %v5901 = vunpack.c.l.b16 %v5880
        %v5902 = vunpack.c.l.b16 %v5881
        %v5903 = vpack.c.b16 %v5896, %v5895
        %v5904 = vpack.c.b16 %v5898, %v5897
        %v5905 = vpack.c.b16 %v5900, %v5899
        %v5906 = vpack.c.b16 %v5902, %v5901
        %v5912 = vsel %vm440, %v5789, 0
        %v5915 = vsel %vm440, %v5790, 0
        %v5918 = vsel %vm440, %v5791, 0
        %v5921 = vsel %vm440, %v5792, 0
        %5923 = vmatprep.subr.bf16.mxu0 0
        %5924 = vmatpush1.bf16.msra.mxu0 %v5903
        %5925 = vmatprep.subr.bf16.mxu0 0
        %5926 = vmatpush1.bf16.msra.mxu0 %v5904
        %5927 = vmatprep.subr.bf16.mxu0 0
        %5928 = vmatpush1.bf16.msra.mxu0 %v5905
        %5929 = vmatprep.subr.bf16.mxu0 0
        %5930 = vmatpush1.bf16.msra.mxu0 %v5906
        %5931 = vmatprep.subr.bf16.mxu0 0
        %5932 = vmatpush1.bf16.msra.mxu0 0
        %5933 = vmatprep.subr.bf16.mxu0 0
        %5934 = vmatpush1.bf16.msra.mxu0 0
        %5935 = vmatprep.subr.bf16.mxu0 0
        %5936 = vmatpush1.bf16.msra.mxu0 0
        %5937 = vmatprep.subr.bf16.mxu0 0
        %5938 = vmatpush1.bf16.msra.mxu0 0
        %5939 = vmatprep.subr.bf16.mxu0 0
        %5940 = vmatpush1.bf16.msra.mxu0 0
        %5941 = vmatprep.subr.bf16.mxu0 0
        %5942 = vmatpush1.bf16.msra.mxu0 0
        %5943 = vmatprep.subr.bf16.mxu0 0
        %5944 = vmatpush1.bf16.msra.mxu0 0
        %5945 = vmatprep.subr.bf16.mxu0 0
        %5946 = vmatpush1.bf16.msra.mxu0 0
        %5947 = vmatprep.subr.bf16.mxu0 0
        %5948 = vmatpush1.bf16.msra.mxu0 0
        %5949 = vmatprep.subr.bf16.mxu0 0
        %5950 = vmatpush1.bf16.msra.mxu0 0
        %5951 = vmatprep.subr.bf16.mxu0 0
        %5952 = vmatpush1.bf16.msra.mxu0 0
        %5953 = vmatprep.subr.bf16.mxu0 0
        %5954 = vmatpush1.bf16.msra.mxu0 0
        %5955 = vmatprep.mubr.bf16.mxu0 0
        %5956 = vmatmul.mubr.bf16.gmra.mrb[0].mxu0 %v5912
        %v5957 = vpop.f32.mrb[0].mxu0
        %v5958 = vadd.f32 %v5886, %v5957
        %v5959 = vpop.f32.mrb[0].mxu0
        %v5960 = vpop.f32.mrb[0].mxu0
        %v5961 = vadd.f32 %v5886, %v5960
        %v5962 = vpop.f32.mrb[0].mxu0
        %5963 = vmatprep.mubr.bf16.mxu0 0
        %5964 = vmatmul.mubr.bf16.gmra.mrb[0].mxu0 %v5915
        %v5965 = vpop.f32.mrb[0].mxu0
        %v5966 = vadd.f32 %v5886, %v5965
        %v5967 = vpop.f32.mrb[0].mxu0
        %v5968 = vpop.f32.mrb[0].mxu0
        %v5969 = vadd.f32 %v5886, %v5968
        %v5970 = vpop.f32.mrb[0].mxu0
        %5971 = vmatprep.mubr.bf16.mxu0 0
        %5972 = vmatmul.mubr.bf16.gmra.mrb[0].mxu0 %v5918
        %v5973 = vpop.f32.mrb[0].mxu0
        %v5974 = vadd.f32 %v5886, %v5973
        %v5975 = vpop.f32.mrb[0].mxu0
        %v5976 = vpop.f32.mrb[0].mxu0
        %v5977 = vadd.f32 %v5886, %v5976
        %v5978 = vpop.f32.mrb[0].mxu0
        %5979 = vmatprep.mubr.bf16.mxu0 0
        %5980 = vmatmul.mubr.bf16.gmra.mrb[0].mxu0 %v5921
        %v5981 = vpop.f32.mrb[0].mxu0
        %v5982 = vadd.f32 %v5886, %v5981
        %v5983 = vpop.f32.mrb[0].mxu0
        %v5984 = vpop.f32.mrb[0].mxu0
        %v5985 = vadd.f32 %v5886, %v5984
        %v5986 = vpop.f32.mrb[0].mxu0
        %5987 = vdwg.mxu0
        %v5988 = vld [vmem:[#allocation8 + $0x3c0] sm:$0xf]
        %v5989 = vld [vmem:[#allocation8 + $0x3c4] sm:$0xf]
        %v5990 = vld [vmem:[#allocation8 + $0x3c8] sm:$0xf]
        %v5991 = vld [vmem:[#allocation8 + $0x3cc] sm:$0xf]
        %v5992 = vld [vmem:[#allocation8 + $0x3d0] sm:$0xf]
        %v5993 = vld [vmem:[#allocation8 + $0x3d4] sm:$0xf]
        %v5994 = vld [vmem:[#allocation8 + $0x3d8] sm:$0xf]
        %v5995 = vld [vmem:[#allocation8 + $0x3dc] sm:$0xf]
        %v5996 = vld [vmem:[#allocation10 + $0x82] sm:$0x1]
        %v5997 = vlaneseq
        %v5998 = vshrl.u32 %v5997, 7
        %v5999 = vsub.s32 0, %v5998
        %v6000 = vrot.slane %v5996, %v5999
        %v6009 = vunpack.c.l.b16 %v5988
        %v6010 = vunpack.c.l.b16 %v5989
        %v6011 = vunpack.c.l.b16 %v5990
        %v6012 = vunpack.c.l.b16 %v5991
        %v6013 = vunpack.c.l.b16 %v5992
        %v6014 = vunpack.c.l.b16 %v5993
        %v6015 = vunpack.c.l.b16 %v5994
        %v6016 = vunpack.c.l.b16 %v5995
        %v6017 = vpack.c.b16 %v6010, %v6009
        %v6018 = vpack.c.b16 %v6012, %v6011
        %v6019 = vpack.c.b16 %v6014, %v6013
        %v6020 = vpack.c.b16 %v6016, %v6015
        %v6026 = vsel %vm440, %v5793, 0
        %v6029 = vsel %vm440, %v5794, 0
        %v6032 = vsel %vm440, %v5795, 0
        %v6035 = vsel %vm440, %v5796, 0
        %6037 = vmatprep.subr.bf16.mxu0 0
        %6038 = vmatpush1.bf16.msra.mxu0 %v6017
        %6039 = vmatprep.subr.bf16.mxu0 0
        %6040 = vmatpush1.bf16.msra.mxu0 %v6018
        %6041 = vmatprep.subr.bf16.mxu0 0
        %6042 = vmatpush1.bf16.msra.mxu0 %v6019
        %6043 = vmatprep.subr.bf16.mxu0 0
        %6044 = vmatpush1.bf16.msra.mxu0 %v6020
        %6045 = vmatprep.subr.bf16.mxu0 0
        %6046 = vmatpush1.bf16.msra.mxu0 0
        %6047 = vmatprep.subr.bf16.mxu0 0
        %6048 = vmatpush1.bf16.msra.mxu0 0
        %6049 = vmatprep.subr.bf16.mxu0 0
        %6050 = vmatpush1.bf16.msra.mxu0 0
        %6051 = vmatprep.subr.bf16.mxu0 0
        %6052 = vmatpush1.bf16.msra.mxu0 0
        %6053 = vmatprep.subr.bf16.mxu0 0
        %6054 = vmatpush1.bf16.msra.mxu0 0
        %6055 = vmatprep.subr.bf16.mxu0 0
        %6056 = vmatpush1.bf16.msra.mxu0 0
        %6057 = vmatprep.subr.bf16.mxu0 0
        %6058 = vmatpush1.bf16.msra.mxu0 0
        %6059 = vmatprep.subr.bf16.mxu0 0
        %6060 = vmatpush1.bf16.msra.mxu0 0
        %6061 = vmatprep.subr.bf16.mxu0 0
        %6062 = vmatpush1.bf16.msra.mxu0 0
        %6063 = vmatprep.subr.bf16.mxu0 0
        %6064 = vmatpush1.bf16.msra.mxu0 0
        %6065 = vmatprep.subr.bf16.mxu0 0
        %6066 = vmatpush1.bf16.msra.mxu0 0
        %6067 = vmatprep.subr.bf16.mxu0 0
        %6068 = vmatpush1.bf16.msra.mxu0 0
        %6069 = vmatprep.mubr.bf16.mxu0 0
        %6070 = vmatmul.mubr.bf16.gmra.mrb[0].mxu0 %v6026
        %v6071 = vpop.f32.mrb[0].mxu0
        %v6072 = vadd.f32 %v6000, %v6071
        %v6073 = vpop.f32.mrb[0].mxu0
        %v6074 = vpop.f32.mrb[0].mxu0
        %v6075 = vadd.f32 %v6000, %v6074
        %v6076 = vpop.f32.mrb[0].mxu0
        %6077 = vmatprep.mubr.bf16.mxu0 0
        %6078 = vmatmul.mubr.bf16.gmra.mrb[0].mxu0 %v6029
        %v6079 = vpop.f32.mrb[0].mxu0
        %v6080 = vadd.f32 %v6000, %v6079
        %v6081 = vpop.f32.mrb[0].mxu0
        %v6082 = vpop.f32.mrb[0].mxu0
        %v6083 = vadd.f32 %v6000, %v6082
        %v6084 = vpop.f32.mrb[0].mxu0
        %6085 = vmatprep.mubr.bf16.mxu0 0
        %6086 = vmatmul.mubr.bf16.gmra.mrb[0].mxu0 %v6032
        %v6087 = vpop.f32.mrb[0].mxu0
        %v6088 = vadd.f32 %v6000, %v6087
        %v6089 = vpop.f32.mrb[0].mxu0
        %v6090 = vpop.f32.mrb[0].mxu0
        %v6091 = vadd.f32 %v6000, %v6090
        %v6092 = vpop.f32.mrb[0].mxu0
        %6093 = vmatprep.mubr.bf16.mxu0 0
        %6094 = vmatmul.mubr.bf16.gmra.mrb[0].mxu0 %v6035
        %v6095 = vpop.f32.mrb[0].mxu0
        %v6096 = vadd.f32 %v6000, %v6095
        %v6097 = vpop.f32.mrb[0].mxu0
        %v6098 = vpop.f32.mrb[0].mxu0
        %v6099 = vadd.f32 %v6000, %v6098
        %v6100 = vpop.f32.mrb[0].mxu0
        %6101 = vdwg.mxu0
        %v6102 = vpack.c.bf16 %v5869, %v5869
        %v6103 = vpack.c.bf16 %v5961, %v5958
        %v6104 = vpack.c.bf16 %v5969, %v5966
        %v6105 = vpack.c.bf16 %v5977, %v5974
        %v6106 = vpack.c.bf16 %v5985, %v5982
        %v6108 = vsel %vm1346, %v6102, 0
        %v6111 = vsel %vm1346, %v6103, 0
        %v6114 = vsel %vm1346, %v6104, 0
        %v6117 = vsel %vm1346, %v6105, 0
        %v6120 = vsel %vm1346, %v6106, 0
        %6122 = vmatprep.subr.bf16.mxu0 0
        %6123 = vmatpush1.bf16.xpose.msra.mxu0 %v6111
        %6124 = vmatprep.subr.bf16.mxu0 0
        %6125 = vmatpush1.bf16.xpose.msra.mxu0 %v6114
        %6126 = vmatprep.subr.bf16.mxu0 0
        %6127 = vmatpush1.bf16.xpose.msra.mxu0 %v6117
        %6128 = vmatprep.subr.bf16.mxu0 0
        %6129 = vmatpush1.bf16.xpose.msra.mxu0 %v6120
        %6130 = vmatprep.subr.bf16.mxu0 0
        %6131 = vmatpush1.bf16.xpose.msra.mxu0 0
        %6132 = vmatprep.subr.bf16.mxu0 0
        %6133 = vmatpush1.bf16.xpose.msra.mxu0 0
        %6134 = vmatprep.subr.bf16.mxu0 0
        %6135 = vmatpush1.bf16.xpose.msra.mxu0 0
        %6136 = vmatprep.subr.bf16.mxu0 0
        %6137 = vmatpush1.bf16.xpose.msra.mxu0 0
        %6138 = vmatprep.subr.bf16.mxu0 0
        %6139 = vmatpush1.bf16.xpose.msra.mxu0 0
        %6140 = vmatprep.subr.bf16.mxu0 0
        %6141 = vmatpush1.bf16.xpose.msra.mxu0 0
        %6142 = vmatprep.subr.bf16.mxu0 0
        %6143 = vmatpush1.bf16.xpose.msra.mxu0 0
        %6144 = vmatprep.subr.bf16.mxu0 0
        %6145 = vmatpush1.bf16.xpose.msra.mxu0 0
        %6146 = vmatprep.subr.bf16.mxu0 0
        %6147 = vmatpush1.bf16.xpose.msra.mxu0 0
        %6148 = vmatprep.subr.bf16.mxu0 0
        %6149 = vmatpush1.bf16.xpose.msra.mxu0 0
        %6150 = vmatprep.subr.bf16.mxu0 0
        %6151 = vmatpush1.bf16.xpose.msra.mxu0 0
        %6152 = vmatprep.subr.bf16.mxu0 0
        %6153 = vmatpush1.bf16.xpose.msra.mxu0 0
        %6154 = vmatprep.mubr.bf16.mxu0 0
        %6155 = vmatmul.mubr.bf16.gmra.mrb[0].mxu0 %v6108
        %v6156 = vpop.f32.mrb[0].mxu0
        %v6157 = vadd.f32 0.0, %v6156
        %v6158 = vpop.f32.mrb[0].mxu0
        %v6159 = vpop.f32.mrb[0].mxu0
        %v6160 = vpop.f32.mrb[0].mxu0
        %6161 = vdwg.mxu0
        %v6162 = vmul.f32 %v6157, 0.25
        %v6163 = vsel %vm440, %v6162, -inf
        %6164 = vmax.xlane.f32.xlu0 %v6163
        %v6165 = vpop.xlane.xlu0 %6164
        %v6166 = vsub.f32 %v6162, %v6165
        %v6167 = vmul.f32 %v6166, 1.442695
        %v6168 = vpow.pop %v6167
        %v6169 = vsel %vm440, %v6168, 0.0
        %6170 = vadd.xlane.f32.xlu0 %v6169
        %v6171 = vpop.xlane.xlu0 %6170
        %v6172 = vrcp.pop %v6171
        %v6173 = vmul.f32 %v6168, %v6172
        %v6174 = vpack.c.bf16 %v6173, %v6173
        %v6175 = vpack.c.bf16 %v6075, %v6072
        %v6176 = vpack.c.bf16 %v6083, %v6080
        %v6177 = vpack.c.bf16 %v6091, %v6088
        %v6178 = vpack.c.bf16 %v6099, %v6096
        %v6180 = vsel %vm440, %v6174, 0
        %6182 = vmatprep.subr.bf16.mxu0 0
        %6183 = vmatpush1.bf16.msra.mxu0 %v6175
        %6184 = vmatprep.subr.bf16.mxu0 0
        %6185 = vmatpush1.bf16.msra.mxu0 %v6176
        %6186 = vmatprep.subr.bf16.mxu0 0
        %6187 = vmatpush1.bf16.msra.mxu0 %v6177
        %6188 = vmatprep.subr.bf16.mxu0 0
        %6189 = vmatpush1.bf16.msra.mxu0 %v6178
        %6190 = vmatprep.subr.bf16.mxu0 0
        %6191 = vmatpush1.bf16.msra.mxu0 0
        %6192 = vmatprep.subr.bf16.mxu0 0
        %6193 = vmatpush1.bf16.msra.mxu0 0
        %6194 = vmatprep.subr.bf16.mxu0 0
        %6195 = vmatpush1.bf16.msra.mxu0 0
        %6196 = vmatprep.subr.bf16.mxu0 0
        %6197 = vmatpush1.bf16.msra.mxu0 0
        %6198 = vmatprep.subr.bf16.mxu0 0
        %6199 = vmatpush1.bf16.msra.mxu0 0
        %6200 = vmatprep.subr.bf16.mxu0 0
        %6201 = vmatpush1.bf16.msra.mxu0 0
        %6202 = vmatprep.subr.bf16.mxu0 0
        %6203 = vmatpush1.bf16.msra.mxu0 0
        %6204 = vmatprep.subr.bf16.mxu0 0
        %6205 = vmatpush1.bf16.msra.mxu0 0
        %6206 = vmatprep.subr.bf16.mxu0 0
        %6207 = vmatpush1.bf16.msra.mxu0 0
        %6208 = vmatprep.subr.bf16.mxu0 0
        %6209 = vmatpush1.bf16.msra.mxu0 0
        %6210 = vmatprep.subr.bf16.mxu0 0
        %6211 = vmatpush1.bf16.msra.mxu0 0
        %6212 = vmatprep.subr.bf16.mxu0 0
        %6213 = vmatpush1.bf16.msra.mxu0 0
        %6214 = vmatprep.mubr.bf16.mxu0 0
        %6215 = vmatmul.mubr.bf16.gmra.mrb[0].mxu0 %v6180
        %v6216 = vpop.f32.mrb[0].mxu0
        %v6217 = vadd.f32 0.0, %v6216
        %v6218 = vpop.f32.mrb[0].mxu0
        %v6219 = vpop.f32.mrb[0].mxu0
        %v6220 = vpop.f32.mrb[0].mxu0
        %6221 = vdwg.mxu0
        %v6222 = vld [vmem:[#allocation8 + $0x3e0] sm:$0xf]
        %v6223 = vld [vmem:[#allocation8 + $0x3e4] sm:$0xf]
        %v6224 = vpack.c.bf16 %v6217, %v6217
        %6226 = vrot.lane.b32.xlu0 %v6102, 112
        %v6227 = vpop.permute.xlu0 %6226
        %6232 = vrot.lane.b32.xlu0 %v6103, 112
        %v6233 = vpop.permute.xlu0 %6232
        %6234 = vrot.lane.b32.xlu0 %v6104, 112
        %v6235 = vpop.permute.xlu0 %6234
        %6236 = vrot.lane.b32.xlu0 %v6105, 112
        %v6237 = vpop.permute.xlu0 %6236
        %6238 = vrot.lane.b32.xlu0 %v6106, 112
        %v6239 = vpop.permute.xlu0 %6238
        %v6241 = vsel %vm1346, %v6227, 0
        %v6244 = vsel %vm1346, %v6233, 0
        %v6247 = vsel %vm1346, %v6235, 0
        %v6250 = vsel %vm1346, %v6237, 0
        %v6253 = vsel %vm1346, %v6239, 0
        %6255 = vmatprep.subr.bf16.mxu0 0
        %6256 = vmatpush1.bf16.xpose.msra.mxu0 %v6244
        %6257 = vmatprep.subr.bf16.mxu0 0
        %6258 = vmatpush1.bf16.xpose.msra.mxu0 %v6247
        %6259 = vmatprep.subr.bf16.mxu0 0
        %6260 = vmatpush1.bf16.xpose.msra.mxu0 %v6250
        %6261 = vmatprep.subr.bf16.mxu0 0
        %6262 = vmatpush1.bf16.xpose.msra.mxu0 %v6253
        %6263 = vmatprep.subr.bf16.mxu0 0
        %6264 = vmatpush1.bf16.xpose.msra.mxu0 0
        %6265 = vmatprep.subr.bf16.mxu0 0
        %6266 = vmatpush1.bf16.xpose.msra.mxu0 0
        %6267 = vmatprep.subr.bf16.mxu0 0
        %6268 = vmatpush1.bf16.xpose.msra.mxu0 0
        %6269 = vmatprep.subr.bf16.mxu0 0
        %6270 = vmatpush1.bf16.xpose.msra.mxu0 0
        %6271 = vmatprep.subr.bf16.mxu0 0
        %6272 = vmatpush1.bf16.xpose.msra.mxu0 0
        %6273 = vmatprep.subr.bf16.mxu0 0
        %6274 = vmatpush1.bf16.xpose.msra.mxu0 0
        %6275 = vmatprep.subr.bf16.mxu0 0
        %6276 = vmatpush1.bf16.xpose.msra.mxu0 0
        %6277 = vmatprep.subr.bf16.mxu0 0
        %6278 = vmatpush1.bf16.xpose.msra.mxu0 0
        %6279 = vmatprep.subr.bf16.mxu0 0
        %6280 = vmatpush1.bf16.xpose.msra.mxu0 0
        %6281 = vmatprep.subr.bf16.mxu0 0
        %6282 = vmatpush1.bf16.xpose.msra.mxu0 0
        %6283 = vmatprep.subr.bf16.mxu0 0
        %6284 = vmatpush1.bf16.xpose.msra.mxu0 0
        %6285 = vmatprep.subr.bf16.mxu0 0
        %6286 = vmatpush1.bf16.xpose.msra.mxu0 0
        %6287 = vmatprep.mubr.bf16.mxu0 0
        %6288 = vmatmul.mubr.bf16.gmra.mrb[0].mxu0 %v6241
        %v6289 = vpop.f32.mrb[0].mxu0
        %v6290 = vadd.f32 0.0, %v6289
        %v6291 = vpop.f32.mrb[0].mxu0
        %v6292 = vpop.f32.mrb[0].mxu0
        %v6293 = vpop.f32.mrb[0].mxu0
        %6294 = vdwg.mxu0
        %v6295 = vmul.f32 %v6290, 0.25
        %v6296 = vsel %vm440, %v6295, -inf
        %6297 = vmax.xlane.f32.xlu0 %v6296
        %v6298 = vpop.xlane.xlu0 %6297
        %v6299 = vsub.f32 %v6295, %v6298
        %v6300 = vmul.f32 %v6299, 1.442695
        %v6301 = vpow.pop %v6300
        %v6302 = vsel %vm440, %v6301, 0.0
        %6303 = vadd.xlane.f32.xlu0 %v6302
        %v6304 = vpop.xlane.xlu0 %6303
        %v6305 = vrcp.pop %v6304
        %v6306 = vmul.f32 %v6301, %v6305
        %v6307 = vpack.c.bf16 %v6306, %v6306
        %6312 = vrot.lane.b32.xlu0 %v6175, 112
        %v6313 = vpop.permute.xlu0 %6312
        %6314 = vrot.lane.b32.xlu0 %v6176, 112
        %v6315 = vpop.permute.xlu0 %6314
        %6316 = vrot.lane.b32.xlu0 %v6177, 112
        %v6317 = vpop.permute.xlu0 %6316
        %6318 = vrot.lane.b32.xlu0 %v6178, 112
        %v6319 = vpop.permute.xlu0 %6318
        %v6325 = vsel %vm440, %v6307, 0
        %6327 = vmatprep.subr.bf16.mxu0 0
        %6328 = vmatpush1.bf16.msra.mxu0 %v6313
        %6329 = vmatprep.subr.bf16.mxu0 0
        %6330 = vmatpush1.bf16.msra.mxu0 %v6315
        %6331 = vmatprep.subr.bf16.mxu0 0
        %6332 = vmatpush1.bf16.msra.mxu0 %v6317
        %6333 = vmatprep.subr.bf16.mxu0 0
        %6334 = vmatpush1.bf16.msra.mxu0 %v6319
        %6335 = vmatprep.subr.bf16.mxu0 0
        %6336 = vmatpush1.bf16.msra.mxu0 0
        %6337 = vmatprep.subr.bf16.mxu0 0
        %6338 = vmatpush1.bf16.msra.mxu0 0
        %6339 = vmatprep.subr.bf16.mxu0 0
        %6340 = vmatpush1.bf16.msra.mxu0 0
        %6341 = vmatprep.subr.bf16.mxu0 0
        %6342 = vmatpush1.bf16.msra.mxu0 0
        %6343 = vmatprep.subr.bf16.mxu0 0
        %6344 = vmatpush1.bf16.msra.mxu0 0
        %6345 = vmatprep.subr.bf16.mxu0 0
        %6346 = vmatpush1.bf16.msra.mxu0 0
        %6347 = vmatprep.subr.bf16.mxu0 0
        %6348 = vmatpush1.bf16.msra.mxu0 0
        %6349 = vmatprep.subr.bf16.mxu0 0
        %6350 = vmatpush1.bf16.msra.mxu0 0
        %6351 = vmatprep.subr.bf16.mxu0 0
        %6352 = vmatpush1.bf16.msra.mxu0 0
        %6353 = vmatprep.subr.bf16.mxu0 0
        %6354 = vmatpush1.bf16.msra.mxu0 0
        %6355 = vmatprep.subr.bf16.mxu0 0
        %6356 = vmatpush1.bf16.msra.mxu0 0
        %6357 = vmatprep.subr.bf16.mxu0 0
        %6358 = vmatpush1.bf16.msra.mxu0 0
        %6359 = vmatprep.mubr.bf16.mxu0 0
        %6360 = vmatmul.mubr.bf16.gmra.mrb[0].mxu0 %v6325
        %v6361 = vpop.f32.mrb[0].mxu0
        %v6362 = vadd.f32 0.0, %v6361
        %v6363 = vpop.f32.mrb[0].mxu0
        %v6364 = vpop.f32.mrb[0].mxu0
        %v6365 = vpop.f32.mrb[0].mxu0
        %6366 = vdwg.mxu0
        %v6367 = vld [vmem:[#allocation8 + $0x3e8] sm:$0xf]
        %v6368 = vld [vmem:[#allocation8 + $0x3ec] sm:$0xf]
        %v6369 = vpack.c.bf16 %v6362, %v6362
        %v6372 = vunpack.c.l.b16 %v6367
        %v6373 = vunpack.c.l.b16 %v6368
        %v6374 = vpack.c.b16 %v6373, %v6372
        %v6377 = vsel %vm1346, %v6369, 0
        %6379 = vmatprep.subr.bf16.mxu0 0
        %6380 = vmatpush1.bf16.msra.mxu0 %v6374
        %6381 = vmatprep.subr.bf16.mxu0 0
        %6382 = vmatpush1.bf16.msra.mxu0 0
        %6383 = vmatprep.subr.bf16.mxu0 0
        %6384 = vmatpush1.bf16.msra.mxu0 0
        %6385 = vmatprep.subr.bf16.mxu0 0
        %6386 = vmatpush1.bf16.msra.mxu0 0
        %6387 = vmatprep.subr.bf16.mxu0 0
        %6388 = vmatpush1.bf16.msra.mxu0 0
        %6389 = vmatprep.subr.bf16.mxu0 0
        %6390 = vmatpush1.bf16.msra.mxu0 0
        %6391 = vmatprep.subr.bf16.mxu0 0
        %6392 = vmatpush1.bf16.msra.mxu0 0
        %6393 = vmatprep.subr.bf16.mxu0 0
        %6394 = vmatpush1.bf16.msra.mxu0 0
        %6395 = vmatprep.subr.bf16.mxu0 0
        %6396 = vmatpush1.bf16.msra.mxu0 0
        %6397 = vmatprep.subr.bf16.mxu0 0
        %6398 = vmatpush1.bf16.msra.mxu0 0
        %6399 = vmatprep.subr.bf16.mxu0 0
        %6400 = vmatpush1.bf16.msra.mxu0 0
        %6401 = vmatprep.subr.bf16.mxu0 0
        %6402 = vmatpush1.bf16.msra.mxu0 0
        %6403 = vmatprep.subr.bf16.mxu0 0
        %6404 = vmatpush1.bf16.msra.mxu0 0
        %6405 = vmatprep.subr.bf16.mxu0 0
        %6406 = vmatpush1.bf16.msra.mxu0 0
        %6407 = vmatprep.subr.bf16.mxu0 0
        %6408 = vmatpush1.bf16.msra.mxu0 0
        %6409 = vmatprep.subr.bf16.mxu0 0
        %6410 = vmatpush1.bf16.msra.mxu0 0
        %6411 = vmatprep.mubr.bf16.mxu0 0
        %6412 = vmatmul.mubr.bf16.gmra.mrb[0].mxu0 %v6377
        %v6413 = vpop.f32.mrb[0].mxu0
        %v6414 = vadd.f32 0.0, %v6413
        %v6415 = vpop.f32.mrb[0].mxu0
        %v6416 = vpop.f32.mrb[0].mxu0
        %v6417 = vpop.f32.mrb[0].mxu0
        %6418 = vdwg.mxu0
        %v6421 = vunpack.c.l.b16 %v6222
        %v6422 = vunpack.c.l.b16 %v6223
        %v6423 = vpack.c.b16 %v6422, %v6421
        %v6426 = vsel %vm1346, %v6224, 0
        %6428 = vmatprep.subr.bf16.mxu0 0
        %6429 = vmatpush1.bf16.msra.mxu0 %v6423
        %6430 = vmatprep.subr.bf16.mxu0 0
        %6431 = vmatpush1.bf16.msra.mxu0 0
        %6432 = vmatprep.subr.bf16.mxu0 0
        %6433 = vmatpush1.bf16.msra.mxu0 0
        %6434 = vmatprep.subr.bf16.mxu0 0
        %6435 = vmatpush1.bf16.msra.mxu0 0
        %6436 = vmatprep.subr.bf16.mxu0 0
        %6437 = vmatpush1.bf16.msra.mxu0 0
        %6438 = vmatprep.subr.bf16.mxu0 0
        %6439 = vmatpush1.bf16.msra.mxu0 0
        %6440 = vmatprep.subr.bf16.mxu0 0
        %6441 = vmatpush1.bf16.msra.mxu0 0
        %6442 = vmatprep.subr.bf16.mxu0 0
        %6443 = vmatpush1.bf16.msra.mxu0 0
        %6444 = vmatprep.subr.bf16.mxu0 0
        %6445 = vmatpush1.bf16.msra.mxu0 0
        %6446 = vmatprep.subr.bf16.mxu0 0
        %6447 = vmatpush1.bf16.msra.mxu0 0
        %6448 = vmatprep.subr.bf16.mxu0 0
        %6449 = vmatpush1.bf16.msra.mxu0 0
        %6450 = vmatprep.subr.bf16.mxu0 0
        %6451 = vmatpush1.bf16.msra.mxu0 0
        %6452 = vmatprep.subr.bf16.mxu0 0
        %6453 = vmatpush1.bf16.msra.mxu0 0
        %6454 = vmatprep.subr.bf16.mxu0 0
        %6455 = vmatpush1.bf16.msra.mxu0 0
        %6456 = vmatprep.subr.bf16.mxu0 0
        %6457 = vmatpush1.bf16.msra.mxu0 0
        %6458 = vmatprep.subr.bf16.mxu0 0
        %6459 = vmatpush1.bf16.msra.mxu0 0
        %6460 = vmatprep.mubr.bf16.mxu0 0
        %6461 = vmatmul.mubr.bf16.gmra.mrb[0].mxu0 %v6426
        %v6462 = vpop.f32.mrb[0].mxu0
        %v6463 = vadd.f32 %v6414, %v6462
        %v6464 = vpop.f32.mrb[0].mxu0
        %v6465 = vpop.f32.mrb[0].mxu0
        %v6466 = vpop.f32.mrb[0].mxu0
        %6467 = vdwg.mxu0
        %v6468 = vld [vmem:[#allocation10 + $0x83] sm:$0x1]
        %v6469 = vlaneseq
        %v6470 = vshrl.u32 %v6469, 7
        %v6471 = vsub.s32 0, %v6470
        %v6472 = vrot.slane %v6468, %v6471
        %v6473 = vadd.f32 %v6463, %v6472
        %v6474 = vadd.f32 %v4642, %v6473
        %v6475 = vld [vmem:[#allocation10 + $0x88] sm:$0x1]
        %v6476 = vld [vmem:[#allocation10 + $0x89] sm:$0x1]
        %v6477 = vsel %vm440, %v6474, 0.0
        %6478 = vadd.xlane.f32.xlu0 %v6477
        %v6479 = vpop.xlane.xlu0 %6478
        %v6480 = vmul.f32 %v6479, %v994
        %v6481 = vsub.f32 %v6474, %v6480
        %v6482 = vmul.f32 %v6481, %v6481
        %v6483 = vsel %vm440, %v6482, 0.0
        %6484 = vadd.xlane.f32.xlu0 %v6483
        %v6485 = vpop.xlane.xlu0 %6484
        %v6486 = vmul.f32 %v6485, %v994
        %v6487 = vadd.f32 %v6486, 1e-05
        %v6488 = vrsqrt.pop %v6487
        %v6489 = vmul.f32 %v6481, %v6488
        %v6490 = vlaneseq
        %v6491 = vshrl.u32 %v6490, 7
        %v6492 = vsub.s32 0, %v6491
        %v6493 = vrot.slane %v6475, %v6492
        %v6494 = vmul.f32 %v6489, %v6493
        %v6495 = vlaneseq
        %v6496 = vshrl.u32 %v6495, 7
        %v6497 = vsub.s32 0, %v6496
        %v6498 = vrot.slane %v6476, %v6497
        %v6499 = vadd.f32 %v6494, %v6498
        %6500 = vst.msk [vmem:[%s376] sm:$0xff] %vm440, %v6499
        %6501 = vst.msk [vmem:[%s383] sm:$0xff] %vm440, %v5773
        %6502 = vst.msk [vmem:[%s383 + $0x8] sm:$0xff] %vm440, %v5774
        %6503 = vst.msk [vmem:[%s383 + $0x10] sm:$0xff] %vm440, %v5775
        %6504 = vst.msk [vmem:[%s383 + $0x18] sm:$0xff] %vm440, %v5776
        %6505 = vst.msk [vmem:[%s383 + $0x20] sm:$0xff] %vm440, %v5777
        %6506 = vst.msk [vmem:[%s383 + $0x28] sm:$0xff] %vm440, %v5778
        %6507 = vst.msk [vmem:[%s383 + $0x30] sm:$0xff] %vm440, %v5779
        %6508 = vst.msk [vmem:[%s383 + $0x38] sm:$0xff] %vm440, %v5780
        %s6509 = sand.u32 %s159, 1
        %s6510 = scalar_lea.sflag [#allocation4], %s6509
        %s6511 = sand.u32 %s159, 1
        %s6512 = smul.addr %s6511, 8
        %s6513 = scalar_lea.vmem [#allocation11], %s6512
        %s6514 = sand.u32 %s185, 1
        %s6515 = scalar_lea.sflag [#allocation13], %s6514
        %s6516 = sand.u32 %s185, 1
        %s6517 = smul.addr %s6516, 64
        %s6518 = scalar_lea.vmem [#allocation12], %s6517
        // Predicated region
        $region61: #{sam_two_way_transformer_pallas.1} parent=39 // pred_check
          %p6519 = pneg %p169
        $region62: #{sam_two_way_transformer_pallas.1} parent=39 // pred_check_branch
          %6521 = sbr.rel (%p6519) target = $region64
        $region63: #{sam_two_way_transformer_pallas.1} parent=39 // pred_region
          %s6523 = ssub.s32 128, 128
          %6524 = vsyncadd %s6510, %s6523
          %s6525 = smul.addr %s31, 128
          %s6526 = scalar_lea.hbm %s5, %s6525
          %s6528 = sshll.u32 %s6513, 4
          %s6529 = int_to_ptr.vmem [resolvable:$true] %s6528
          %6531 = dma.vmem_to_hbm [thread:$0]  %s6529, 128, %s6526, %s6510
        $region64: #{sam_two_way_transformer_pallas.1} parent=39 // pred_fallthru
          _
        // Predicated region
        $region65: #{sam_two_way_transformer_pallas.1} parent=39 // pred_check
          %p6532 = pneg %p195
        $region66: #{sam_two_way_transformer_pallas.1} parent=39 // pred_check_branch
          %6534 = sbr.rel (%p6532) target = $region68
        $region67: #{sam_two_way_transformer_pallas.1} parent=39 // pred_region
          %s6536 = ssub.s32 1024, 1024
          %6537 = vsyncadd %s6515, %s6536
          %s6538 = smul.addr %s31, 8
          %s6539 = smul.addr %s6538, 128
          %s6540 = scalar_lea.hbm %s6, %s6539
          %s6541 = sshll.u32 %s6518, 4
          %s6542 = int_to_ptr.vmem [resolvable:$true] %s6541
          %6547 = dma.vmem_to_hbm [thread:$0]  %s6542, 1024, %s6540, %s6515, 128, 128, 8
        $region68: #{sam_two_way_transformer_pallas.1} parent=39 // pred_fallthru
          _
      $region40: #{sam_two_way_transformer_pallas.1} parent=5 // pred_fallthru
        _
      %p6548 = scmp.le.s32.totalorder 2, %s26
      // Predicated region
      $region69: #{sam_two_way_transformer_pallas.1} parent=5 // pred_check
        %p6549 = pneg %p6548
      $region70: #{sam_two_way_transformer_pallas.1} parent=5 // pred_check_branch
        %6551 = sbr.rel (%p6549) target = $region72
      $region71: #{sam_two_way_transformer_pallas.1} parent=5 // pred_region
        %s6552 = ssub.s32 %s26, 2
        // Predicated region
        $region73: #{sam_two_way_transformer_pallas.1} parent=71 // pred_check
          %p6553 = pneg %p175
        $region74: #{sam_two_way_transformer_pallas.1} parent=71 // pred_check_branch
          %6555 = sbr.rel (%p6553) target = $region76
        $region75: #{sam_two_way_transformer_pallas.1} parent=71 // pred_region
          %s6556 = sand.u32 %s160, 1
          %s6557 = scalar_lea.sflag [#allocation4], %s6556
          %s6558 = sand.u32 %s160, 1
          %s6559 = smul.addr %s6558, 8
          %s6560 = scalar_lea.vmem [#allocation11], %s6559
          %6561 = dma.done %s6557, 128
        $region76: #{sam_two_way_transformer_pallas.1} parent=71 // pred_fallthru
          _
        // Predicated region
        $region77: #{sam_two_way_transformer_pallas.1} parent=71 // pred_check
          %p6562 = pneg %p201
        $region78: #{sam_two_way_transformer_pallas.1} parent=71 // pred_check_branch
          %6564 = sbr.rel (%p6562) target = $region80
        $region79: #{sam_two_way_transformer_pallas.1} parent=71 // pred_region
          %s6565 = sand.u32 %s186, 1
          %s6566 = scalar_lea.sflag [#allocation13], %s6565
          %s6567 = sand.u32 %s186, 1
          %s6568 = smul.addr %s6567, 64
          %s6569 = scalar_lea.vmem [#allocation12], %s6568
          %6570 = dma.done %s6566, 1024
        $region80: #{sam_two_way_transformer_pallas.1} parent=71 // pred_fallthru
          _
      $region72: #{sam_two_way_transformer_pallas.1} parent=5 // pred_fallthru
        _
    $region6: #{sam_two_way_transformer_pallas.1} parent=1 // loop_footer
      %s30 = sadd.s32 1, %s26
    $region7: #{sam_two_way_transformer_pallas.1} parent=1 // loop_footer_branch
      %25 = sbr.rel target = $region3
    $region8: #{sam_two_way_transformer_pallas.1} parent=1 // loop_exit
      _
    %6571 = vsyncpa [#allocation3], 1
    %s6572 = scalar_lea.sflag [#allocation3], 1
    %6573 = vsyncpa %s6572, 1
    %6574 = vsyncpa [#allocation6], 1
    %s6575 = scalar_lea.sflag [#allocation6], 1
    %6576 = vsyncpa %s6575, 1
    %6577 = vsyncpa [#allocation9], 1
    %6578 = vsyncpa [#allocation4], 1
    %s6579 = scalar_lea.sflag [#allocation4], 1
    %6580 = vsyncpa %s6579, 1
    %6581 = vsyncpa [#allocation13], 1
    %s6582 = scalar_lea.sflag [#allocation13], 1
    %6583 = vsyncpa %s6582, 1

</llo_original>
